<compile_context>
chip_gen: v7x
topology: tpu7x:2x2x1
jax: 0.10.0
libtpu: 0.0.40
codegen_flags: <defaults>
</compile_context>

<pallas_src>
from functools import partial

import numpy as np
import jax
import jax.numpy as jnp
from jax import lax
from jax.experimental import pallas as pl
from jax.experimental.pallas import tpu as pltpu

NEG_SLOPE = 0.01   # nn.LeakyReLU default negative_slope
BN_EPS = 1e-5
CP = 128           # lane-dense channel padding


# ----------------------------- Pallas kernels --------------------------------

def _make_conv_pool_bn_lrelu_kernel(kh, kw, OH, OW, PH, PW, C):
    """Fused Conv2d(valid, bias) + MaxPool2d(2) + BatchNorm2d + LeakyReLU.

    Per grid step (= one image), loops over pooled output rows; for each it
    accumulates the two contributing conv rows with kh*kw MXU matmuls
    (shifted-tap form, no im2col), max-pools H in registers, max-pools W via
    stride-2 VMEM reads, applies scale/shift (conv bias pre-folded into shift)
    and LeakyReLU, and stores one lane-dense pooled row.
    """
    def kernel(x_ref, w_ref, scale_ref, shift_ref, o_ref, row_ref):
        # x_ref:     (1, H, W, C)   bf16  (NHWC, channels zero-padded to 128)
        # w_ref:     (kh*kw, C, C)  bf16  (tap-major, [cin, cout])
        # scale_ref: (1, C) f32 ; shift_ref: (1, C) f32 (bias folded in)
        # o_ref:     (1, PH, PW, C) bf16
        # row_ref:   VMEM scratch (OW, C) f32
        scale = scale_ref[...]
        shift = shift_ref[...]

        def body(ph, carry):
            h0 = 2 * ph
            acc0 = jnp.zeros((OW, C), jnp.float32)   # conv row 2*ph
            acc1 = jnp.zeros((OW, C), jnp.float32)   # conv row 2*ph + 1
            for ki in range(kh):
                r0 = x_ref[0, h0 + ki]               # (W, C) bf16
                r1 = x_ref[0, h0 + ki + 1]
                for kj in range(kw):
                    w_tap = w_ref[ki * kw + kj]      # (C, C) bf16
                    acc0 = acc0 + jnp.dot(r0[kj:kj + OW, :], w_tap,
                                          preferred_element_type=jnp.float32)
                    acc1 = acc1 + jnp.dot(r1[kj:kj + OW, :], w_tap,
                                          preferred_element_type=jnp.float32)
            # Max-pool over H (the two conv rows), then over W via stride-2 reads.
            row_ref[...] = jnp.maximum(acc0, acc1)
            pooled = jnp.maximum(row_ref[pl.ds(0, PW, stride=2), :],
                                 row_ref[pl.ds(1, PW, stride=2), :])   # (PW, C)
            z = pooled * scale + shift
            z = jnp.where(z >= 0.0, z, NEG_SLOPE * z)
            o_ref[0, ph] = z.astype(o_ref.dtype)
            return carry

        lax.fori_loop(0, PH, body, 0)

    return kernel


def conv_pool_bn_lrelu(x, w_taps, scale, shift):
    """x: (N, H, W, 128) bf16 -> (N, OH//2, OW//2, 128) bf16."""
    N, H, W, C = x.shape
    kk = w_taps.shape[0]
    kh = kw = int(round(kk ** 0.5))
    assert kh * kw == kk
    OH, OW = H - kh + 1, W - kw + 1
    PH, PW = OH // 2, OW // 2
    kernel = _make_conv_pool_bn_lrelu_kernel(kh, kw, OH, OW, PH, PW, C)
    return pl.pallas_call(
        kernel,
        grid=(N,),
        out_shape=jax.ShapeDtypeStruct((N, PH, PW, C), jnp.bfloat16),
        in_specs=[
            pl.BlockSpec((1, H, W, C), lambda n: (n, 0, 0, 0)),
            pl.BlockSpec((kk, C, C), lambda n: (0, 0, 0)),   # resident weights
            pl.BlockSpec((1, C), lambda n: (0, 0)),
            pl.BlockSpec((1, C), lambda n: (0, 0)),
        ],
        out_specs=pl.BlockSpec((1, PH, PW, C), lambda n: (n, 0, 0, 0)),
        scratch_shapes=[pltpu.VMEM((OW, C), jnp.float32)],
        compiler_params=pltpu.CompilerParams(
            dimension_semantics=("parallel",)),
    )(x, w_taps, scale, shift)


def _tail_kernel(x_ref, w1_ref, s_ref, t_ref, w2_ref, b2_ref, o_ref):
    """Fused Linear(512->128) + BN1d + LeakyReLU + Linear(128->num_classes)."""
    h = jnp.dot(x_ref[...], w1_ref[...], preferred_element_type=jnp.float32)
    h = h * s_ref[...] + t_ref[...]                 # BN1d (linear bias folded in)
    h = jnp.where(h >= 0.0, h, NEG_SLOPE * h)
    o_ref[...] = (jnp.dot(h.astype(w2_ref.dtype), w2_ref[...],
                          preferred_element_type=jnp.float32) + b2_ref[...])


def classifier_tail(flat, wl_mat, s4, t4, wo_mat, bo_p):
    """flat: (N, 512) bf16 -> (N, 128) f32 logits (class dim zero-padded)."""
    N, K = flat.shape
    Np = max(8, -(-N // 8) * 8)
    if Np > 256:                       # tile M for large batches
        Np = -(-Np // 256) * 256
        TM = 256
    else:
        TM = Np
    flat_p = jnp.pad(flat, ((0, Np - N), (0, 0)))
    Cout = wo_mat.shape[1]
    out = pl.pallas_call(
        _tail_kernel,
        grid=(Np // TM,),
        out_shape=jax.ShapeDtypeStruct((Np, Cout), jnp.float32),
        in_specs=[
            pl.BlockSpec((TM, K), lambda i: (i, 0)),
            pl.BlockSpec(wl_mat.shape, lambda i: (0, 0)),
            pl.BlockSpec(s4.shape, lambda i: (0, 0)),
            pl.BlockSpec(t4.shape, lambda i: (0, 0)),
            pl.BlockSpec(wo_mat.shape, lambda i: (0, 0)),
            pl.BlockSpec(bo_p.shape, lambda i: (0, 0)),
        ],
        out_specs=pl.BlockSpec((TM, Cout), lambda i: (i, 0)),
        compiler_params=pltpu.CompilerParams(
            dimension_semantics=("parallel",)),
    )(flat_p, wl_mat, s4, t4, wo_mat, bo_p)
    return out[:N]


# --------------------- one-time parameter preparation -------------------------

def prepare_params(params, num_classes):
    """Hoist all weight reshapes / padding / bias folding out of forward()."""
    def prep_conv(w, b, bn):
        scale, shift = bn
        cout, cin, kh, kw = w.shape
        taps = jnp.transpose(w, (2, 3, 1, 0)).reshape(kh * kw, cin, cout)
        w_taps = jnp.zeros((kh * kw, CP, CP), jnp.float32)
        w_taps = w_taps.at[:, :cin, :cout].set(taps)
        sc = jnp.zeros((1, CP), jnp.float32).at[0, :cout].set(scale)
        # max-pool commutes with the per-channel bias -> fold bias into shift
        sh = jnp.zeros((1, CP), jnp.float32).at[0, :cout].set(shift + scale * b)
        return w_taps.astype(jnp.bfloat16), sc, sh

    conv = [prep_conv(params["w1"], params["b1"], params["bn1"]),
            prep_conv(params["w2"], params["b2"], params["bn2"]),
            prep_conv(params["w3"], params["b3"], params["bn3"])]

    # Linear(512->128): permute its input rows so it consumes the NHWC flatten
    # of the (N, 2, 2, 128) conv3 output directly (PyTorch flattens NCHW).
    wl = params["wl"]                                   # (128, 512) = (out, c*h*w)
    wl4 = wl.reshape(128, 128, 2, 2)                    # (out, c, h, w)
    wl_mat = jnp.transpose(wl4, (2, 3, 1, 0)).reshape(512, 128)   # (h*w*c, out)
    scale4, shift4 = params["bn4"]
    s4 = scale4[None, :].astype(jnp.float32)
    t4 = (shift4 + scale4 * params["bl"])[None, :].astype(jnp.float32)

    wo = params["wo"]                                   # (num_classes, 128)
    wo_mat = jnp.zeros((128, CP), jnp.float32).at[:, :num_classes].set(wo.T)
    bo_p = jnp.zeros((1, CP), jnp.float32).at[0, :num_classes].set(params["bo"])

    return {"conv": conv,
            "wl": wl_mat.astype(jnp.bfloat16), "s4": s4, "t4": t4,
            "wo": wo_mat.astype(jnp.bfloat16), "bo": bo_p}


# ----------------------------- forward ----------------------------------------

@partial(jax.jit, static_argnames=("num_classes",))
def forward(prep, x_nchw, num_classes):
    x = jnp.transpose(x_nchw, (0, 2, 3, 1)).astype(jnp.float32)   # NCHW -> NHWC
    N, H, W, cin = x.shape
    x = jnp.pad(x, ((0, 0), (0, 0), (0, 0), (0, CP - cin))).astype(jnp.bfloat16)
    for w_taps, sc, sh in prep["conv"]:
        x = conv_pool_bn_lrelu(x, w_taps, sc, sh)      # fused conv blocks
    flat = x.reshape(N, -1)        # NHWC flatten; wl rows were pre-permuted
    # Dropout(p=0.5) layers: identity in inference mode.
    logits = classifier_tail(flat, prep["wl"], prep["s4"], prep["t4"],
                             prep["wo"], prep["bo"])
    return logits[:, :num_classes]


# ----------------------------- parameters ------------------------------------

def init_params(key, num_input_channels, num_classes):
    ks = jax.random.split(key, 14)

    def nrm(k, shape, s=0.05):
        return s * jax.random.normal(k, shape, jnp.float32)

    def bn(k, c):
        k1, k2, k3, k4 = jax.random.split(k, 4)
        gamma = 1.0 + 0.1 * jax.random.normal(k1, (c,), jnp.float32)
        beta = 0.1 * jax.random.normal(k2, (c,), jnp.float32)
        mean = 0.05 * jax.random.normal(k3, (c,), jnp.float32)
        var = 1.0 + 0.2 * jax.random.uniform(k4, (c,), jnp.float32)
        scale = gamma / jnp.sqrt(var + BN_EPS)            # fold running stats
        shift = beta - mean * scale
        return scale, shift

    p = {
        "w1": nrm(ks[0], (32, num_input_channels, 5, 5)), "b1": nrm(ks[1], (32,)),
        "w2": nrm(ks[2], (64, 32, 3, 3)),                 "b2": nrm(ks[3], (64,)),
        "w3": nrm(ks[4], (128, 64, 3, 3)),                "b3": nrm(ks[5], (128,)),
        "wl": nrm(ks[6], (128, 512)),                     "bl": nrm(ks[7], (128,)),
        "wo": nrm(ks[8], (num_classes, 128)),             "bo": nrm(ks[9], (num_classes,)),
        "bn1": bn(ks[10], 32), "bn2": bn(ks[11], 64),
        "bn3": bn(ks[12], 128), "bn4": bn(ks[13], 128),
    }
    return p


# ----------------------------- pure-JAX reference -----------------------------

def im2col(x_nhwc, kh, kw):
    N, H, W, C = x_nhwc.shape
    oh, ow = H - kh + 1, W - kw + 1
    patches = []
    for i in range(kh):
        for j in range(kw):
            patches.append(x_nhwc[:, i:i + oh, j:j + ow, :])
    p = jnp.stack(patches, axis=3)                       # (N, oh, ow, kh*kw, C)
    return p.reshape(N * oh * ow, kh * kw * C), oh, ow


def _ref_conv_block(x, w, b, scale, shift):
    cout, cin, kh, kw = w.shape
    cols, oh, ow = im2col(x, kh, kw)
    w_mat = jnp.transpose(w, (2, 3, 1, 0)).reshape(kh * kw * cin, cout)
    y = (cols @ w_mat + b).reshape(x.shape[0], oh, ow, cout)
    N, H, W, C = y.shape
    y = y.reshape(N, H // 2, 2, W // 2, 2, C).max(axis=(2, 4))
    y = y * scale + shift
    return jnp.where(y >= 0, y, NEG_SLOPE * y)


def forward_ref(params, x_nchw):
    x = jnp.transpose(x_nchw, (0, 2, 3, 1)).astype(jnp.float32)
    x = _ref_conv_block(x, params["w1"], params["b1"], *params["bn1"])
    x = _ref_conv_block(x, params["w2"], params["b2"], *params["bn2"])
    x = _ref_conv_block(x, params["w3"], params["b3"], *params["bn3"])
    flat = jnp.transpose(x, (0, 3, 1, 2)).reshape(x.shape[0], -1)  # NCHW .view(-1,512)
    h = flat @ params["wl"].T + params["bl"]
    h = h * params["bn4"][0] + params["bn4"][1]
    h = jnp.where(h >= 0, h, NEG_SLOPE * h)
    return h @ params["wo"].T + params["bo"]


# ----------------------------- main -------------------------------------------

if __name__ == "__main__":
    num_input_channels, num_classes = 3, 10
    key = jax.random.PRNGKey(0)
    kp, kx = jax.random.split(key)
    params = init_params(kp, num_input_channels, num_classes)
    prep = prepare_params(params, num_classes)            # one-time weight prep

    # 32x32 spatial input so the conv stack yields (N, 128, 2, 2) -> view(-1, 512)
    x = jax.random.normal(kx, (2, num_input_channels, 32, 32), jnp.float32)

    out = jax.block_until_ready(forward(prep, x, num_classes=num_classes))
    assert out.shape == (2, num_classes), out.shape

    ref = jax.block_until_ready(forward_ref(params, x))
    np.testing.assert_allclose(np.asarray(out), np.asarray(ref),
                               rtol=2e-2, atol=2e-2)

    print("KERNEL_OK")
</pallas_src>

<mosaic_0001>
module attributes {stable_mosaic.version = 11 : i64} {
  func.func @kernel(%arg0: i32, %arg1: memref<1x32x32x128xbf16, #tpu.memory_space<vmem>>, %arg2: memref<25x128x128xbf16, #tpu.memory_space<vmem>>, %arg3: memref<1x128xf32, #tpu.memory_space<vmem>>, %arg4: memref<1x128xf32, #tpu.memory_space<vmem>>, %arg5: memref<1x14x14x128xbf16, #tpu.memory_space<vmem>>, %arg6: memref<28x128xf32, #tpu.memory_space<vmem>>) attributes {dimension_semantics = [#tpu.dimension_semantics<parallel>], iteration_bounds = array<i64: 2>, scalar_prefetch = 0 : i64, scratch_operands = 1 : i64, tpu.core_type = #tpu.core_type<tc>, window_params = [{transform_indices = @transform_0, window_bounds = array<i64: 1, 32, 32, 128>}, {pipeline_mode = #tpu.pipeline_mode<synchronous>, transform_indices = @transform_1, window_bounds = array<i64: 25, 128, 128>}, {pipeline_mode = #tpu.pipeline_mode<synchronous>, transform_indices = @transform_2, window_bounds = array<i64: 1, 128>}, {pipeline_mode = #tpu.pipeline_mode<synchronous>, transform_indices = @transform_3, window_bounds = array<i64: 1, 128>}, {transform_indices = @transform_4, window_bounds = array<i64: 1, 14, 14, 128>}]} {
    %c0 = arith.constant 0 : index
    %c0_0 = arith.constant 0 : index
    %0 = vector.load %arg3[%c0, %c0_0] : memref<1x128xf32, #tpu.memory_space<vmem>>, vector<1x128xf32>
    %c0_1 = arith.constant 0 : index
    %c0_2 = arith.constant 0 : index
    %1 = vector.load %arg4[%c0_1, %c0_2] : memref<1x128xf32, #tpu.memory_space<vmem>>, vector<1x128xf32>
    %c0_i32 = arith.constant 0 : i32
    %c14_i32 = arith.constant 14 : i32
    %2 = arith.addi %c0_i32, %c14_i32 : i32
    %c1_i32 = arith.constant 1 : i32
    scf.for %arg7 = %c0_i32 to %2 step %c1_i32  : i32 {
      %c2_i32 = arith.constant 2 : i32
      %3 = arith.muli %c2_i32, %arg7 : i32
      %cst = arith.constant 0.000000e+00 : f32
      %4 = vector.broadcast %cst : f32 to vector<28x128xf32>
      %cst_4 = arith.constant 0.000000e+00 : f32
      %5 = vector.broadcast %cst_4 : f32 to vector<28x128xf32>
      %c0_i32_5 = arith.constant 0 : i32
      %6 = arith.addi %3, %c0_i32_5 : i32
      %c0_6 = arith.constant 0 : index
      %7 = arith.index_cast %6 : i32 to index
      %c0_7 = arith.constant 0 : index
      %c0_8 = arith.constant 0 : index
      %8 = vector.load %arg1[%c0_6, %7, %c0_7, %c0_8] : memref<1x32x32x128xbf16, #tpu.memory_space<vmem>>, vector<1x1x32x128xbf16>
      %9 = vector.shape_cast %8 : vector<1x1x32x128xbf16> to vector<32x128xbf16>
      %c0_i32_9 = arith.constant 0 : i32
      %10 = arith.addi %3, %c0_i32_9 : i32
      %c1_i32_10 = arith.constant 1 : i32
      %11 = arith.addi %10, %c1_i32_10 : i32
      %c0_11 = arith.constant 0 : index
      %12 = arith.index_cast %11 : i32 to index
      %c0_12 = arith.constant 0 : index
      %c0_13 = arith.constant 0 : index
      %13 = vector.load %arg1[%c0_11, %12, %c0_12, %c0_13] : memref<1x32x32x128xbf16, #tpu.memory_space<vmem>>, vector<1x1x32x128xbf16>
      %14 = vector.shape_cast %13 : vector<1x1x32x128xbf16> to vector<32x128xbf16>
      %c0_14 = arith.constant 0 : index
      %c0_15 = arith.constant 0 : index
      %c0_16 = arith.constant 0 : index
      %15 = vector.load %arg2[%c0_14, %c0_15, %c0_16] : memref<25x128x128xbf16, #tpu.memory_space<vmem>>, vector<1x128x128xbf16>
      %16 = vector.shape_cast %15 : vector<1x128x128xbf16> to vector<128x128xbf16>
      %17 = vector.extract_strided_slice %9 {offsets = [0, 0], sizes = [28, 128], strides = [1, 1]} : vector<32x128xbf16> to vector<28x128xbf16>
      %cst_17 = arith.constant dense<0.000000e+00> : vector<28x128xf32>
      %18 = tpu.matmul %17, %16, %cst_17 {dimension_numbers = #tpu.dot_dimension_numbers<[1], [0], [0], [1], [0, 0, 1, 1], [], []>} : vector<28x128xbf16>, vector<128x128xbf16>, vector<28x128xf32> -> vector<28x128xf32>
      %19 = arith.addf %4, %18 : vector<28x128xf32>
      %20 = vector.extract_strided_slice %14 {offsets = [0, 0], sizes = [28, 128], strides = [1, 1]} : vector<32x128xbf16> to vector<28x128xbf16>
      %cst_18 = arith.constant dense<0.000000e+00> : vector<28x128xf32>
      %21 = tpu.matmul %20, %16, %cst_18 {dimension_numbers = #tpu.dot_dimension_numbers<[1], [0], [0], [1], [0, 0, 1, 1], [], []>} : vector<28x128xbf16>, vector<128x128xbf16>, vector<28x128xf32> -> vector<28x128xf32>
      %22 = arith.addf %5, %21 : vector<28x128xf32>
      %c1 = arith.constant 1 : index
      %c0_19 = arith.constant 0 : index
      %c0_20 = arith.constant 0 : index
      %23 = vector.load %arg2[%c1, %c0_19, %c0_20] : memref<25x128x128xbf16, #tpu.memory_space<vmem>>, vector<1x128x128xbf16>
      %24 = vector.shape_cast %23 : vector<1x128x128xbf16> to vector<128x128xbf16>
      %25 = vector.extract_strided_slice %9 {offsets = [1, 0], sizes = [28, 128], strides = [1, 1]} : vector<32x128xbf16> to vector<28x128xbf16>
      %cst_21 = arith.constant dense<0.000000e+00> : vector<28x128xf32>
      %26 = tpu.matmul %25, %24, %cst_21 {dimension_numbers = #tpu.dot_dimension_numbers<[1], [0], [0], [1], [0, 0, 1, 1], [], []>} : vector<28x128xbf16>, vector<128x128xbf16>, vector<28x128xf32> -> vector<28x128xf32>
      %27 = arith.addf %19, %26 : vector<28x128xf32>
      %28 = vector.extract_strided_slice %14 {offsets = [1, 0], sizes = [28, 128], strides = [1, 1]} : vector<32x128xbf16> to vector<28x128xbf16>
      %cst_22 = arith.constant dense<0.000000e+00> : vector<28x128xf32>
      %29 = tpu.matmul %28, %24, %cst_22 {dimension_numbers = #tpu.dot_dimension_numbers<[1], [0], [0], [1], [0, 0, 1, 1], [], []>} : vector<28x128xbf16>, vector<128x128xbf16>, vector<28x128xf32> -> vector<28x128xf32>
      %30 = arith.addf %22, %29 : vector<28x128xf32>
      %c2 = arith.constant 2 : index
      %c0_23 = arith.constant 0 : index
      %c0_24 = arith.constant 0 : index
      %31 = vector.load %arg2[%c2, %c0_23, %c0_24] : memref<25x128x128xbf16, #tpu.memory_space<vmem>>, vector<1x128x128xbf16>
      %32 = vector.shape_cast %31 : vector<1x128x128xbf16> to vector<128x128xbf16>
      %33 = vector.extract_strided_slice %9 {offsets = [2, 0], sizes = [28, 128], strides = [1, 1]} : vector<32x128xbf16> to vector<28x128xbf16>
      %cst_25 = arith.constant dense<0.000000e+00> : vector<28x128xf32>
      %34 = tpu.matmul %33, %32, %cst_25 {dimension_numbers = #tpu.dot_dimension_numbers<[1], [0], [0], [1], [0, 0, 1, 1], [], []>} : vector<28x128xbf16>, vector<128x128xbf16>, vector<28x128xf32> -> vector<28x128xf32>
      %35 = arith.addf %27, %34 : vector<28x128xf32>
      %36 = vector.extract_strided_slice %14 {offsets = [2, 0], sizes = [28, 128], strides = [1, 1]} : vector<32x128xbf16> to vector<28x128xbf16>
      %cst_26 = arith.constant dense<0.000000e+00> : vector<28x128xf32>
      %37 = tpu.matmul %36, %32, %cst_26 {dimension_numbers = #tpu.dot_dimension_numbers<[1], [0], [0], [1], [0, 0, 1, 1], [], []>} : vector<28x128xbf16>, vector<128x128xbf16>, vector<28x128xf32> -> vector<28x128xf32>
      %38 = arith.addf %30, %37 : vector<28x128xf32>
      %c3 = arith.constant 3 : index
      %c0_27 = arith.constant 0 : index
      %c0_28 = arith.constant 0 : index
      %39 = vector.load %arg2[%c3, %c0_27, %c0_28] : memref<25x128x128xbf16, #tpu.memory_space<vmem>>, vector<1x128x128xbf16>
      %40 = vector.shape_cast %39 : vector<1x128x128xbf16> to vector<128x128xbf16>
      %41 = vector.extract_strided_slice %9 {offsets = [3, 0], sizes = [28, 128], strides = [1, 1]} : vector<32x128xbf16> to vector<28x128xbf16>
      %cst_29 = arith.constant dense<0.000000e+00> : vector<28x128xf32>
      %42 = tpu.matmul %41, %40, %cst_29 {dimension_numbers = #tpu.dot_dimension_numbers<[1], [0], [0], [1], [0, 0, 1, 1], [], []>} : vector<28x128xbf16>, vector<128x128xbf16>, vector<28x128xf32> -> vector<28x128xf32>
      %43 = arith.addf %35, %42 : vector<28x128xf32>
      %44 = vector.extract_strided_slice %14 {offsets = [3, 0], sizes = [28, 128], strides = [1, 1]} : vector<32x128xbf16> to vector<28x128xbf16>
      %cst_30 = arith.constant dense<0.000000e+00> : vector<28x128xf32>
      %45 = tpu.matmul %44, %40, %cst_30 {dimension_numbers = #tpu.dot_dimension_numbers<[1], [0], [0], [1], [0, 0, 1, 1], [], []>} : vector<28x128xbf16>, vector<128x128xbf16>, vector<28x128xf32> -> vector<28x128xf32>
      %46 = arith.addf %38, %45 : vector<28x128xf32>
      %c4 = arith.constant 4 : index
      %c0_31 = arith.constant 0 : index
      %c0_32 = arith.constant 0 : index
      %47 = vector.load %arg2[%c4, %c0_31, %c0_32] : memref<25x128x128xbf16, #tpu.memory_space<vmem>>, vector<1x128x128xbf16>
      %48 = vector.shape_cast %47 : vector<1x128x128xbf16> to vector<128x128xbf16>
      %49 = vector.extract_strided_slice %9 {offsets = [4, 0], sizes = [28, 128], strides = [1, 1]} : vector<32x128xbf16> to vector<28x128xbf16>
      %cst_33 = arith.constant dense<0.000000e+00> : vector<28x128xf32>
      %50 = tpu.matmul %49, %48, %cst_33 {dimension_numbers = #tpu.dot_dimension_numbers<[1], [0], [0], [1], [0, 0, 1, 1], [], []>} : vector<28x128xbf16>, vector<128x128xbf16>, vector<28x128xf32> -> vector<28x128xf32>
      %51 = arith.addf %43, %50 : vector<28x128xf32>
      %52 = vector.extract_strided_slice %14 {offsets = [4, 0], sizes = [28, 128], strides = [1, 1]} : vector<32x128xbf16> to vector<28x128xbf16>
      %cst_34 = arith.constant dense<0.000000e+00> : vector<28x128xf32>
      %53 = tpu.matmul %52, %48, %cst_34 {dimension_numbers = #tpu.dot_dimension_numbers<[1], [0], [0], [1], [0, 0, 1, 1], [], []>} : vector<28x128xbf16>, vector<128x128xbf16>, vector<28x128xf32> -> vector<28x128xf32>
      %54 = arith.addf %46, %53 : vector<28x128xf32>
      %c1_i32_35 = arith.constant 1 : i32
      %55 = arith.addi %3, %c1_i32_35 : i32
      %c0_36 = arith.constant 0 : index
      %56 = arith.index_cast %55 : i32 to index
      %c0_37 = arith.constant 0 : index
      %c0_38 = arith.constant 0 : index
      %57 = vector.load %arg1[%c0_36, %56, %c0_37, %c0_38] : memref<1x32x32x128xbf16, #tpu.memory_space<vmem>>, vector<1x1x32x128xbf16>
      %58 = vector.shape_cast %57 : vector<1x1x32x128xbf16> to vector<32x128xbf16>
      %c1_i32_39 = arith.constant 1 : i32
      %59 = arith.addi %3, %c1_i32_39 : i32
      %c1_i32_40 = arith.constant 1 : i32
      %60 = arith.addi %59, %c1_i32_40 : i32
      %c0_41 = arith.constant 0 : index
      %61 = arith.index_cast %60 : i32 to index
      %c0_42 = arith.constant 0 : index
      %c0_43 = arith.constant 0 : index
      %62 = vector.load %arg1[%c0_41, %61, %c0_42, %c0_43] : memref<1x32x32x128xbf16, #tpu.memory_space<vmem>>, vector<1x1x32x128xbf16>
      %63 = vector.shape_cast %62 : vector<1x1x32x128xbf16> to vector<32x128xbf16>
      %c5 = arith.constant 5 : index
      %c0_44 = arith.constant 0 : index
      %c0_45 = arith.constant 0 : index
      %64 = vector.load %arg2[%c5, %c0_44, %c0_45] : memref<25x128x128xbf16, #tpu.memory_space<vmem>>, vector<1x128x128xbf16>
      %65 = vector.shape_cast %64 : vector<1x128x128xbf16> to vector<128x128xbf16>
      %66 = vector.extract_strided_slice %58 {offsets = [0, 0], sizes = [28, 128], strides = [1, 1]} : vector<32x128xbf16> to vector<28x128xbf16>
      %cst_46 = arith.constant dense<0.000000e+00> : vector<28x128xf32>
      %67 = tpu.matmul %66, %65, %cst_46 {dimension_numbers = #tpu.dot_dimension_numbers<[1], [0], [0], [1], [0, 0, 1, 1], [], []>} : vector<28x128xbf16>, vector<128x128xbf16>, vector<28x128xf32> -> vector<28x128xf32>
      %68 = arith.addf %51, %67 : vector<28x128xf32>
      %69 = vector.extract_strided_slice %63 {offsets = [0, 0], sizes = [28, 128], strides = [1, 1]} : vector<32x128xbf16> to vector<28x128xbf16>
      %cst_47 = arith.constant dense<0.000000e+00> : vector<28x128xf32>
      %70 = tpu.matmul %69, %65, %cst_47 {dimension_numbers = #tpu.dot_dimension_numbers<[1], [0], [0], [1], [0, 0, 1, 1], [], []>} : vector<28x128xbf16>, vector<128x128xbf16>, vector<28x128xf32> -> vector<28x128xf32>
      %71 = arith.addf %54, %70 : vector<28x128xf32>
      %c6 = arith.constant 6 : index
      %c0_48 = arith.constant 0 : index
      %c0_49 = arith.constant 0 : index
      %72 = vector.load %arg2[%c6, %c0_48, %c0_49] : memref<25x128x128xbf16, #tpu.memory_space<vmem>>, vector<1x128x128xbf16>
      %73 = vector.shape_cast %72 : vector<1x128x128xbf16> to vector<128x128xbf16>
      %74 = vector.extract_strided_slice %58 {offsets = [1, 0], sizes = [28, 128], strides = [1, 1]} : vector<32x128xbf16> to vector<28x128xbf16>
      %cst_50 = arith.constant dense<0.000000e+00> : vector<28x128xf32>
      %75 = tpu.matmul %74, %73, %cst_50 {dimension_numbers = #tpu.dot_dimension_numbers<[1], [0], [0], [1], [0, 0, 1, 1], [], []>} : vector<28x128xbf16>, vector<128x128xbf16>, vector<28x128xf32> -> vector<28x128xf32>
      %76 = arith.addf %68, %75 : vector<28x128xf32>
      %77 = vector.extract_strided_slice %63 {offsets = [1, 0], sizes = [28, 128], strides = [1, 1]} : vector<32x128xbf16> to vector<28x128xbf16>
      %cst_51 = arith.constant dense<0.000000e+00> : vector<28x128xf32>
      %78 = tpu.matmul %77, %73, %cst_51 {dimension_numbers = #tpu.dot_dimension_numbers<[1], [0], [0], [1], [0, 0, 1, 1], [], []>} : vector<28x128xbf16>, vector<128x128xbf16>, vector<28x128xf32> -> vector<28x128xf32>
      %79 = arith.addf %71, %78 : vector<28x128xf32>
      %c7 = arith.constant 7 : index
      %c0_52 = arith.constant 0 : index
      %c0_53 = arith.constant 0 : index
      %80 = vector.load %arg2[%c7, %c0_52, %c0_53] : memref<25x128x128xbf16, #tpu.memory_space<vmem>>, vector<1x128x128xbf16>
      %81 = vector.shape_cast %80 : vector<1x128x128xbf16> to vector<128x128xbf16>
      %82 = vector.extract_strided_slice %58 {offsets = [2, 0], sizes = [28, 128], strides = [1, 1]} : vector<32x128xbf16> to vector<28x128xbf16>
      %cst_54 = arith.constant dense<0.000000e+00> : vector<28x128xf32>
      %83 = tpu.matmul %82, %81, %cst_54 {dimension_numbers = #tpu.dot_dimension_numbers<[1], [0], [0], [1], [0, 0, 1, 1], [], []>} : vector<28x128xbf16>, vector<128x128xbf16>, vector<28x128xf32> -> vector<28x128xf32>
      %84 = arith.addf %76, %83 : vector<28x128xf32>
      %85 = vector.extract_strided_slice %63 {offsets = [2, 0], sizes = [28, 128], strides = [1, 1]} : vector<32x128xbf16> to vector<28x128xbf16>
      %cst_55 = arith.constant dense<0.000000e+00> : vector<28x128xf32>
      %86 = tpu.matmul %85, %81, %cst_55 {dimension_numbers = #tpu.dot_dimension_numbers<[1], [0], [0], [1], [0, 0, 1, 1], [], []>} : vector<28x128xbf16>, vector<128x128xbf16>, vector<28x128xf32> -> vector<28x128xf32>
      %87 = arith.addf %79, %86 : vector<28x128xf32>
      %c8 = arith.constant 8 : index
      %c0_56 = arith.constant 0 : index
      %c0_57 = arith.constant 0 : index
      %88 = vector.load %arg2[%c8, %c0_56, %c0_57] : memref<25x128x128xbf16, #tpu.memory_space<vmem>>, vector<1x128x128xbf16>
      %89 = vector.shape_cast %88 : vector<1x128x128xbf16> to vector<128x128xbf16>
      %90 = vector.extract_strided_slice %58 {offsets = [3, 0], sizes = [28, 128], strides = [1, 1]} : vector<32x128xbf16> to vector<28x128xbf16>
      %cst_58 = arith.constant dense<0.000000e+00> : vector<28x128xf32>
      %91 = tpu.matmul %90, %89, %cst_58 {dimension_numbers = #tpu.dot_dimension_numbers<[1], [0], [0], [1], [0, 0, 1, 1], [], []>} : vector<28x128xbf16>, vector<128x128xbf16>, vector<28x128xf32> -> vector<28x128xf32>
      %92 = arith.addf %84, %91 : vector<28x128xf32>
      %93 = vector.extract_strided_slice %63 {offsets = [3, 0], sizes = [28, 128], strides = [1, 1]} : vector<32x128xbf16> to vector<28x128xbf16>
      %cst_59 = arith.constant dense<0.000000e+00> : vector<28x128xf32>
      %94 = tpu.matmul %93, %89, %cst_59 {dimension_numbers = #tpu.dot_dimension_numbers<[1], [0], [0], [1], [0, 0, 1, 1], [], []>} : vector<28x128xbf16>, vector<128x128xbf16>, vector<28x128xf32> -> vector<28x128xf32>
      %95 = arith.addf %87, %94 : vector<28x128xf32>
      %c9 = arith.constant 9 : index
      %c0_60 = arith.constant 0 : index
      %c0_61 = arith.constant 0 : index
      %96 = vector.load %arg2[%c9, %c0_60, %c0_61] : memref<25x128x128xbf16, #tpu.memory_space<vmem>>, vector<1x128x128xbf16>
      %97 = vector.shape_cast %96 : vector<1x128x128xbf16> to vector<128x128xbf16>
      %98 = vector.extract_strided_slice %58 {offsets = [4, 0], sizes = [28, 128], strides = [1, 1]} : vector<32x128xbf16> to vector<28x128xbf16>
      %cst_62 = arith.constant dense<0.000000e+00> : vector<28x128xf32>
      %99 = tpu.matmul %98, %97, %cst_62 {dimension_numbers = #tpu.dot_dimension_numbers<[1], [0], [0], [1], [0, 0, 1, 1], [], []>} : vector<28x128xbf16>, vector<128x128xbf16>, vector<28x128xf32> -> vector<28x128xf32>
      %100 = arith.addf %92, %99 : vector<28x128xf32>
      %101 = vector.extract_strided_slice %63 {offsets = [4, 0], sizes = [28, 128], strides = [1, 1]} : vector<32x128xbf16> to vector<28x128xbf16>
      %cst_63 = arith.constant dense<0.000000e+00> : vector<28x128xf32>
      %102 = tpu.matmul %101, %97, %cst_63 {dimension_numbers = #tpu.dot_dimension_numbers<[1], [0], [0], [1], [0, 0, 1, 1], [], []>} : vector<28x128xbf16>, vector<128x128xbf16>, vector<28x128xf32> -> vector<28x128xf32>
      %103 = arith.addf %95, %102 : vector<28x128xf32>
      %c2_i32_64 = arith.constant 2 : i32
      %104 = arith.addi %3, %c2_i32_64 : i32
      %c0_65 = arith.constant 0 : index
      %105 = arith.index_cast %104 : i32 to index
      %c0_66 = arith.constant 0 : index
      %c0_67 = arith.constant 0 : index
      %106 = vector.load %arg1[%c0_65, %105, %c0_66, %c0_67] : memref<1x32x32x128xbf16, #tpu.memory_space<vmem>>, vector<1x1x32x128xbf16>
      %107 = vector.shape_cast %106 : vector<1x1x32x128xbf16> to vector<32x128xbf16>
      %c2_i32_68 = arith.constant 2 : i32
      %108 = arith.addi %3, %c2_i32_68 : i32
      %c1_i32_69 = arith.constant 1 : i32
      %109 = arith.addi %108, %c1_i32_69 : i32
      %c0_70 = arith.constant 0 : index
      %110 = arith.index_cast %109 : i32 to index
      %c0_71 = arith.constant 0 : index
      %c0_72 = arith.constant 0 : index
      %111 = vector.load %arg1[%c0_70, %110, %c0_71, %c0_72] : memref<1x32x32x128xbf16, #tpu.memory_space<vmem>>, vector<1x1x32x128xbf16>
      %112 = vector.shape_cast %111 : vector<1x1x32x128xbf16> to vector<32x128xbf16>
      %c10 = arith.constant 10 : index
      %c0_73 = arith.constant 0 : index
      %c0_74 = arith.constant 0 : index
      %113 = vector.load %arg2[%c10, %c0_73, %c0_74] : memref<25x128x128xbf16, #tpu.memory_space<vmem>>, vector<1x128x128xbf16>
      %114 = vector.shape_cast %113 : vector<1x128x128xbf16> to vector<128x128xbf16>
      %115 = vector.extract_strided_slice %107 {offsets = [0, 0], sizes = [28, 128], strides = [1, 1]} : vector<32x128xbf16> to vector<28x128xbf16>
      %cst_75 = arith.constant dense<0.000000e+00> : vector<28x128xf32>
      %116 = tpu.matmul %115, %114, %cst_75 {dimension_numbers = #tpu.dot_dimension_numbers<[1], [0], [0], [1], [0, 0, 1, 1], [], []>} : vector<28x128xbf16>, vector<128x128xbf16>, vector<28x128xf32> -> vector<28x128xf32>
      %117 = arith.addf %100, %116 : vector<28x128xf32>
      %118 = vector.extract_strided_slice %112 {offsets = [0, 0], sizes = [28, 128], strides = [1, 1]} : vector<32x128xbf16> to vector<28x128xbf16>
      %cst_76 = arith.constant dense<0.000000e+00> : vector<28x128xf32>
      %119 = tpu.matmul %118, %114, %cst_76 {dimension_numbers = #tpu.dot_dimension_numbers<[1], [0], [0], [1], [0, 0, 1, 1], [], []>} : vector<28x128xbf16>, vector<128x128xbf16>, vector<28x128xf32> -> vector<28x128xf32>
      %120 = arith.addf %103, %119 : vector<28x128xf32>
      %c11 = arith.constant 11 : index
      %c0_77 = arith.constant 0 : index
      %c0_78 = arith.constant 0 : index
      %121 = vector.load %arg2[%c11, %c0_77, %c0_78] : memref<25x128x128xbf16, #tpu.memory_space<vmem>>, vector<1x128x128xbf16>
      %122 = vector.shape_cast %121 : vector<1x128x128xbf16> to vector<128x128xbf16>
      %123 = vector.extract_strided_slice %107 {offsets = [1, 0], sizes = [28, 128], strides = [1, 1]} : vector<32x128xbf16> to vector<28x128xbf16>
      %cst_79 = arith.constant dense<0.000000e+00> : vector<28x128xf32>
      %124 = tpu.matmul %123, %122, %cst_79 {dimension_numbers = #tpu.dot_dimension_numbers<[1], [0], [0], [1], [0, 0, 1, 1], [], []>} : vector<28x128xbf16>, vector<128x128xbf16>, vector<28x128xf32> -> vector<28x128xf32>
      %125 = arith.addf %117, %124 : vector<28x128xf32>
      %126 = vector.extract_strided_slice %112 {offsets = [1, 0], sizes = [28, 128], strides = [1, 1]} : vector<32x128xbf16> to vector<28x128xbf16>
      %cst_80 = arith.constant dense<0.000000e+00> : vector<28x128xf32>
      %127 = tpu.matmul %126, %122, %cst_80 {dimension_numbers = #tpu.dot_dimension_numbers<[1], [0], [0], [1], [0, 0, 1, 1], [], []>} : vector<28x128xbf16>, vector<128x128xbf16>, vector<28x128xf32> -> vector<28x128xf32>
      %128 = arith.addf %120, %127 : vector<28x128xf32>
      %c12 = arith.constant 12 : index
      %c0_81 = arith.constant 0 : index
      %c0_82 = arith.constant 0 : index
      %129 = vector.load %arg2[%c12, %c0_81, %c0_82] : memref<25x128x128xbf16, #tpu.memory_space<vmem>>, vector<1x128x128xbf16>
      %130 = vector.shape_cast %129 : vector<1x128x128xbf16> to vector<128x128xbf16>
      %131 = vector.extract_strided_slice %107 {offsets = [2, 0], sizes = [28, 128], strides = [1, 1]} : vector<32x128xbf16> to vector<28x128xbf16>
      %cst_83 = arith.constant dense<0.000000e+00> : vector<28x128xf32>
      %132 = tpu.matmul %131, %130, %cst_83 {dimension_numbers = #tpu.dot_dimension_numbers<[1], [0], [0], [1], [0, 0, 1, 1], [], []>} : vector<28x128xbf16>, vector<128x128xbf16>, vector<28x128xf32> -> vector<28x128xf32>
      %133 = arith.addf %125, %132 : vector<28x128xf32>
      %134 = vector.extract_strided_slice %112 {offsets = [2, 0], sizes = [28, 128], strides = [1, 1]} : vector<32x128xbf16> to vector<28x128xbf16>
      %cst_84 = arith.constant dense<0.000000e+00> : vector<28x128xf32>
      %135 = tpu.matmul %134, %130, %cst_84 {dimension_numbers = #tpu.dot_dimension_numbers<[1], [0], [0], [1], [0, 0, 1, 1], [], []>} : vector<28x128xbf16>, vector<128x128xbf16>, vector<28x128xf32> -> vector<28x128xf32>
      %136 = arith.addf %128, %135 : vector<28x128xf32>
      %c13 = arith.constant 13 : index
      %c0_85 = arith.constant 0 : index
      %c0_86 = arith.constant 0 : index
      %137 = vector.load %arg2[%c13, %c0_85, %c0_86] : memref<25x128x128xbf16, #tpu.memory_space<vmem>>, vector<1x128x128xbf16>
      %138 = vector.shape_cast %137 : vector<1x128x128xbf16> to vector<128x128xbf16>
      %139 = vector.extract_strided_slice %107 {offsets = [3, 0], sizes = [28, 128], strides = [1, 1]} : vector<32x128xbf16> to vector<28x128xbf16>
      %cst_87 = arith.constant dense<0.000000e+00> : vector<28x128xf32>
      %140 = tpu.matmul %139, %138, %cst_87 {dimension_numbers = #tpu.dot_dimension_numbers<[1], [0], [0], [1], [0, 0, 1, 1], [], []>} : vector<28x128xbf16>, vector<128x128xbf16>, vector<28x128xf32> -> vector<28x128xf32>
      %141 = arith.addf %133, %140 : vector<28x128xf32>
      %142 = vector.extract_strided_slice %112 {offsets = [3, 0], sizes = [28, 128], strides = [1, 1]} : vector<32x128xbf16> to vector<28x128xbf16>
      %cst_88 = arith.constant dense<0.000000e+00> : vector<28x128xf32>
      %143 = tpu.matmul %142, %138, %cst_88 {dimension_numbers = #tpu.dot_dimension_numbers<[1], [0], [0], [1], [0, 0, 1, 1], [], []>} : vector<28x128xbf16>, vector<128x128xbf16>, vector<28x128xf32> -> vector<28x128xf32>
      %144 = arith.addf %136, %143 : vector<28x128xf32>
      %c14 = arith.constant 14 : index
      %c0_89 = arith.constant 0 : index
      %c0_90 = arith.constant 0 : index
      %145 = vector.load %arg2[%c14, %c0_89, %c0_90] : memref<25x128x128xbf16, #tpu.memory_space<vmem>>, vector<1x128x128xbf16>
      %146 = vector.shape_cast %145 : vector<1x128x128xbf16> to vector<128x128xbf16>
      %147 = vector.extract_strided_slice %107 {offsets = [4, 0], sizes = [28, 128], strides = [1, 1]} : vector<32x128xbf16> to vector<28x128xbf16>
      %cst_91 = arith.constant dense<0.000000e+00> : vector<28x128xf32>
      %148 = tpu.matmul %147, %146, %cst_91 {dimension_numbers = #tpu.dot_dimension_numbers<[1], [0], [0], [1], [0, 0, 1, 1], [], []>} : vector<28x128xbf16>, vector<128x128xbf16>, vector<28x128xf32> -> vector<28x128xf32>
      %149 = arith.addf %141, %148 : vector<28x128xf32>
      %150 = vector.extract_strided_slice %112 {offsets = [4, 0], sizes = [28, 128], strides = [1, 1]} : vector<32x128xbf16> to vector<28x128xbf16>
      %cst_92 = arith.constant dense<0.000000e+00> : vector<28x128xf32>
      %151 = tpu.matmul %150, %146, %cst_92 {dimension_numbers = #tpu.dot_dimension_numbers<[1], [0], [0], [1], [0, 0, 1, 1], [], []>} : vector<28x128xbf16>, vector<128x128xbf16>, vector<28x128xf32> -> vector<28x128xf32>
      %152 = arith.addf %144, %151 : vector<28x128xf32>
      %c3_i32 = arith.constant 3 : i32
      %153 = arith.addi %3, %c3_i32 : i32
      %c0_93 = arith.constant 0 : index
      %154 = arith.index_cast %153 : i32 to index
      %c0_94 = arith.constant 0 : index
      %c0_95 = arith.constant 0 : index
      %155 = vector.load %arg1[%c0_93, %154, %c0_94, %c0_95] : memref<1x32x32x128xbf16, #tpu.memory_space<vmem>>, vector<1x1x32x128xbf16>
      %156 = vector.shape_cast %155 : vector<1x1x32x128xbf16> to vector<32x128xbf16>
      %c3_i32_96 = arith.constant 3 : i32
      %157 = arith.addi %3, %c3_i32_96 : i32
      %c1_i32_97 = arith.constant 1 : i32
      %158 = arith.addi %157, %c1_i32_97 : i32
      %c0_98 = arith.constant 0 : index
      %159 = arith.index_cast %158 : i32 to index
      %c0_99 = arith.constant 0 : index
      %c0_100 = arith.constant 0 : index
      %160 = vector.load %arg1[%c0_98, %159, %c0_99, %c0_100] : memref<1x32x32x128xbf16, #tpu.memory_space<vmem>>, vector<1x1x32x128xbf16>
      %161 = vector.shape_cast %160 : vector<1x1x32x128xbf16> to vector<32x128xbf16>
      %c15 = arith.constant 15 : index
      %c0_101 = arith.constant 0 : index
      %c0_102 = arith.constant 0 : index
      %162 = vector.load %arg2[%c15, %c0_101, %c0_102] : memref<25x128x128xbf16, #tpu.memory_space<vmem>>, vector<1x128x128xbf16>
      %163 = vector.shape_cast %162 : vector<1x128x128xbf16> to vector<128x128xbf16>
      %164 = vector.extract_strided_slice %156 {offsets = [0, 0], sizes = [28, 128], strides = [1, 1]} : vector<32x128xbf16> to vector<28x128xbf16>
      %cst_103 = arith.constant dense<0.000000e+00> : vector<28x128xf32>
      %165 = tpu.matmul %164, %163, %cst_103 {dimension_numbers = #tpu.dot_dimension_numbers<[1], [0], [0], [1], [0, 0, 1, 1], [], []>} : vector<28x128xbf16>, vector<128x128xbf16>, vector<28x128xf32> -> vector<28x128xf32>
      %166 = arith.addf %149, %165 : vector<28x128xf32>
      %167 = vector.extract_strided_slice %161 {offsets = [0, 0], sizes = [28, 128], strides = [1, 1]} : vector<32x128xbf16> to vector<28x128xbf16>
      %cst_104 = arith.constant dense<0.000000e+00> : vector<28x128xf32>
      %168 = tpu.matmul %167, %163, %cst_104 {dimension_numbers = #tpu.dot_dimension_numbers<[1], [0], [0], [1], [0, 0, 1, 1], [], []>} : vector<28x128xbf16>, vector<128x128xbf16>, vector<28x128xf32> -> vector<28x128xf32>
      %169 = arith.addf %152, %168 : vector<28x128xf32>
      %c16 = arith.constant 16 : index
      %c0_105 = arith.constant 0 : index
      %c0_106 = arith.constant 0 : index
      %170 = vector.load %arg2[%c16, %c0_105, %c0_106] : memref<25x128x128xbf16, #tpu.memory_space<vmem>>, vector<1x128x128xbf16>
      %171 = vector.shape_cast %170 : vector<1x128x128xbf16> to vector<128x128xbf16>
      %172 = vector.extract_strided_slice %156 {offsets = [1, 0], sizes = [28, 128], strides = [1, 1]} : vector<32x128xbf16> to vector<28x128xbf16>
      %cst_107 = arith.constant dense<0.000000e+00> : vector<28x128xf32>
      %173 = tpu.matmul %172, %171, %cst_107 {dimension_numbers = #tpu.dot_dimension_numbers<[1], [0], [0], [1], [0, 0, 1, 1], [], []>} : vector<28x128xbf16>, vector<128x128xbf16>, vector<28x128xf32> -> vector<28x128xf32>
      %174 = arith.addf %166, %173 : vector<28x128xf32>
      %175 = vector.extract_strided_slice %161 {offsets = [1, 0], sizes = [28, 128], strides = [1, 1]} : vector<32x128xbf16> to vector<28x128xbf16>
      %cst_108 = arith.constant dense<0.000000e+00> : vector<28x128xf32>
      %176 = tpu.matmul %175, %171, %cst_108 {dimension_numbers = #tpu.dot_dimension_numbers<[1], [0], [0], [1], [0, 0, 1, 1], [], []>} : vector<28x128xbf16>, vector<128x128xbf16>, vector<28x128xf32> -> vector<28x128xf32>
      %177 = arith.addf %169, %176 : vector<28x128xf32>
      %c17 = arith.constant 17 : index
      %c0_109 = arith.constant 0 : index
      %c0_110 = arith.constant 0 : index
      %178 = vector.load %arg2[%c17, %c0_109, %c0_110] : memref<25x128x128xbf16, #tpu.memory_space<vmem>>, vector<1x128x128xbf16>
      %179 = vector.shape_cast %178 : vector<1x128x128xbf16> to vector<128x128xbf16>
      %180 = vector.extract_strided_slice %156 {offsets = [2, 0], sizes = [28, 128], strides = [1, 1]} : vector<32x128xbf16> to vector<28x128xbf16>
      %cst_111 = arith.constant dense<0.000000e+00> : vector<28x128xf32>
      %181 = tpu.matmul %180, %179, %cst_111 {dimension_numbers = #tpu.dot_dimension_numbers<[1], [0], [0], [1], [0, 0, 1, 1], [], []>} : vector<28x128xbf16>, vector<128x128xbf16>, vector<28x128xf32> -> vector<28x128xf32>
      %182 = arith.addf %174, %181 : vector<28x128xf32>
      %183 = vector.extract_strided_slice %161 {offsets = [2, 0], sizes = [28, 128], strides = [1, 1]} : vector<32x128xbf16> to vector<28x128xbf16>
      %cst_112 = arith.constant dense<0.000000e+00> : vector<28x128xf32>
      %184 = tpu.matmul %183, %179, %cst_112 {dimension_numbers = #tpu.dot_dimension_numbers<[1], [0], [0], [1], [0, 0, 1, 1], [], []>} : vector<28x128xbf16>, vector<128x128xbf16>, vector<28x128xf32> -> vector<28x128xf32>
      %185 = arith.addf %177, %184 : vector<28x128xf32>
      %c18 = arith.constant 18 : index
      %c0_113 = arith.constant 0 : index
      %c0_114 = arith.constant 0 : index
      %186 = vector.load %arg2[%c18, %c0_113, %c0_114] : memref<25x128x128xbf16, #tpu.memory_space<vmem>>, vector<1x128x128xbf16>
      %187 = vector.shape_cast %186 : vector<1x128x128xbf16> to vector<128x128xbf16>
      %188 = vector.extract_strided_slice %156 {offsets = [3, 0], sizes = [28, 128], strides = [1, 1]} : vector<32x128xbf16> to vector<28x128xbf16>
      %cst_115 = arith.constant dense<0.000000e+00> : vector<28x128xf32>
      %189 = tpu.matmul %188, %187, %cst_115 {dimension_numbers = #tpu.dot_dimension_numbers<[1], [0], [0], [1], [0, 0, 1, 1], [], []>} : vector<28x128xbf16>, vector<128x128xbf16>, vector<28x128xf32> -> vector<28x128xf32>
      %190 = arith.addf %182, %189 : vector<28x128xf32>
      %191 = vector.extract_strided_slice %161 {offsets = [3, 0], sizes = [28, 128], strides = [1, 1]} : vector<32x128xbf16> to vector<28x128xbf16>
      %cst_116 = arith.constant dense<0.000000e+00> : vector<28x128xf32>
      %192 = tpu.matmul %191, %187, %cst_116 {dimension_numbers = #tpu.dot_dimension_numbers<[1], [0], [0], [1], [0, 0, 1, 1], [], []>} : vector<28x128xbf16>, vector<128x128xbf16>, vector<28x128xf32> -> vector<28x128xf32>
      %193 = arith.addf %185, %192 : vector<28x128xf32>
      %c19 = arith.constant 19 : index
      %c0_117 = arith.constant 0 : index
      %c0_118 = arith.constant 0 : index
      %194 = vector.load %arg2[%c19, %c0_117, %c0_118] : memref<25x128x128xbf16, #tpu.memory_space<vmem>>, vector<1x128x128xbf16>
      %195 = vector.shape_cast %194 : vector<1x128x128xbf16> to vector<128x128xbf16>
      %196 = vector.extract_strided_slice %156 {offsets = [4, 0], sizes = [28, 128], strides = [1, 1]} : vector<32x128xbf16> to vector<28x128xbf16>
      %cst_119 = arith.constant dense<0.000000e+00> : vector<28x128xf32>
      %197 = tpu.matmul %196, %195, %cst_119 {dimension_numbers = #tpu.dot_dimension_numbers<[1], [0], [0], [1], [0, 0, 1, 1], [], []>} : vector<28x128xbf16>, vector<128x128xbf16>, vector<28x128xf32> -> vector<28x128xf32>
      %198 = arith.addf %190, %197 : vector<28x128xf32>
      %199 = vector.extract_strided_slice %161 {offsets = [4, 0], sizes = [28, 128], strides = [1, 1]} : vector<32x128xbf16> to vector<28x128xbf16>
      %cst_120 = arith.constant dense<0.000000e+00> : vector<28x128xf32>
      %200 = tpu.matmul %199, %195, %cst_120 {dimension_numbers = #tpu.dot_dimension_numbers<[1], [0], [0], [1], [0, 0, 1, 1], [], []>} : vector<28x128xbf16>, vector<128x128xbf16>, vector<28x128xf32> -> vector<28x128xf32>
      %201 = arith.addf %193, %200 : vector<28x128xf32>
      %c4_i32 = arith.constant 4 : i32
      %202 = arith.addi %3, %c4_i32 : i32
      %c0_121 = arith.constant 0 : index
      %203 = arith.index_cast %202 : i32 to index
      %c0_122 = arith.constant 0 : index
      %c0_123 = arith.constant 0 : index
      %204 = vector.load %arg1[%c0_121, %203, %c0_122, %c0_123] : memref<1x32x32x128xbf16, #tpu.memory_space<vmem>>, vector<1x1x32x128xbf16>
      %205 = vector.shape_cast %204 : vector<1x1x32x128xbf16> to vector<32x128xbf16>
      %c4_i32_124 = arith.constant 4 : i32
      %206 = arith.addi %3, %c4_i32_124 : i32
      %c1_i32_125 = arith.constant 1 : i32
      %207 = arith.addi %206, %c1_i32_125 : i32
      %c0_126 = arith.constant 0 : index
      %208 = arith.index_cast %207 : i32 to index
      %c0_127 = arith.constant 0 : index
      %c0_128 = arith.constant 0 : index
      %209 = vector.load %arg1[%c0_126, %208, %c0_127, %c0_128] : memref<1x32x32x128xbf16, #tpu.memory_space<vmem>>, vector<1x1x32x128xbf16>
      %210 = vector.shape_cast %209 : vector<1x1x32x128xbf16> to vector<32x128xbf16>
      %c20 = arith.constant 20 : index
      %c0_129 = arith.constant 0 : index
      %c0_130 = arith.constant 0 : index
      %211 = vector.load %arg2[%c20, %c0_129, %c0_130] : memref<25x128x128xbf16, #tpu.memory_space<vmem>>, vector<1x128x128xbf16>
      %212 = vector.shape_cast %211 : vector<1x128x128xbf16> to vector<128x128xbf16>
      %213 = vector.extract_strided_slice %205 {offsets = [0, 0], sizes = [28, 128], strides = [1, 1]} : vector<32x128xbf16> to vector<28x128xbf16>
      %cst_131 = arith.constant dense<0.000000e+00> : vector<28x128xf32>
      %214 = tpu.matmul %213, %212, %cst_131 {dimension_numbers = #tpu.dot_dimension_numbers<[1], [0], [0], [1], [0, 0, 1, 1], [], []>} : vector<28x128xbf16>, vector<128x128xbf16>, vector<28x128xf32> -> vector<28x128xf32>
      %215 = arith.addf %198, %214 : vector<28x128xf32>
      %216 = vector.extract_strided_slice %210 {offsets = [0, 0], sizes = [28, 128], strides = [1, 1]} : vector<32x128xbf16> to vector<28x128xbf16>
      %cst_132 = arith.constant dense<0.000000e+00> : vector<28x128xf32>
      %217 = tpu.matmul %216, %212, %cst_132 {dimension_numbers = #tpu.dot_dimension_numbers<[1], [0], [0], [1], [0, 0, 1, 1], [], []>} : vector<28x128xbf16>, vector<128x128xbf16>, vector<28x128xf32> -> vector<28x128xf32>
      %218 = arith.addf %201, %217 : vector<28x128xf32>
      %c21 = arith.constant 21 : index
      %c0_133 = arith.constant 0 : index
      %c0_134 = arith.constant 0 : index
      %219 = vector.load %arg2[%c21, %c0_133, %c0_134] : memref<25x128x128xbf16, #tpu.memory_space<vmem>>, vector<1x128x128xbf16>
      %220 = vector.shape_cast %219 : vector<1x128x128xbf16> to vector<128x128xbf16>
      %221 = vector.extract_strided_slice %205 {offsets = [1, 0], sizes = [28, 128], strides = [1, 1]} : vector<32x128xbf16> to vector<28x128xbf16>
      %cst_135 = arith.constant dense<0.000000e+00> : vector<28x128xf32>
      %222 = tpu.matmul %221, %220, %cst_135 {dimension_numbers = #tpu.dot_dimension_numbers<[1], [0], [0], [1], [0, 0, 1, 1], [], []>} : vector<28x128xbf16>, vector<128x128xbf16>, vector<28x128xf32> -> vector<28x128xf32>
      %223 = arith.addf %215, %222 : vector<28x128xf32>
      %224 = vector.extract_strided_slice %210 {offsets = [1, 0], sizes = [28, 128], strides = [1, 1]} : vector<32x128xbf16> to vector<28x128xbf16>
      %cst_136 = arith.constant dense<0.000000e+00> : vector<28x128xf32>
      %225 = tpu.matmul %224, %220, %cst_136 {dimension_numbers = #tpu.dot_dimension_numbers<[1], [0], [0], [1], [0, 0, 1, 1], [], []>} : vector<28x128xbf16>, vector<128x128xbf16>, vector<28x128xf32> -> vector<28x128xf32>
      %226 = arith.addf %218, %225 : vector<28x128xf32>
      %c22 = arith.constant 22 : index
      %c0_137 = arith.constant 0 : index
      %c0_138 = arith.constant 0 : index
      %227 = vector.load %arg2[%c22, %c0_137, %c0_138] : memref<25x128x128xbf16, #tpu.memory_space<vmem>>, vector<1x128x128xbf16>
      %228 = vector.shape_cast %227 : vector<1x128x128xbf16> to vector<128x128xbf16>
      %229 = vector.extract_strided_slice %205 {offsets = [2, 0], sizes = [28, 128], strides = [1, 1]} : vector<32x128xbf16> to vector<28x128xbf16>
      %cst_139 = arith.constant dense<0.000000e+00> : vector<28x128xf32>
      %230 = tpu.matmul %229, %228, %cst_139 {dimension_numbers = #tpu.dot_dimension_numbers<[1], [0], [0], [1], [0, 0, 1, 1], [], []>} : vector<28x128xbf16>, vector<128x128xbf16>, vector<28x128xf32> -> vector<28x128xf32>
      %231 = arith.addf %223, %230 : vector<28x128xf32>
      %232 = vector.extract_strided_slice %210 {offsets = [2, 0], sizes = [28, 128], strides = [1, 1]} : vector<32x128xbf16> to vector<28x128xbf16>
      %cst_140 = arith.constant dense<0.000000e+00> : vector<28x128xf32>
      %233 = tpu.matmul %232, %228, %cst_140 {dimension_numbers = #tpu.dot_dimension_numbers<[1], [0], [0], [1], [0, 0, 1, 1], [], []>} : vector<28x128xbf16>, vector<128x128xbf16>, vector<28x128xf32> -> vector<28x128xf32>
      %234 = arith.addf %226, %233 : vector<28x128xf32>
      %c23 = arith.constant 23 : index
      %c0_141 = arith.constant 0 : index
      %c0_142 = arith.constant 0 : index
      %235 = vector.load %arg2[%c23, %c0_141, %c0_142] : memref<25x128x128xbf16, #tpu.memory_space<vmem>>, vector<1x128x128xbf16>
      %236 = vector.shape_cast %235 : vector<1x128x128xbf16> to vector<128x128xbf16>
      %237 = vector.extract_strided_slice %205 {offsets = [3, 0], sizes = [28, 128], strides = [1, 1]} : vector<32x128xbf16> to vector<28x128xbf16>
      %cst_143 = arith.constant dense<0.000000e+00> : vector<28x128xf32>
      %238 = tpu.matmul %237, %236, %cst_143 {dimension_numbers = #tpu.dot_dimension_numbers<[1], [0], [0], [1], [0, 0, 1, 1], [], []>} : vector<28x128xbf16>, vector<128x128xbf16>, vector<28x128xf32> -> vector<28x128xf32>
      %239 = arith.addf %231, %238 : vector<28x128xf32>
      %240 = vector.extract_strided_slice %210 {offsets = [3, 0], sizes = [28, 128], strides = [1, 1]} : vector<32x128xbf16> to vector<28x128xbf16>
      %cst_144 = arith.constant dense<0.000000e+00> : vector<28x128xf32>
      %241 = tpu.matmul %240, %236, %cst_144 {dimension_numbers = #tpu.dot_dimension_numbers<[1], [0], [0], [1], [0, 0, 1, 1], [], []>} : vector<28x128xbf16>, vector<128x128xbf16>, vector<28x128xf32> -> vector<28x128xf32>
      %242 = arith.addf %234, %241 : vector<28x128xf32>
      %c24 = arith.constant 24 : index
      %c0_145 = arith.constant 0 : index
      %c0_146 = arith.constant 0 : index
      %243 = vector.load %arg2[%c24, %c0_145, %c0_146] : memref<25x128x128xbf16, #tpu.memory_space<vmem>>, vector<1x128x128xbf16>
      %244 = vector.shape_cast %243 : vector<1x128x128xbf16> to vector<128x128xbf16>
      %245 = vector.extract_strided_slice %205 {offsets = [4, 0], sizes = [28, 128], strides = [1, 1]} : vector<32x128xbf16> to vector<28x128xbf16>
      %cst_147 = arith.constant dense<0.000000e+00> : vector<28x128xf32>
      %246 = tpu.matmul %245, %244, %cst_147 {dimension_numbers = #tpu.dot_dimension_numbers<[1], [0], [0], [1], [0, 0, 1, 1], [], []>} : vector<28x128xbf16>, vector<128x128xbf16>, vector<28x128xf32> -> vector<28x128xf32>
      %247 = arith.addf %239, %246 : vector<28x128xf32>
      %248 = vector.extract_strided_slice %210 {offsets = [4, 0], sizes = [28, 128], strides = [1, 1]} : vector<32x128xbf16> to vector<28x128xbf16>
      %cst_148 = arith.constant dense<0.000000e+00> : vector<28x128xf32>
      %249 = tpu.matmul %248, %244, %cst_148 {dimension_numbers = #tpu.dot_dimension_numbers<[1], [0], [0], [1], [0, 0, 1, 1], [], []>} : vector<28x128xbf16>, vector<128x128xbf16>, vector<28x128xf32> -> vector<28x128xf32>
      %250 = arith.addf %242, %249 : vector<28x128xf32>
      %251 = arith.maximumf %247, %250 : vector<28x128xf32>
      %c0_149 = arith.constant 0 : index
      %c0_150 = arith.constant 0 : index
      %252 = vector.load %arg6[%c0_149, %c0_150] : memref<28x128xf32, #tpu.memory_space<vmem>>, vector<28x128xf32>
      tpu.vector_store %arg6[%c0_149, %c0_150], %251 {strides = array<i32>} : memref<28x128xf32, #tpu.memory_space<vmem>>, vector<28x128xf32>,
      %c0_151 = arith.constant 0 : index
      %c0_152 = arith.constant 0 : index
      %253 = tpu.strided_load %arg6[%c0_151, %c0_152] {strides = array<i32: 2, 1>} : memref<28x128xf32, #tpu.memory_space<vmem>>, vector<14x128xf32>
      %c1_153 = arith.constant 1 : index
      %c0_154 = arith.constant 0 : index
      %254 = tpu.strided_load %arg6[%c1_153, %c0_154] {strides = array<i32: 2, 1>} : memref<28x128xf32, #tpu.memory_space<vmem>>, vector<14x128xf32>
      %255 = arith.maximumf %253, %254 : vector<14x128xf32>
      %256 = vector.broadcast %0 : vector<1x128xf32> to vector<14x128xf32>
      %257 = arith.mulf %255, %256 : vector<14x128xf32>
      %258 = vector.broadcast %1 : vector<1x128xf32> to vector<14x128xf32>
      %259 = arith.addf %257, %258 : vector<14x128xf32>
      %cst_155 = arith.constant 0.000000e+00 : f32
      %260 = vector.broadcast %cst_155 : f32 to vector<14x128xf32>
      %261 = arith.cmpf oge, %259, %260 : vector<14x128xf32>
      %cst_156 = arith.constant 0.00999999977 : f32
      %262 = vector.broadcast %cst_156 : f32 to vector<14x128xf32>
      %263 = arith.mulf %262, %259 : vector<14x128xf32>
      %264 = arith.select %261, %259, %263 : vector<14x128xi1>, vector<14x128xf32>
      %265 = arith.truncf %264 : vector<14x128xf32> to vector<14x128xbf16>
      %c0_157 = arith.constant 0 : index
      %266 = arith.index_cast %arg7 : i32 to index
      %c0_158 = arith.constant 0 : index
      %c0_159 = arith.constant 0 : index
      %267 = vector.load %arg5[%c0_157, %266, %c0_158, %c0_159] : memref<1x14x14x128xbf16, #tpu.memory_space<vmem>>, vector<1x1x14x128xbf16>
      %268 = vector.shape_cast %267 : vector<1x1x14x128xbf16> to vector<14x128xbf16>
      %269 = vector.shape_cast %265 : vector<14x128xbf16> to vector<1x1x14x128xbf16>
      tpu.vector_store %arg5[%c0_157, %266, %c0_158, %c0_159], %269 {strides = array<i32>} : memref<1x14x14x128xbf16, #tpu.memory_space<vmem>>, vector<1x1x14x128xbf16>,
    }
    %c14_i32_3 = arith.constant 14 : i32
    return
  }
  func.func @transform_0(%arg0: i32) -> (i32, i32, i32, i32) {
    %c0_i32 = arith.constant 0 : i32
    %c0_i32_0 = arith.constant 0 : i32
    %c0_i32_1 = arith.constant 0 : i32
    %c0_i32_2 = arith.constant 0 : i32
    return %arg0, %c0_i32, %c0_i32_0, %c0_i32_1 : i32, i32, i32, i32
  }
  func.func @transform_1(%arg0: i32) -> (i32, i32, i32) {
    %c0_i32 = arith.constant 0 : i32
    %c0_i32_0 = arith.constant 0 : i32
    %c0_i32_1 = arith.constant 0 : i32
    %c0_i32_2 = arith.constant 0 : i32
    return %c0_i32, %c0_i32_0, %c0_i32_1 : i32, i32, i32
  }
  func.func @transform_2(%arg0: i32) -> (i32, i32) {
    %c0_i32 = arith.constant 0 : i32
    %c0_i32_0 = arith.constant 0 : i32
    %c0_i32_1 = arith.constant 0 : i32
    return %c0_i32, %c0_i32_0 : i32, i32
  }
  func.func @transform_3(%arg0: i32) -> (i32, i32) {
    %c0_i32 = arith.constant 0 : i32
    %c0_i32_0 = arith.constant 0 : i32
    %c0_i32_1 = arith.constant 0 : i32
    return %c0_i32, %c0_i32_0 : i32, i32
  }
  func.func @transform_4(%arg0: i32) -> (i32, i32, i32, i32) {
    %c0_i32 = arith.constant 0 : i32
    %c0_i32_0 = arith.constant 0 : i32
    %c0_i32_1 = arith.constant 0 : i32
    %c0_i32_2 = arith.constant 0 : i32
    return %arg0, %c0_i32, %c0_i32_0, %c0_i32_1 : i32, i32, i32, i32
  }
}

module attributes {stable_mosaic.version = 11 : i64} {
  func.func @kernel(%arg0: i32, %arg1: memref<1x14x14x128xbf16, #tpu.memory_space<vmem>>, %arg2: memref<9x128x128xbf16, #tpu.memory_space<vmem>>, %arg3: memref<1x128xf32, #tpu.memory_space<vmem>>, %arg4: memref<1x128xf32, #tpu.memory_space<vmem>>, %arg5: memref<1x6x6x128xbf16, #tpu.memory_space<vmem>>, %arg6: memref<12x128xf32, #tpu.memory_space<vmem>>) attributes {dimension_semantics = [#tpu.dimension_semantics<parallel>], iteration_bounds = array<i64: 2>, scalar_prefetch = 0 : i64, scratch_operands = 1 : i64, tpu.core_type = #tpu.core_type<tc>, window_params = [{transform_indices = @transform_0, window_bounds = array<i64: 1, 14, 14, 128>}, {pipeline_mode = #tpu.pipeline_mode<synchronous>, transform_indices = @transform_1, window_bounds = array<i64: 9, 128, 128>}, {pipeline_mode = #tpu.pipeline_mode<synchronous>, transform_indices = @transform_2, window_bounds = array<i64: 1, 128>}, {pipeline_mode = #tpu.pipeline_mode<synchronous>, transform_indices = @transform_3, window_bounds = array<i64: 1, 128>}, {transform_indices = @transform_4, window_bounds = array<i64: 1, 6, 6, 128>}]} {
    %c0 = arith.constant 0 : index
    %c0_0 = arith.constant 0 : index
    %0 = vector.load %arg3[%c0, %c0_0] : memref<1x128xf32, #tpu.memory_space<vmem>>, vector<1x128xf32>
    %c0_1 = arith.constant 0 : index
    %c0_2 = arith.constant 0 : index
    %1 = vector.load %arg4[%c0_1, %c0_2] : memref<1x128xf32, #tpu.memory_space<vmem>>, vector<1x128xf32>
    %c0_i32 = arith.constant 0 : i32
    %c6_i32 = arith.constant 6 : i32
    %2 = arith.addi %c0_i32, %c6_i32 : i32
    %c1_i32 = arith.constant 1 : i32
    scf.for %arg7 = %c0_i32 to %2 step %c1_i32  : i32 {
      %c2_i32 = arith.constant 2 : i32
      %3 = arith.muli %c2_i32, %arg7 : i32
      %cst = arith.constant 0.000000e+00 : f32
      %4 = vector.broadcast %cst : f32 to vector<12x128xf32>
      %cst_4 = arith.constant 0.000000e+00 : f32
      %5 = vector.broadcast %cst_4 : f32 to vector<12x128xf32>
      %c0_i32_5 = arith.constant 0 : i32
      %6 = arith.addi %3, %c0_i32_5 : i32
      %c0_6 = arith.constant 0 : index
      %7 = arith.index_cast %6 : i32 to index
      %c0_7 = arith.constant 0 : index
      %c0_8 = arith.constant 0 : index
      %8 = vector.load %arg1[%c0_6, %7, %c0_7, %c0_8] : memref<1x14x14x128xbf16, #tpu.memory_space<vmem>>, vector<1x1x14x128xbf16>
      %9 = vector.shape_cast %8 : vector<1x1x14x128xbf16> to vector<14x128xbf16>
      %c0_i32_9 = arith.constant 0 : i32
      %10 = arith.addi %3, %c0_i32_9 : i32
      %c1_i32_10 = arith.constant 1 : i32
      %11 = arith.addi %10, %c1_i32_10 : i32
      %c0_11 = arith.constant 0 : index
      %12 = arith.index_cast %11 : i32 to index
      %c0_12 = arith.constant 0 : index
      %c0_13 = arith.constant 0 : index
      %13 = vector.load %arg1[%c0_11, %12, %c0_12, %c0_13] : memref<1x14x14x128xbf16, #tpu.memory_space<vmem>>, vector<1x1x14x128xbf16>
      %14 = vector.shape_cast %13 : vector<1x1x14x128xbf16> to vector<14x128xbf16>
      %c0_14 = arith.constant 0 : index
      %c0_15 = arith.constant 0 : index
      %c0_16 = arith.constant 0 : index
      %15 = vector.load %arg2[%c0_14, %c0_15, %c0_16] : memref<9x128x128xbf16, #tpu.memory_space<vmem>>, vector<1x128x128xbf16>
      %16 = vector.shape_cast %15 : vector<1x128x128xbf16> to vector<128x128xbf16>
      %17 = vector.extract_strided_slice %9 {offsets = [0, 0], sizes = [12, 128], strides = [1, 1]} : vector<14x128xbf16> to vector<12x128xbf16>
      %cst_17 = arith.constant dense<0.000000e+00> : vector<12x128xf32>
      %18 = tpu.matmul %17, %16, %cst_17 {dimension_numbers = #tpu.dot_dimension_numbers<[1], [0], [0], [1], [0, 0, 1, 1], [], []>} : vector<12x128xbf16>, vector<128x128xbf16>, vector<12x128xf32> -> vector<12x128xf32>
      %19 = arith.addf %4, %18 : vector<12x128xf32>
      %20 = vector.extract_strided_slice %14 {offsets = [0, 0], sizes = [12, 128], strides = [1, 1]} : vector<14x128xbf16> to vector<12x128xbf16>
      %cst_18 = arith.constant dense<0.000000e+00> : vector<12x128xf32>
      %21 = tpu.matmul %20, %16, %cst_18 {dimension_numbers = #tpu.dot_dimension_numbers<[1], [0], [0], [1], [0, 0, 1, 1], [], []>} : vector<12x128xbf16>, vector<128x128xbf16>, vector<12x128xf32> -> vector<12x128xf32>
      %22 = arith.addf %5, %21 : vector<12x128xf32>
      %c1 = arith.constant 1 : index
      %c0_19 = arith.constant 0 : index
      %c0_20 = arith.constant 0 : index
      %23 = vector.load %arg2[%c1, %c0_19, %c0_20] : memref<9x128x128xbf16, #tpu.memory_space<vmem>>, vector<1x128x128xbf16>
      %24 = vector.shape_cast %23 : vector<1x128x128xbf16> to vector<128x128xbf16>
      %25 = vector.extract_strided_slice %9 {offsets = [1, 0], sizes = [12, 128], strides = [1, 1]} : vector<14x128xbf16> to vector<12x128xbf16>
      %cst_21 = arith.constant dense<0.000000e+00> : vector<12x128xf32>
      %26 = tpu.matmul %25, %24, %cst_21 {dimension_numbers = #tpu.dot_dimension_numbers<[1], [0], [0], [1], [0, 0, 1, 1], [], []>} : vector<12x128xbf16>, vector<128x128xbf16>, vector<12x128xf32> -> vector<12x128xf32>
      %27 = arith.addf %19, %26 : vector<12x128xf32>
      %28 = vector.extract_strided_slice %14 {offsets = [1, 0], sizes = [12, 128], strides = [1, 1]} : vector<14x128xbf16> to vector<12x128xbf16>
      %cst_22 = arith.constant dense<0.000000e+00> : vector<12x128xf32>
      %29 = tpu.matmul %28, %24, %cst_22 {dimension_numbers = #tpu.dot_dimension_numbers<[1], [0], [0], [1], [0, 0, 1, 1], [], []>} : vector<12x128xbf16>, vector<128x128xbf16>, vector<12x128xf32> -> vector<12x128xf32>
      %30 = arith.addf %22, %29 : vector<12x128xf32>
      %c2 = arith.constant 2 : index
      %c0_23 = arith.constant 0 : index
      %c0_24 = arith.constant 0 : index
      %31 = vector.load %arg2[%c2, %c0_23, %c0_24] : memref<9x128x128xbf16, #tpu.memory_space<vmem>>, vector<1x128x128xbf16>
      %32 = vector.shape_cast %31 : vector<1x128x128xbf16> to vector<128x128xbf16>
      %33 = vector.extract_strided_slice %9 {offsets = [2, 0], sizes = [12, 128], strides = [1, 1]} : vector<14x128xbf16> to vector<12x128xbf16>
      %cst_25 = arith.constant dense<0.000000e+00> : vector<12x128xf32>
      %34 = tpu.matmul %33, %32, %cst_25 {dimension_numbers = #tpu.dot_dimension_numbers<[1], [0], [0], [1], [0, 0, 1, 1], [], []>} : vector<12x128xbf16>, vector<128x128xbf16>, vector<12x128xf32> -> vector<12x128xf32>
      %35 = arith.addf %27, %34 : vector<12x128xf32>
      %36 = vector.extract_strided_slice %14 {offsets = [2, 0], sizes = [12, 128], strides = [1, 1]} : vector<14x128xbf16> to vector<12x128xbf16>
      %cst_26 = arith.constant dense<0.000000e+00> : vector<12x128xf32>
      %37 = tpu.matmul %36, %32, %cst_26 {dimension_numbers = #tpu.dot_dimension_numbers<[1], [0], [0], [1], [0, 0, 1, 1], [], []>} : vector<12x128xbf16>, vector<128x128xbf16>, vector<12x128xf32> -> vector<12x128xf32>
      %38 = arith.addf %30, %37 : vector<12x128xf32>
      %c1_i32_27 = arith.constant 1 : i32
      %39 = arith.addi %3, %c1_i32_27 : i32
      %c0_28 = arith.constant 0 : index
      %40 = arith.index_cast %39 : i32 to index
      %c0_29 = arith.constant 0 : index
      %c0_30 = arith.constant 0 : index
      %41 = vector.load %arg1[%c0_28, %40, %c0_29, %c0_30] : memref<1x14x14x128xbf16, #tpu.memory_space<vmem>>, vector<1x1x14x128xbf16>
      %42 = vector.shape_cast %41 : vector<1x1x14x128xbf16> to vector<14x128xbf16>
      %c1_i32_31 = arith.constant 1 : i32
      %43 = arith.addi %3, %c1_i32_31 : i32
      %c1_i32_32 = arith.constant 1 : i32
      %44 = arith.addi %43, %c1_i32_32 : i32
      %c0_33 = arith.constant 0 : index
      %45 = arith.index_cast %44 : i32 to index
      %c0_34 = arith.constant 0 : index
      %c0_35 = arith.constant 0 : index
      %46 = vector.load %arg1[%c0_33, %45, %c0_34, %c0_35] : memref<1x14x14x128xbf16, #tpu.memory_space<vmem>>, vector<1x1x14x128xbf16>
      %47 = vector.shape_cast %46 : vector<1x1x14x128xbf16> to vector<14x128xbf16>
      %c3 = arith.constant 3 : index
      %c0_36 = arith.constant 0 : index
      %c0_37 = arith.constant 0 : index
      %48 = vector.load %arg2[%c3, %c0_36, %c0_37] : memref<9x128x128xbf16, #tpu.memory_space<vmem>>, vector<1x128x128xbf16>
      %49 = vector.shape_cast %48 : vector<1x128x128xbf16> to vector<128x128xbf16>
      %50 = vector.extract_strided_slice %42 {offsets = [0, 0], sizes = [12, 128], strides = [1, 1]} : vector<14x128xbf16> to vector<12x128xbf16>
      %cst_38 = arith.constant dense<0.000000e+00> : vector<12x128xf32>
      %51 = tpu.matmul %50, %49, %cst_38 {dimension_numbers = #tpu.dot_dimension_numbers<[1], [0], [0], [1], [0, 0, 1, 1], [], []>} : vector<12x128xbf16>, vector<128x128xbf16>, vector<12x128xf32> -> vector<12x128xf32>
      %52 = arith.addf %35, %51 : vector<12x128xf32>
      %53 = vector.extract_strided_slice %47 {offsets = [0, 0], sizes = [12, 128], strides = [1, 1]} : vector<14x128xbf16> to vector<12x128xbf16>
      %cst_39 = arith.constant dense<0.000000e+00> : vector<12x128xf32>
      %54 = tpu.matmul %53, %49, %cst_39 {dimension_numbers = #tpu.dot_dimension_numbers<[1], [0], [0], [1], [0, 0, 1, 1], [], []>} : vector<12x128xbf16>, vector<128x128xbf16>, vector<12x128xf32> -> vector<12x128xf32>
      %55 = arith.addf %38, %54 : vector<12x128xf32>
      %c4 = arith.constant 4 : index
      %c0_40 = arith.constant 0 : index
      %c0_41 = arith.constant 0 : index
      %56 = vector.load %arg2[%c4, %c0_40, %c0_41] : memref<9x128x128xbf16, #tpu.memory_space<vmem>>, vector<1x128x128xbf16>
      %57 = vector.shape_cast %56 : vector<1x128x128xbf16> to vector<128x128xbf16>
      %58 = vector.extract_strided_slice %42 {offsets = [1, 0], sizes = [12, 128], strides = [1, 1]} : vector<14x128xbf16> to vector<12x128xbf16>
      %cst_42 = arith.constant dense<0.000000e+00> : vector<12x128xf32>
      %59 = tpu.matmul %58, %57, %cst_42 {dimension_numbers = #tpu.dot_dimension_numbers<[1], [0], [0], [1], [0, 0, 1, 1], [], []>} : vector<12x128xbf16>, vector<128x128xbf16>, vector<12x128xf32> -> vector<12x128xf32>
      %60 = arith.addf %52, %59 : vector<12x128xf32>
      %61 = vector.extract_strided_slice %47 {offsets = [1, 0], sizes = [12, 128], strides = [1, 1]} : vector<14x128xbf16> to vector<12x128xbf16>
      %cst_43 = arith.constant dense<0.000000e+00> : vector<12x128xf32>
      %62 = tpu.matmul %61, %57, %cst_43 {dimension_numbers = #tpu.dot_dimension_numbers<[1], [0], [0], [1], [0, 0, 1, 1], [], []>} : vector<12x128xbf16>, vector<128x128xbf16>, vector<12x128xf32> -> vector<12x128xf32>
      %63 = arith.addf %55, %62 : vector<12x128xf32>
      %c5 = arith.constant 5 : index
      %c0_44 = arith.constant 0 : index
      %c0_45 = arith.constant 0 : index
      %64 = vector.load %arg2[%c5, %c0_44, %c0_45] : memref<9x128x128xbf16, #tpu.memory_space<vmem>>, vector<1x128x128xbf16>
      %65 = vector.shape_cast %64 : vector<1x128x128xbf16> to vector<128x128xbf16>
      %66 = vector.extract_strided_slice %42 {offsets = [2, 0], sizes = [12, 128], strides = [1, 1]} : vector<14x128xbf16> to vector<12x128xbf16>
      %cst_46 = arith.constant dense<0.000000e+00> : vector<12x128xf32>
      %67 = tpu.matmul %66, %65, %cst_46 {dimension_numbers = #tpu.dot_dimension_numbers<[1], [0], [0], [1], [0, 0, 1, 1], [], []>} : vector<12x128xbf16>, vector<128x128xbf16>, vector<12x128xf32> -> vector<12x128xf32>
      %68 = arith.addf %60, %67 : vector<12x128xf32>
      %69 = vector.extract_strided_slice %47 {offsets = [2, 0], sizes = [12, 128], strides = [1, 1]} : vector<14x128xbf16> to vector<12x128xbf16>
      %cst_47 = arith.constant dense<0.000000e+00> : vector<12x128xf32>
      %70 = tpu.matmul %69, %65, %cst_47 {dimension_numbers = #tpu.dot_dimension_numbers<[1], [0], [0], [1], [0, 0, 1, 1], [], []>} : vector<12x128xbf16>, vector<128x128xbf16>, vector<12x128xf32> -> vector<12x128xf32>
      %71 = arith.addf %63, %70 : vector<12x128xf32>
      %c2_i32_48 = arith.constant 2 : i32
      %72 = arith.addi %3, %c2_i32_48 : i32
      %c0_49 = arith.constant 0 : index
      %73 = arith.index_cast %72 : i32 to index
      %c0_50 = arith.constant 0 : index
      %c0_51 = arith.constant 0 : index
      %74 = vector.load %arg1[%c0_49, %73, %c0_50, %c0_51] : memref<1x14x14x128xbf16, #tpu.memory_space<vmem>>, vector<1x1x14x128xbf16>
      %75 = vector.shape_cast %74 : vector<1x1x14x128xbf16> to vector<14x128xbf16>
      %c2_i32_52 = arith.constant 2 : i32
      %76 = arith.addi %3, %c2_i32_52 : i32
      %c1_i32_53 = arith.constant 1 : i32
      %77 = arith.addi %76, %c1_i32_53 : i32
      %c0_54 = arith.constant 0 : index
      %78 = arith.index_cast %77 : i32 to index
      %c0_55 = arith.constant 0 : index
      %c0_56 = arith.constant 0 : index
      %79 = vector.load %arg1[%c0_54, %78, %c0_55, %c0_56] : memref<1x14x14x128xbf16, #tpu.memory_space<vmem>>, vector<1x1x14x128xbf16>
      %80 = vector.shape_cast %79 : vector<1x1x14x128xbf16> to vector<14x128xbf16>
      %c6 = arith.constant 6 : index
      %c0_57 = arith.constant 0 : index
      %c0_58 = arith.constant 0 : index
      %81 = vector.load %arg2[%c6, %c0_57, %c0_58] : memref<9x128x128xbf16, #tpu.memory_space<vmem>>, vector<1x128x128xbf16>
      %82 = vector.shape_cast %81 : vector<1x128x128xbf16> to vector<128x128xbf16>
      %83 = vector.extract_strided_slice %75 {offsets = [0, 0], sizes = [12, 128], strides = [1, 1]} : vector<14x128xbf16> to vector<12x128xbf16>
      %cst_59 = arith.constant dense<0.000000e+00> : vector<12x128xf32>
      %84 = tpu.matmul %83, %82, %cst_59 {dimension_numbers = #tpu.dot_dimension_numbers<[1], [0], [0], [1], [0, 0, 1, 1], [], []>} : vector<12x128xbf16>, vector<128x128xbf16>, vector<12x128xf32> -> vector<12x128xf32>
      %85 = arith.addf %68, %84 : vector<12x128xf32>
      %86 = vector.extract_strided_slice %80 {offsets = [0, 0], sizes = [12, 128], strides = [1, 1]} : vector<14x128xbf16> to vector<12x128xbf16>
      %cst_60 = arith.constant dense<0.000000e+00> : vector<12x128xf32>
      %87 = tpu.matmul %86, %82, %cst_60 {dimension_numbers = #tpu.dot_dimension_numbers<[1], [0], [0], [1], [0, 0, 1, 1], [], []>} : vector<12x128xbf16>, vector<128x128xbf16>, vector<12x128xf32> -> vector<12x128xf32>
      %88 = arith.addf %71, %87 : vector<12x128xf32>
      %c7 = arith.constant 7 : index
      %c0_61 = arith.constant 0 : index
      %c0_62 = arith.constant 0 : index
      %89 = vector.load %arg2[%c7, %c0_61, %c0_62] : memref<9x128x128xbf16, #tpu.memory_space<vmem>>, vector<1x128x128xbf16>
      %90 = vector.shape_cast %89 : vector<1x128x128xbf16> to vector<128x128xbf16>
      %91 = vector.extract_strided_slice %75 {offsets = [1, 0], sizes = [12, 128], strides = [1, 1]} : vector<14x128xbf16> to vector<12x128xbf16>
      %cst_63 = arith.constant dense<0.000000e+00> : vector<12x128xf32>
      %92 = tpu.matmul %91, %90, %cst_63 {dimension_numbers = #tpu.dot_dimension_numbers<[1], [0], [0], [1], [0, 0, 1, 1], [], []>} : vector<12x128xbf16>, vector<128x128xbf16>, vector<12x128xf32> -> vector<12x128xf32>
      %93 = arith.addf %85, %92 : vector<12x128xf32>
      %94 = vector.extract_strided_slice %80 {offsets = [1, 0], sizes = [12, 128], strides = [1, 1]} : vector<14x128xbf16> to vector<12x128xbf16>
      %cst_64 = arith.constant dense<0.000000e+00> : vector<12x128xf32>
      %95 = tpu.matmul %94, %90, %cst_64 {dimension_numbers = #tpu.dot_dimension_numbers<[1], [0], [0], [1], [0, 0, 1, 1], [], []>} : vector<12x128xbf16>, vector<128x128xbf16>, vector<12x128xf32> -> vector<12x128xf32>
      %96 = arith.addf %88, %95 : vector<12x128xf32>
      %c8 = arith.constant 8 : index
      %c0_65 = arith.constant 0 : index
      %c0_66 = arith.constant 0 : index
      %97 = vector.load %arg2[%c8, %c0_65, %c0_66] : memref<9x128x128xbf16, #tpu.memory_space<vmem>>, vector<1x128x128xbf16>
      %98 = vector.shape_cast %97 : vector<1x128x128xbf16> to vector<128x128xbf16>
      %99 = vector.extract_strided_slice %75 {offsets = [2, 0], sizes = [12, 128], strides = [1, 1]} : vector<14x128xbf16> to vector<12x128xbf16>
      %cst_67 = arith.constant dense<0.000000e+00> : vector<12x128xf32>
      %100 = tpu.matmul %99, %98, %cst_67 {dimension_numbers = #tpu.dot_dimension_numbers<[1], [0], [0], [1], [0, 0, 1, 1], [], []>} : vector<12x128xbf16>, vector<128x128xbf16>, vector<12x128xf32> -> vector<12x128xf32>
      %101 = arith.addf %93, %100 : vector<12x128xf32>
      %102 = vector.extract_strided_slice %80 {offsets = [2, 0], sizes = [12, 128], strides = [1, 1]} : vector<14x128xbf16> to vector<12x128xbf16>
      %cst_68 = arith.constant dense<0.000000e+00> : vector<12x128xf32>
      %103 = tpu.matmul %102, %98, %cst_68 {dimension_numbers = #tpu.dot_dimension_numbers<[1], [0], [0], [1], [0, 0, 1, 1], [], []>} : vector<12x128xbf16>, vector<128x128xbf16>, vector<12x128xf32> -> vector<12x128xf32>
      %104 = arith.addf %96, %103 : vector<12x128xf32>
      %105 = arith.maximumf %101, %104 : vector<12x128xf32>
      %c0_69 = arith.constant 0 : index
      %c0_70 = arith.constant 0 : index
      %106 = vector.load %arg6[%c0_69, %c0_70] : memref<12x128xf32, #tpu.memory_space<vmem>>, vector<12x128xf32>
      tpu.vector_store %arg6[%c0_69, %c0_70], %105 {strides = array<i32>} : memref<12x128xf32, #tpu.memory_space<vmem>>, vector<12x128xf32>,
      %c0_71 = arith.constant 0 : index
      %c0_72 = arith.constant 0 : index
      %107 = tpu.strided_load %arg6[%c0_71, %c0_72] {strides = array<i32: 2, 1>} : memref<12x128xf32, #tpu.memory_space<vmem>>, vector<6x128xf32>
      %c1_73 = arith.constant 1 : index
      %c0_74 = arith.constant 0 : index
      %108 = tpu.strided_load %arg6[%c1_73, %c0_74] {strides = array<i32: 2, 1>} : memref<12x128xf32, #tpu.memory_space<vmem>>, vector<6x128xf32>
      %109 = arith.maximumf %107, %108 : vector<6x128xf32>
      %110 = vector.broadcast %0 : vector<1x128xf32> to vector<6x128xf32>
      %111 = arith.mulf %109, %110 : vector<6x128xf32>
      %112 = vector.broadcast %1 : vector<1x128xf32> to vector<6x128xf32>
      %113 = arith.addf %111, %112 : vector<6x128xf32>
      %cst_75 = arith.constant 0.000000e+00 : f32
      %114 = vector.broadcast %cst_75 : f32 to vector<6x128xf32>
      %115 = arith.cmpf oge, %113, %114 : vector<6x128xf32>
      %cst_76 = arith.constant 0.00999999977 : f32
      %116 = vector.broadcast %cst_76 : f32 to vector<6x128xf32>
      %117 = arith.mulf %116, %113 : vector<6x128xf32>
      %118 = arith.select %115, %113, %117 : vector<6x128xi1>, vector<6x128xf32>
      %119 = arith.truncf %118 : vector<6x128xf32> to vector<6x128xbf16>
      %c0_77 = arith.constant 0 : index
      %120 = arith.index_cast %arg7 : i32 to index
      %c0_78 = arith.constant 0 : index
      %c0_79 = arith.constant 0 : index
      %121 = vector.load %arg5[%c0_77, %120, %c0_78, %c0_79] : memref<1x6x6x128xbf16, #tpu.memory_space<vmem>>, vector<1x1x6x128xbf16>
      %122 = vector.shape_cast %121 : vector<1x1x6x128xbf16> to vector<6x128xbf16>
      %123 = vector.shape_cast %119 : vector<6x128xbf16> to vector<1x1x6x128xbf16>
      tpu.vector_store %arg5[%c0_77, %120, %c0_78, %c0_79], %123 {strides = array<i32>} : memref<1x6x6x128xbf16, #tpu.memory_space<vmem>>, vector<1x1x6x128xbf16>,
    }
    %c6_i32_3 = arith.constant 6 : i32
    return
  }
  func.func @transform_0(%arg0: i32) -> (i32, i32, i32, i32) {
    %c0_i32 = arith.constant 0 : i32
    %c0_i32_0 = arith.constant 0 : i32
    %c0_i32_1 = arith.constant 0 : i32
    %c0_i32_2 = arith.constant 0 : i32
    return %arg0, %c0_i32, %c0_i32_0, %c0_i32_1 : i32, i32, i32, i32
  }
  func.func @transform_1(%arg0: i32) -> (i32, i32, i32) {
    %c0_i32 = arith.constant 0 : i32
    %c0_i32_0 = arith.constant 0 : i32
    %c0_i32_1 = arith.constant 0 : i32
    %c0_i32_2 = arith.constant 0 : i32
    return %c0_i32, %c0_i32_0, %c0_i32_1 : i32, i32, i32
  }
  func.func @transform_2(%arg0: i32) -> (i32, i32) {
    %c0_i32 = arith.constant 0 : i32
    %c0_i32_0 = arith.constant 0 : i32
    %c0_i32_1 = arith.constant 0 : i32
    return %c0_i32, %c0_i32_0 : i32, i32
  }
  func.func @transform_3(%arg0: i32) -> (i32, i32) {
    %c0_i32 = arith.constant 0 : i32
    %c0_i32_0 = arith.constant 0 : i32
    %c0_i32_1 = arith.constant 0 : i32
    return %c0_i32, %c0_i32_0 : i32, i32
  }
  func.func @transform_4(%arg0: i32) -> (i32, i32, i32, i32) {
    %c0_i32 = arith.constant 0 : i32
    %c0_i32_0 = arith.constant 0 : i32
    %c0_i32_1 = arith.constant 0 : i32
    %c0_i32_2 = arith.constant 0 : i32
    return %arg0, %c0_i32, %c0_i32_0, %c0_i32_1 : i32, i32, i32, i32
  }
}

module attributes {stable_mosaic.version = 11 : i64} {
  func.func @kernel(%arg0: i32, %arg1: memref<1x6x6x128xbf16, #tpu.memory_space<vmem>>, %arg2: memref<9x128x128xbf16, #tpu.memory_space<vmem>>, %arg3: memref<1x128xf32, #tpu.memory_space<vmem>>, %arg4: memref<1x128xf32, #tpu.memory_space<vmem>>, %arg5: memref<1x2x2x128xbf16, #tpu.memory_space<vmem>>, %arg6: memref<4x128xf32, #tpu.memory_space<vmem>>) attributes {dimension_semantics = [#tpu.dimension_semantics<parallel>], iteration_bounds = array<i64: 2>, scalar_prefetch = 0 : i64, scratch_operands = 1 : i64, tpu.core_type = #tpu.core_type<tc>, window_params = [{transform_indices = @transform_0, window_bounds = array<i64: 1, 6, 6, 128>}, {pipeline_mode = #tpu.pipeline_mode<synchronous>, transform_indices = @transform_1, window_bounds = array<i64: 9, 128, 128>}, {pipeline_mode = #tpu.pipeline_mode<synchronous>, transform_indices = @transform_2, window_bounds = array<i64: 1, 128>}, {pipeline_mode = #tpu.pipeline_mode<synchronous>, transform_indices = @transform_3, window_bounds = array<i64: 1, 128>}, {transform_indices = @transform_4, window_bounds = array<i64: 1, 2, 2, 128>}]} {
    %c0 = arith.constant 0 : index
    %c0_0 = arith.constant 0 : index
    %0 = vector.load %arg3[%c0, %c0_0] : memref<1x128xf32, #tpu.memory_space<vmem>>, vector<1x128xf32>
    %c0_1 = arith.constant 0 : index
    %c0_2 = arith.constant 0 : index
    %1 = vector.load %arg4[%c0_1, %c0_2] : memref<1x128xf32, #tpu.memory_space<vmem>>, vector<1x128xf32>
    %c0_i32 = arith.constant 0 : i32
    %c2_i32 = arith.constant 2 : i32
    %2 = arith.addi %c0_i32, %c2_i32 : i32
    %c1_i32 = arith.constant 1 : i32
    scf.for %arg7 = %c0_i32 to %2 step %c1_i32  : i32 {
      %c2_i32_4 = arith.constant 2 : i32
      %3 = arith.muli %c2_i32_4, %arg7 : i32
      %cst = arith.constant 0.000000e+00 : f32
      %4 = vector.broadcast %cst : f32 to vector<4x128xf32>
      %cst_5 = arith.constant 0.000000e+00 : f32
      %5 = vector.broadcast %cst_5 : f32 to vector<4x128xf32>
      %c0_i32_6 = arith.constant 0 : i32
      %6 = arith.addi %3, %c0_i32_6 : i32
      %c0_7 = arith.constant 0 : index
      %7 = arith.index_cast %6 : i32 to index
      %c0_8 = arith.constant 0 : index
      %c0_9 = arith.constant 0 : index
      %8 = vector.load %arg1[%c0_7, %7, %c0_8, %c0_9] : memref<1x6x6x128xbf16, #tpu.memory_space<vmem>>, vector<1x1x6x128xbf16>
      %9 = vector.shape_cast %8 : vector<1x1x6x128xbf16> to vector<6x128xbf16>
      %c0_i32_10 = arith.constant 0 : i32
      %10 = arith.addi %3, %c0_i32_10 : i32
      %c1_i32_11 = arith.constant 1 : i32
      %11 = arith.addi %10, %c1_i32_11 : i32
      %c0_12 = arith.constant 0 : index
      %12 = arith.index_cast %11 : i32 to index
      %c0_13 = arith.constant 0 : index
      %c0_14 = arith.constant 0 : index
      %13 = vector.load %arg1[%c0_12, %12, %c0_13, %c0_14] : memref<1x6x6x128xbf16, #tpu.memory_space<vmem>>, vector<1x1x6x128xbf16>
      %14 = vector.shape_cast %13 : vector<1x1x6x128xbf16> to vector<6x128xbf16>
      %c0_15 = arith.constant 0 : index
      %c0_16 = arith.constant 0 : index
      %c0_17 = arith.constant 0 : index
      %15 = vector.load %arg2[%c0_15, %c0_16, %c0_17] : memref<9x128x128xbf16, #tpu.memory_space<vmem>>, vector<1x128x128xbf16>
      %16 = vector.shape_cast %15 : vector<1x128x128xbf16> to vector<128x128xbf16>
      %17 = vector.extract_strided_slice %9 {offsets = [0, 0], sizes = [4, 128], strides = [1, 1]} : vector<6x128xbf16> to vector<4x128xbf16>
      %cst_18 = arith.constant dense<0.000000e+00> : vector<4x128xf32>
      %18 = tpu.matmul %17, %16, %cst_18 {dimension_numbers = #tpu.dot_dimension_numbers<[1], [0], [0], [1], [0, 0, 1, 1], [], []>} : vector<4x128xbf16>, vector<128x128xbf16>, vector<4x128xf32> -> vector<4x128xf32>
      %19 = arith.addf %4, %18 : vector<4x128xf32>
      %20 = vector.extract_strided_slice %14 {offsets = [0, 0], sizes = [4, 128], strides = [1, 1]} : vector<6x128xbf16> to vector<4x128xbf16>
      %cst_19 = arith.constant dense<0.000000e+00> : vector<4x128xf32>
      %21 = tpu.matmul %20, %16, %cst_19 {dimension_numbers = #tpu.dot_dimension_numbers<[1], [0], [0], [1], [0, 0, 1, 1], [], []>} : vector<4x128xbf16>, vector<128x128xbf16>, vector<4x128xf32> -> vector<4x128xf32>
      %22 = arith.addf %5, %21 : vector<4x128xf32>
      %c1 = arith.constant 1 : index
      %c0_20 = arith.constant 0 : index
      %c0_21 = arith.constant 0 : index
      %23 = vector.load %arg2[%c1, %c0_20, %c0_21] : memref<9x128x128xbf16, #tpu.memory_space<vmem>>, vector<1x128x128xbf16>
      %24 = vector.shape_cast %23 : vector<1x128x128xbf16> to vector<128x128xbf16>
      %25 = vector.extract_strided_slice %9 {offsets = [1, 0], sizes = [4, 128], strides = [1, 1]} : vector<6x128xbf16> to vector<4x128xbf16>
      %cst_22 = arith.constant dense<0.000000e+00> : vector<4x128xf32>
      %26 = tpu.matmul %25, %24, %cst_22 {dimension_numbers = #tpu.dot_dimension_numbers<[1], [0], [0], [1], [0, 0, 1, 1], [], []>} : vector<4x128xbf16>, vector<128x128xbf16>, vector<4x128xf32> -> vector<4x128xf32>
      %27 = arith.addf %19, %26 : vector<4x128xf32>
      %28 = vector.extract_strided_slice %14 {offsets = [1, 0], sizes = [4, 128], strides = [1, 1]} : vector<6x128xbf16> to vector<4x128xbf16>
      %cst_23 = arith.constant dense<0.000000e+00> : vector<4x128xf32>
      %29 = tpu.matmul %28, %24, %cst_23 {dimension_numbers = #tpu.dot_dimension_numbers<[1], [0], [0], [1], [0, 0, 1, 1], [], []>} : vector<4x128xbf16>, vector<128x128xbf16>, vector<4x128xf32> -> vector<4x128xf32>
      %30 = arith.addf %22, %29 : vector<4x128xf32>
      %c2 = arith.constant 2 : index
      %c0_24 = arith.constant 0 : index
      %c0_25 = arith.constant 0 : index
      %31 = vector.load %arg2[%c2, %c0_24, %c0_25] : memref<9x128x128xbf16, #tpu.memory_space<vmem>>, vector<1x128x128xbf16>
      %32 = vector.shape_cast %31 : vector<1x128x128xbf16> to vector<128x128xbf16>
      %33 = vector.extract_strided_slice %9 {offsets = [2, 0], sizes = [4, 128], strides = [1, 1]} : vector<6x128xbf16> to vector<4x128xbf16>
      %cst_26 = arith.constant dense<0.000000e+00> : vector<4x128xf32>
      %34 = tpu.matmul %33, %32, %cst_26 {dimension_numbers = #tpu.dot_dimension_numbers<[1], [0], [0], [1], [0, 0, 1, 1], [], []>} : vector<4x128xbf16>, vector<128x128xbf16>, vector<4x128xf32> -> vector<4x128xf32>
      %35 = arith.addf %27, %34 : vector<4x128xf32>
      %36 = vector.extract_strided_slice %14 {offsets = [2, 0], sizes = [4, 128], strides = [1, 1]} : vector<6x128xbf16> to vector<4x128xbf16>
      %cst_27 = arith.constant dense<0.000000e+00> : vector<4x128xf32>
      %37 = tpu.matmul %36, %32, %cst_27 {dimension_numbers = #tpu.dot_dimension_numbers<[1], [0], [0], [1], [0, 0, 1, 1], [], []>} : vector<4x128xbf16>, vector<128x128xbf16>, vector<4x128xf32> -> vector<4x128xf32>
      %38 = arith.addf %30, %37 : vector<4x128xf32>
      %c1_i32_28 = arith.constant 1 : i32
      %39 = arith.addi %3, %c1_i32_28 : i32
      %c0_29 = arith.constant 0 : index
      %40 = arith.index_cast %39 : i32 to index
      %c0_30 = arith.constant 0 : index
      %c0_31 = arith.constant 0 : index
      %41 = vector.load %arg1[%c0_29, %40, %c0_30, %c0_31] : memref<1x6x6x128xbf16, #tpu.memory_space<vmem>>, vector<1x1x6x128xbf16>
      %42 = vector.shape_cast %41 : vector<1x1x6x128xbf16> to vector<6x128xbf16>
      %c1_i32_32 = arith.constant 1 : i32
      %43 = arith.addi %3, %c1_i32_32 : i32
      %c1_i32_33 = arith.constant 1 : i32
      %44 = arith.addi %43, %c1_i32_33 : i32
      %c0_34 = arith.constant 0 : index
      %45 = arith.index_cast %44 : i32 to index
      %c0_35 = arith.constant 0 : index
      %c0_36 = arith.constant 0 : index
      %46 = vector.load %arg1[%c0_34, %45, %c0_35, %c0_36] : memref<1x6x6x128xbf16, #tpu.memory_space<vmem>>, vector<1x1x6x128xbf16>
      %47 = vector.shape_cast %46 : vector<1x1x6x128xbf16> to vector<6x128xbf16>
      %c3 = arith.constant 3 : index
      %c0_37 = arith.constant 0 : index
      %c0_38 = arith.constant 0 : index
      %48 = vector.load %arg2[%c3, %c0_37, %c0_38] : memref<9x128x128xbf16, #tpu.memory_space<vmem>>, vector<1x128x128xbf16>
      %49 = vector.shape_cast %48 : vector<1x128x128xbf16> to vector<128x128xbf16>
      %50 = vector.extract_strided_slice %42 {offsets = [0, 0], sizes = [4, 128], strides = [1, 1]} : vector<6x128xbf16> to vector<4x128xbf16>
      %cst_39 = arith.constant dense<0.000000e+00> : vector<4x128xf32>
      %51 = tpu.matmul %50, %49, %cst_39 {dimension_numbers = #tpu.dot_dimension_numbers<[1], [0], [0], [1], [0, 0, 1, 1], [], []>} : vector<4x128xbf16>, vector<128x128xbf16>, vector<4x128xf32> -> vector<4x128xf32>
      %52 = arith.addf %35, %51 : vector<4x128xf32>
      %53 = vector.extract_strided_slice %47 {offsets = [0, 0], sizes = [4, 128], strides = [1, 1]} : vector<6x128xbf16> to vector<4x128xbf16>
      %cst_40 = arith.constant dense<0.000000e+00> : vector<4x128xf32>
      %54 = tpu.matmul %53, %49, %cst_40 {dimension_numbers = #tpu.dot_dimension_numbers<[1], [0], [0], [1], [0, 0, 1, 1], [], []>} : vector<4x128xbf16>, vector<128x128xbf16>, vector<4x128xf32> -> vector<4x128xf32>
      %55 = arith.addf %38, %54 : vector<4x128xf32>
      %c4 = arith.constant 4 : index
      %c0_41 = arith.constant 0 : index
      %c0_42 = arith.constant 0 : index
      %56 = vector.load %arg2[%c4, %c0_41, %c0_42] : memref<9x128x128xbf16, #tpu.memory_space<vmem>>, vector<1x128x128xbf16>
      %57 = vector.shape_cast %56 : vector<1x128x128xbf16> to vector<128x128xbf16>
      %58 = vector.extract_strided_slice %42 {offsets = [1, 0], sizes = [4, 128], strides = [1, 1]} : vector<6x128xbf16> to vector<4x128xbf16>
      %cst_43 = arith.constant dense<0.000000e+00> : vector<4x128xf32>
      %59 = tpu.matmul %58, %57, %cst_43 {dimension_numbers = #tpu.dot_dimension_numbers<[1], [0], [0], [1], [0, 0, 1, 1], [], []>} : vector<4x128xbf16>, vector<128x128xbf16>, vector<4x128xf32> -> vector<4x128xf32>
      %60 = arith.addf %52, %59 : vector<4x128xf32>
      %61 = vector.extract_strided_slice %47 {offsets = [1, 0], sizes = [4, 128], strides = [1, 1]} : vector<6x128xbf16> to vector<4x128xbf16>
      %cst_44 = arith.constant dense<0.000000e+00> : vector<4x128xf32>
      %62 = tpu.matmul %61, %57, %cst_44 {dimension_numbers = #tpu.dot_dimension_numbers<[1], [0], [0], [1], [0, 0, 1, 1], [], []>} : vector<4x128xbf16>, vector<128x128xbf16>, vector<4x128xf32> -> vector<4x128xf32>
      %63 = arith.addf %55, %62 : vector<4x128xf32>
      %c5 = arith.constant 5 : index
      %c0_45 = arith.constant 0 : index
      %c0_46 = arith.constant 0 : index
      %64 = vector.load %arg2[%c5, %c0_45, %c0_46] : memref<9x128x128xbf16, #tpu.memory_space<vmem>>, vector<1x128x128xbf16>
      %65 = vector.shape_cast %64 : vector<1x128x128xbf16> to vector<128x128xbf16>
      %66 = vector.extract_strided_slice %42 {offsets = [2, 0], sizes = [4, 128], strides = [1, 1]} : vector<6x128xbf16> to vector<4x128xbf16>
      %cst_47 = arith.constant dense<0.000000e+00> : vector<4x128xf32>
      %67 = tpu.matmul %66, %65, %cst_47 {dimension_numbers = #tpu.dot_dimension_numbers<[1], [0], [0], [1], [0, 0, 1, 1], [], []>} : vector<4x128xbf16>, vector<128x128xbf16>, vector<4x128xf32> -> vector<4x128xf32>
      %68 = arith.addf %60, %67 : vector<4x128xf32>
      %69 = vector.extract_strided_slice %47 {offsets = [2, 0], sizes = [4, 128], strides = [1, 1]} : vector<6x128xbf16> to vector<4x128xbf16>
      %cst_48 = arith.constant dense<0.000000e+00> : vector<4x128xf32>
      %70 = tpu.matmul %69, %65, %cst_48 {dimension_numbers = #tpu.dot_dimension_numbers<[1], [0], [0], [1], [0, 0, 1, 1], [], []>} : vector<4x128xbf16>, vector<128x128xbf16>, vector<4x128xf32> -> vector<4x128xf32>
      %71 = arith.addf %63, %70 : vector<4x128xf32>
      %c2_i32_49 = arith.constant 2 : i32
      %72 = arith.addi %3, %c2_i32_49 : i32
      %c0_50 = arith.constant 0 : index
      %73 = arith.index_cast %72 : i32 to index
      %c0_51 = arith.constant 0 : index
      %c0_52 = arith.constant 0 : index
      %74 = vector.load %arg1[%c0_50, %73, %c0_51, %c0_52] : memref<1x6x6x128xbf16, #tpu.memory_space<vmem>>, vector<1x1x6x128xbf16>
      %75 = vector.shape_cast %74 : vector<1x1x6x128xbf16> to vector<6x128xbf16>
      %c2_i32_53 = arith.constant 2 : i32
      %76 = arith.addi %3, %c2_i32_53 : i32
      %c1_i32_54 = arith.constant 1 : i32
      %77 = arith.addi %76, %c1_i32_54 : i32
      %c0_55 = arith.constant 0 : index
      %78 = arith.index_cast %77 : i32 to index
      %c0_56 = arith.constant 0 : index
      %c0_57 = arith.constant 0 : index
      %79 = vector.load %arg1[%c0_55, %78, %c0_56, %c0_57] : memref<1x6x6x128xbf16, #tpu.memory_space<vmem>>, vector<1x1x6x128xbf16>
      %80 = vector.shape_cast %79 : vector<1x1x6x128xbf16> to vector<6x128xbf16>
      %c6 = arith.constant 6 : index
      %c0_58 = arith.constant 0 : index
      %c0_59 = arith.constant 0 : index
      %81 = vector.load %arg2[%c6, %c0_58, %c0_59] : memref<9x128x128xbf16, #tpu.memory_space<vmem>>, vector<1x128x128xbf16>
      %82 = vector.shape_cast %81 : vector<1x128x128xbf16> to vector<128x128xbf16>
      %83 = vector.extract_strided_slice %75 {offsets = [0, 0], sizes = [4, 128], strides = [1, 1]} : vector<6x128xbf16> to vector<4x128xbf16>
      %cst_60 = arith.constant dense<0.000000e+00> : vector<4x128xf32>
      %84 = tpu.matmul %83, %82, %cst_60 {dimension_numbers = #tpu.dot_dimension_numbers<[1], [0], [0], [1], [0, 0, 1, 1], [], []>} : vector<4x128xbf16>, vector<128x128xbf16>, vector<4x128xf32> -> vector<4x128xf32>
      %85 = arith.addf %68, %84 : vector<4x128xf32>
      %86 = vector.extract_strided_slice %80 {offsets = [0, 0], sizes = [4, 128], strides = [1, 1]} : vector<6x128xbf16> to vector<4x128xbf16>
      %cst_61 = arith.constant dense<0.000000e+00> : vector<4x128xf32>
      %87 = tpu.matmul %86, %82, %cst_61 {dimension_numbers = #tpu.dot_dimension_numbers<[1], [0], [0], [1], [0, 0, 1, 1], [], []>} : vector<4x128xbf16>, vector<128x128xbf16>, vector<4x128xf32> -> vector<4x128xf32>
      %88 = arith.addf %71, %87 : vector<4x128xf32>
      %c7 = arith.constant 7 : index
      %c0_62 = arith.constant 0 : index
      %c0_63 = arith.constant 0 : index
      %89 = vector.load %arg2[%c7, %c0_62, %c0_63] : memref<9x128x128xbf16, #tpu.memory_space<vmem>>, vector<1x128x128xbf16>
      %90 = vector.shape_cast %89 : vector<1x128x128xbf16> to vector<128x128xbf16>
      %91 = vector.extract_strided_slice %75 {offsets = [1, 0], sizes = [4, 128], strides = [1, 1]} : vector<6x128xbf16> to vector<4x128xbf16>
      %cst_64 = arith.constant dense<0.000000e+00> : vector<4x128xf32>
      %92 = tpu.matmul %91, %90, %cst_64 {dimension_numbers = #tpu.dot_dimension_numbers<[1], [0], [0], [1], [0, 0, 1, 1], [], []>} : vector<4x128xbf16>, vector<128x128xbf16>, vector<4x128xf32> -> vector<4x128xf32>
      %93 = arith.addf %85, %92 : vector<4x128xf32>
      %94 = vector.extract_strided_slice %80 {offsets = [1, 0], sizes = [4, 128], strides = [1, 1]} : vector<6x128xbf16> to vector<4x128xbf16>
      %cst_65 = arith.constant dense<0.000000e+00> : vector<4x128xf32>
      %95 = tpu.matmul %94, %90, %cst_65 {dimension_numbers = #tpu.dot_dimension_numbers<[1], [0], [0], [1], [0, 0, 1, 1], [], []>} : vector<4x128xbf16>, vector<128x128xbf16>, vector<4x128xf32> -> vector<4x128xf32>
      %96 = arith.addf %88, %95 : vector<4x128xf32>
      %c8 = arith.constant 8 : index
      %c0_66 = arith.constant 0 : index
      %c0_67 = arith.constant 0 : index
      %97 = vector.load %arg2[%c8, %c0_66, %c0_67] : memref<9x128x128xbf16, #tpu.memory_space<vmem>>, vector<1x128x128xbf16>
      %98 = vector.shape_cast %97 : vector<1x128x128xbf16> to vector<128x128xbf16>
      %99 = vector.extract_strided_slice %75 {offsets = [2, 0], sizes = [4, 128], strides = [1, 1]} : vector<6x128xbf16> to vector<4x128xbf16>
      %cst_68 = arith.constant dense<0.000000e+00> : vector<4x128xf32>
      %100 = tpu.matmul %99, %98, %cst_68 {dimension_numbers = #tpu.dot_dimension_numbers<[1], [0], [0], [1], [0, 0, 1, 1], [], []>} : vector<4x128xbf16>, vector<128x128xbf16>, vector<4x128xf32> -> vector<4x128xf32>
      %101 = arith.addf %93, %100 : vector<4x128xf32>
      %102 = vector.extract_strided_slice %80 {offsets = [2, 0], sizes = [4, 128], strides = [1, 1]} : vector<6x128xbf16> to vector<4x128xbf16>
      %cst_69 = arith.constant dense<0.000000e+00> : vector<4x128xf32>
      %103 = tpu.matmul %102, %98, %cst_69 {dimension_numbers = #tpu.dot_dimension_numbers<[1], [0], [0], [1], [0, 0, 1, 1], [], []>} : vector<4x128xbf16>, vector<128x128xbf16>, vector<4x128xf32> -> vector<4x128xf32>
      %104 = arith.addf %96, %103 : vector<4x128xf32>
      %105 = arith.maximumf %101, %104 : vector<4x128xf32>
      %c0_70 = arith.constant 0 : index
      %c0_71 = arith.constant 0 : index
      %106 = vector.load %arg6[%c0_70, %c0_71] : memref<4x128xf32, #tpu.memory_space<vmem>>, vector<4x128xf32>
      tpu.vector_store %arg6[%c0_70, %c0_71], %105 {strides = array<i32>} : memref<4x128xf32, #tpu.memory_space<vmem>>, vector<4x128xf32>,
      %c0_72 = arith.constant 0 : index
      %c0_73 = arith.constant 0 : index
      %107 = tpu.strided_load %arg6[%c0_72, %c0_73] {strides = array<i32: 2, 1>} : memref<4x128xf32, #tpu.memory_space<vmem>>, vector<2x128xf32>
      %c1_74 = arith.constant 1 : index
      %c0_75 = arith.constant 0 : index
      %108 = tpu.strided_load %arg6[%c1_74, %c0_75] {strides = array<i32: 2, 1>} : memref<4x128xf32, #tpu.memory_space<vmem>>, vector<2x128xf32>
      %109 = arith.maximumf %107, %108 : vector<2x128xf32>
      %110 = vector.broadcast %0 : vector<1x128xf32> to vector<2x128xf32>
      %111 = arith.mulf %109, %110 : vector<2x128xf32>
      %112 = vector.broadcast %1 : vector<1x128xf32> to vector<2x128xf32>
      %113 = arith.addf %111, %112 : vector<2x128xf32>
      %cst_76 = arith.constant 0.000000e+00 : f32
      %114 = vector.broadcast %cst_76 : f32 to vector<2x128xf32>
      %115 = arith.cmpf oge, %113, %114 : vector<2x128xf32>
      %cst_77 = arith.constant 0.00999999977 : f32
      %116 = vector.broadcast %cst_77 : f32 to vector<2x128xf32>
      %117 = arith.mulf %116, %113 : vector<2x128xf32>
      %118 = arith.select %115, %113, %117 : vector<2x128xi1>, vector<2x128xf32>
      %119 = arith.truncf %118 : vector<2x128xf32> to vector<2x128xbf16>
      %c0_78 = arith.constant 0 : index
      %120 = arith.index_cast %arg7 : i32 to index
      %c0_79 = arith.constant 0 : index
      %c0_80 = arith.constant 0 : index
      %121 = vector.load %arg5[%c0_78, %120, %c0_79, %c0_80] : memref<1x2x2x128xbf16, #tpu.memory_space<vmem>>, vector<1x1x2x128xbf16>
      %122 = vector.shape_cast %121 : vector<1x1x2x128xbf16> to vector<2x128xbf16>
      %123 = vector.shape_cast %119 : vector<2x128xbf16> to vector<1x1x2x128xbf16>
      tpu.vector_store %arg5[%c0_78, %120, %c0_79, %c0_80], %123 {strides = array<i32>} : memref<1x2x2x128xbf16, #tpu.memory_space<vmem>>, vector<1x1x2x128xbf16>,
    }
    %c2_i32_3 = arith.constant 2 : i32
    return
  }
  func.func @transform_0(%arg0: i32) -> (i32, i32, i32, i32) {
    %c0_i32 = arith.constant 0 : i32
    %c0_i32_0 = arith.constant 0 : i32
    %c0_i32_1 = arith.constant 0 : i32
    %c0_i32_2 = arith.constant 0 : i32
    return %arg0, %c0_i32, %c0_i32_0, %c0_i32_1 : i32, i32, i32, i32
  }
  func.func @transform_1(%arg0: i32) -> (i32, i32, i32) {
    %c0_i32 = arith.constant 0 : i32
    %c0_i32_0 = arith.constant 0 : i32
    %c0_i32_1 = arith.constant 0 : i32
    %c0_i32_2 = arith.constant 0 : i32
    return %c0_i32, %c0_i32_0, %c0_i32_1 : i32, i32, i32
  }
  func.func @transform_2(%arg0: i32) -> (i32, i32) {
    %c0_i32 = arith.constant 0 : i32
    %c0_i32_0 = arith.constant 0 : i32
    %c0_i32_1 = arith.constant 0 : i32
    return %c0_i32, %c0_i32_0 : i32, i32
  }
  func.func @transform_3(%arg0: i32) -> (i32, i32) {
    %c0_i32 = arith.constant 0 : i32
    %c0_i32_0 = arith.constant 0 : i32
    %c0_i32_1 = arith.constant 0 : i32
    return %c0_i32, %c0_i32_0 : i32, i32
  }
  func.func @transform_4(%arg0: i32) -> (i32, i32, i32, i32) {
    %c0_i32 = arith.constant 0 : i32
    %c0_i32_0 = arith.constant 0 : i32
    %c0_i32_1 = arith.constant 0 : i32
    %c0_i32_2 = arith.constant 0 : i32
    return %arg0, %c0_i32, %c0_i32_0, %c0_i32_1 : i32, i32, i32, i32
  }
}

module attributes {stable_mosaic.version = 11 : i64} {
  func.func @_tail_kernel(%arg0: i32, %arg1: memref<8x512xbf16, #tpu.memory_space<vmem>>, %arg2: memref<512x128xbf16, #tpu.memory_space<vmem>>, %arg3: memref<1x128xf32, #tpu.memory_space<vmem>>, %arg4: memref<1x128xf32, #tpu.memory_space<vmem>>, %arg5: memref<128x128xbf16, #tpu.memory_space<vmem>>, %arg6: memref<1x128xf32, #tpu.memory_space<vmem>>, %arg7: memref<8x128xf32, #tpu.memory_space<vmem>>) attributes {dimension_semantics = [#tpu.dimension_semantics<parallel>], iteration_bounds = array<i64: 1>, scalar_prefetch = 0 : i64, scratch_operands = 0 : i64, tpu.core_type = #tpu.core_type<tc>, window_params = [{transform_indices = @transform_0, window_bounds = array<i64: 8, 512>}, {pipeline_mode = #tpu.pipeline_mode<synchronous>, transform_indices = @transform_1, window_bounds = array<i64: 512, 128>}, {pipeline_mode = #tpu.pipeline_mode<synchronous>, transform_indices = @transform_2, window_bounds = array<i64: 1, 128>}, {pipeline_mode = #tpu.pipeline_mode<synchronous>, transform_indices = @transform_3, window_bounds = array<i64: 1, 128>}, {pipeline_mode = #tpu.pipeline_mode<synchronous>, transform_indices = @transform_4, window_bounds = array<i64: 128, 128>}, {pipeline_mode = #tpu.pipeline_mode<synchronous>, transform_indices = @transform_5, window_bounds = array<i64: 1, 128>}, {transform_indices = @transform_6, window_bounds = array<i64: 8, 128>}]} {
    %c0 = arith.constant 0 : index
    %c0_0 = arith.constant 0 : index
    %0 = vector.load %arg1[%c0, %c0_0] : memref<8x512xbf16, #tpu.memory_space<vmem>>, vector<8x512xbf16>
    %c0_1 = arith.constant 0 : index
    %c0_2 = arith.constant 0 : index
    %1 = vector.load %arg2[%c0_1, %c0_2] : memref<512x128xbf16, #tpu.memory_space<vmem>>, vector<512x128xbf16>
    %cst = arith.constant dense<0.000000e+00> : vector<8x128xf32>
    %2 = tpu.matmul %0, %1, %cst {dimension_numbers = #tpu.dot_dimension_numbers<[1], [0], [0], [1], [0, 0, 1, 1], [], []>} : vector<8x512xbf16>, vector<512x128xbf16>, vector<8x128xf32> -> vector<8x128xf32>
    %c0_3 = arith.constant 0 : index
    %c0_4 = arith.constant 0 : index
    %3 = vector.load %arg3[%c0_3, %c0_4] : memref<1x128xf32, #tpu.memory_space<vmem>>, vector<1x128xf32>
    %4 = vector.broadcast %3 : vector<1x128xf32> to vector<8x128xf32>
    %5 = arith.mulf %2, %4 : vector<8x128xf32>
    %c0_5 = arith.constant 0 : index
    %c0_6 = arith.constant 0 : index
    %6 = vector.load %arg4[%c0_5, %c0_6] : memref<1x128xf32, #tpu.memory_space<vmem>>, vector<1x128xf32>
    %7 = vector.broadcast %6 : vector<1x128xf32> to vector<8x128xf32>
    %8 = arith.addf %5, %7 : vector<8x128xf32>
    %cst_7 = arith.constant 0.000000e+00 : f32
    %9 = vector.broadcast %cst_7 : f32 to vector<8x128xf32>
    %10 = arith.cmpf oge, %8, %9 : vector<8x128xf32>
    %cst_8 = arith.constant 0.00999999977 : f32
    %11 = vector.broadcast %cst_8 : f32 to vector<8x128xf32>
    %12 = arith.mulf %11, %8 : vector<8x128xf32>
    %13 = arith.select %10, %8, %12 : vector<8x128xi1>, vector<8x128xf32>
    %14 = arith.truncf %13 : vector<8x128xf32> to vector<8x128xbf16>
    %c0_9 = arith.constant 0 : index
    %c0_10 = arith.constant 0 : index
    %15 = vector.load %arg5[%c0_9, %c0_10] : memref<128x128xbf16, #tpu.memory_space<vmem>>, vector<128x128xbf16>
    %cst_11 = arith.constant dense<0.000000e+00> : vector<8x128xf32>
    %16 = tpu.matmul %14, %15, %cst_11 {dimension_numbers = #tpu.dot_dimension_numbers<[1], [0], [0], [1], [0, 0, 1, 1], [], []>} : vector<8x128xbf16>, vector<128x128xbf16>, vector<8x128xf32> -> vector<8x128xf32>
    %c0_12 = arith.constant 0 : index
    %c0_13 = arith.constant 0 : index
    %17 = vector.load %arg6[%c0_12, %c0_13] : memref<1x128xf32, #tpu.memory_space<vmem>>, vector<1x128xf32>
    %18 = vector.broadcast %17 : vector<1x128xf32> to vector<8x128xf32>
    %19 = arith.addf %16, %18 : vector<8x128xf32>
    %c0_14 = arith.constant 0 : index
    %c0_15 = arith.constant 0 : index
    %20 = vector.load %arg7[%c0_14, %c0_15] : memref<8x128xf32, #tpu.memory_space<vmem>>, vector<8x128xf32>
    tpu.vector_store %arg7[%c0_14, %c0_15], %19 {strides = array<i32>} : memref<8x128xf32, #tpu.memory_space<vmem>>, vector<8x128xf32>,
    return
  }
  func.func @transform_0(%arg0: i32) -> (i32, i32) {
    %c0_i32 = arith.constant 0 : i32
    %c0_i32_0 = arith.constant 0 : i32
    return %arg0, %c0_i32 : i32, i32
  }
  func.func @transform_1(%arg0: i32) -> (i32, i32) {
    %c0_i32 = arith.constant 0 : i32
    %c0_i32_0 = arith.constant 0 : i32
    %c0_i32_1 = arith.constant 0 : i32
    return %c0_i32, %c0_i32_0 : i32, i32
  }
  func.func @transform_2(%arg0: i32) -> (i32, i32) {
    %c0_i32 = arith.constant 0 : i32
    %c0_i32_0 = arith.constant 0 : i32
    %c0_i32_1 = arith.constant 0 : i32
    return %c0_i32, %c0_i32_0 : i32, i32
  }
  func.func @transform_3(%arg0: i32) -> (i32, i32) {
    %c0_i32 = arith.constant 0 : i32
    %c0_i32_0 = arith.constant 0 : i32
    %c0_i32_1 = arith.constant 0 : i32
    return %c0_i32, %c0_i32_0 : i32, i32
  }
  func.func @transform_4(%arg0: i32) -> (i32, i32) {
    %c0_i32 = arith.constant 0 : i32
    %c0_i32_0 = arith.constant 0 : i32
    %c0_i32_1 = arith.constant 0 : i32
    return %c0_i32, %c0_i32_0 : i32, i32
  }
  func.func @transform_5(%arg0: i32) -> (i32, i32) {
    %c0_i32 = arith.constant 0 : i32
    %c0_i32_0 = arith.constant 0 : i32
    %c0_i32_1 = arith.constant 0 : i32
    return %c0_i32, %c0_i32_0 : i32, i32
  }
  func.func @transform_6(%arg0: i32) -> (i32, i32) {
    %c0_i32 = arith.constant 0 : i32
    %c0_i32_0 = arith.constant 0 : i32
    return %arg0, %c0_i32 : i32, i32
  }
}

</mosaic_0001>

<llo_original>
// kernel: forward.5
$region0: #{forward.5}
  #allocation0 [shape = 'u32[]', space=smem, size = 0x4, offset = 0x4, fixed_abs, tag = 'smem constant byte address 0x4 - core index']
  #allocation1 [shape = 'u32[144,128]{1,0:T(1,128)}', space=vmem, size = 0x12000, scoped, tag = 'internal scratch']
  #allocation2 [shape = 'f32[12,128]{1,0:T(8,128)}', space=vmem, size = 0x2000, scoped, tag = 'scratch operand']
  %s0 = inlined_call_operand.vmem [shape: bf16[2,14,14,128], index: 0, kind: input, shape index: {}]
  %s1 = inlined_call_operand.vmem [shape: bf16[9,128,128], index: 1, kind: input, shape index: {}]
  %s2 = inlined_call_operand.vmem [shape: f32[1,128], index: 2, kind: input, shape index: {}]
  %s3 = inlined_call_operand.vmem [shape: f32[1,128], index: 3, kind: input, shape index: {}]
  %s4 = inlined_call_operand.vmem [shape: bf16[2,6,6,128], index: 4, kind: output, shape index: {}]
  %s5 = sld [smem:[#allocation0]]
  $region56: #{forward.5} parent=0
    _
  %s7 = ssub.s32 1, %s5
  %s8 = scalar_select 0, %s7, %s5
  loop: start=0, step=1, limit=4
  $region2: #{forward.5} parent=0 // loop_pre_header
    _
  $region3: #{forward.5} parent=0 // loop_header
    %s10 = sphi 0, %s14
    %p11 = scmp.ge.s32.totalorder %s10, 4
    %s20 = sphi 0, %s22
    %s23 = sphi 0, %s20
    %s24 = sphi 0, %s23
    %s40 = sphi 0, %s24
    %s44 = sphi 0, %s44
    %s46 = sphi 0, %s44
    %s47 = sphi 0, %s46
    %s61 = sphi 0, %s47
    %s65 = sphi 0, %s65
    %s67 = sphi 0, %s65
    %s68 = sphi 0, %s67
    %s82 = sphi 0, %s68
    %s86 = sphi 0, %s86
    %s88 = sphi 0, %s86
    %s89 = sphi 0, %s88
    %s103 = sphi 0, %s89
    %s109 = sphi 0, %s111
    %s112 = sphi 0, %s109
    %s113 = sphi 0, %s112
    %s129 = sphi 0, %s113
  $region4: #{forward.5} parent=0 // loop_header_branch
    %13 = sbr.rel (%p11) target = $region8
  $region5: #{forward.5} parent=0 // loop_body
    %s15 = ssub.s32 %s10, 1
    %s16 = ssub.s32 %s10, 2
    %s17 = sadd.s32 %s10, 1
    %s18 = ssub.s32 %s10, %s17
    %p19 = scmp.eq.s32.totalorder %s18, 0
    %s21 = sadd.s32 %s20, 1
    %s22 = scalar_select %p19, %s20, %s21
    %p25 = pneg %p19
    %p26 = scmp.eq.s32.totalorder %s10, 1
    %p27 = por %p25, %p26
    %p28 = scmp.ne.s32.totalorder %s20, %s23
    %p29 = scmp.eq.s32.totalorder %s10, 0
    %p30 = por %p28, %p29
    %p31 = scmp.ne.s32.totalorder %s20, %s23
    %p32 = scmp.eq.s32.totalorder %s15, 1
    %p33 = por %p31, %p32
    %p34 = scmp.ne.s32.totalorder %s23, %s24
    %p35 = scmp.eq.s32.totalorder %s15, 0
    %p36 = por %p34, %p35
    %p37 = scmp.ne.s32.totalorder %s23, %s24
    %p38 = scmp.eq.s32.totalorder %s16, 1
    %p39 = por %p37, %p38
    %p41 = scmp.ne.s32.totalorder %s24, %s40
    %p42 = scmp.eq.s32.totalorder %s16, 0
    %p43 = por %p41, %p42
    %s45 = sadd.s32 %s44, 1
    %p48 = scmp.eq.s32.totalorder %s10, 1
    %p49 = scmp.ne.s32.totalorder %s44, %s46
    %p50 = scmp.eq.s32.totalorder %s10, 0
    %p51 = por %p49, %p50
    %p52 = scmp.ne.s32.totalorder %s44, %s46
    %p53 = scmp.eq.s32.totalorder %s15, 1
    %p54 = por %p52, %p53
    %p55 = scmp.ne.s32.totalorder %s46, %s47
    %p56 = scmp.eq.s32.totalorder %s15, 0
    %p57 = por %p55, %p56
    %p58 = scmp.ne.s32.totalorder %s46, %s47
    %p59 = scmp.eq.s32.totalorder %s16, 1
    %p60 = por %p58, %p59
    %p62 = scmp.ne.s32.totalorder %s47, %s61
    %p63 = scmp.eq.s32.totalorder %s16, 0
    %p64 = por %p62, %p63
    %s66 = sadd.s32 %s65, 1
    %p69 = scmp.eq.s32.totalorder %s10, 1
    %p70 = scmp.ne.s32.totalorder %s65, %s67
    %p71 = scmp.eq.s32.totalorder %s10, 0
    %p72 = por %p70, %p71
    %p73 = scmp.ne.s32.totalorder %s65, %s67
    %p74 = scmp.eq.s32.totalorder %s15, 1
    %p75 = por %p73, %p74
    %p76 = scmp.ne.s32.totalorder %s67, %s68
    %p77 = scmp.eq.s32.totalorder %s15, 0
    %p78 = por %p76, %p77
    %p79 = scmp.ne.s32.totalorder %s67, %s68
    %p80 = scmp.eq.s32.totalorder %s16, 1
    %p81 = por %p79, %p80
    %p83 = scmp.ne.s32.totalorder %s68, %s82
    %p84 = scmp.eq.s32.totalorder %s16, 0
    %p85 = por %p83, %p84
    %s87 = sadd.s32 %s86, 1
    %p90 = scmp.eq.s32.totalorder %s10, 1
    %p91 = scmp.ne.s32.totalorder %s86, %s88
    %p92 = scmp.eq.s32.totalorder %s10, 0
    %p93 = por %p91, %p92
    %p94 = scmp.ne.s32.totalorder %s86, %s88
    %p95 = scmp.eq.s32.totalorder %s15, 1
    %p96 = por %p94, %p95
    %p97 = scmp.ne.s32.totalorder %s88, %s89
    %p98 = scmp.eq.s32.totalorder %s15, 0
    %p99 = por %p97, %p98
    %p100 = scmp.ne.s32.totalorder %s88, %s89
    %p101 = scmp.eq.s32.totalorder %s16, 1
    %p102 = por %p100, %p101
    %p104 = scmp.ne.s32.totalorder %s89, %s103
    %p105 = scmp.eq.s32.totalorder %s16, 0
    %p106 = por %p104, %p105
    %s107 = ssub.s32 %s10, %s17
    %p108 = scmp.eq.s32.totalorder %s107, 0
    %s110 = sadd.s32 %s109, 1
    %s111 = scalar_select %p108, %s109, %s110
    %p114 = pneg %p108
    %p115 = scmp.eq.s32.totalorder %s10, 1
    %p116 = por %p114, %p115
    %p117 = scmp.ne.s32.totalorder %s109, %s112
    %p118 = scmp.eq.s32.totalorder %s10, 0
    %p119 = por %p117, %p118
    %p120 = scmp.ne.s32.totalorder %s109, %s112
    %p121 = scmp.eq.s32.totalorder %s15, 1
    %p122 = por %p120, %p121
    %p123 = scmp.ne.s32.totalorder %s112, %s113
    %p124 = scmp.eq.s32.totalorder %s15, 0
    %p125 = por %p123, %p124
    %p126 = scmp.ne.s32.totalorder %s112, %s113
    %p127 = scmp.eq.s32.totalorder %s16, 1
    %p128 = por %p126, %p127
    %p130 = scmp.ne.s32.totalorder %s113, %s129
    %p131 = scmp.eq.s32.totalorder %s16, 0
    %p132 = por %p130, %p131
    %p133 = scmp.le.s32.totalorder 1, %s10
    %p134 = scmp.lt.s32.totalorder %s10, 3
    %p135 = pnand %p133, %p134
    %p136 = pneg %p135
    // Predicated region
    $region9: #{forward.5} parent=5 // pred_check
      _
    $region10: #{forward.5} parent=5 // pred_check_branch
      %138 = sbr.rel (%p135) target = $region12
    $region11: #{forward.5} parent=5 // pred_region
      %s139 = ssub.s32 %s10, 1
      // Predicated region
      $region13: #{forward.5} parent=11 // pred_check
        %p140 = pneg %p57
      $region14: #{forward.5} parent=11 // pred_check_branch
        %142 = sbr.rel (%p140) target = $region16
      $region15: #{forward.5} parent=11 // pred_region
        _
      $region16: #{forward.5} parent=11 // pred_fallthru
        _
      // Predicated region
      $region17: #{forward.5} parent=11 // pred_check
        %p143 = pneg %p78
      $region18: #{forward.5} parent=11 // pred_check_branch
        %145 = sbr.rel (%p143) target = $region20
      $region19: #{forward.5} parent=11 // pred_region
        _
      $region20: #{forward.5} parent=11 // pred_fallthru
        _
      // Predicated region
      $region21: #{forward.5} parent=11 // pred_check
        %p146 = pneg %p99
      $region22: #{forward.5} parent=11 // pred_check_branch
        %148 = sbr.rel (%p146) target = $region24
      $region23: #{forward.5} parent=11 // pred_region
        _
      $region24: #{forward.5} parent=11 // pred_fallthru
        _
    $region12: #{forward.5} parent=5 // pred_fallthru
      _
    %p149 = scmp.lt.s32.totalorder %s10, 2
    // Predicated region
    $region25: #{forward.5} parent=5 // pred_check
      %p150 = pneg %p149
    $region26: #{forward.5} parent=5 // pred_check_branch
      %152 = sbr.rel (%p150) target = $region28
    $region27: #{forward.5} parent=5 // pred_region
      // Predicated region
      $region29: #{forward.5} parent=27 // pred_check
        %p153 = pneg %p30
      $region30: #{forward.5} parent=27 // pred_check_branch
        %155 = sbr.rel (%p153) target = $region32
      $region31: #{forward.5} parent=27 // pred_region
        %p156 = scmp.lt.s32.totalorder %s10, 1
        %s157 = scalar_select %p156, %s10, 1
        %s158 = smul.addr %s157, 28
        %s159 = smul.addr %s158, 4
        %s160 = scalar_lea.vmem %s0, %s159
      $region32: #{forward.5} parent=27 // pred_fallthru
        _
    $region28: #{forward.5} parent=5 // pred_fallthru
      _
    %p161 = scmp.le.s32.totalorder 1, %s10
    %p162 = scmp.lt.s32.totalorder %s10, 3
    %p163 = pnand %p161, %p162
    %p164 = pneg %p163
    // Predicated region
    $region33: #{forward.5} parent=5 // pred_check
      _
    $region34: #{forward.5} parent=5 // pred_check_branch
      %166 = sbr.rel (%p163) target = $region36
    $region35: #{forward.5} parent=5 // pred_region
      %s167 = ssub.s32 %s10, 1
      %p168 = scmp.lt.s32.totalorder %s15, 1
      %s169 = scalar_select %p168, %s15, 1
      %s170 = smul.addr %s169, 28
      %s171 = smul.addr %s170, 4
      %s172 = scalar_lea.vmem %s0, %s171
      %p173 = pneg %p36
      %p174 = pneg %p33
      %p175 = pneg %p57
      %p176 = pneg %p54
      %p177 = pneg %p78
      %p178 = pneg %p75
      %p179 = pneg %p99
      %p180 = pneg %p96
      %p181 = pneg %p125
      %p182 = pneg %p122
      %p183 = scmp.lt.s32.totalorder %s15, 1
      %s184 = scalar_select %p183, %s15, 1
      %s185 = smul.addr %s184, 6
      %s186 = smul.addr %s185, 4
      %s187 = scalar_lea.vmem %s4, %s186
      %p188 = scmp.lt.s32.totalorder %s15, 1
      %s189 = scalar_select %p188, %s15, 1
      %s190 = smul.addr %s189, 28
      %s191 = smul.addr %s190, 4
      %s192 = scalar_lea.vmem %s0, %s191
      %p193 = scmp.lt.s32.totalorder %s15, 1
      %s194 = scalar_select %p193, %s15, 1
      %s195 = smul.addr %s194, 6
      %s196 = smul.addr %s195, 4
      %s197 = scalar_lea.vmem %s4, %s196
      %v199 = vld [vmem:[%s2] sm:$0x1]
      %v200 = vld [vmem:[%s3] sm:$0x1]
      loop: start=0, step=1, limit=6
      $region37: #{forward.5} parent=35 // loop_pre_header
        _
      $region38: #{forward.5} parent=35 // loop_header
        %s202 = sphi 0, %s206
        %p203 = scmp.ge.s32.totalorder %s202, 6
      $region39: #{forward.5} parent=35 // loop_header_branch
        %205 = sbr.rel (%p203) target = $region43
      $region40: #{forward.5} parent=35 // loop_body
        %s207 = smul.u32 %s202, 2
        %s208 = smul.u32 %s207, 2
        %s209 = smul.addr %s208, 4
        %s210 = scalar_lea.vmem %s192, %s209
        %v211 = vld [vmem:[%s210] sm:$0xf]
        %v212 = vld [vmem:[%s210 + $0x4] sm:$0x7]
        %s213 = sadd.s32 %s207, 1
        %s214 = smul.u32 %s213, 2
        %s215 = smul.addr %s214, 4
        %s216 = scalar_lea.vmem %s192, %s215
        %v217 = vld [vmem:[%s216] sm:$0xf]
        %v218 = vld [vmem:[%s216 + $0x4] sm:$0x7]
        %v219 = vld [vmem:[%s1] sm:$0xf]
        %v220 = vld [vmem:[%s1 + $0x4] sm:$0xf]
        %v221 = vld [vmem:[%s1 + $0x8] sm:$0xf]
        %v222 = vld [vmem:[%s1 + $0xc] sm:$0xf]
        %v223 = vld [vmem:[%s1 + $0x10] sm:$0xf]
        %v224 = vld [vmem:[%s1 + $0x14] sm:$0xf]
        %v225 = vld [vmem:[%s1 + $0x18] sm:$0xf]
        %v226 = vld [vmem:[%s1 + $0x1c] sm:$0xf]
        %v227 = vld [vmem:[%s1 + $0x20] sm:$0xf]
        %v228 = vld [vmem:[%s1 + $0x24] sm:$0xf]
        %v229 = vld [vmem:[%s1 + $0x28] sm:$0xf]
        %v230 = vld [vmem:[%s1 + $0x2c] sm:$0xf]
        %v231 = vld [vmem:[%s1 + $0x30] sm:$0xf]
        %v232 = vld [vmem:[%s1 + $0x34] sm:$0xf]
        %v233 = vld [vmem:[%s1 + $0x38] sm:$0xf]
        %v234 = vld [vmem:[%s1 + $0x3c] sm:$0xf]
        %s235 = scalar_lea.vmem %s1, 64
        %v236 = vld [vmem:[%s235] sm:$0xf]
        %v237 = vld [vmem:[%s235 + $0x4] sm:$0xf]
        %v238 = vld [vmem:[%s235 + $0x8] sm:$0xf]
        %v239 = vld [vmem:[%s235 + $0xc] sm:$0xf]
        %v240 = vld [vmem:[%s235 + $0x10] sm:$0xf]
        %v241 = vld [vmem:[%s235 + $0x14] sm:$0xf]
        %v242 = vld [vmem:[%s235 + $0x18] sm:$0xf]
        %v243 = vld [vmem:[%s235 + $0x1c] sm:$0xf]
        %v244 = vld [vmem:[%s235 + $0x20] sm:$0xf]
        %v245 = vld [vmem:[%s235 + $0x24] sm:$0xf]
        %v246 = vld [vmem:[%s235 + $0x28] sm:$0xf]
        %v247 = vld [vmem:[%s235 + $0x2c] sm:$0xf]
        %v248 = vld [vmem:[%s235 + $0x30] sm:$0xf]
        %v249 = vld [vmem:[%s235 + $0x34] sm:$0xf]
        %v250 = vld [vmem:[%s235 + $0x38] sm:$0xf]
        %v251 = vld [vmem:[%s235 + $0x3c] sm:$0xf]
        %v254 = vunpack.c.l.b16 %v211
        %v255 = vunpack.c.l.b16 %v212
        %v256 = vpack.c.b16 %v255, %v254
        %v258 = vshrl.u32 %v256, 16
        %v260 = vshll.u32 %v256, 16
        %v262 = vrot.slane %v260, 1
        %v263 = vor.u32 %v258, %v262
        %v281 = vunpack.c.l.b16 %v236
        %v282 = vunpack.c.l.b16 %v237
        %v283 = vunpack.c.l.b16 %v238
        %v284 = vunpack.c.l.b16 %v239
        %v285 = vunpack.c.l.b16 %v240
        %v286 = vunpack.c.l.b16 %v241
        %v287 = vunpack.c.l.b16 %v242
        %v288 = vunpack.c.l.b16 %v243
        %v289 = vunpack.c.l.b16 %v244
        %v290 = vunpack.c.l.b16 %v245
        %v291 = vunpack.c.l.b16 %v246
        %v292 = vunpack.c.l.b16 %v247
        %v293 = vunpack.c.l.b16 %v248
        %v294 = vunpack.c.l.b16 %v249
        %v295 = vunpack.c.l.b16 %v250
        %v296 = vunpack.c.l.b16 %v251
        %v297 = vpack.c.b16 %v282, %v281
        %v298 = vpack.c.b16 %v284, %v283
        %v299 = vpack.c.b16 %v286, %v285
        %v300 = vpack.c.b16 %v288, %v287
        %v301 = vpack.c.b16 %v290, %v289
        %v302 = vpack.c.b16 %v292, %v291
        %v303 = vpack.c.b16 %v294, %v293
        %v304 = vpack.c.b16 %v296, %v295
        %313 = vmatprep.subr.bf16.mxu0 0
        %314 = vmatpush1.bf16.msra.mxu0 %v297
        %315 = vmatprep.subr.bf16.mxu0 0
        %316 = vmatpush1.bf16.msra.mxu0 %v298
        %317 = vmatprep.subr.bf16.mxu0 0
        %318 = vmatpush1.bf16.msra.mxu0 %v299
        %319 = vmatprep.subr.bf16.mxu0 0
        %320 = vmatpush1.bf16.msra.mxu0 %v300
        %321 = vmatprep.subr.bf16.mxu0 0
        %322 = vmatpush1.bf16.msra.mxu0 %v301
        %323 = vmatprep.subr.bf16.mxu0 0
        %324 = vmatpush1.bf16.msra.mxu0 %v302
        %325 = vmatprep.subr.bf16.mxu0 0
        %326 = vmatpush1.bf16.msra.mxu0 %v303
        %327 = vmatprep.subr.bf16.mxu0 0
        %328 = vmatpush1.bf16.msra.mxu0 %v304
        %329 = vmatprep.subr.bf16.mxu0 0
        %330 = vmatpush1.bf16.msra.mxu0 0
        %331 = vmatprep.subr.bf16.mxu0 0
        %332 = vmatpush1.bf16.msra.mxu0 0
        %333 = vmatprep.subr.bf16.mxu0 0
        %334 = vmatpush1.bf16.msra.mxu0 0
        %335 = vmatprep.subr.bf16.mxu0 0
        %336 = vmatpush1.bf16.msra.mxu0 0
        %337 = vmatprep.subr.bf16.mxu0 0
        %338 = vmatpush1.bf16.msra.mxu0 0
        %339 = vmatprep.subr.bf16.mxu0 0
        %340 = vmatpush1.bf16.msra.mxu0 0
        %341 = vmatprep.subr.bf16.mxu0 0
        %342 = vmatpush1.bf16.msra.mxu0 0
        %343 = vmatprep.subr.bf16.mxu0 0
        %344 = vmatpush1.bf16.msra.mxu0 0
        %345 = vmatprep.mubr.bf16.mxu0 0
        %346 = vmatmul.mubr.bf16.gmra.mrb[0].mxu0 %v263
        %v347 = vpop.f32.mrb[0].mxu0
        %v348 = vadd.f32 0.0, %v347
        %v349 = vpop.f32.mrb[0].mxu0
        %v350 = vpop.f32.mrb[0].mxu0
        %v351 = vadd.f32 0.0, %v350
        %v352 = vpop.f32.mrb[0].mxu0
        %353 = vdwg.mxu0
        %v371 = vunpack.c.l.b16 %v219
        %v372 = vunpack.c.l.b16 %v220
        %v373 = vunpack.c.l.b16 %v221
        %v374 = vunpack.c.l.b16 %v222
        %v375 = vunpack.c.l.b16 %v223
        %v376 = vunpack.c.l.b16 %v224
        %v377 = vunpack.c.l.b16 %v225
        %v378 = vunpack.c.l.b16 %v226
        %v379 = vunpack.c.l.b16 %v227
        %v380 = vunpack.c.l.b16 %v228
        %v381 = vunpack.c.l.b16 %v229
        %v382 = vunpack.c.l.b16 %v230
        %v383 = vunpack.c.l.b16 %v231
        %v384 = vunpack.c.l.b16 %v232
        %v385 = vunpack.c.l.b16 %v233
        %v386 = vunpack.c.l.b16 %v234
        %v387 = vpack.c.b16 %v372, %v371
        %v388 = vpack.c.b16 %v374, %v373
        %v389 = vpack.c.b16 %v376, %v375
        %v390 = vpack.c.b16 %v378, %v377
        %v391 = vpack.c.b16 %v380, %v379
        %v392 = vpack.c.b16 %v382, %v381
        %v393 = vpack.c.b16 %v384, %v383
        %v394 = vpack.c.b16 %v386, %v385
        %403 = vmatprep.subr.bf16.mxu0 0
        %404 = vmatpush1.bf16.msra.mxu0 %v387
        %405 = vmatprep.subr.bf16.mxu0 0
        %406 = vmatpush1.bf16.msra.mxu0 %v388
        %407 = vmatprep.subr.bf16.mxu0 0
        %408 = vmatpush1.bf16.msra.mxu0 %v389
        %409 = vmatprep.subr.bf16.mxu0 0
        %410 = vmatpush1.bf16.msra.mxu0 %v390
        %411 = vmatprep.subr.bf16.mxu0 0
        %412 = vmatpush1.bf16.msra.mxu0 %v391
        %413 = vmatprep.subr.bf16.mxu0 0
        %414 = vmatpush1.bf16.msra.mxu0 %v392
        %415 = vmatprep.subr.bf16.mxu0 0
        %416 = vmatpush1.bf16.msra.mxu0 %v393
        %417 = vmatprep.subr.bf16.mxu0 0
        %418 = vmatpush1.bf16.msra.mxu0 %v394
        %419 = vmatprep.subr.bf16.mxu0 0
        %420 = vmatpush1.bf16.msra.mxu0 0
        %421 = vmatprep.subr.bf16.mxu0 0
        %422 = vmatpush1.bf16.msra.mxu0 0
        %423 = vmatprep.subr.bf16.mxu0 0
        %424 = vmatpush1.bf16.msra.mxu0 0
        %425 = vmatprep.subr.bf16.mxu0 0
        %426 = vmatpush1.bf16.msra.mxu0 0
        %427 = vmatprep.subr.bf16.mxu0 0
        %428 = vmatpush1.bf16.msra.mxu0 0
        %429 = vmatprep.subr.bf16.mxu0 0
        %430 = vmatpush1.bf16.msra.mxu0 0
        %431 = vmatprep.subr.bf16.mxu0 0
        %432 = vmatpush1.bf16.msra.mxu0 0
        %433 = vmatprep.subr.bf16.mxu0 0
        %434 = vmatpush1.bf16.msra.mxu0 0
        %435 = vmatprep.mubr.bf16.mxu0 0
        %436 = vmatmul.mubr.bf16.gmra.mrb[0].mxu0 %v256
        %v437 = vpop.f32.mrb[0].mxu0
        %v438 = vadd.f32 %v348, %v437
        %v439 = vpop.f32.mrb[0].mxu0
        %v440 = vpop.f32.mrb[0].mxu0
        %v441 = vadd.f32 %v351, %v440
        %v442 = vpop.f32.mrb[0].mxu0
        %443 = vdwg.mxu0
        %v446 = vunpack.c.l.b16 %v217
        %v447 = vunpack.c.l.b16 %v218
        %v448 = vpack.c.b16 %v447, %v446
        %v450 = vshrl.u32 %v448, 16
        %v452 = vshll.u32 %v448, 16
        %v454 = vrot.slane %v452, 1
        %v455 = vor.u32 %v450, %v454
        %457 = vmatprep.subr.bf16.mxu0 0
        %458 = vmatpush1.bf16.msra.mxu0 %v297
        %459 = vmatprep.subr.bf16.mxu0 0
        %460 = vmatpush1.bf16.msra.mxu0 %v298
        %461 = vmatprep.subr.bf16.mxu0 0
        %462 = vmatpush1.bf16.msra.mxu0 %v299
        %463 = vmatprep.subr.bf16.mxu0 0
        %464 = vmatpush1.bf16.msra.mxu0 %v300
        %465 = vmatprep.subr.bf16.mxu0 0
        %466 = vmatpush1.bf16.msra.mxu0 %v301
        %467 = vmatprep.subr.bf16.mxu0 0
        %468 = vmatpush1.bf16.msra.mxu0 %v302
        %469 = vmatprep.subr.bf16.mxu0 0
        %470 = vmatpush1.bf16.msra.mxu0 %v303
        %471 = vmatprep.subr.bf16.mxu0 0
        %472 = vmatpush1.bf16.msra.mxu0 %v304
        %473 = vmatprep.subr.bf16.mxu0 0
        %474 = vmatpush1.bf16.msra.mxu0 0
        %475 = vmatprep.subr.bf16.mxu0 0
        %476 = vmatpush1.bf16.msra.mxu0 0
        %477 = vmatprep.subr.bf16.mxu0 0
        %478 = vmatpush1.bf16.msra.mxu0 0
        %479 = vmatprep.subr.bf16.mxu0 0
        %480 = vmatpush1.bf16.msra.mxu0 0
        %481 = vmatprep.subr.bf16.mxu0 0
        %482 = vmatpush1.bf16.msra.mxu0 0
        %483 = vmatprep.subr.bf16.mxu0 0
        %484 = vmatpush1.bf16.msra.mxu0 0
        %485 = vmatprep.subr.bf16.mxu0 0
        %486 = vmatpush1.bf16.msra.mxu0 0
        %487 = vmatprep.subr.bf16.mxu0 0
        %488 = vmatpush1.bf16.msra.mxu0 0
        %489 = vmatprep.mubr.bf16.mxu0 0
        %490 = vmatmul.mubr.bf16.gmra.mrb[0].mxu0 %v455
        %v491 = vpop.f32.mrb[0].mxu0
        %v492 = vadd.f32 0.0, %v491
        %v493 = vpop.f32.mrb[0].mxu0
        %v494 = vpop.f32.mrb[0].mxu0
        %v495 = vadd.f32 0.0, %v494
        %v496 = vpop.f32.mrb[0].mxu0
        %497 = vdwg.mxu0
        %499 = vmatprep.subr.bf16.mxu0 0
        %500 = vmatpush1.bf16.msra.mxu0 %v387
        %501 = vmatprep.subr.bf16.mxu0 0
        %502 = vmatpush1.bf16.msra.mxu0 %v388
        %503 = vmatprep.subr.bf16.mxu0 0
        %504 = vmatpush1.bf16.msra.mxu0 %v389
        %505 = vmatprep.subr.bf16.mxu0 0
        %506 = vmatpush1.bf16.msra.mxu0 %v390
        %507 = vmatprep.subr.bf16.mxu0 0
        %508 = vmatpush1.bf16.msra.mxu0 %v391
        %509 = vmatprep.subr.bf16.mxu0 0
        %510 = vmatpush1.bf16.msra.mxu0 %v392
        %511 = vmatprep.subr.bf16.mxu0 0
        %512 = vmatpush1.bf16.msra.mxu0 %v393
        %513 = vmatprep.subr.bf16.mxu0 0
        %514 = vmatpush1.bf16.msra.mxu0 %v394
        %515 = vmatprep.subr.bf16.mxu0 0
        %516 = vmatpush1.bf16.msra.mxu0 0
        %517 = vmatprep.subr.bf16.mxu0 0
        %518 = vmatpush1.bf16.msra.mxu0 0
        %519 = vmatprep.subr.bf16.mxu0 0
        %520 = vmatpush1.bf16.msra.mxu0 0
        %521 = vmatprep.subr.bf16.mxu0 0
        %522 = vmatpush1.bf16.msra.mxu0 0
        %523 = vmatprep.subr.bf16.mxu0 0
        %524 = vmatpush1.bf16.msra.mxu0 0
        %525 = vmatprep.subr.bf16.mxu0 0
        %526 = vmatpush1.bf16.msra.mxu0 0
        %527 = vmatprep.subr.bf16.mxu0 0
        %528 = vmatpush1.bf16.msra.mxu0 0
        %529 = vmatprep.subr.bf16.mxu0 0
        %530 = vmatpush1.bf16.msra.mxu0 0
        %531 = vmatprep.mubr.bf16.mxu0 0
        %532 = vmatmul.mubr.bf16.gmra.mrb[0].mxu0 %v448
        %v533 = vpop.f32.mrb[0].mxu0
        %v534 = vadd.f32 %v492, %v533
        %v535 = vpop.f32.mrb[0].mxu0
        %v536 = vpop.f32.mrb[0].mxu0
        %v537 = vadd.f32 %v495, %v536
        %v538 = vpop.f32.mrb[0].mxu0
        %539 = vdwg.mxu0
        %s540 = scalar_lea.vmem %s1, 128
        %v541 = vld [vmem:[%s540] sm:$0xf]
        %v542 = vld [vmem:[%s540 + $0x4] sm:$0xf]
        %v543 = vld [vmem:[%s540 + $0x8] sm:$0xf]
        %v544 = vld [vmem:[%s540 + $0xc] sm:$0xf]
        %v545 = vld [vmem:[%s540 + $0x10] sm:$0xf]
        %v546 = vld [vmem:[%s540 + $0x14] sm:$0xf]
        %v547 = vld [vmem:[%s540 + $0x18] sm:$0xf]
        %v548 = vld [vmem:[%s540 + $0x1c] sm:$0xf]
        %v549 = vld [vmem:[%s540 + $0x20] sm:$0xf]
        %v550 = vld [vmem:[%s540 + $0x24] sm:$0xf]
        %v551 = vld [vmem:[%s540 + $0x28] sm:$0xf]
        %v552 = vld [vmem:[%s540 + $0x2c] sm:$0xf]
        %v553 = vld [vmem:[%s540 + $0x30] sm:$0xf]
        %v554 = vld [vmem:[%s540 + $0x34] sm:$0xf]
        %v555 = vld [vmem:[%s540 + $0x38] sm:$0xf]
        %v556 = vld [vmem:[%s540 + $0x3c] sm:$0xf]
        %v557 = vrot.slane %v256, 1
        %v575 = vunpack.c.l.b16 %v541
        %v576 = vunpack.c.l.b16 %v542
        %v577 = vunpack.c.l.b16 %v543
        %v578 = vunpack.c.l.b16 %v544
        %v579 = vunpack.c.l.b16 %v545
        %v580 = vunpack.c.l.b16 %v546
        %v581 = vunpack.c.l.b16 %v547
        %v582 = vunpack.c.l.b16 %v548
        %v583 = vunpack.c.l.b16 %v549
        %v584 = vunpack.c.l.b16 %v550
        %v585 = vunpack.c.l.b16 %v551
        %v586 = vunpack.c.l.b16 %v552
        %v587 = vunpack.c.l.b16 %v553
        %v588 = vunpack.c.l.b16 %v554
        %v589 = vunpack.c.l.b16 %v555
        %v590 = vunpack.c.l.b16 %v556
        %v591 = vpack.c.b16 %v576, %v575
        %v592 = vpack.c.b16 %v578, %v577
        %v593 = vpack.c.b16 %v580, %v579
        %v594 = vpack.c.b16 %v582, %v581
        %v595 = vpack.c.b16 %v584, %v583
        %v596 = vpack.c.b16 %v586, %v585
        %v597 = vpack.c.b16 %v588, %v587
        %v598 = vpack.c.b16 %v590, %v589
        %607 = vmatprep.subr.bf16.mxu0 0
        %608 = vmatpush1.bf16.msra.mxu0 %v591
        %609 = vmatprep.subr.bf16.mxu0 0
        %610 = vmatpush1.bf16.msra.mxu0 %v592
        %611 = vmatprep.subr.bf16.mxu0 0
        %612 = vmatpush1.bf16.msra.mxu0 %v593
        %613 = vmatprep.subr.bf16.mxu0 0
        %614 = vmatpush1.bf16.msra.mxu0 %v594
        %615 = vmatprep.subr.bf16.mxu0 0
        %616 = vmatpush1.bf16.msra.mxu0 %v595
        %617 = vmatprep.subr.bf16.mxu0 0
        %618 = vmatpush1.bf16.msra.mxu0 %v596
        %619 = vmatprep.subr.bf16.mxu0 0
        %620 = vmatpush1.bf16.msra.mxu0 %v597
        %621 = vmatprep.subr.bf16.mxu0 0
        %622 = vmatpush1.bf16.msra.mxu0 %v598
        %623 = vmatprep.subr.bf16.mxu0 0
        %624 = vmatpush1.bf16.msra.mxu0 0
        %625 = vmatprep.subr.bf16.mxu0 0
        %626 = vmatpush1.bf16.msra.mxu0 0
        %627 = vmatprep.subr.bf16.mxu0 0
        %628 = vmatpush1.bf16.msra.mxu0 0
        %629 = vmatprep.subr.bf16.mxu0 0
        %630 = vmatpush1.bf16.msra.mxu0 0
        %631 = vmatprep.subr.bf16.mxu0 0
        %632 = vmatpush1.bf16.msra.mxu0 0
        %633 = vmatprep.subr.bf16.mxu0 0
        %634 = vmatpush1.bf16.msra.mxu0 0
        %635 = vmatprep.subr.bf16.mxu0 0
        %636 = vmatpush1.bf16.msra.mxu0 0
        %637 = vmatprep.subr.bf16.mxu0 0
        %638 = vmatpush1.bf16.msra.mxu0 0
        %639 = vmatprep.mubr.bf16.mxu0 0
        %640 = vmatmul.mubr.bf16.gmra.mrb[0].mxu0 %v557
        %v641 = vpop.f32.mrb[0].mxu0
        %v642 = vadd.f32 0.0, %v641
        %v643 = vpop.f32.mrb[0].mxu0
        %v644 = vpop.f32.mrb[0].mxu0
        %v645 = vadd.f32 0.0, %v644
        %v646 = vpop.f32.mrb[0].mxu0
        %647 = vdwg.mxu0
        %v648 = vadd.f32 %v438, %v642
        %v649 = vadd.f32 %v441, %v645
        %v650 = vrot.slane %v448, 1
        %652 = vmatprep.subr.bf16.mxu0 0
        %653 = vmatpush1.bf16.msra.mxu0 %v591
        %654 = vmatprep.subr.bf16.mxu0 0
        %655 = vmatpush1.bf16.msra.mxu0 %v592
        %656 = vmatprep.subr.bf16.mxu0 0
        %657 = vmatpush1.bf16.msra.mxu0 %v593
        %658 = vmatprep.subr.bf16.mxu0 0
        %659 = vmatpush1.bf16.msra.mxu0 %v594
        %660 = vmatprep.subr.bf16.mxu0 0
        %661 = vmatpush1.bf16.msra.mxu0 %v595
        %662 = vmatprep.subr.bf16.mxu0 0
        %663 = vmatpush1.bf16.msra.mxu0 %v596
        %664 = vmatprep.subr.bf16.mxu0 0
        %665 = vmatpush1.bf16.msra.mxu0 %v597
        %666 = vmatprep.subr.bf16.mxu0 0
        %667 = vmatpush1.bf16.msra.mxu0 %v598
        %668 = vmatprep.subr.bf16.mxu0 0
        %669 = vmatpush1.bf16.msra.mxu0 0
        %670 = vmatprep.subr.bf16.mxu0 0
        %671 = vmatpush1.bf16.msra.mxu0 0
        %672 = vmatprep.subr.bf16.mxu0 0
        %673 = vmatpush1.bf16.msra.mxu0 0
        %674 = vmatprep.subr.bf16.mxu0 0
        %675 = vmatpush1.bf16.msra.mxu0 0
        %676 = vmatprep.subr.bf16.mxu0 0
        %677 = vmatpush1.bf16.msra.mxu0 0
        %678 = vmatprep.subr.bf16.mxu0 0
        %679 = vmatpush1.bf16.msra.mxu0 0
        %680 = vmatprep.subr.bf16.mxu0 0
        %681 = vmatpush1.bf16.msra.mxu0 0
        %682 = vmatprep.subr.bf16.mxu0 0
        %683 = vmatpush1.bf16.msra.mxu0 0
        %684 = vmatprep.mubr.bf16.mxu0 0
        %685 = vmatmul.mubr.bf16.gmra.mrb[0].mxu0 %v650
        %v686 = vpop.f32.mrb[0].mxu0
        %v687 = vadd.f32 0.0, %v686
        %v688 = vpop.f32.mrb[0].mxu0
        %v689 = vpop.f32.mrb[0].mxu0
        %v690 = vadd.f32 0.0, %v689
        %v691 = vpop.f32.mrb[0].mxu0
        %692 = vdwg.mxu0
        %v693 = vadd.f32 %v534, %v687
        %v694 = vadd.f32 %v537, %v690
        %s695 = sadd.s32 %s207, 2
        %s696 = smul.u32 %s695, 2
        %s697 = smul.addr %s696, 4
        %s698 = scalar_lea.vmem %s192, %s697
        %v699 = vld [vmem:[%s698] sm:$0xf]
        %v700 = vld [vmem:[%s698 + $0x4] sm:$0x7]
        %s701 = scalar_lea.vmem %s1, 192
        %v702 = vld [vmem:[%s701] sm:$0xf]
        %v703 = vld [vmem:[%s701 + $0x4] sm:$0xf]
        %v704 = vld [vmem:[%s701 + $0x8] sm:$0xf]
        %v705 = vld [vmem:[%s701 + $0xc] sm:$0xf]
        %v706 = vld [vmem:[%s701 + $0x10] sm:$0xf]
        %v707 = vld [vmem:[%s701 + $0x14] sm:$0xf]
        %v708 = vld [vmem:[%s701 + $0x18] sm:$0xf]
        %v709 = vld [vmem:[%s701 + $0x1c] sm:$0xf]
        %v710 = vld [vmem:[%s701 + $0x20] sm:$0xf]
        %v711 = vld [vmem:[%s701 + $0x24] sm:$0xf]
        %v712 = vld [vmem:[%s701 + $0x28] sm:$0xf]
        %v713 = vld [vmem:[%s701 + $0x2c] sm:$0xf]
        %v714 = vld [vmem:[%s701 + $0x30] sm:$0xf]
        %v715 = vld [vmem:[%s701 + $0x34] sm:$0xf]
        %v716 = vld [vmem:[%s701 + $0x38] sm:$0xf]
        %v717 = vld [vmem:[%s701 + $0x3c] sm:$0xf]
        %v734 = vunpack.c.l.b16 %v702
        %v735 = vunpack.c.l.b16 %v703
        %v736 = vunpack.c.l.b16 %v704
        %v737 = vunpack.c.l.b16 %v705
        %v738 = vunpack.c.l.b16 %v706
        %v739 = vunpack.c.l.b16 %v707
        %v740 = vunpack.c.l.b16 %v708
        %v741 = vunpack.c.l.b16 %v709
        %v742 = vunpack.c.l.b16 %v710
        %v743 = vunpack.c.l.b16 %v711
        %v744 = vunpack.c.l.b16 %v712
        %v745 = vunpack.c.l.b16 %v713
        %v746 = vunpack.c.l.b16 %v714
        %v747 = vunpack.c.l.b16 %v715
        %v748 = vunpack.c.l.b16 %v716
        %v749 = vunpack.c.l.b16 %v717
        %v750 = vpack.c.b16 %v735, %v734
        %v751 = vpack.c.b16 %v737, %v736
        %v752 = vpack.c.b16 %v739, %v738
        %v753 = vpack.c.b16 %v741, %v740
        %v754 = vpack.c.b16 %v743, %v742
        %v755 = vpack.c.b16 %v745, %v744
        %v756 = vpack.c.b16 %v747, %v746
        %v757 = vpack.c.b16 %v749, %v748
        %766 = vmatprep.subr.bf16.mxu0 0
        %767 = vmatpush1.bf16.msra.mxu0 %v750
        %768 = vmatprep.subr.bf16.mxu0 0
        %769 = vmatpush1.bf16.msra.mxu0 %v751
        %770 = vmatprep.subr.bf16.mxu0 0
        %771 = vmatpush1.bf16.msra.mxu0 %v752
        %772 = vmatprep.subr.bf16.mxu0 0
        %773 = vmatpush1.bf16.msra.mxu0 %v753
        %774 = vmatprep.subr.bf16.mxu0 0
        %775 = vmatpush1.bf16.msra.mxu0 %v754
        %776 = vmatprep.subr.bf16.mxu0 0
        %777 = vmatpush1.bf16.msra.mxu0 %v755
        %778 = vmatprep.subr.bf16.mxu0 0
        %779 = vmatpush1.bf16.msra.mxu0 %v756
        %780 = vmatprep.subr.bf16.mxu0 0
        %781 = vmatpush1.bf16.msra.mxu0 %v757
        %782 = vmatprep.subr.bf16.mxu0 0
        %783 = vmatpush1.bf16.msra.mxu0 0
        %784 = vmatprep.subr.bf16.mxu0 0
        %785 = vmatpush1.bf16.msra.mxu0 0
        %786 = vmatprep.subr.bf16.mxu0 0
        %787 = vmatpush1.bf16.msra.mxu0 0
        %788 = vmatprep.subr.bf16.mxu0 0
        %789 = vmatpush1.bf16.msra.mxu0 0
        %790 = vmatprep.subr.bf16.mxu0 0
        %791 = vmatpush1.bf16.msra.mxu0 0
        %792 = vmatprep.subr.bf16.mxu0 0
        %793 = vmatpush1.bf16.msra.mxu0 0
        %794 = vmatprep.subr.bf16.mxu0 0
        %795 = vmatpush1.bf16.msra.mxu0 0
        %796 = vmatprep.subr.bf16.mxu0 0
        %797 = vmatpush1.bf16.msra.mxu0 0
        %798 = vmatprep.mubr.bf16.mxu0 0
        %799 = vmatmul.mubr.bf16.gmra.mrb[0].mxu0 %v448
        %v800 = vpop.f32.mrb[0].mxu0
        %v801 = vadd.f32 0.0, %v800
        %v802 = vpop.f32.mrb[0].mxu0
        %v803 = vpop.f32.mrb[0].mxu0
        %v804 = vadd.f32 0.0, %v803
        %v805 = vpop.f32.mrb[0].mxu0
        %806 = vdwg.mxu0
        %v807 = vadd.f32 %v648, %v801
        %v808 = vadd.f32 %v649, %v804
        %v811 = vunpack.c.l.b16 %v699
        %v812 = vunpack.c.l.b16 %v700
        %v813 = vpack.c.b16 %v812, %v811
        %815 = vmatprep.subr.bf16.mxu0 0
        %816 = vmatpush1.bf16.msra.mxu0 %v750
        %817 = vmatprep.subr.bf16.mxu0 0
        %818 = vmatpush1.bf16.msra.mxu0 %v751
        %819 = vmatprep.subr.bf16.mxu0 0
        %820 = vmatpush1.bf16.msra.mxu0 %v752
        %821 = vmatprep.subr.bf16.mxu0 0
        %822 = vmatpush1.bf16.msra.mxu0 %v753
        %823 = vmatprep.subr.bf16.mxu0 0
        %824 = vmatpush1.bf16.msra.mxu0 %v754
        %825 = vmatprep.subr.bf16.mxu0 0
        %826 = vmatpush1.bf16.msra.mxu0 %v755
        %827 = vmatprep.subr.bf16.mxu0 0
        %828 = vmatpush1.bf16.msra.mxu0 %v756
        %829 = vmatprep.subr.bf16.mxu0 0
        %830 = vmatpush1.bf16.msra.mxu0 %v757
        %831 = vmatprep.subr.bf16.mxu0 0
        %832 = vmatpush1.bf16.msra.mxu0 0
        %833 = vmatprep.subr.bf16.mxu0 0
        %834 = vmatpush1.bf16.msra.mxu0 0
        %835 = vmatprep.subr.bf16.mxu0 0
        %836 = vmatpush1.bf16.msra.mxu0 0
        %837 = vmatprep.subr.bf16.mxu0 0
        %838 = vmatpush1.bf16.msra.mxu0 0
        %839 = vmatprep.subr.bf16.mxu0 0
        %840 = vmatpush1.bf16.msra.mxu0 0
        %841 = vmatprep.subr.bf16.mxu0 0
        %842 = vmatpush1.bf16.msra.mxu0 0
        %843 = vmatprep.subr.bf16.mxu0 0
        %844 = vmatpush1.bf16.msra.mxu0 0
        %845 = vmatprep.subr.bf16.mxu0 0
        %846 = vmatpush1.bf16.msra.mxu0 0
        %847 = vmatprep.mubr.bf16.mxu0 0
        %848 = vmatmul.mubr.bf16.gmra.mrb[0].mxu0 %v813
        %v849 = vpop.f32.mrb[0].mxu0
        %v850 = vadd.f32 0.0, %v849
        %v851 = vpop.f32.mrb[0].mxu0
        %v852 = vpop.f32.mrb[0].mxu0
        %v853 = vadd.f32 0.0, %v852
        %v854 = vpop.f32.mrb[0].mxu0
        %855 = vdwg.mxu0
        %v856 = vadd.f32 %v693, %v850
        %v857 = vadd.f32 %v694, %v853
        %s858 = scalar_lea.vmem %s1, 256
        %v859 = vld [vmem:[%s858] sm:$0xf]
        %v860 = vld [vmem:[%s858 + $0x4] sm:$0xf]
        %v861 = vld [vmem:[%s858 + $0x8] sm:$0xf]
        %v862 = vld [vmem:[%s858 + $0xc] sm:$0xf]
        %v863 = vld [vmem:[%s858 + $0x10] sm:$0xf]
        %v864 = vld [vmem:[%s858 + $0x14] sm:$0xf]
        %v865 = vld [vmem:[%s858 + $0x18] sm:$0xf]
        %v866 = vld [vmem:[%s858 + $0x1c] sm:$0xf]
        %v867 = vld [vmem:[%s858 + $0x20] sm:$0xf]
        %v868 = vld [vmem:[%s858 + $0x24] sm:$0xf]
        %v869 = vld [vmem:[%s858 + $0x28] sm:$0xf]
        %v870 = vld [vmem:[%s858 + $0x2c] sm:$0xf]
        %v871 = vld [vmem:[%s858 + $0x30] sm:$0xf]
        %v872 = vld [vmem:[%s858 + $0x34] sm:$0xf]
        %v873 = vld [vmem:[%s858 + $0x38] sm:$0xf]
        %v874 = vld [vmem:[%s858 + $0x3c] sm:$0xf]
        %v891 = vunpack.c.l.b16 %v859
        %v892 = vunpack.c.l.b16 %v860
        %v893 = vunpack.c.l.b16 %v861
        %v894 = vunpack.c.l.b16 %v862
        %v895 = vunpack.c.l.b16 %v863
        %v896 = vunpack.c.l.b16 %v864
        %v897 = vunpack.c.l.b16 %v865
        %v898 = vunpack.c.l.b16 %v866
        %v899 = vunpack.c.l.b16 %v867
        %v900 = vunpack.c.l.b16 %v868
        %v901 = vunpack.c.l.b16 %v869
        %v902 = vunpack.c.l.b16 %v870
        %v903 = vunpack.c.l.b16 %v871
        %v904 = vunpack.c.l.b16 %v872
        %v905 = vunpack.c.l.b16 %v873
        %v906 = vunpack.c.l.b16 %v874
        %v907 = vpack.c.b16 %v892, %v891
        %v908 = vpack.c.b16 %v894, %v893
        %v909 = vpack.c.b16 %v896, %v895
        %v910 = vpack.c.b16 %v898, %v897
        %v911 = vpack.c.b16 %v900, %v899
        %v912 = vpack.c.b16 %v902, %v901
        %v913 = vpack.c.b16 %v904, %v903
        %v914 = vpack.c.b16 %v906, %v905
        %923 = vmatprep.subr.bf16.mxu0 0
        %924 = vmatpush1.bf16.msra.mxu0 %v907
        %925 = vmatprep.subr.bf16.mxu0 0
        %926 = vmatpush1.bf16.msra.mxu0 %v908
        %927 = vmatprep.subr.bf16.mxu0 0
        %928 = vmatpush1.bf16.msra.mxu0 %v909
        %929 = vmatprep.subr.bf16.mxu0 0
        %930 = vmatpush1.bf16.msra.mxu0 %v910
        %931 = vmatprep.subr.bf16.mxu0 0
        %932 = vmatpush1.bf16.msra.mxu0 %v911
        %933 = vmatprep.subr.bf16.mxu0 0
        %934 = vmatpush1.bf16.msra.mxu0 %v912
        %935 = vmatprep.subr.bf16.mxu0 0
        %936 = vmatpush1.bf16.msra.mxu0 %v913
        %937 = vmatprep.subr.bf16.mxu0 0
        %938 = vmatpush1.bf16.msra.mxu0 %v914
        %939 = vmatprep.subr.bf16.mxu0 0
        %940 = vmatpush1.bf16.msra.mxu0 0
        %941 = vmatprep.subr.bf16.mxu0 0
        %942 = vmatpush1.bf16.msra.mxu0 0
        %943 = vmatprep.subr.bf16.mxu0 0
        %944 = vmatpush1.bf16.msra.mxu0 0
        %945 = vmatprep.subr.bf16.mxu0 0
        %946 = vmatpush1.bf16.msra.mxu0 0
        %947 = vmatprep.subr.bf16.mxu0 0
        %948 = vmatpush1.bf16.msra.mxu0 0
        %949 = vmatprep.subr.bf16.mxu0 0
        %950 = vmatpush1.bf16.msra.mxu0 0
        %951 = vmatprep.subr.bf16.mxu0 0
        %952 = vmatpush1.bf16.msra.mxu0 0
        %953 = vmatprep.subr.bf16.mxu0 0
        %954 = vmatpush1.bf16.msra.mxu0 0
        %955 = vmatprep.mubr.bf16.mxu0 0
        %956 = vmatmul.mubr.bf16.gmra.mrb[0].mxu0 %v455
        %v957 = vpop.f32.mrb[0].mxu0
        %v958 = vadd.f32 0.0, %v957
        %v959 = vpop.f32.mrb[0].mxu0
        %v960 = vpop.f32.mrb[0].mxu0
        %v961 = vadd.f32 0.0, %v960
        %v962 = vpop.f32.mrb[0].mxu0
        %963 = vdwg.mxu0
        %v964 = vadd.f32 %v807, %v958
        %v965 = vadd.f32 %v808, %v961
        %v967 = vshrl.u32 %v813, 16
        %v969 = vshll.u32 %v813, 16
        %v971 = vrot.slane %v969, 1
        %v972 = vor.u32 %v967, %v971
        %974 = vmatprep.subr.bf16.mxu0 0
        %975 = vmatpush1.bf16.msra.mxu0 %v907
        %976 = vmatprep.subr.bf16.mxu0 0
        %977 = vmatpush1.bf16.msra.mxu0 %v908
        %978 = vmatprep.subr.bf16.mxu0 0
        %979 = vmatpush1.bf16.msra.mxu0 %v909
        %980 = vmatprep.subr.bf16.mxu0 0
        %981 = vmatpush1.bf16.msra.mxu0 %v910
        %982 = vmatprep.subr.bf16.mxu0 0
        %983 = vmatpush1.bf16.msra.mxu0 %v911
        %984 = vmatprep.subr.bf16.mxu0 0
        %985 = vmatpush1.bf16.msra.mxu0 %v912
        %986 = vmatprep.subr.bf16.mxu0 0
        %987 = vmatpush1.bf16.msra.mxu0 %v913
        %988 = vmatprep.subr.bf16.mxu0 0
        %989 = vmatpush1.bf16.msra.mxu0 %v914
        %990 = vmatprep.subr.bf16.mxu0 0
        %991 = vmatpush1.bf16.msra.mxu0 0
        %992 = vmatprep.subr.bf16.mxu0 0
        %993 = vmatpush1.bf16.msra.mxu0 0
        %994 = vmatprep.subr.bf16.mxu0 0
        %995 = vmatpush1.bf16.msra.mxu0 0
        %996 = vmatprep.subr.bf16.mxu0 0
        %997 = vmatpush1.bf16.msra.mxu0 0
        %998 = vmatprep.subr.bf16.mxu0 0
        %999 = vmatpush1.bf16.msra.mxu0 0
        %1000 = vmatprep.subr.bf16.mxu0 0
        %1001 = vmatpush1.bf16.msra.mxu0 0
        %1002 = vmatprep.subr.bf16.mxu0 0
        %1003 = vmatpush1.bf16.msra.mxu0 0
        %1004 = vmatprep.subr.bf16.mxu0 0
        %1005 = vmatpush1.bf16.msra.mxu0 0
        %1006 = vmatprep.mubr.bf16.mxu0 0
        %1007 = vmatmul.mubr.bf16.gmra.mrb[0].mxu0 %v972
        %v1008 = vpop.f32.mrb[0].mxu0
        %v1009 = vadd.f32 0.0, %v1008
        %v1010 = vpop.f32.mrb[0].mxu0
        %v1011 = vpop.f32.mrb[0].mxu0
        %v1012 = vadd.f32 0.0, %v1011
        %v1013 = vpop.f32.mrb[0].mxu0
        %1014 = vdwg.mxu0
        %v1015 = vadd.f32 %v856, %v1009
        %v1016 = vadd.f32 %v857, %v1012
        %s1017 = scalar_lea.vmem %s1, 320
        %v1018 = vld [vmem:[%s1017] sm:$0xf]
        %v1019 = vld [vmem:[%s1017 + $0x4] sm:$0xf]
        %v1020 = vld [vmem:[%s1017 + $0x8] sm:$0xf]
        %v1021 = vld [vmem:[%s1017 + $0xc] sm:$0xf]
        %v1022 = vld [vmem:[%s1017 + $0x10] sm:$0xf]
        %v1023 = vld [vmem:[%s1017 + $0x14] sm:$0xf]
        %v1024 = vld [vmem:[%s1017 + $0x18] sm:$0xf]
        %v1025 = vld [vmem:[%s1017 + $0x1c] sm:$0xf]
        %v1026 = vld [vmem:[%s1017 + $0x20] sm:$0xf]
        %v1027 = vld [vmem:[%s1017 + $0x24] sm:$0xf]
        %v1028 = vld [vmem:[%s1017 + $0x28] sm:$0xf]
        %v1029 = vld [vmem:[%s1017 + $0x2c] sm:$0xf]
        %v1030 = vld [vmem:[%s1017 + $0x30] sm:$0xf]
        %v1031 = vld [vmem:[%s1017 + $0x34] sm:$0xf]
        %v1032 = vld [vmem:[%s1017 + $0x38] sm:$0xf]
        %v1033 = vld [vmem:[%s1017 + $0x3c] sm:$0xf]
        %v1050 = vunpack.c.l.b16 %v1018
        %v1051 = vunpack.c.l.b16 %v1019
        %v1052 = vunpack.c.l.b16 %v1020
        %v1053 = vunpack.c.l.b16 %v1021
        %v1054 = vunpack.c.l.b16 %v1022
        %v1055 = vunpack.c.l.b16 %v1023
        %v1056 = vunpack.c.l.b16 %v1024
        %v1057 = vunpack.c.l.b16 %v1025
        %v1058 = vunpack.c.l.b16 %v1026
        %v1059 = vunpack.c.l.b16 %v1027
        %v1060 = vunpack.c.l.b16 %v1028
        %v1061 = vunpack.c.l.b16 %v1029
        %v1062 = vunpack.c.l.b16 %v1030
        %v1063 = vunpack.c.l.b16 %v1031
        %v1064 = vunpack.c.l.b16 %v1032
        %v1065 = vunpack.c.l.b16 %v1033
        %v1066 = vpack.c.b16 %v1051, %v1050
        %v1067 = vpack.c.b16 %v1053, %v1052
        %v1068 = vpack.c.b16 %v1055, %v1054
        %v1069 = vpack.c.b16 %v1057, %v1056
        %v1070 = vpack.c.b16 %v1059, %v1058
        %v1071 = vpack.c.b16 %v1061, %v1060
        %v1072 = vpack.c.b16 %v1063, %v1062
        %v1073 = vpack.c.b16 %v1065, %v1064
        %1082 = vmatprep.subr.bf16.mxu0 0
        %1083 = vmatpush1.bf16.msra.mxu0 %v1066
        %1084 = vmatprep.subr.bf16.mxu0 0
        %1085 = vmatpush1.bf16.msra.mxu0 %v1067
        %1086 = vmatprep.subr.bf16.mxu0 0
        %1087 = vmatpush1.bf16.msra.mxu0 %v1068
        %1088 = vmatprep.subr.bf16.mxu0 0
        %1089 = vmatpush1.bf16.msra.mxu0 %v1069
        %1090 = vmatprep.subr.bf16.mxu0 0
        %1091 = vmatpush1.bf16.msra.mxu0 %v1070
        %1092 = vmatprep.subr.bf16.mxu0 0
        %1093 = vmatpush1.bf16.msra.mxu0 %v1071
        %1094 = vmatprep.subr.bf16.mxu0 0
        %1095 = vmatpush1.bf16.msra.mxu0 %v1072
        %1096 = vmatprep.subr.bf16.mxu0 0
        %1097 = vmatpush1.bf16.msra.mxu0 %v1073
        %1098 = vmatprep.subr.bf16.mxu0 0
        %1099 = vmatpush1.bf16.msra.mxu0 0
        %1100 = vmatprep.subr.bf16.mxu0 0
        %1101 = vmatpush1.bf16.msra.mxu0 0
        %1102 = vmatprep.subr.bf16.mxu0 0
        %1103 = vmatpush1.bf16.msra.mxu0 0
        %1104 = vmatprep.subr.bf16.mxu0 0
        %1105 = vmatpush1.bf16.msra.mxu0 0
        %1106 = vmatprep.subr.bf16.mxu0 0
        %1107 = vmatpush1.bf16.msra.mxu0 0
        %1108 = vmatprep.subr.bf16.mxu0 0
        %1109 = vmatpush1.bf16.msra.mxu0 0
        %1110 = vmatprep.subr.bf16.mxu0 0
        %1111 = vmatpush1.bf16.msra.mxu0 0
        %1112 = vmatprep.subr.bf16.mxu0 0
        %1113 = vmatpush1.bf16.msra.mxu0 0
        %1114 = vmatprep.mubr.bf16.mxu0 0
        %1115 = vmatmul.mubr.bf16.gmra.mrb[0].mxu0 %v650
        %v1116 = vpop.f32.mrb[0].mxu0
        %v1117 = vadd.f32 0.0, %v1116
        %v1118 = vpop.f32.mrb[0].mxu0
        %v1119 = vpop.f32.mrb[0].mxu0
        %v1120 = vadd.f32 0.0, %v1119
        %v1121 = vpop.f32.mrb[0].mxu0
        %1122 = vdwg.mxu0
        %v1123 = vadd.f32 %v964, %v1117
        %v1124 = vadd.f32 %v965, %v1120
        %v1125 = vrot.slane %v813, 1
        %1127 = vmatprep.subr.bf16.mxu0 0
        %1128 = vmatpush1.bf16.msra.mxu0 %v1066
        %1129 = vmatprep.subr.bf16.mxu0 0
        %1130 = vmatpush1.bf16.msra.mxu0 %v1067
        %1131 = vmatprep.subr.bf16.mxu0 0
        %1132 = vmatpush1.bf16.msra.mxu0 %v1068
        %1133 = vmatprep.subr.bf16.mxu0 0
        %1134 = vmatpush1.bf16.msra.mxu0 %v1069
        %1135 = vmatprep.subr.bf16.mxu0 0
        %1136 = vmatpush1.bf16.msra.mxu0 %v1070
        %1137 = vmatprep.subr.bf16.mxu0 0
        %1138 = vmatpush1.bf16.msra.mxu0 %v1071
        %1139 = vmatprep.subr.bf16.mxu0 0
        %1140 = vmatpush1.bf16.msra.mxu0 %v1072
        %1141 = vmatprep.subr.bf16.mxu0 0
        %1142 = vmatpush1.bf16.msra.mxu0 %v1073
        %1143 = vmatprep.subr.bf16.mxu0 0
        %1144 = vmatpush1.bf16.msra.mxu0 0
        %1145 = vmatprep.subr.bf16.mxu0 0
        %1146 = vmatpush1.bf16.msra.mxu0 0
        %1147 = vmatprep.subr.bf16.mxu0 0
        %1148 = vmatpush1.bf16.msra.mxu0 0
        %1149 = vmatprep.subr.bf16.mxu0 0
        %1150 = vmatpush1.bf16.msra.mxu0 0
        %1151 = vmatprep.subr.bf16.mxu0 0
        %1152 = vmatpush1.bf16.msra.mxu0 0
        %1153 = vmatprep.subr.bf16.mxu0 0
        %1154 = vmatpush1.bf16.msra.mxu0 0
        %1155 = vmatprep.subr.bf16.mxu0 0
        %1156 = vmatpush1.bf16.msra.mxu0 0
        %1157 = vmatprep.subr.bf16.mxu0 0
        %1158 = vmatpush1.bf16.msra.mxu0 0
        %1159 = vmatprep.mubr.bf16.mxu0 0
        %1160 = vmatmul.mubr.bf16.gmra.mrb[0].mxu0 %v1125
        %v1161 = vpop.f32.mrb[0].mxu0
        %v1162 = vadd.f32 0.0, %v1161
        %v1163 = vpop.f32.mrb[0].mxu0
        %v1164 = vpop.f32.mrb[0].mxu0
        %v1165 = vadd.f32 0.0, %v1164
        %v1166 = vpop.f32.mrb[0].mxu0
        %1167 = vdwg.mxu0
        %v1168 = vadd.f32 %v1015, %v1162
        %v1169 = vadd.f32 %v1016, %v1165
        %s1170 = sadd.s32 %s207, 3
        %s1171 = smul.u32 %s1170, 2
        %s1172 = smul.addr %s1171, 4
        %s1173 = scalar_lea.vmem %s192, %s1172
        %v1174 = vld [vmem:[%s1173] sm:$0xf]
        %v1175 = vld [vmem:[%s1173 + $0x4] sm:$0x7]
        %s1176 = scalar_lea.vmem %s1, 384
        %v1177 = vld [vmem:[%s1176] sm:$0xf]
        %v1178 = vld [vmem:[%s1176 + $0x4] sm:$0xf]
        %v1179 = vld [vmem:[%s1176 + $0x8] sm:$0xf]
        %v1180 = vld [vmem:[%s1176 + $0xc] sm:$0xf]
        %v1181 = vld [vmem:[%s1176 + $0x10] sm:$0xf]
        %v1182 = vld [vmem:[%s1176 + $0x14] sm:$0xf]
        %v1183 = vld [vmem:[%s1176 + $0x18] sm:$0xf]
        %v1184 = vld [vmem:[%s1176 + $0x1c] sm:$0xf]
        %v1185 = vld [vmem:[%s1176 + $0x20] sm:$0xf]
        %v1186 = vld [vmem:[%s1176 + $0x24] sm:$0xf]
        %v1187 = vld [vmem:[%s1176 + $0x28] sm:$0xf]
        %v1188 = vld [vmem:[%s1176 + $0x2c] sm:$0xf]
        %v1189 = vld [vmem:[%s1176 + $0x30] sm:$0xf]
        %v1190 = vld [vmem:[%s1176 + $0x34] sm:$0xf]
        %v1191 = vld [vmem:[%s1176 + $0x38] sm:$0xf]
        %v1192 = vld [vmem:[%s1176 + $0x3c] sm:$0xf]
        %v1209 = vunpack.c.l.b16 %v1177
        %v1210 = vunpack.c.l.b16 %v1178
        %v1211 = vunpack.c.l.b16 %v1179
        %v1212 = vunpack.c.l.b16 %v1180
        %v1213 = vunpack.c.l.b16 %v1181
        %v1214 = vunpack.c.l.b16 %v1182
        %v1215 = vunpack.c.l.b16 %v1183
        %v1216 = vunpack.c.l.b16 %v1184
        %v1217 = vunpack.c.l.b16 %v1185
        %v1218 = vunpack.c.l.b16 %v1186
        %v1219 = vunpack.c.l.b16 %v1187
        %v1220 = vunpack.c.l.b16 %v1188
        %v1221 = vunpack.c.l.b16 %v1189
        %v1222 = vunpack.c.l.b16 %v1190
        %v1223 = vunpack.c.l.b16 %v1191
        %v1224 = vunpack.c.l.b16 %v1192
        %v1225 = vpack.c.b16 %v1210, %v1209
        %v1226 = vpack.c.b16 %v1212, %v1211
        %v1227 = vpack.c.b16 %v1214, %v1213
        %v1228 = vpack.c.b16 %v1216, %v1215
        %v1229 = vpack.c.b16 %v1218, %v1217
        %v1230 = vpack.c.b16 %v1220, %v1219
        %v1231 = vpack.c.b16 %v1222, %v1221
        %v1232 = vpack.c.b16 %v1224, %v1223
        %1241 = vmatprep.subr.bf16.mxu0 0
        %1242 = vmatpush1.bf16.msra.mxu0 %v1225
        %1243 = vmatprep.subr.bf16.mxu0 0
        %1244 = vmatpush1.bf16.msra.mxu0 %v1226
        %1245 = vmatprep.subr.bf16.mxu0 0
        %1246 = vmatpush1.bf16.msra.mxu0 %v1227
        %1247 = vmatprep.subr.bf16.mxu0 0
        %1248 = vmatpush1.bf16.msra.mxu0 %v1228
        %1249 = vmatprep.subr.bf16.mxu0 0
        %1250 = vmatpush1.bf16.msra.mxu0 %v1229
        %1251 = vmatprep.subr.bf16.mxu0 0
        %1252 = vmatpush1.bf16.msra.mxu0 %v1230
        %1253 = vmatprep.subr.bf16.mxu0 0
        %1254 = vmatpush1.bf16.msra.mxu0 %v1231
        %1255 = vmatprep.subr.bf16.mxu0 0
        %1256 = vmatpush1.bf16.msra.mxu0 %v1232
        %1257 = vmatprep.subr.bf16.mxu0 0
        %1258 = vmatpush1.bf16.msra.mxu0 0
        %1259 = vmatprep.subr.bf16.mxu0 0
        %1260 = vmatpush1.bf16.msra.mxu0 0
        %1261 = vmatprep.subr.bf16.mxu0 0
        %1262 = vmatpush1.bf16.msra.mxu0 0
        %1263 = vmatprep.subr.bf16.mxu0 0
        %1264 = vmatpush1.bf16.msra.mxu0 0
        %1265 = vmatprep.subr.bf16.mxu0 0
        %1266 = vmatpush1.bf16.msra.mxu0 0
        %1267 = vmatprep.subr.bf16.mxu0 0
        %1268 = vmatpush1.bf16.msra.mxu0 0
        %1269 = vmatprep.subr.bf16.mxu0 0
        %1270 = vmatpush1.bf16.msra.mxu0 0
        %1271 = vmatprep.subr.bf16.mxu0 0
        %1272 = vmatpush1.bf16.msra.mxu0 0
        %1273 = vmatprep.mubr.bf16.mxu0 0
        %1274 = vmatmul.mubr.bf16.gmra.mrb[0].mxu0 %v813
        %v1275 = vpop.f32.mrb[0].mxu0
        %v1276 = vadd.f32 0.0, %v1275
        %v1277 = vpop.f32.mrb[0].mxu0
        %v1278 = vpop.f32.mrb[0].mxu0
        %v1279 = vadd.f32 0.0, %v1278
        %v1280 = vpop.f32.mrb[0].mxu0
        %1281 = vdwg.mxu0
        %v1282 = vadd.f32 %v1123, %v1276
        %v1283 = vadd.f32 %v1124, %v1279
        %v1286 = vunpack.c.l.b16 %v1174
        %v1287 = vunpack.c.l.b16 %v1175
        %v1288 = vpack.c.b16 %v1287, %v1286
        %1290 = vmatprep.subr.bf16.mxu0 0
        %1291 = vmatpush1.bf16.msra.mxu0 %v1225
        %1292 = vmatprep.subr.bf16.mxu0 0
        %1293 = vmatpush1.bf16.msra.mxu0 %v1226
        %1294 = vmatprep.subr.bf16.mxu0 0
        %1295 = vmatpush1.bf16.msra.mxu0 %v1227
        %1296 = vmatprep.subr.bf16.mxu0 0
        %1297 = vmatpush1.bf16.msra.mxu0 %v1228
        %1298 = vmatprep.subr.bf16.mxu0 0
        %1299 = vmatpush1.bf16.msra.mxu0 %v1229
        %1300 = vmatprep.subr.bf16.mxu0 0
        %1301 = vmatpush1.bf16.msra.mxu0 %v1230
        %1302 = vmatprep.subr.bf16.mxu0 0
        %1303 = vmatpush1.bf16.msra.mxu0 %v1231
        %1304 = vmatprep.subr.bf16.mxu0 0
        %1305 = vmatpush1.bf16.msra.mxu0 %v1232
        %1306 = vmatprep.subr.bf16.mxu0 0
        %1307 = vmatpush1.bf16.msra.mxu0 0
        %1308 = vmatprep.subr.bf16.mxu0 0
        %1309 = vmatpush1.bf16.msra.mxu0 0
        %1310 = vmatprep.subr.bf16.mxu0 0
        %1311 = vmatpush1.bf16.msra.mxu0 0
        %1312 = vmatprep.subr.bf16.mxu0 0
        %1313 = vmatpush1.bf16.msra.mxu0 0
        %1314 = vmatprep.subr.bf16.mxu0 0
        %1315 = vmatpush1.bf16.msra.mxu0 0
        %1316 = vmatprep.subr.bf16.mxu0 0
        %1317 = vmatpush1.bf16.msra.mxu0 0
        %1318 = vmatprep.subr.bf16.mxu0 0
        %1319 = vmatpush1.bf16.msra.mxu0 0
        %1320 = vmatprep.subr.bf16.mxu0 0
        %1321 = vmatpush1.bf16.msra.mxu0 0
        %1322 = vmatprep.mubr.bf16.mxu0 0
        %1323 = vmatmul.mubr.bf16.gmra.mrb[0].mxu0 %v1288
        %v1324 = vpop.f32.mrb[0].mxu0
        %v1325 = vadd.f32 0.0, %v1324
        %v1326 = vpop.f32.mrb[0].mxu0
        %v1327 = vpop.f32.mrb[0].mxu0
        %v1328 = vadd.f32 0.0, %v1327
        %v1329 = vpop.f32.mrb[0].mxu0
        %1330 = vdwg.mxu0
        %v1331 = vadd.f32 %v1168, %v1325
        %v1332 = vadd.f32 %v1169, %v1328
        %s1333 = scalar_lea.vmem %s1, 448
        %v1334 = vld [vmem:[%s1333] sm:$0xf]
        %v1335 = vld [vmem:[%s1333 + $0x4] sm:$0xf]
        %v1336 = vld [vmem:[%s1333 + $0x8] sm:$0xf]
        %v1337 = vld [vmem:[%s1333 + $0xc] sm:$0xf]
        %v1338 = vld [vmem:[%s1333 + $0x10] sm:$0xf]
        %v1339 = vld [vmem:[%s1333 + $0x14] sm:$0xf]
        %v1340 = vld [vmem:[%s1333 + $0x18] sm:$0xf]
        %v1341 = vld [vmem:[%s1333 + $0x1c] sm:$0xf]
        %v1342 = vld [vmem:[%s1333 + $0x20] sm:$0xf]
        %v1343 = vld [vmem:[%s1333 + $0x24] sm:$0xf]
        %v1344 = vld [vmem:[%s1333 + $0x28] sm:$0xf]
        %v1345 = vld [vmem:[%s1333 + $0x2c] sm:$0xf]
        %v1346 = vld [vmem:[%s1333 + $0x30] sm:$0xf]
        %v1347 = vld [vmem:[%s1333 + $0x34] sm:$0xf]
        %v1348 = vld [vmem:[%s1333 + $0x38] sm:$0xf]
        %v1349 = vld [vmem:[%s1333 + $0x3c] sm:$0xf]
        %v1366 = vunpack.c.l.b16 %v1334
        %v1367 = vunpack.c.l.b16 %v1335
        %v1368 = vunpack.c.l.b16 %v1336
        %v1369 = vunpack.c.l.b16 %v1337
        %v1370 = vunpack.c.l.b16 %v1338
        %v1371 = vunpack.c.l.b16 %v1339
        %v1372 = vunpack.c.l.b16 %v1340
        %v1373 = vunpack.c.l.b16 %v1341
        %v1374 = vunpack.c.l.b16 %v1342
        %v1375 = vunpack.c.l.b16 %v1343
        %v1376 = vunpack.c.l.b16 %v1344
        %v1377 = vunpack.c.l.b16 %v1345
        %v1378 = vunpack.c.l.b16 %v1346
        %v1379 = vunpack.c.l.b16 %v1347
        %v1380 = vunpack.c.l.b16 %v1348
        %v1381 = vunpack.c.l.b16 %v1349
        %v1382 = vpack.c.b16 %v1367, %v1366
        %v1383 = vpack.c.b16 %v1369, %v1368
        %v1384 = vpack.c.b16 %v1371, %v1370
        %v1385 = vpack.c.b16 %v1373, %v1372
        %v1386 = vpack.c.b16 %v1375, %v1374
        %v1387 = vpack.c.b16 %v1377, %v1376
        %v1388 = vpack.c.b16 %v1379, %v1378
        %v1389 = vpack.c.b16 %v1381, %v1380
        %1398 = vmatprep.subr.bf16.mxu0 0
        %1399 = vmatpush1.bf16.msra.mxu0 %v1382
        %1400 = vmatprep.subr.bf16.mxu0 0
        %1401 = vmatpush1.bf16.msra.mxu0 %v1383
        %1402 = vmatprep.subr.bf16.mxu0 0
        %1403 = vmatpush1.bf16.msra.mxu0 %v1384
        %1404 = vmatprep.subr.bf16.mxu0 0
        %1405 = vmatpush1.bf16.msra.mxu0 %v1385
        %1406 = vmatprep.subr.bf16.mxu0 0
        %1407 = vmatpush1.bf16.msra.mxu0 %v1386
        %1408 = vmatprep.subr.bf16.mxu0 0
        %1409 = vmatpush1.bf16.msra.mxu0 %v1387
        %1410 = vmatprep.subr.bf16.mxu0 0
        %1411 = vmatpush1.bf16.msra.mxu0 %v1388
        %1412 = vmatprep.subr.bf16.mxu0 0
        %1413 = vmatpush1.bf16.msra.mxu0 %v1389
        %1414 = vmatprep.subr.bf16.mxu0 0
        %1415 = vmatpush1.bf16.msra.mxu0 0
        %1416 = vmatprep.subr.bf16.mxu0 0
        %1417 = vmatpush1.bf16.msra.mxu0 0
        %1418 = vmatprep.subr.bf16.mxu0 0
        %1419 = vmatpush1.bf16.msra.mxu0 0
        %1420 = vmatprep.subr.bf16.mxu0 0
        %1421 = vmatpush1.bf16.msra.mxu0 0
        %1422 = vmatprep.subr.bf16.mxu0 0
        %1423 = vmatpush1.bf16.msra.mxu0 0
        %1424 = vmatprep.subr.bf16.mxu0 0
        %1425 = vmatpush1.bf16.msra.mxu0 0
        %1426 = vmatprep.subr.bf16.mxu0 0
        %1427 = vmatpush1.bf16.msra.mxu0 0
        %1428 = vmatprep.subr.bf16.mxu0 0
        %1429 = vmatpush1.bf16.msra.mxu0 0
        %1430 = vmatprep.mubr.bf16.mxu0 0
        %1431 = vmatmul.mubr.bf16.gmra.mrb[0].mxu0 %v972
        %v1432 = vpop.f32.mrb[0].mxu0
        %v1433 = vadd.f32 0.0, %v1432
        %v1434 = vpop.f32.mrb[0].mxu0
        %v1435 = vpop.f32.mrb[0].mxu0
        %v1436 = vadd.f32 0.0, %v1435
        %v1437 = vpop.f32.mrb[0].mxu0
        %1438 = vdwg.mxu0
        %v1439 = vadd.f32 %v1282, %v1433
        %v1440 = vadd.f32 %v1283, %v1436
        %v1442 = vshrl.u32 %v1288, 16
        %v1444 = vshll.u32 %v1288, 16
        %v1446 = vrot.slane %v1444, 1
        %v1447 = vor.u32 %v1442, %v1446
        %1449 = vmatprep.subr.bf16.mxu0 0
        %1450 = vmatpush1.bf16.msra.mxu0 %v1382
        %1451 = vmatprep.subr.bf16.mxu0 0
        %1452 = vmatpush1.bf16.msra.mxu0 %v1383
        %1453 = vmatprep.subr.bf16.mxu0 0
        %1454 = vmatpush1.bf16.msra.mxu0 %v1384
        %1455 = vmatprep.subr.bf16.mxu0 0
        %1456 = vmatpush1.bf16.msra.mxu0 %v1385
        %1457 = vmatprep.subr.bf16.mxu0 0
        %1458 = vmatpush1.bf16.msra.mxu0 %v1386
        %1459 = vmatprep.subr.bf16.mxu0 0
        %1460 = vmatpush1.bf16.msra.mxu0 %v1387
        %1461 = vmatprep.subr.bf16.mxu0 0
        %1462 = vmatpush1.bf16.msra.mxu0 %v1388
        %1463 = vmatprep.subr.bf16.mxu0 0
        %1464 = vmatpush1.bf16.msra.mxu0 %v1389
        %1465 = vmatprep.subr.bf16.mxu0 0
        %1466 = vmatpush1.bf16.msra.mxu0 0
        %1467 = vmatprep.subr.bf16.mxu0 0
        %1468 = vmatpush1.bf16.msra.mxu0 0
        %1469 = vmatprep.subr.bf16.mxu0 0
        %1470 = vmatpush1.bf16.msra.mxu0 0
        %1471 = vmatprep.subr.bf16.mxu0 0
        %1472 = vmatpush1.bf16.msra.mxu0 0
        %1473 = vmatprep.subr.bf16.mxu0 0
        %1474 = vmatpush1.bf16.msra.mxu0 0
        %1475 = vmatprep.subr.bf16.mxu0 0
        %1476 = vmatpush1.bf16.msra.mxu0 0
        %1477 = vmatprep.subr.bf16.mxu0 0
        %1478 = vmatpush1.bf16.msra.mxu0 0
        %1479 = vmatprep.subr.bf16.mxu0 0
        %1480 = vmatpush1.bf16.msra.mxu0 0
        %1481 = vmatprep.mubr.bf16.mxu0 0
        %1482 = vmatmul.mubr.bf16.gmra.mrb[0].mxu0 %v1447
        %v1483 = vpop.f32.mrb[0].mxu0
        %v1484 = vadd.f32 0.0, %v1483
        %v1485 = vpop.f32.mrb[0].mxu0
        %v1486 = vpop.f32.mrb[0].mxu0
        %v1487 = vadd.f32 0.0, %v1486
        %v1488 = vpop.f32.mrb[0].mxu0
        %1489 = vdwg.mxu0
        %v1490 = vadd.f32 %v1331, %v1484
        %v1491 = vadd.f32 %v1332, %v1487
        %s1492 = scalar_lea.vmem %s1, 512
        %v1493 = vld [vmem:[%s1492] sm:$0xf]
        %v1494 = vld [vmem:[%s1492 + $0x4] sm:$0xf]
        %v1495 = vld [vmem:[%s1492 + $0x8] sm:$0xf]
        %v1496 = vld [vmem:[%s1492 + $0xc] sm:$0xf]
        %v1497 = vld [vmem:[%s1492 + $0x10] sm:$0xf]
        %v1498 = vld [vmem:[%s1492 + $0x14] sm:$0xf]
        %v1499 = vld [vmem:[%s1492 + $0x18] sm:$0xf]
        %v1500 = vld [vmem:[%s1492 + $0x1c] sm:$0xf]
        %v1501 = vld [vmem:[%s1492 + $0x20] sm:$0xf]
        %v1502 = vld [vmem:[%s1492 + $0x24] sm:$0xf]
        %v1503 = vld [vmem:[%s1492 + $0x28] sm:$0xf]
        %v1504 = vld [vmem:[%s1492 + $0x2c] sm:$0xf]
        %v1505 = vld [vmem:[%s1492 + $0x30] sm:$0xf]
        %v1506 = vld [vmem:[%s1492 + $0x34] sm:$0xf]
        %v1507 = vld [vmem:[%s1492 + $0x38] sm:$0xf]
        %v1508 = vld [vmem:[%s1492 + $0x3c] sm:$0xf]
        %v1525 = vunpack.c.l.b16 %v1493
        %v1526 = vunpack.c.l.b16 %v1494
        %v1527 = vunpack.c.l.b16 %v1495
        %v1528 = vunpack.c.l.b16 %v1496
        %v1529 = vunpack.c.l.b16 %v1497
        %v1530 = vunpack.c.l.b16 %v1498
        %v1531 = vunpack.c.l.b16 %v1499
        %v1532 = vunpack.c.l.b16 %v1500
        %v1533 = vunpack.c.l.b16 %v1501
        %v1534 = vunpack.c.l.b16 %v1502
        %v1535 = vunpack.c.l.b16 %v1503
        %v1536 = vunpack.c.l.b16 %v1504
        %v1537 = vunpack.c.l.b16 %v1505
        %v1538 = vunpack.c.l.b16 %v1506
        %v1539 = vunpack.c.l.b16 %v1507
        %v1540 = vunpack.c.l.b16 %v1508
        %v1541 = vpack.c.b16 %v1526, %v1525
        %v1542 = vpack.c.b16 %v1528, %v1527
        %v1543 = vpack.c.b16 %v1530, %v1529
        %v1544 = vpack.c.b16 %v1532, %v1531
        %v1545 = vpack.c.b16 %v1534, %v1533
        %v1546 = vpack.c.b16 %v1536, %v1535
        %v1547 = vpack.c.b16 %v1538, %v1537
        %v1548 = vpack.c.b16 %v1540, %v1539
        %1557 = vmatprep.subr.bf16.mxu0 0
        %1558 = vmatpush1.bf16.msra.mxu0 %v1541
        %1559 = vmatprep.subr.bf16.mxu0 0
        %1560 = vmatpush1.bf16.msra.mxu0 %v1542
        %1561 = vmatprep.subr.bf16.mxu0 0
        %1562 = vmatpush1.bf16.msra.mxu0 %v1543
        %1563 = vmatprep.subr.bf16.mxu0 0
        %1564 = vmatpush1.bf16.msra.mxu0 %v1544
        %1565 = vmatprep.subr.bf16.mxu0 0
        %1566 = vmatpush1.bf16.msra.mxu0 %v1545
        %1567 = vmatprep.subr.bf16.mxu0 0
        %1568 = vmatpush1.bf16.msra.mxu0 %v1546
        %1569 = vmatprep.subr.bf16.mxu0 0
        %1570 = vmatpush1.bf16.msra.mxu0 %v1547
        %1571 = vmatprep.subr.bf16.mxu0 0
        %1572 = vmatpush1.bf16.msra.mxu0 %v1548
        %1573 = vmatprep.subr.bf16.mxu0 0
        %1574 = vmatpush1.bf16.msra.mxu0 0
        %1575 = vmatprep.subr.bf16.mxu0 0
        %1576 = vmatpush1.bf16.msra.mxu0 0
        %1577 = vmatprep.subr.bf16.mxu0 0
        %1578 = vmatpush1.bf16.msra.mxu0 0
        %1579 = vmatprep.subr.bf16.mxu0 0
        %1580 = vmatpush1.bf16.msra.mxu0 0
        %1581 = vmatprep.subr.bf16.mxu0 0
        %1582 = vmatpush1.bf16.msra.mxu0 0
        %1583 = vmatprep.subr.bf16.mxu0 0
        %1584 = vmatpush1.bf16.msra.mxu0 0
        %1585 = vmatprep.subr.bf16.mxu0 0
        %1586 = vmatpush1.bf16.msra.mxu0 0
        %1587 = vmatprep.subr.bf16.mxu0 0
        %1588 = vmatpush1.bf16.msra.mxu0 0
        %1589 = vmatprep.mubr.bf16.mxu0 0
        %1590 = vmatmul.mubr.bf16.gmra.mrb[0].mxu0 %v1125
        %v1591 = vpop.f32.mrb[0].mxu0
        %v1592 = vadd.f32 0.0, %v1591
        %v1593 = vpop.f32.mrb[0].mxu0
        %v1594 = vpop.f32.mrb[0].mxu0
        %v1595 = vadd.f32 0.0, %v1594
        %v1596 = vpop.f32.mrb[0].mxu0
        %1597 = vdwg.mxu0
        %v1598 = vadd.f32 %v1439, %v1592
        %v1599 = vadd.f32 %v1440, %v1595
        %v1600 = vrot.slane %v1288, 1
        %1602 = vmatprep.subr.bf16.mxu0 0
        %1603 = vmatpush1.bf16.msra.mxu0 %v1541
        %1604 = vmatprep.subr.bf16.mxu0 0
        %1605 = vmatpush1.bf16.msra.mxu0 %v1542
        %1606 = vmatprep.subr.bf16.mxu0 0
        %1607 = vmatpush1.bf16.msra.mxu0 %v1543
        %1608 = vmatprep.subr.bf16.mxu0 0
        %1609 = vmatpush1.bf16.msra.mxu0 %v1544
        %1610 = vmatprep.subr.bf16.mxu0 0
        %1611 = vmatpush1.bf16.msra.mxu0 %v1545
        %1612 = vmatprep.subr.bf16.mxu0 0
        %1613 = vmatpush1.bf16.msra.mxu0 %v1546
        %1614 = vmatprep.subr.bf16.mxu0 0
        %1615 = vmatpush1.bf16.msra.mxu0 %v1547
        %1616 = vmatprep.subr.bf16.mxu0 0
        %1617 = vmatpush1.bf16.msra.mxu0 %v1548
        %1618 = vmatprep.subr.bf16.mxu0 0
        %1619 = vmatpush1.bf16.msra.mxu0 0
        %1620 = vmatprep.subr.bf16.mxu0 0
        %1621 = vmatpush1.bf16.msra.mxu0 0
        %1622 = vmatprep.subr.bf16.mxu0 0
        %1623 = vmatpush1.bf16.msra.mxu0 0
        %1624 = vmatprep.subr.bf16.mxu0 0
        %1625 = vmatpush1.bf16.msra.mxu0 0
        %1626 = vmatprep.subr.bf16.mxu0 0
        %1627 = vmatpush1.bf16.msra.mxu0 0
        %1628 = vmatprep.subr.bf16.mxu0 0
        %1629 = vmatpush1.bf16.msra.mxu0 0
        %1630 = vmatprep.subr.bf16.mxu0 0
        %1631 = vmatpush1.bf16.msra.mxu0 0
        %1632 = vmatprep.subr.bf16.mxu0 0
        %1633 = vmatpush1.bf16.msra.mxu0 0
        %1634 = vmatprep.mubr.bf16.mxu0 0
        %1635 = vmatmul.mubr.bf16.gmra.mrb[0].mxu0 %v1600
        %v1636 = vpop.f32.mrb[0].mxu0
        %v1637 = vadd.f32 0.0, %v1636
        %v1638 = vpop.f32.mrb[0].mxu0
        %v1639 = vpop.f32.mrb[0].mxu0
        %v1640 = vadd.f32 0.0, %v1639
        %v1641 = vpop.f32.mrb[0].mxu0
        %1642 = vdwg.mxu0
        %v1643 = vadd.f32 %v1490, %v1637
        %v1644 = vadd.f32 %v1491, %v1640
        %v1645 = vmax.f32 %v1598, %v1643
        %v1646 = vmax.f32 %v1599, %v1644
        %1647 = vst [vmem:[#allocation2] sm:$0xff] %v1645
        %1648 = vst [vmem:[#allocation2 + $0x8] sm:$0xf] %v1646
        %v1649 = vld [vmem:[#allocation2] ss:$2 sm:$0x3f]
        %s1650 = scalar_lea.vmem [#allocation2], 1
        %v1651 = vld [vmem:[%s1650] ss:$2 sm:$0x3f]
        %v1652 = vmax.f32 %v1649, %v1651
        %v1654 = vlaneseq
        %v1655 = vshrl.u32 %v1654, 7
        %v1656 = vsub.s32 0, %v1655
        %v1657 = vrot.slane %v199, %v1656
        %v1659 = vmul.f32 %v1652, %v1657
        %v1661 = vlaneseq
        %v1662 = vshrl.u32 %v1661, 7
        %v1663 = vsub.s32 0, %v1662
        %v1664 = vrot.slane %v200, %v1663
        %v1666 = vadd.f32 %v1659, %v1664
        %vm1667 = vcmp.ge.f32.partialorder %v1666, 0.0
        %v1668 = vmul.f32 %v1666, 0.01
        %v1669 = vsel %vm1667, %v1666, %v1668
        %v1670 = vpack.c.bf16 %v1669, %v1669
        %s1671 = smul.addr %s202, 4
        %s1672 = scalar_lea.vmem %s197, %s1671
        %1673 = vst [vmem:[%s1672] sm:$0x7] %v1670
      $region41: #{forward.5} parent=35 // loop_footer
        %s206 = sadd.s32 1, %s202
      $region42: #{forward.5} parent=35 // loop_footer_branch
        %201 = sbr.rel target = $region38
      $region43: #{forward.5} parent=35 // loop_exit
        _
      %p1674 = scmp.lt.s32.totalorder %s15, 1
      %s1675 = scalar_select %p1674, %s15, 1
      %s1676 = smul.addr %s1675, 6
      %s1677 = smul.addr %s1676, 4
      %s1678 = scalar_lea.vmem %s4, %s1677
      // Predicated region
      $region44: #{forward.5} parent=35 // pred_check
        %p1679 = pneg %p122
      $region45: #{forward.5} parent=35 // pred_check_branch
        %1681 = sbr.rel (%p1679) target = $region47
      $region46: #{forward.5} parent=35 // pred_region
        _
      $region47: #{forward.5} parent=35 // pred_fallthru
        _
    $region36: #{forward.5} parent=5 // pred_fallthru
      _
    %p1682 = scmp.le.s32.totalorder 2, %s10
    // Predicated region
    $region48: #{forward.5} parent=5 // pred_check
      %p1683 = pneg %p1682
    $region49: #{forward.5} parent=5 // pred_check_branch
      %1685 = sbr.rel (%p1683) target = $region51
    $region50: #{forward.5} parent=5 // pred_region
      %s1686 = ssub.s32 %s10, 2
      // Predicated region
      $region52: #{forward.5} parent=50 // pred_check
        %p1687 = pneg %p128
      $region53: #{forward.5} parent=50 // pred_check_branch
        %1689 = sbr.rel (%p1687) target = $region55
      $region54: #{forward.5} parent=50 // pred_region
        %p1690 = scmp.lt.s32.totalorder %s16, 1
        %s1691 = scalar_select %p1690, %s16, 1
        %s1692 = smul.addr %s1691, 6
        %s1693 = smul.addr %s1692, 4
        %s1694 = scalar_lea.vmem %s4, %s1693
      $region55: #{forward.5} parent=50 // pred_fallthru
        _
    $region51: #{forward.5} parent=5 // pred_fallthru
      _
  $region6: #{forward.5} parent=0 // loop_footer
    %s14 = sadd.s32 1, %s10
  $region7: #{forward.5} parent=0 // loop_footer_branch
    %9 = sbr.rel target = $region3
  $region8: #{forward.5} parent=0 // loop_exit
    _

// kernel: forward.7
$region0: #{forward.7}
  #allocation0 [shape = 'u32[]', space=smem, size = 0x4, offset = 0x4, fixed_abs, tag = 'smem constant byte address 0x4 - core index']
  #allocation1 [shape = 'u32[144,128]{1,0:T(1,128)}', space=vmem, size = 0x12000, scoped, tag = 'internal scratch']
  %s0 = inlined_call_operand.vmem [shape: bf16[8,512], index: 0, kind: input, shape index: {}]
  %s1 = inlined_call_operand.vmem [shape: bf16[512,128], index: 1, kind: input, shape index: {}]
  %s2 = inlined_call_operand.vmem [shape: f32[1,128], index: 2, kind: input, shape index: {}]
  %s3 = inlined_call_operand.vmem [shape: f32[1,128], index: 3, kind: input, shape index: {}]
  %s4 = inlined_call_operand.vmem [shape: bf16[128,128], index: 4, kind: input, shape index: {}]
  %s5 = inlined_call_operand.vmem [shape: f32[1,128], index: 5, kind: input, shape index: {}]
  %s6 = inlined_call_operand.vmem [shape: f32[8,128], index: 6, kind: output, shape index: {}]
  %s7 = sld [smem:[#allocation0]]
  $region34: #{forward.7} parent=0
    _
  %s9 = ssub.s32 1, %s7
  %s10 = scalar_select 0, %s9, %s7
  // Predicated region
  $region2: #{forward.7} parent=0 // pred_check
    _
  $region3: #{forward.7} parent=0 // pred_check_branch
    %12 = sbr.rel (0) target = $region5
  $region4: #{forward.7} parent=0 // pred_region
    _
  $region5: #{forward.7} parent=0 // pred_fallthru
    _
  // Predicated region
  $region6: #{forward.7} parent=0 // pred_check
    _
  $region7: #{forward.7} parent=0 // pred_check_branch
    %14 = sbr.rel (0) target = $region9
  $region8: #{forward.7} parent=0 // pred_region
    _
  $region9: #{forward.7} parent=0 // pred_fallthru
    _
  // Predicated region
  $region10: #{forward.7} parent=0 // pred_check
    _
  $region11: #{forward.7} parent=0 // pred_check_branch
    %16 = sbr.rel (0) target = $region13
  $region12: #{forward.7} parent=0 // pred_region
    _
  $region13: #{forward.7} parent=0 // pred_fallthru
    _
  // Predicated region
  $region14: #{forward.7} parent=0 // pred_check
    _
  $region15: #{forward.7} parent=0 // pred_check_branch
    %18 = sbr.rel (0) target = $region17
  $region16: #{forward.7} parent=0 // pred_region
    _
  $region17: #{forward.7} parent=0 // pred_fallthru
    _
  // Predicated region
  $region18: #{forward.7} parent=0 // pred_check
    _
  $region19: #{forward.7} parent=0 // pred_check_branch
    %20 = sbr.rel (0) target = $region21
  $region20: #{forward.7} parent=0 // pred_region
    _
  $region21: #{forward.7} parent=0 // pred_fallthru
    _
  // Predicated region
  $region22: #{forward.7} parent=0 // pred_check
    _
  $region23: #{forward.7} parent=0 // pred_check_branch
    %22 = sbr.rel (0) target = $region25
  $region24: #{forward.7} parent=0 // pred_region
    _
  $region25: #{forward.7} parent=0 // pred_fallthru
    _
  %v24 = vld [vmem:[%s0] sm:$0xff]
  %v25 = vld [vmem:[%s0 + $0x8] sm:$0xff]
  %v26 = vld [vmem:[%s1] sm:$0xf]
  %v27 = vld [vmem:[%s1 + $0x4] sm:$0xf]
  %v28 = vld [vmem:[%s1 + $0x8] sm:$0xf]
  %v29 = vld [vmem:[%s1 + $0xc] sm:$0xf]
  %v30 = vld [vmem:[%s1 + $0x10] sm:$0xf]
  %v31 = vld [vmem:[%s1 + $0x14] sm:$0xf]
  %v32 = vld [vmem:[%s1 + $0x18] sm:$0xf]
  %v33 = vld [vmem:[%s1 + $0x1c] sm:$0xf]
  %v34 = vld [vmem:[%s1 + $0x20] sm:$0xf]
  %v35 = vld [vmem:[%s1 + $0x24] sm:$0xf]
  %v36 = vld [vmem:[%s1 + $0x28] sm:$0xf]
  %v37 = vld [vmem:[%s1 + $0x2c] sm:$0xf]
  %v38 = vld [vmem:[%s1 + $0x30] sm:$0xf]
  %v39 = vld [vmem:[%s1 + $0x34] sm:$0xf]
  %v40 = vld [vmem:[%s1 + $0x38] sm:$0xf]
  %v41 = vld [vmem:[%s1 + $0x3c] sm:$0xf]
  %v42 = vld [vmem:[%s1 + $0x40] sm:$0xf]
  %v43 = vld [vmem:[%s1 + $0x44] sm:$0xf]
  %v44 = vld [vmem:[%s1 + $0x48] sm:$0xf]
  %v45 = vld [vmem:[%s1 + $0x4c] sm:$0xf]
  %v46 = vld [vmem:[%s1 + $0x50] sm:$0xf]
  %v47 = vld [vmem:[%s1 + $0x54] sm:$0xf]
  %v48 = vld [vmem:[%s1 + $0x58] sm:$0xf]
  %v49 = vld [vmem:[%s1 + $0x5c] sm:$0xf]
  %v50 = vld [vmem:[%s1 + $0x60] sm:$0xf]
  %v51 = vld [vmem:[%s1 + $0x64] sm:$0xf]
  %v52 = vld [vmem:[%s1 + $0x68] sm:$0xf]
  %v53 = vld [vmem:[%s1 + $0x6c] sm:$0xf]
  %v54 = vld [vmem:[%s1 + $0x70] sm:$0xf]
  %v55 = vld [vmem:[%s1 + $0x74] sm:$0xf]
  %v56 = vld [vmem:[%s1 + $0x78] sm:$0xf]
  %v57 = vld [vmem:[%s1 + $0x7c] sm:$0xf]
  %v58 = vld [vmem:[%s1 + $0x80] sm:$0xf]
  %v59 = vld [vmem:[%s1 + $0x84] sm:$0xf]
  %v60 = vld [vmem:[%s1 + $0x88] sm:$0xf]
  %v61 = vld [vmem:[%s1 + $0x8c] sm:$0xf]
  %v62 = vld [vmem:[%s1 + $0x90] sm:$0xf]
  %v63 = vld [vmem:[%s1 + $0x94] sm:$0xf]
  %v64 = vld [vmem:[%s1 + $0x98] sm:$0xf]
  %v65 = vld [vmem:[%s1 + $0x9c] sm:$0xf]
  %v66 = vld [vmem:[%s1 + $0xa0] sm:$0xf]
  %v67 = vld [vmem:[%s1 + $0xa4] sm:$0xf]
  %v68 = vld [vmem:[%s1 + $0xa8] sm:$0xf]
  %v69 = vld [vmem:[%s1 + $0xac] sm:$0xf]
  %v70 = vld [vmem:[%s1 + $0xb0] sm:$0xf]
  %v71 = vld [vmem:[%s1 + $0xb4] sm:$0xf]
  %v72 = vld [vmem:[%s1 + $0xb8] sm:$0xf]
  %v73 = vld [vmem:[%s1 + $0xbc] sm:$0xf]
  %v74 = vld [vmem:[%s1 + $0xc0] sm:$0xf]
  %v75 = vld [vmem:[%s1 + $0xc4] sm:$0xf]
  %v76 = vld [vmem:[%s1 + $0xc8] sm:$0xf]
  %v77 = vld [vmem:[%s1 + $0xcc] sm:$0xf]
  %v78 = vld [vmem:[%s1 + $0xd0] sm:$0xf]
  %v79 = vld [vmem:[%s1 + $0xd4] sm:$0xf]
  %v80 = vld [vmem:[%s1 + $0xd8] sm:$0xf]
  %v81 = vld [vmem:[%s1 + $0xdc] sm:$0xf]
  %v82 = vld [vmem:[%s1 + $0xe0] sm:$0xf]
  %v83 = vld [vmem:[%s1 + $0xe4] sm:$0xf]
  %v84 = vld [vmem:[%s1 + $0xe8] sm:$0xf]
  %v85 = vld [vmem:[%s1 + $0xec] sm:$0xf]
  %v86 = vld [vmem:[%s1 + $0xf0] sm:$0xf]
  %v87 = vld [vmem:[%s1 + $0xf4] sm:$0xf]
  %v88 = vld [vmem:[%s1 + $0xf8] sm:$0xf]
  %v89 = vld [vmem:[%s1 + $0xfc] sm:$0xf]
  %v92 = vunpack.c.l.b16 %v24
  %v93 = vunpack.c.h.b16 %v24
  %v94 = vunpack.c.l.b16 %v25
  %v95 = vunpack.c.h.b16 %v25
  %v96 = vpack.c.b16 %v92, %v92
  %v97 = vpack.c.b16 %v93, %v93
  %v98 = vpack.c.b16 %v94, %v94
  %v99 = vpack.c.b16 %v95, %v95
  %v168 = vunpack.c.l.b16 %v26
  %v169 = vunpack.c.l.b16 %v27
  %v170 = vunpack.c.l.b16 %v28
  %v171 = vunpack.c.l.b16 %v29
  %v172 = vunpack.c.l.b16 %v30
  %v173 = vunpack.c.l.b16 %v31
  %v174 = vunpack.c.l.b16 %v32
  %v175 = vunpack.c.l.b16 %v33
  %v176 = vunpack.c.l.b16 %v34
  %v177 = vunpack.c.l.b16 %v35
  %v178 = vunpack.c.l.b16 %v36
  %v179 = vunpack.c.l.b16 %v37
  %v180 = vunpack.c.l.b16 %v38
  %v181 = vunpack.c.l.b16 %v39
  %v182 = vunpack.c.l.b16 %v40
  %v183 = vunpack.c.l.b16 %v41
  %v184 = vunpack.c.l.b16 %v42
  %v185 = vunpack.c.l.b16 %v43
  %v186 = vunpack.c.l.b16 %v44
  %v187 = vunpack.c.l.b16 %v45
  %v188 = vunpack.c.l.b16 %v46
  %v189 = vunpack.c.l.b16 %v47
  %v190 = vunpack.c.l.b16 %v48
  %v191 = vunpack.c.l.b16 %v49
  %v192 = vunpack.c.l.b16 %v50
  %v193 = vunpack.c.l.b16 %v51
  %v194 = vunpack.c.l.b16 %v52
  %v195 = vunpack.c.l.b16 %v53
  %v196 = vunpack.c.l.b16 %v54
  %v197 = vunpack.c.l.b16 %v55
  %v198 = vunpack.c.l.b16 %v56
  %v199 = vunpack.c.l.b16 %v57
  %v200 = vunpack.c.l.b16 %v58
  %v201 = vunpack.c.l.b16 %v59
  %v202 = vunpack.c.l.b16 %v60
  %v203 = vunpack.c.l.b16 %v61
  %v204 = vunpack.c.l.b16 %v62
  %v205 = vunpack.c.l.b16 %v63
  %v206 = vunpack.c.l.b16 %v64
  %v207 = vunpack.c.l.b16 %v65
  %v208 = vunpack.c.l.b16 %v66
  %v209 = vunpack.c.l.b16 %v67
  %v210 = vunpack.c.l.b16 %v68
  %v211 = vunpack.c.l.b16 %v69
  %v212 = vunpack.c.l.b16 %v70
  %v213 = vunpack.c.l.b16 %v71
  %v214 = vunpack.c.l.b16 %v72
  %v215 = vunpack.c.l.b16 %v73
  %v216 = vunpack.c.l.b16 %v74
  %v217 = vunpack.c.l.b16 %v75
  %v218 = vunpack.c.l.b16 %v76
  %v219 = vunpack.c.l.b16 %v77
  %v220 = vunpack.c.l.b16 %v78
  %v221 = vunpack.c.l.b16 %v79
  %v222 = vunpack.c.l.b16 %v80
  %v223 = vunpack.c.l.b16 %v81
  %v224 = vunpack.c.l.b16 %v82
  %v225 = vunpack.c.l.b16 %v83
  %v226 = vunpack.c.l.b16 %v84
  %v227 = vunpack.c.l.b16 %v85
  %v228 = vunpack.c.l.b16 %v86
  %v229 = vunpack.c.l.b16 %v87
  %v230 = vunpack.c.l.b16 %v88
  %v231 = vunpack.c.l.b16 %v89
  %v232 = vpack.c.b16 %v169, %v168
  %v233 = vpack.c.b16 %v171, %v170
  %v234 = vpack.c.b16 %v173, %v172
  %v235 = vpack.c.b16 %v175, %v174
  %v236 = vpack.c.b16 %v177, %v176
  %v237 = vpack.c.b16 %v179, %v178
  %v238 = vpack.c.b16 %v181, %v180
  %v239 = vpack.c.b16 %v183, %v182
  %v240 = vpack.c.b16 %v185, %v184
  %v241 = vpack.c.b16 %v187, %v186
  %v242 = vpack.c.b16 %v189, %v188
  %v243 = vpack.c.b16 %v191, %v190
  %v244 = vpack.c.b16 %v193, %v192
  %v245 = vpack.c.b16 %v195, %v194
  %v246 = vpack.c.b16 %v197, %v196
  %v247 = vpack.c.b16 %v199, %v198
  %v248 = vpack.c.b16 %v201, %v200
  %v249 = vpack.c.b16 %v203, %v202
  %v250 = vpack.c.b16 %v205, %v204
  %v251 = vpack.c.b16 %v207, %v206
  %v252 = vpack.c.b16 %v209, %v208
  %v253 = vpack.c.b16 %v211, %v210
  %v254 = vpack.c.b16 %v213, %v212
  %v255 = vpack.c.b16 %v215, %v214
  %v256 = vpack.c.b16 %v217, %v216
  %v257 = vpack.c.b16 %v219, %v218
  %v258 = vpack.c.b16 %v221, %v220
  %v259 = vpack.c.b16 %v223, %v222
  %v260 = vpack.c.b16 %v225, %v224
  %v261 = vpack.c.b16 %v227, %v226
  %v262 = vpack.c.b16 %v229, %v228
  %v263 = vpack.c.b16 %v231, %v230
  %296 = vmatprep.subr.bf16.mxu0 0
  %297 = vmatpush1.bf16.msra.mxu0 %v232
  %298 = vmatprep.subr.bf16.mxu0 0
  %299 = vmatpush1.bf16.msra.mxu0 %v233
  %300 = vmatprep.subr.bf16.mxu0 0
  %301 = vmatpush1.bf16.msra.mxu0 %v234
  %302 = vmatprep.subr.bf16.mxu0 0
  %303 = vmatpush1.bf16.msra.mxu0 %v235
  %304 = vmatprep.subr.bf16.mxu0 0
  %305 = vmatpush1.bf16.msra.mxu0 %v236
  %306 = vmatprep.subr.bf16.mxu0 0
  %307 = vmatpush1.bf16.msra.mxu0 %v237
  %308 = vmatprep.subr.bf16.mxu0 0
  %309 = vmatpush1.bf16.msra.mxu0 %v238
  %310 = vmatprep.subr.bf16.mxu0 0
  %311 = vmatpush1.bf16.msra.mxu0 %v239
  %312 = vmatprep.subr.bf16.mxu0 0
  %313 = vmatpush1.bf16.msra.mxu0 %v240
  %314 = vmatprep.subr.bf16.mxu0 0
  %315 = vmatpush1.bf16.msra.mxu0 %v241
  %316 = vmatprep.subr.bf16.mxu0 0
  %317 = vmatpush1.bf16.msra.mxu0 %v242
  %318 = vmatprep.subr.bf16.mxu0 0
  %319 = vmatpush1.bf16.msra.mxu0 %v243
  %320 = vmatprep.subr.bf16.mxu0 0
  %321 = vmatpush1.bf16.msra.mxu0 %v244
  %322 = vmatprep.subr.bf16.mxu0 0
  %323 = vmatpush1.bf16.msra.mxu0 %v245
  %324 = vmatprep.subr.bf16.mxu0 0
  %325 = vmatpush1.bf16.msra.mxu0 %v246
  %326 = vmatprep.subr.bf16.mxu0 0
  %327 = vmatpush1.bf16.msra.mxu0 %v247
  %328 = vmatprep.mubr.bf16.mxu0 %v97
  %329 = vmatmul.mubr.bf16.gmra.mrb[0].mxu0 %v96
  %v330 = vpop.f32.mrb[0].mxu0
  %v331 = vadd.f32 0.0, %v330
  %v332 = vpop.f32.mrb[0].mxu0
  %v333 = vpop.f32.mrb[0].mxu0
  %v334 = vpop.f32.mrb[0].mxu0
  %335 = vdwg.mxu0
  %336 = vmatprep.subr.bf16.mxu0 0
  %337 = vmatpush1.bf16.msra.mxu0 %v248
  %338 = vmatprep.subr.bf16.mxu0 0
  %339 = vmatpush1.bf16.msra.mxu0 %v249
  %340 = vmatprep.subr.bf16.mxu0 0
  %341 = vmatpush1.bf16.msra.mxu0 %v250
  %342 = vmatprep.subr.bf16.mxu0 0
  %343 = vmatpush1.bf16.msra.mxu0 %v251
  %344 = vmatprep.subr.bf16.mxu0 0
  %345 = vmatpush1.bf16.msra.mxu0 %v252
  %346 = vmatprep.subr.bf16.mxu0 0
  %347 = vmatpush1.bf16.msra.mxu0 %v253
  %348 = vmatprep.subr.bf16.mxu0 0
  %349 = vmatpush1.bf16.msra.mxu0 %v254
  %350 = vmatprep.subr.bf16.mxu0 0
  %351 = vmatpush1.bf16.msra.mxu0 %v255
  %352 = vmatprep.subr.bf16.mxu0 0
  %353 = vmatpush1.bf16.msra.mxu0 %v256
  %354 = vmatprep.subr.bf16.mxu0 0
  %355 = vmatpush1.bf16.msra.mxu0 %v257
  %356 = vmatprep.subr.bf16.mxu0 0
  %357 = vmatpush1.bf16.msra.mxu0 %v258
  %358 = vmatprep.subr.bf16.mxu0 0
  %359 = vmatpush1.bf16.msra.mxu0 %v259
  %360 = vmatprep.subr.bf16.mxu0 0
  %361 = vmatpush1.bf16.msra.mxu0 %v260
  %362 = vmatprep.subr.bf16.mxu0 0
  %363 = vmatpush1.bf16.msra.mxu0 %v261
  %364 = vmatprep.subr.bf16.mxu0 0
  %365 = vmatpush1.bf16.msra.mxu0 %v262
  %366 = vmatprep.subr.bf16.mxu0 0
  %367 = vmatpush1.bf16.msra.mxu0 %v263
  %368 = vmatprep.mubr.bf16.mxu0 %v99
  %369 = vmatmul.mubr.bf16.gmra.mrb[0].mxu0 %v98
  %v370 = vpop.f32.mrb[0].mxu0
  %v371 = vadd.f32 %v331, %v370
  %v372 = vpop.f32.mrb[0].mxu0
  %v373 = vpop.f32.mrb[0].mxu0
  %v374 = vpop.f32.mrb[0].mxu0
  %375 = vdwg.mxu0
  %v376 = vld [vmem:[%s2] sm:$0x1]
  %v378 = vlaneseq
  %v379 = vshrl.u32 %v378, 7
  %v380 = vsub.s32 0, %v379
  %v381 = vrot.slane %v376, %v380
  %v383 = vmul.f32 %v371, %v381
  %v384 = vld [vmem:[%s3] sm:$0x1]
  %v386 = vlaneseq
  %v387 = vshrl.u32 %v386, 7
  %v388 = vsub.s32 0, %v387
  %v389 = vrot.slane %v384, %v388
  %v391 = vadd.f32 %v383, %v389
  %vm392 = vcmp.ge.f32.partialorder %v391, 0.0
  %v393 = vmul.f32 %v391, 0.01
  %v394 = vsel %vm392, %v391, %v393
  %v395 = vpack.c.bf16 %v394, %v394
  %v396 = vld [vmem:[%s4] sm:$0xf]
  %v397 = vld [vmem:[%s4 + $0x4] sm:$0xf]
  %v398 = vld [vmem:[%s4 + $0x8] sm:$0xf]
  %v399 = vld [vmem:[%s4 + $0xc] sm:$0xf]
  %v400 = vld [vmem:[%s4 + $0x10] sm:$0xf]
  %v401 = vld [vmem:[%s4 + $0x14] sm:$0xf]
  %v402 = vld [vmem:[%s4 + $0x18] sm:$0xf]
  %v403 = vld [vmem:[%s4 + $0x1c] sm:$0xf]
  %v404 = vld [vmem:[%s4 + $0x20] sm:$0xf]
  %v405 = vld [vmem:[%s4 + $0x24] sm:$0xf]
  %v406 = vld [vmem:[%s4 + $0x28] sm:$0xf]
  %v407 = vld [vmem:[%s4 + $0x2c] sm:$0xf]
  %v408 = vld [vmem:[%s4 + $0x30] sm:$0xf]
  %v409 = vld [vmem:[%s4 + $0x34] sm:$0xf]
  %v410 = vld [vmem:[%s4 + $0x38] sm:$0xf]
  %v411 = vld [vmem:[%s4 + $0x3c] sm:$0xf]
  %v412 = vld [vmem:[%s5] sm:$0x1]
  %v414 = vlaneseq
  %v415 = vshrl.u32 %v414, 7
  %v416 = vsub.s32 0, %v415
  %v417 = vrot.slane %v412, %v416
  %v435 = vunpack.c.l.b16 %v396
  %v436 = vunpack.c.l.b16 %v397
  %v437 = vunpack.c.l.b16 %v398
  %v438 = vunpack.c.l.b16 %v399
  %v439 = vunpack.c.l.b16 %v400
  %v440 = vunpack.c.l.b16 %v401
  %v441 = vunpack.c.l.b16 %v402
  %v442 = vunpack.c.l.b16 %v403
  %v443 = vunpack.c.l.b16 %v404
  %v444 = vunpack.c.l.b16 %v405
  %v445 = vunpack.c.l.b16 %v406
  %v446 = vunpack.c.l.b16 %v407
  %v447 = vunpack.c.l.b16 %v408
  %v448 = vunpack.c.l.b16 %v409
  %v449 = vunpack.c.l.b16 %v410
  %v450 = vunpack.c.l.b16 %v411
  %v451 = vpack.c.b16 %v436, %v435
  %v452 = vpack.c.b16 %v438, %v437
  %v453 = vpack.c.b16 %v440, %v439
  %v454 = vpack.c.b16 %v442, %v441
  %v455 = vpack.c.b16 %v444, %v443
  %v456 = vpack.c.b16 %v446, %v445
  %v457 = vpack.c.b16 %v448, %v447
  %v458 = vpack.c.b16 %v450, %v449
  %467 = vmatprep.subr.bf16.mxu0 0
  %468 = vmatpush1.bf16.msra.mxu0 %v451
  %469 = vmatprep.subr.bf16.mxu0 0
  %470 = vmatpush1.bf16.msra.mxu0 %v452
  %471 = vmatprep.subr.bf16.mxu0 0
  %472 = vmatpush1.bf16.msra.mxu0 %v453
  %473 = vmatprep.subr.bf16.mxu0 0
  %474 = vmatpush1.bf16.msra.mxu0 %v454
  %475 = vmatprep.subr.bf16.mxu0 0
  %476 = vmatpush1.bf16.msra.mxu0 %v455
  %477 = vmatprep.subr.bf16.mxu0 0
  %478 = vmatpush1.bf16.msra.mxu0 %v456
  %479 = vmatprep.subr.bf16.mxu0 0
  %480 = vmatpush1.bf16.msra.mxu0 %v457
  %481 = vmatprep.subr.bf16.mxu0 0
  %482 = vmatpush1.bf16.msra.mxu0 %v458
  %483 = vmatprep.subr.bf16.mxu0 0
  %484 = vmatpush1.bf16.msra.mxu0 0
  %485 = vmatprep.subr.bf16.mxu0 0
  %486 = vmatpush1.bf16.msra.mxu0 0
  %487 = vmatprep.subr.bf16.mxu0 0
  %488 = vmatpush1.bf16.msra.mxu0 0
  %489 = vmatprep.subr.bf16.mxu0 0
  %490 = vmatpush1.bf16.msra.mxu0 0
  %491 = vmatprep.subr.bf16.mxu0 0
  %492 = vmatpush1.bf16.msra.mxu0 0
  %493 = vmatprep.subr.bf16.mxu0 0
  %494 = vmatpush1.bf16.msra.mxu0 0
  %495 = vmatprep.subr.bf16.mxu0 0
  %496 = vmatpush1.bf16.msra.mxu0 0
  %497 = vmatprep.subr.bf16.mxu0 0
  %498 = vmatpush1.bf16.msra.mxu0 0
  %499 = vmatprep.mubr.bf16.mxu0 0
  %500 = vmatmul.mubr.bf16.gmra.mrb[0].mxu0 %v395
  %v501 = vpop.f32.mrb[0].mxu0
  %v502 = vadd.f32 %v417, %v501
  %v503 = vpop.f32.mrb[0].mxu0
  %v504 = vpop.f32.mrb[0].mxu0
  %v505 = vpop.f32.mrb[0].mxu0
  %506 = vdwg.mxu0
  %507 = vst [vmem:[%s6] sm:$0xff] %v502
  // Predicated region
  $region26: #{forward.7} parent=0 // pred_check
    _
  $region27: #{forward.7} parent=0 // pred_check_branch
    %509 = sbr.rel (0) target = $region29
  $region28: #{forward.7} parent=0 // pred_region
    _
  $region29: #{forward.7} parent=0 // pred_fallthru
    _
  // Predicated region
  $region30: #{forward.7} parent=0 // pred_check
    _
  $region31: #{forward.7} parent=0 // pred_check_branch
    %511 = sbr.rel (0) target = $region33
  $region32: #{forward.7} parent=0 // pred_region
    _
  $region33: #{forward.7} parent=0 // pred_fallthru
    _

// kernel: forward.6
$region0: #{forward.6}
  #allocation0 [shape = 'u32[]', space=smem, size = 0x4, offset = 0x4, fixed_abs, tag = 'smem constant byte address 0x4 - core index']
  #allocation1 [shape = 'u32[144,128]{1,0:T(1,128)}', space=vmem, size = 0x12000, scoped, tag = 'internal scratch']
  #allocation2 [shape = 'f32[4,128]{1,0:T(4,128)}', space=vmem, size = 0x800, scoped, tag = 'scratch operand']
  %s0 = inlined_call_operand.vmem [shape: bf16[2,6,6,128], index: 0, kind: input, shape index: {}]
  %s1 = inlined_call_operand.vmem [shape: bf16[9,128,128], index: 1, kind: input, shape index: {}]
  %s2 = inlined_call_operand.vmem [shape: f32[1,128], index: 2, kind: input, shape index: {}]
  %s3 = inlined_call_operand.vmem [shape: f32[1,128], index: 3, kind: input, shape index: {}]
  %s4 = inlined_call_operand.vmem [shape: bf16[2,2,2,128], index: 4, kind: output, shape index: {}]
  %s5 = sld [smem:[#allocation0]]
  $region56: #{forward.6} parent=0
    _
  %s7 = ssub.s32 1, %s5
  %s8 = scalar_select 0, %s7, %s5
  loop: start=0, step=1, limit=4
  $region2: #{forward.6} parent=0 // loop_pre_header
    _
  $region3: #{forward.6} parent=0 // loop_header
    %s10 = sphi 0, %s14
    %p11 = scmp.ge.s32.totalorder %s10, 4
    %s20 = sphi 0, %s22
    %s23 = sphi 0, %s20
    %s24 = sphi 0, %s23
    %s40 = sphi 0, %s24
    %s44 = sphi 0, %s44
    %s46 = sphi 0, %s44
    %s47 = sphi 0, %s46
    %s61 = sphi 0, %s47
    %s65 = sphi 0, %s65
    %s67 = sphi 0, %s65
    %s68 = sphi 0, %s67
    %s82 = sphi 0, %s68
    %s86 = sphi 0, %s86
    %s88 = sphi 0, %s86
    %s89 = sphi 0, %s88
    %s103 = sphi 0, %s89
    %s109 = sphi 0, %s111
    %s112 = sphi 0, %s109
    %s113 = sphi 0, %s112
    %s129 = sphi 0, %s113
  $region4: #{forward.6} parent=0 // loop_header_branch
    %13 = sbr.rel (%p11) target = $region8
  $region5: #{forward.6} parent=0 // loop_body
    %s15 = ssub.s32 %s10, 1
    %s16 = ssub.s32 %s10, 2
    %s17 = sadd.s32 %s10, 1
    %s18 = ssub.s32 %s10, %s17
    %p19 = scmp.eq.s32.totalorder %s18, 0
    %s21 = sadd.s32 %s20, 1
    %s22 = scalar_select %p19, %s20, %s21
    %p25 = pneg %p19
    %p26 = scmp.eq.s32.totalorder %s10, 1
    %p27 = por %p25, %p26
    %p28 = scmp.ne.s32.totalorder %s20, %s23
    %p29 = scmp.eq.s32.totalorder %s10, 0
    %p30 = por %p28, %p29
    %p31 = scmp.ne.s32.totalorder %s20, %s23
    %p32 = scmp.eq.s32.totalorder %s15, 1
    %p33 = por %p31, %p32
    %p34 = scmp.ne.s32.totalorder %s23, %s24
    %p35 = scmp.eq.s32.totalorder %s15, 0
    %p36 = por %p34, %p35
    %p37 = scmp.ne.s32.totalorder %s23, %s24
    %p38 = scmp.eq.s32.totalorder %s16, 1
    %p39 = por %p37, %p38
    %p41 = scmp.ne.s32.totalorder %s24, %s40
    %p42 = scmp.eq.s32.totalorder %s16, 0
    %p43 = por %p41, %p42
    %s45 = sadd.s32 %s44, 1
    %p48 = scmp.eq.s32.totalorder %s10, 1
    %p49 = scmp.ne.s32.totalorder %s44, %s46
    %p50 = scmp.eq.s32.totalorder %s10, 0
    %p51 = por %p49, %p50
    %p52 = scmp.ne.s32.totalorder %s44, %s46
    %p53 = scmp.eq.s32.totalorder %s15, 1
    %p54 = por %p52, %p53
    %p55 = scmp.ne.s32.totalorder %s46, %s47
    %p56 = scmp.eq.s32.totalorder %s15, 0
    %p57 = por %p55, %p56
    %p58 = scmp.ne.s32.totalorder %s46, %s47
    %p59 = scmp.eq.s32.totalorder %s16, 1
    %p60 = por %p58, %p59
    %p62 = scmp.ne.s32.totalorder %s47, %s61
    %p63 = scmp.eq.s32.totalorder %s16, 0
    %p64 = por %p62, %p63
    %s66 = sadd.s32 %s65, 1
    %p69 = scmp.eq.s32.totalorder %s10, 1
    %p70 = scmp.ne.s32.totalorder %s65, %s67
    %p71 = scmp.eq.s32.totalorder %s10, 0
    %p72 = por %p70, %p71
    %p73 = scmp.ne.s32.totalorder %s65, %s67
    %p74 = scmp.eq.s32.totalorder %s15, 1
    %p75 = por %p73, %p74
    %p76 = scmp.ne.s32.totalorder %s67, %s68
    %p77 = scmp.eq.s32.totalorder %s15, 0
    %p78 = por %p76, %p77
    %p79 = scmp.ne.s32.totalorder %s67, %s68
    %p80 = scmp.eq.s32.totalorder %s16, 1
    %p81 = por %p79, %p80
    %p83 = scmp.ne.s32.totalorder %s68, %s82
    %p84 = scmp.eq.s32.totalorder %s16, 0
    %p85 = por %p83, %p84
    %s87 = sadd.s32 %s86, 1
    %p90 = scmp.eq.s32.totalorder %s10, 1
    %p91 = scmp.ne.s32.totalorder %s86, %s88
    %p92 = scmp.eq.s32.totalorder %s10, 0
    %p93 = por %p91, %p92
    %p94 = scmp.ne.s32.totalorder %s86, %s88
    %p95 = scmp.eq.s32.totalorder %s15, 1
    %p96 = por %p94, %p95
    %p97 = scmp.ne.s32.totalorder %s88, %s89
    %p98 = scmp.eq.s32.totalorder %s15, 0
    %p99 = por %p97, %p98
    %p100 = scmp.ne.s32.totalorder %s88, %s89
    %p101 = scmp.eq.s32.totalorder %s16, 1
    %p102 = por %p100, %p101
    %p104 = scmp.ne.s32.totalorder %s89, %s103
    %p105 = scmp.eq.s32.totalorder %s16, 0
    %p106 = por %p104, %p105
    %s107 = ssub.s32 %s10, %s17
    %p108 = scmp.eq.s32.totalorder %s107, 0
    %s110 = sadd.s32 %s109, 1
    %s111 = scalar_select %p108, %s109, %s110
    %p114 = pneg %p108
    %p115 = scmp.eq.s32.totalorder %s10, 1
    %p116 = por %p114, %p115
    %p117 = scmp.ne.s32.totalorder %s109, %s112
    %p118 = scmp.eq.s32.totalorder %s10, 0
    %p119 = por %p117, %p118
    %p120 = scmp.ne.s32.totalorder %s109, %s112
    %p121 = scmp.eq.s32.totalorder %s15, 1
    %p122 = por %p120, %p121
    %p123 = scmp.ne.s32.totalorder %s112, %s113
    %p124 = scmp.eq.s32.totalorder %s15, 0
    %p125 = por %p123, %p124
    %p126 = scmp.ne.s32.totalorder %s112, %s113
    %p127 = scmp.eq.s32.totalorder %s16, 1
    %p128 = por %p126, %p127
    %p130 = scmp.ne.s32.totalorder %s113, %s129
    %p131 = scmp.eq.s32.totalorder %s16, 0
    %p132 = por %p130, %p131
    %p133 = scmp.le.s32.totalorder 1, %s10
    %p134 = scmp.lt.s32.totalorder %s10, 3
    %p135 = pnand %p133, %p134
    %p136 = pneg %p135
    // Predicated region
    $region9: #{forward.6} parent=5 // pred_check
      _
    $region10: #{forward.6} parent=5 // pred_check_branch
      %138 = sbr.rel (%p135) target = $region12
    $region11: #{forward.6} parent=5 // pred_region
      %s139 = ssub.s32 %s10, 1
      // Predicated region
      $region13: #{forward.6} parent=11 // pred_check
        %p140 = pneg %p57
      $region14: #{forward.6} parent=11 // pred_check_branch
        %142 = sbr.rel (%p140) target = $region16
      $region15: #{forward.6} parent=11 // pred_region
        _
      $region16: #{forward.6} parent=11 // pred_fallthru
        _
      // Predicated region
      $region17: #{forward.6} parent=11 // pred_check
        %p143 = pneg %p78
      $region18: #{forward.6} parent=11 // pred_check_branch
        %145 = sbr.rel (%p143) target = $region20
      $region19: #{forward.6} parent=11 // pred_region
        _
      $region20: #{forward.6} parent=11 // pred_fallthru
        _
      // Predicated region
      $region21: #{forward.6} parent=11 // pred_check
        %p146 = pneg %p99
      $region22: #{forward.6} parent=11 // pred_check_branch
        %148 = sbr.rel (%p146) target = $region24
      $region23: #{forward.6} parent=11 // pred_region
        _
      $region24: #{forward.6} parent=11 // pred_fallthru
        _
    $region12: #{forward.6} parent=5 // pred_fallthru
      _
    %p149 = scmp.lt.s32.totalorder %s10, 2
    // Predicated region
    $region25: #{forward.6} parent=5 // pred_check
      %p150 = pneg %p149
    $region26: #{forward.6} parent=5 // pred_check_branch
      %152 = sbr.rel (%p150) target = $region28
    $region27: #{forward.6} parent=5 // pred_region
      // Predicated region
      $region29: #{forward.6} parent=27 // pred_check
        %p153 = pneg %p30
      $region30: #{forward.6} parent=27 // pred_check_branch
        %155 = sbr.rel (%p153) target = $region32
      $region31: #{forward.6} parent=27 // pred_region
        %p156 = scmp.lt.s32.totalorder %s10, 1
        %s157 = scalar_select %p156, %s10, 1
        %s158 = smul.addr %s157, 6
        %s159 = smul.addr %s158, 4
        %s160 = scalar_lea.vmem %s0, %s159
      $region32: #{forward.6} parent=27 // pred_fallthru
        _
    $region28: #{forward.6} parent=5 // pred_fallthru
      _
    %p161 = scmp.le.s32.totalorder 1, %s10
    %p162 = scmp.lt.s32.totalorder %s10, 3
    %p163 = pnand %p161, %p162
    %p164 = pneg %p163
    // Predicated region
    $region33: #{forward.6} parent=5 // pred_check
      _
    $region34: #{forward.6} parent=5 // pred_check_branch
      %166 = sbr.rel (%p163) target = $region36
    $region35: #{forward.6} parent=5 // pred_region
      %s167 = ssub.s32 %s10, 1
      %p168 = scmp.lt.s32.totalorder %s15, 1
      %s169 = scalar_select %p168, %s15, 1
      %s170 = smul.addr %s169, 6
      %s171 = smul.addr %s170, 4
      %s172 = scalar_lea.vmem %s0, %s171
      %p173 = pneg %p36
      %p174 = pneg %p33
      %p175 = pneg %p57
      %p176 = pneg %p54
      %p177 = pneg %p78
      %p178 = pneg %p75
      %p179 = pneg %p99
      %p180 = pneg %p96
      %p181 = pneg %p125
      %p182 = pneg %p122
      %p183 = scmp.lt.s32.totalorder %s15, 1
      %s184 = scalar_select %p183, %s15, 1
      %s185 = smul.addr %s184, 2
      %s186 = scalar_lea.vmem %s4, %s185
      %p187 = scmp.lt.s32.totalorder %s15, 1
      %s188 = scalar_select %p187, %s15, 1
      %s189 = smul.addr %s188, 6
      %s190 = smul.addr %s189, 4
      %s191 = scalar_lea.vmem %s0, %s190
      %p192 = scmp.lt.s32.totalorder %s15, 1
      %s193 = scalar_select %p192, %s15, 1
      %s194 = smul.addr %s193, 2
      %s195 = scalar_lea.vmem %s4, %s194
      %v197 = vld [vmem:[%s2] sm:$0x1]
      %v198 = vld [vmem:[%s3] sm:$0x1]
      loop: start=0, step=1, limit=2
      $region37: #{forward.6} parent=35 // loop_pre_header
        _
      $region38: #{forward.6} parent=35 // loop_header
        %s200 = sphi 0, %s204
        %p201 = scmp.ge.s32.totalorder %s200, 2
      $region39: #{forward.6} parent=35 // loop_header_branch
        %203 = sbr.rel (%p201) target = $region43
      $region40: #{forward.6} parent=35 // loop_body
        %s205 = smul.u32 %s200, 2
        %s206 = smul.addr %s205, 4
        %s207 = scalar_lea.vmem %s191, %s206
        %v208 = vld [vmem:[%s207] sm:$0x7]
        %s209 = sadd.s32 %s205, 1
        %s210 = smul.addr %s209, 4
        %s211 = scalar_lea.vmem %s191, %s210
        %v212 = vld [vmem:[%s211] sm:$0x7]
        %v213 = vld [vmem:[%s1] sm:$0xf]
        %v214 = vld [vmem:[%s1 + $0x4] sm:$0xf]
        %v215 = vld [vmem:[%s1 + $0x8] sm:$0xf]
        %v216 = vld [vmem:[%s1 + $0xc] sm:$0xf]
        %v217 = vld [vmem:[%s1 + $0x10] sm:$0xf]
        %v218 = vld [vmem:[%s1 + $0x14] sm:$0xf]
        %v219 = vld [vmem:[%s1 + $0x18] sm:$0xf]
        %v220 = vld [vmem:[%s1 + $0x1c] sm:$0xf]
        %v221 = vld [vmem:[%s1 + $0x20] sm:$0xf]
        %v222 = vld [vmem:[%s1 + $0x24] sm:$0xf]
        %v223 = vld [vmem:[%s1 + $0x28] sm:$0xf]
        %v224 = vld [vmem:[%s1 + $0x2c] sm:$0xf]
        %v225 = vld [vmem:[%s1 + $0x30] sm:$0xf]
        %v226 = vld [vmem:[%s1 + $0x34] sm:$0xf]
        %v227 = vld [vmem:[%s1 + $0x38] sm:$0xf]
        %v228 = vld [vmem:[%s1 + $0x3c] sm:$0xf]
        %s229 = scalar_lea.vmem %s1, 64
        %v230 = vld [vmem:[%s229] sm:$0xf]
        %v231 = vld [vmem:[%s229 + $0x4] sm:$0xf]
        %v232 = vld [vmem:[%s229 + $0x8] sm:$0xf]
        %v233 = vld [vmem:[%s229 + $0xc] sm:$0xf]
        %v234 = vld [vmem:[%s229 + $0x10] sm:$0xf]
        %v235 = vld [vmem:[%s229 + $0x14] sm:$0xf]
        %v236 = vld [vmem:[%s229 + $0x18] sm:$0xf]
        %v237 = vld [vmem:[%s229 + $0x1c] sm:$0xf]
        %v238 = vld [vmem:[%s229 + $0x20] sm:$0xf]
        %v239 = vld [vmem:[%s229 + $0x24] sm:$0xf]
        %v240 = vld [vmem:[%s229 + $0x28] sm:$0xf]
        %v241 = vld [vmem:[%s229 + $0x2c] sm:$0xf]
        %v242 = vld [vmem:[%s229 + $0x30] sm:$0xf]
        %v243 = vld [vmem:[%s229 + $0x34] sm:$0xf]
        %v244 = vld [vmem:[%s229 + $0x38] sm:$0xf]
        %v245 = vld [vmem:[%s229 + $0x3c] sm:$0xf]
        %v247 = vunpack.c.l.b16 %v208
        %v248 = vpack.c.b16 %v247, %v247
        %v250 = vshrl.u32 %v248, 16
        %v252 = vshll.u32 %v248, 16
        %v254 = vrot.slane %v252, 1
        %v255 = vor.u32 %v250, %v254
        %v273 = vunpack.c.l.b16 %v230
        %v274 = vunpack.c.l.b16 %v231
        %v275 = vunpack.c.l.b16 %v232
        %v276 = vunpack.c.l.b16 %v233
        %v277 = vunpack.c.l.b16 %v234
        %v278 = vunpack.c.l.b16 %v235
        %v279 = vunpack.c.l.b16 %v236
        %v280 = vunpack.c.l.b16 %v237
        %v281 = vunpack.c.l.b16 %v238
        %v282 = vunpack.c.l.b16 %v239
        %v283 = vunpack.c.l.b16 %v240
        %v284 = vunpack.c.l.b16 %v241
        %v285 = vunpack.c.l.b16 %v242
        %v286 = vunpack.c.l.b16 %v243
        %v287 = vunpack.c.l.b16 %v244
        %v288 = vunpack.c.l.b16 %v245
        %v289 = vpack.c.b16 %v274, %v273
        %v290 = vpack.c.b16 %v276, %v275
        %v291 = vpack.c.b16 %v278, %v277
        %v292 = vpack.c.b16 %v280, %v279
        %v293 = vpack.c.b16 %v282, %v281
        %v294 = vpack.c.b16 %v284, %v283
        %v295 = vpack.c.b16 %v286, %v285
        %v296 = vpack.c.b16 %v288, %v287
        %305 = vmatprep.subr.bf16.mxu0 0
        %306 = vmatpush1.bf16.msra.mxu0 %v289
        %307 = vmatprep.subr.bf16.mxu0 0
        %308 = vmatpush1.bf16.msra.mxu0 %v290
        %309 = vmatprep.subr.bf16.mxu0 0
        %310 = vmatpush1.bf16.msra.mxu0 %v291
        %311 = vmatprep.subr.bf16.mxu0 0
        %312 = vmatpush1.bf16.msra.mxu0 %v292
        %313 = vmatprep.subr.bf16.mxu0 0
        %314 = vmatpush1.bf16.msra.mxu0 %v293
        %315 = vmatprep.subr.bf16.mxu0 0
        %316 = vmatpush1.bf16.msra.mxu0 %v294
        %317 = vmatprep.subr.bf16.mxu0 0
        %318 = vmatpush1.bf16.msra.mxu0 %v295
        %319 = vmatprep.subr.bf16.mxu0 0
        %320 = vmatpush1.bf16.msra.mxu0 %v296
        %321 = vmatprep.subr.bf16.mxu0 0
        %322 = vmatpush1.bf16.msra.mxu0 0
        %323 = vmatprep.subr.bf16.mxu0 0
        %324 = vmatpush1.bf16.msra.mxu0 0
        %325 = vmatprep.subr.bf16.mxu0 0
        %326 = vmatpush1.bf16.msra.mxu0 0
        %327 = vmatprep.subr.bf16.mxu0 0
        %328 = vmatpush1.bf16.msra.mxu0 0
        %329 = vmatprep.subr.bf16.mxu0 0
        %330 = vmatpush1.bf16.msra.mxu0 0
        %331 = vmatprep.subr.bf16.mxu0 0
        %332 = vmatpush1.bf16.msra.mxu0 0
        %333 = vmatprep.subr.bf16.mxu0 0
        %334 = vmatpush1.bf16.msra.mxu0 0
        %335 = vmatprep.subr.bf16.mxu0 0
        %336 = vmatpush1.bf16.msra.mxu0 0
        %337 = vmatprep.mubr.bf16.mxu0 0
        %338 = vmatmul.mubr.bf16.gmra.mrb[0].mxu0 %v255
        %v339 = vpop.f32.mrb[0].mxu0
        %v340 = vadd.f32 0.0, %v339
        %v341 = vpop.f32.mrb[0].mxu0
        %v342 = vpop.f32.mrb[0].mxu0
        %v343 = vpop.f32.mrb[0].mxu0
        %344 = vdwg.mxu0
        %v361 = vunpack.c.l.b16 %v213
        %v362 = vunpack.c.l.b16 %v214
        %v363 = vunpack.c.l.b16 %v215
        %v364 = vunpack.c.l.b16 %v216
        %v365 = vunpack.c.l.b16 %v217
        %v366 = vunpack.c.l.b16 %v218
        %v367 = vunpack.c.l.b16 %v219
        %v368 = vunpack.c.l.b16 %v220
        %v369 = vunpack.c.l.b16 %v221
        %v370 = vunpack.c.l.b16 %v222
        %v371 = vunpack.c.l.b16 %v223
        %v372 = vunpack.c.l.b16 %v224
        %v373 = vunpack.c.l.b16 %v225
        %v374 = vunpack.c.l.b16 %v226
        %v375 = vunpack.c.l.b16 %v227
        %v376 = vunpack.c.l.b16 %v228
        %v377 = vpack.c.b16 %v362, %v361
        %v378 = vpack.c.b16 %v364, %v363
        %v379 = vpack.c.b16 %v366, %v365
        %v380 = vpack.c.b16 %v368, %v367
        %v381 = vpack.c.b16 %v370, %v369
        %v382 = vpack.c.b16 %v372, %v371
        %v383 = vpack.c.b16 %v374, %v373
        %v384 = vpack.c.b16 %v376, %v375
        %393 = vmatprep.subr.bf16.mxu0 0
        %394 = vmatpush1.bf16.msra.mxu0 %v377
        %395 = vmatprep.subr.bf16.mxu0 0
        %396 = vmatpush1.bf16.msra.mxu0 %v378
        %397 = vmatprep.subr.bf16.mxu0 0
        %398 = vmatpush1.bf16.msra.mxu0 %v379
        %399 = vmatprep.subr.bf16.mxu0 0
        %400 = vmatpush1.bf16.msra.mxu0 %v380
        %401 = vmatprep.subr.bf16.mxu0 0
        %402 = vmatpush1.bf16.msra.mxu0 %v381
        %403 = vmatprep.subr.bf16.mxu0 0
        %404 = vmatpush1.bf16.msra.mxu0 %v382
        %405 = vmatprep.subr.bf16.mxu0 0
        %406 = vmatpush1.bf16.msra.mxu0 %v383
        %407 = vmatprep.subr.bf16.mxu0 0
        %408 = vmatpush1.bf16.msra.mxu0 %v384
        %409 = vmatprep.subr.bf16.mxu0 0
        %410 = vmatpush1.bf16.msra.mxu0 0
        %411 = vmatprep.subr.bf16.mxu0 0
        %412 = vmatpush1.bf16.msra.mxu0 0
        %413 = vmatprep.subr.bf16.mxu0 0
        %414 = vmatpush1.bf16.msra.mxu0 0
        %415 = vmatprep.subr.bf16.mxu0 0
        %416 = vmatpush1.bf16.msra.mxu0 0
        %417 = vmatprep.subr.bf16.mxu0 0
        %418 = vmatpush1.bf16.msra.mxu0 0
        %419 = vmatprep.subr.bf16.mxu0 0
        %420 = vmatpush1.bf16.msra.mxu0 0
        %421 = vmatprep.subr.bf16.mxu0 0
        %422 = vmatpush1.bf16.msra.mxu0 0
        %423 = vmatprep.subr.bf16.mxu0 0
        %424 = vmatpush1.bf16.msra.mxu0 0
        %425 = vmatprep.mubr.bf16.mxu0 0
        %426 = vmatmul.mubr.bf16.gmra.mrb[0].mxu0 %v208
        %v427 = vpop.f32.mrb[0].mxu0
        %v428 = vadd.f32 %v340, %v427
        %v429 = vpop.f32.mrb[0].mxu0
        %v430 = vpop.f32.mrb[0].mxu0
        %v431 = vpop.f32.mrb[0].mxu0
        %432 = vdwg.mxu0
        %v434 = vunpack.c.l.b16 %v212
        %v435 = vpack.c.b16 %v434, %v434
        %v437 = vshrl.u32 %v435, 16
        %v439 = vshll.u32 %v435, 16
        %v441 = vrot.slane %v439, 1
        %v442 = vor.u32 %v437, %v441
        %444 = vmatprep.subr.bf16.mxu0 0
        %445 = vmatpush1.bf16.msra.mxu0 %v289
        %446 = vmatprep.subr.bf16.mxu0 0
        %447 = vmatpush1.bf16.msra.mxu0 %v290
        %448 = vmatprep.subr.bf16.mxu0 0
        %449 = vmatpush1.bf16.msra.mxu0 %v291
        %450 = vmatprep.subr.bf16.mxu0 0
        %451 = vmatpush1.bf16.msra.mxu0 %v292
        %452 = vmatprep.subr.bf16.mxu0 0
        %453 = vmatpush1.bf16.msra.mxu0 %v293
        %454 = vmatprep.subr.bf16.mxu0 0
        %455 = vmatpush1.bf16.msra.mxu0 %v294
        %456 = vmatprep.subr.bf16.mxu0 0
        %457 = vmatpush1.bf16.msra.mxu0 %v295
        %458 = vmatprep.subr.bf16.mxu0 0
        %459 = vmatpush1.bf16.msra.mxu0 %v296
        %460 = vmatprep.subr.bf16.mxu0 0
        %461 = vmatpush1.bf16.msra.mxu0 0
        %462 = vmatprep.subr.bf16.mxu0 0
        %463 = vmatpush1.bf16.msra.mxu0 0
        %464 = vmatprep.subr.bf16.mxu0 0
        %465 = vmatpush1.bf16.msra.mxu0 0
        %466 = vmatprep.subr.bf16.mxu0 0
        %467 = vmatpush1.bf16.msra.mxu0 0
        %468 = vmatprep.subr.bf16.mxu0 0
        %469 = vmatpush1.bf16.msra.mxu0 0
        %470 = vmatprep.subr.bf16.mxu0 0
        %471 = vmatpush1.bf16.msra.mxu0 0
        %472 = vmatprep.subr.bf16.mxu0 0
        %473 = vmatpush1.bf16.msra.mxu0 0
        %474 = vmatprep.subr.bf16.mxu0 0
        %475 = vmatpush1.bf16.msra.mxu0 0
        %476 = vmatprep.mubr.bf16.mxu0 0
        %477 = vmatmul.mubr.bf16.gmra.mrb[0].mxu0 %v442
        %v478 = vpop.f32.mrb[0].mxu0
        %v479 = vadd.f32 0.0, %v478
        %v480 = vpop.f32.mrb[0].mxu0
        %v481 = vpop.f32.mrb[0].mxu0
        %v482 = vpop.f32.mrb[0].mxu0
        %483 = vdwg.mxu0
        %484 = vmatprep.subr.bf16.mxu0 0
        %485 = vmatpush1.bf16.msra.mxu0 %v377
        %486 = vmatprep.subr.bf16.mxu0 0
        %487 = vmatpush1.bf16.msra.mxu0 %v378
        %488 = vmatprep.subr.bf16.mxu0 0
        %489 = vmatpush1.bf16.msra.mxu0 %v379
        %490 = vmatprep.subr.bf16.mxu0 0
        %491 = vmatpush1.bf16.msra.mxu0 %v380
        %492 = vmatprep.subr.bf16.mxu0 0
        %493 = vmatpush1.bf16.msra.mxu0 %v381
        %494 = vmatprep.subr.bf16.mxu0 0
        %495 = vmatpush1.bf16.msra.mxu0 %v382
        %496 = vmatprep.subr.bf16.mxu0 0
        %497 = vmatpush1.bf16.msra.mxu0 %v383
        %498 = vmatprep.subr.bf16.mxu0 0
        %499 = vmatpush1.bf16.msra.mxu0 %v384
        %500 = vmatprep.subr.bf16.mxu0 0
        %501 = vmatpush1.bf16.msra.mxu0 0
        %502 = vmatprep.subr.bf16.mxu0 0
        %503 = vmatpush1.bf16.msra.mxu0 0
        %504 = vmatprep.subr.bf16.mxu0 0
        %505 = vmatpush1.bf16.msra.mxu0 0
        %506 = vmatprep.subr.bf16.mxu0 0
        %507 = vmatpush1.bf16.msra.mxu0 0
        %508 = vmatprep.subr.bf16.mxu0 0
        %509 = vmatpush1.bf16.msra.mxu0 0
        %510 = vmatprep.subr.bf16.mxu0 0
        %511 = vmatpush1.bf16.msra.mxu0 0
        %512 = vmatprep.subr.bf16.mxu0 0
        %513 = vmatpush1.bf16.msra.mxu0 0
        %514 = vmatprep.subr.bf16.mxu0 0
        %515 = vmatpush1.bf16.msra.mxu0 0
        %516 = vmatprep.mubr.bf16.mxu0 0
        %517 = vmatmul.mubr.bf16.gmra.mrb[0].mxu0 %v212
        %v518 = vpop.f32.mrb[0].mxu0
        %v519 = vadd.f32 %v479, %v518
        %v520 = vpop.f32.mrb[0].mxu0
        %v521 = vpop.f32.mrb[0].mxu0
        %v522 = vpop.f32.mrb[0].mxu0
        %523 = vdwg.mxu0
        %s524 = scalar_lea.vmem %s1, 128
        %v525 = vld [vmem:[%s524] sm:$0xf]
        %v526 = vld [vmem:[%s524 + $0x4] sm:$0xf]
        %v527 = vld [vmem:[%s524 + $0x8] sm:$0xf]
        %v528 = vld [vmem:[%s524 + $0xc] sm:$0xf]
        %v529 = vld [vmem:[%s524 + $0x10] sm:$0xf]
        %v530 = vld [vmem:[%s524 + $0x14] sm:$0xf]
        %v531 = vld [vmem:[%s524 + $0x18] sm:$0xf]
        %v532 = vld [vmem:[%s524 + $0x1c] sm:$0xf]
        %v533 = vld [vmem:[%s524 + $0x20] sm:$0xf]
        %v534 = vld [vmem:[%s524 + $0x24] sm:$0xf]
        %v535 = vld [vmem:[%s524 + $0x28] sm:$0xf]
        %v536 = vld [vmem:[%s524 + $0x2c] sm:$0xf]
        %v537 = vld [vmem:[%s524 + $0x30] sm:$0xf]
        %v538 = vld [vmem:[%s524 + $0x34] sm:$0xf]
        %v539 = vld [vmem:[%s524 + $0x38] sm:$0xf]
        %v540 = vld [vmem:[%s524 + $0x3c] sm:$0xf]
        %v541 = vrot.slane %v248, 1
        %v559 = vunpack.c.l.b16 %v525
        %v560 = vunpack.c.l.b16 %v526
        %v561 = vunpack.c.l.b16 %v527
        %v562 = vunpack.c.l.b16 %v528
        %v563 = vunpack.c.l.b16 %v529
        %v564 = vunpack.c.l.b16 %v530
        %v565 = vunpack.c.l.b16 %v531
        %v566 = vunpack.c.l.b16 %v532
        %v567 = vunpack.c.l.b16 %v533
        %v568 = vunpack.c.l.b16 %v534
        %v569 = vunpack.c.l.b16 %v535
        %v570 = vunpack.c.l.b16 %v536
        %v571 = vunpack.c.l.b16 %v537
        %v572 = vunpack.c.l.b16 %v538
        %v573 = vunpack.c.l.b16 %v539
        %v574 = vunpack.c.l.b16 %v540
        %v575 = vpack.c.b16 %v560, %v559
        %v576 = vpack.c.b16 %v562, %v561
        %v577 = vpack.c.b16 %v564, %v563
        %v578 = vpack.c.b16 %v566, %v565
        %v579 = vpack.c.b16 %v568, %v567
        %v580 = vpack.c.b16 %v570, %v569
        %v581 = vpack.c.b16 %v572, %v571
        %v582 = vpack.c.b16 %v574, %v573
        %591 = vmatprep.subr.bf16.mxu0 0
        %592 = vmatpush1.bf16.msra.mxu0 %v575
        %593 = vmatprep.subr.bf16.mxu0 0
        %594 = vmatpush1.bf16.msra.mxu0 %v576
        %595 = vmatprep.subr.bf16.mxu0 0
        %596 = vmatpush1.bf16.msra.mxu0 %v577
        %597 = vmatprep.subr.bf16.mxu0 0
        %598 = vmatpush1.bf16.msra.mxu0 %v578
        %599 = vmatprep.subr.bf16.mxu0 0
        %600 = vmatpush1.bf16.msra.mxu0 %v579
        %601 = vmatprep.subr.bf16.mxu0 0
        %602 = vmatpush1.bf16.msra.mxu0 %v580
        %603 = vmatprep.subr.bf16.mxu0 0
        %604 = vmatpush1.bf16.msra.mxu0 %v581
        %605 = vmatprep.subr.bf16.mxu0 0
        %606 = vmatpush1.bf16.msra.mxu0 %v582
        %607 = vmatprep.subr.bf16.mxu0 0
        %608 = vmatpush1.bf16.msra.mxu0 0
        %609 = vmatprep.subr.bf16.mxu0 0
        %610 = vmatpush1.bf16.msra.mxu0 0
        %611 = vmatprep.subr.bf16.mxu0 0
        %612 = vmatpush1.bf16.msra.mxu0 0
        %613 = vmatprep.subr.bf16.mxu0 0
        %614 = vmatpush1.bf16.msra.mxu0 0
        %615 = vmatprep.subr.bf16.mxu0 0
        %616 = vmatpush1.bf16.msra.mxu0 0
        %617 = vmatprep.subr.bf16.mxu0 0
        %618 = vmatpush1.bf16.msra.mxu0 0
        %619 = vmatprep.subr.bf16.mxu0 0
        %620 = vmatpush1.bf16.msra.mxu0 0
        %621 = vmatprep.subr.bf16.mxu0 0
        %622 = vmatpush1.bf16.msra.mxu0 0
        %623 = vmatprep.mubr.bf16.mxu0 0
        %624 = vmatmul.mubr.bf16.gmra.mrb[0].mxu0 %v541
        %v625 = vpop.f32.mrb[0].mxu0
        %v626 = vadd.f32 0.0, %v625
        %v627 = vpop.f32.mrb[0].mxu0
        %v628 = vpop.f32.mrb[0].mxu0
        %v629 = vpop.f32.mrb[0].mxu0
        %630 = vdwg.mxu0
        %v631 = vadd.f32 %v428, %v626
        %v632 = vrot.slane %v435, 1
        %634 = vmatprep.subr.bf16.mxu0 0
        %635 = vmatpush1.bf16.msra.mxu0 %v575
        %636 = vmatprep.subr.bf16.mxu0 0
        %637 = vmatpush1.bf16.msra.mxu0 %v576
        %638 = vmatprep.subr.bf16.mxu0 0
        %639 = vmatpush1.bf16.msra.mxu0 %v577
        %640 = vmatprep.subr.bf16.mxu0 0
        %641 = vmatpush1.bf16.msra.mxu0 %v578
        %642 = vmatprep.subr.bf16.mxu0 0
        %643 = vmatpush1.bf16.msra.mxu0 %v579
        %644 = vmatprep.subr.bf16.mxu0 0
        %645 = vmatpush1.bf16.msra.mxu0 %v580
        %646 = vmatprep.subr.bf16.mxu0 0
        %647 = vmatpush1.bf16.msra.mxu0 %v581
        %648 = vmatprep.subr.bf16.mxu0 0
        %649 = vmatpush1.bf16.msra.mxu0 %v582
        %650 = vmatprep.subr.bf16.mxu0 0
        %651 = vmatpush1.bf16.msra.mxu0 0
        %652 = vmatprep.subr.bf16.mxu0 0
        %653 = vmatpush1.bf16.msra.mxu0 0
        %654 = vmatprep.subr.bf16.mxu0 0
        %655 = vmatpush1.bf16.msra.mxu0 0
        %656 = vmatprep.subr.bf16.mxu0 0
        %657 = vmatpush1.bf16.msra.mxu0 0
        %658 = vmatprep.subr.bf16.mxu0 0
        %659 = vmatpush1.bf16.msra.mxu0 0
        %660 = vmatprep.subr.bf16.mxu0 0
        %661 = vmatpush1.bf16.msra.mxu0 0
        %662 = vmatprep.subr.bf16.mxu0 0
        %663 = vmatpush1.bf16.msra.mxu0 0
        %664 = vmatprep.subr.bf16.mxu0 0
        %665 = vmatpush1.bf16.msra.mxu0 0
        %666 = vmatprep.mubr.bf16.mxu0 0
        %667 = vmatmul.mubr.bf16.gmra.mrb[0].mxu0 %v632
        %v668 = vpop.f32.mrb[0].mxu0
        %v669 = vadd.f32 0.0, %v668
        %v670 = vpop.f32.mrb[0].mxu0
        %v671 = vpop.f32.mrb[0].mxu0
        %v672 = vpop.f32.mrb[0].mxu0
        %673 = vdwg.mxu0
        %v674 = vadd.f32 %v519, %v669
        %s675 = sadd.s32 %s205, 2
        %s676 = smul.addr %s675, 4
        %s677 = scalar_lea.vmem %s191, %s676
        %v678 = vld [vmem:[%s677] sm:$0x7]
        %s679 = scalar_lea.vmem %s1, 192
        %v680 = vld [vmem:[%s679] sm:$0xf]
        %v681 = vld [vmem:[%s679 + $0x4] sm:$0xf]
        %v682 = vld [vmem:[%s679 + $0x8] sm:$0xf]
        %v683 = vld [vmem:[%s679 + $0xc] sm:$0xf]
        %v684 = vld [vmem:[%s679 + $0x10] sm:$0xf]
        %v685 = vld [vmem:[%s679 + $0x14] sm:$0xf]
        %v686 = vld [vmem:[%s679 + $0x18] sm:$0xf]
        %v687 = vld [vmem:[%s679 + $0x1c] sm:$0xf]
        %v688 = vld [vmem:[%s679 + $0x20] sm:$0xf]
        %v689 = vld [vmem:[%s679 + $0x24] sm:$0xf]
        %v690 = vld [vmem:[%s679 + $0x28] sm:$0xf]
        %v691 = vld [vmem:[%s679 + $0x2c] sm:$0xf]
        %v692 = vld [vmem:[%s679 + $0x30] sm:$0xf]
        %v693 = vld [vmem:[%s679 + $0x34] sm:$0xf]
        %v694 = vld [vmem:[%s679 + $0x38] sm:$0xf]
        %v695 = vld [vmem:[%s679 + $0x3c] sm:$0xf]
        %v712 = vunpack.c.l.b16 %v680
        %v713 = vunpack.c.l.b16 %v681
        %v714 = vunpack.c.l.b16 %v682
        %v715 = vunpack.c.l.b16 %v683
        %v716 = vunpack.c.l.b16 %v684
        %v717 = vunpack.c.l.b16 %v685
        %v718 = vunpack.c.l.b16 %v686
        %v719 = vunpack.c.l.b16 %v687
        %v720 = vunpack.c.l.b16 %v688
        %v721 = vunpack.c.l.b16 %v689
        %v722 = vunpack.c.l.b16 %v690
        %v723 = vunpack.c.l.b16 %v691
        %v724 = vunpack.c.l.b16 %v692
        %v725 = vunpack.c.l.b16 %v693
        %v726 = vunpack.c.l.b16 %v694
        %v727 = vunpack.c.l.b16 %v695
        %v728 = vpack.c.b16 %v713, %v712
        %v729 = vpack.c.b16 %v715, %v714
        %v730 = vpack.c.b16 %v717, %v716
        %v731 = vpack.c.b16 %v719, %v718
        %v732 = vpack.c.b16 %v721, %v720
        %v733 = vpack.c.b16 %v723, %v722
        %v734 = vpack.c.b16 %v725, %v724
        %v735 = vpack.c.b16 %v727, %v726
        %744 = vmatprep.subr.bf16.mxu0 0
        %745 = vmatpush1.bf16.msra.mxu0 %v728
        %746 = vmatprep.subr.bf16.mxu0 0
        %747 = vmatpush1.bf16.msra.mxu0 %v729
        %748 = vmatprep.subr.bf16.mxu0 0
        %749 = vmatpush1.bf16.msra.mxu0 %v730
        %750 = vmatprep.subr.bf16.mxu0 0
        %751 = vmatpush1.bf16.msra.mxu0 %v731
        %752 = vmatprep.subr.bf16.mxu0 0
        %753 = vmatpush1.bf16.msra.mxu0 %v732
        %754 = vmatprep.subr.bf16.mxu0 0
        %755 = vmatpush1.bf16.msra.mxu0 %v733
        %756 = vmatprep.subr.bf16.mxu0 0
        %757 = vmatpush1.bf16.msra.mxu0 %v734
        %758 = vmatprep.subr.bf16.mxu0 0
        %759 = vmatpush1.bf16.msra.mxu0 %v735
        %760 = vmatprep.subr.bf16.mxu0 0
        %761 = vmatpush1.bf16.msra.mxu0 0
        %762 = vmatprep.subr.bf16.mxu0 0
        %763 = vmatpush1.bf16.msra.mxu0 0
        %764 = vmatprep.subr.bf16.mxu0 0
        %765 = vmatpush1.bf16.msra.mxu0 0
        %766 = vmatprep.subr.bf16.mxu0 0
        %767 = vmatpush1.bf16.msra.mxu0 0
        %768 = vmatprep.subr.bf16.mxu0 0
        %769 = vmatpush1.bf16.msra.mxu0 0
        %770 = vmatprep.subr.bf16.mxu0 0
        %771 = vmatpush1.bf16.msra.mxu0 0
        %772 = vmatprep.subr.bf16.mxu0 0
        %773 = vmatpush1.bf16.msra.mxu0 0
        %774 = vmatprep.subr.bf16.mxu0 0
        %775 = vmatpush1.bf16.msra.mxu0 0
        %776 = vmatprep.mubr.bf16.mxu0 0
        %777 = vmatmul.mubr.bf16.gmra.mrb[0].mxu0 %v212
        %v778 = vpop.f32.mrb[0].mxu0
        %v779 = vadd.f32 0.0, %v778
        %v780 = vpop.f32.mrb[0].mxu0
        %v781 = vpop.f32.mrb[0].mxu0
        %v782 = vpop.f32.mrb[0].mxu0
        %783 = vdwg.mxu0
        %v784 = vadd.f32 %v631, %v779
        %785 = vmatprep.subr.bf16.mxu0 0
        %786 = vmatpush1.bf16.msra.mxu0 %v728
        %787 = vmatprep.subr.bf16.mxu0 0
        %788 = vmatpush1.bf16.msra.mxu0 %v729
        %789 = vmatprep.subr.bf16.mxu0 0
        %790 = vmatpush1.bf16.msra.mxu0 %v730
        %791 = vmatprep.subr.bf16.mxu0 0
        %792 = vmatpush1.bf16.msra.mxu0 %v731
        %793 = vmatprep.subr.bf16.mxu0 0
        %794 = vmatpush1.bf16.msra.mxu0 %v732
        %795 = vmatprep.subr.bf16.mxu0 0
        %796 = vmatpush1.bf16.msra.mxu0 %v733
        %797 = vmatprep.subr.bf16.mxu0 0
        %798 = vmatpush1.bf16.msra.mxu0 %v734
        %799 = vmatprep.subr.bf16.mxu0 0
        %800 = vmatpush1.bf16.msra.mxu0 %v735
        %801 = vmatprep.subr.bf16.mxu0 0
        %802 = vmatpush1.bf16.msra.mxu0 0
        %803 = vmatprep.subr.bf16.mxu0 0
        %804 = vmatpush1.bf16.msra.mxu0 0
        %805 = vmatprep.subr.bf16.mxu0 0
        %806 = vmatpush1.bf16.msra.mxu0 0
        %807 = vmatprep.subr.bf16.mxu0 0
        %808 = vmatpush1.bf16.msra.mxu0 0
        %809 = vmatprep.subr.bf16.mxu0 0
        %810 = vmatpush1.bf16.msra.mxu0 0
        %811 = vmatprep.subr.bf16.mxu0 0
        %812 = vmatpush1.bf16.msra.mxu0 0
        %813 = vmatprep.subr.bf16.mxu0 0
        %814 = vmatpush1.bf16.msra.mxu0 0
        %815 = vmatprep.subr.bf16.mxu0 0
        %816 = vmatpush1.bf16.msra.mxu0 0
        %817 = vmatprep.mubr.bf16.mxu0 0
        %818 = vmatmul.mubr.bf16.gmra.mrb[0].mxu0 %v678
        %v819 = vpop.f32.mrb[0].mxu0
        %v820 = vadd.f32 0.0, %v819
        %v821 = vpop.f32.mrb[0].mxu0
        %v822 = vpop.f32.mrb[0].mxu0
        %v823 = vpop.f32.mrb[0].mxu0
        %824 = vdwg.mxu0
        %v825 = vadd.f32 %v674, %v820
        %s826 = scalar_lea.vmem %s1, 256
        %v827 = vld [vmem:[%s826] sm:$0xf]
        %v828 = vld [vmem:[%s826 + $0x4] sm:$0xf]
        %v829 = vld [vmem:[%s826 + $0x8] sm:$0xf]
        %v830 = vld [vmem:[%s826 + $0xc] sm:$0xf]
        %v831 = vld [vmem:[%s826 + $0x10] sm:$0xf]
        %v832 = vld [vmem:[%s826 + $0x14] sm:$0xf]
        %v833 = vld [vmem:[%s826 + $0x18] sm:$0xf]
        %v834 = vld [vmem:[%s826 + $0x1c] sm:$0xf]
        %v835 = vld [vmem:[%s826 + $0x20] sm:$0xf]
        %v836 = vld [vmem:[%s826 + $0x24] sm:$0xf]
        %v837 = vld [vmem:[%s826 + $0x28] sm:$0xf]
        %v838 = vld [vmem:[%s826 + $0x2c] sm:$0xf]
        %v839 = vld [vmem:[%s826 + $0x30] sm:$0xf]
        %v840 = vld [vmem:[%s826 + $0x34] sm:$0xf]
        %v841 = vld [vmem:[%s826 + $0x38] sm:$0xf]
        %v842 = vld [vmem:[%s826 + $0x3c] sm:$0xf]
        %v859 = vunpack.c.l.b16 %v827
        %v860 = vunpack.c.l.b16 %v828
        %v861 = vunpack.c.l.b16 %v829
        %v862 = vunpack.c.l.b16 %v830
        %v863 = vunpack.c.l.b16 %v831
        %v864 = vunpack.c.l.b16 %v832
        %v865 = vunpack.c.l.b16 %v833
        %v866 = vunpack.c.l.b16 %v834
        %v867 = vunpack.c.l.b16 %v835
        %v868 = vunpack.c.l.b16 %v836
        %v869 = vunpack.c.l.b16 %v837
        %v870 = vunpack.c.l.b16 %v838
        %v871 = vunpack.c.l.b16 %v839
        %v872 = vunpack.c.l.b16 %v840
        %v873 = vunpack.c.l.b16 %v841
        %v874 = vunpack.c.l.b16 %v842
        %v875 = vpack.c.b16 %v860, %v859
        %v876 = vpack.c.b16 %v862, %v861
        %v877 = vpack.c.b16 %v864, %v863
        %v878 = vpack.c.b16 %v866, %v865
        %v879 = vpack.c.b16 %v868, %v867
        %v880 = vpack.c.b16 %v870, %v869
        %v881 = vpack.c.b16 %v872, %v871
        %v882 = vpack.c.b16 %v874, %v873
        %891 = vmatprep.subr.bf16.mxu0 0
        %892 = vmatpush1.bf16.msra.mxu0 %v875
        %893 = vmatprep.subr.bf16.mxu0 0
        %894 = vmatpush1.bf16.msra.mxu0 %v876
        %895 = vmatprep.subr.bf16.mxu0 0
        %896 = vmatpush1.bf16.msra.mxu0 %v877
        %897 = vmatprep.subr.bf16.mxu0 0
        %898 = vmatpush1.bf16.msra.mxu0 %v878
        %899 = vmatprep.subr.bf16.mxu0 0
        %900 = vmatpush1.bf16.msra.mxu0 %v879
        %901 = vmatprep.subr.bf16.mxu0 0
        %902 = vmatpush1.bf16.msra.mxu0 %v880
        %903 = vmatprep.subr.bf16.mxu0 0
        %904 = vmatpush1.bf16.msra.mxu0 %v881
        %905 = vmatprep.subr.bf16.mxu0 0
        %906 = vmatpush1.bf16.msra.mxu0 %v882
        %907 = vmatprep.subr.bf16.mxu0 0
        %908 = vmatpush1.bf16.msra.mxu0 0
        %909 = vmatprep.subr.bf16.mxu0 0
        %910 = vmatpush1.bf16.msra.mxu0 0
        %911 = vmatprep.subr.bf16.mxu0 0
        %912 = vmatpush1.bf16.msra.mxu0 0
        %913 = vmatprep.subr.bf16.mxu0 0
        %914 = vmatpush1.bf16.msra.mxu0 0
        %915 = vmatprep.subr.bf16.mxu0 0
        %916 = vmatpush1.bf16.msra.mxu0 0
        %917 = vmatprep.subr.bf16.mxu0 0
        %918 = vmatpush1.bf16.msra.mxu0 0
        %919 = vmatprep.subr.bf16.mxu0 0
        %920 = vmatpush1.bf16.msra.mxu0 0
        %921 = vmatprep.subr.bf16.mxu0 0
        %922 = vmatpush1.bf16.msra.mxu0 0
        %923 = vmatprep.mubr.bf16.mxu0 0
        %924 = vmatmul.mubr.bf16.gmra.mrb[0].mxu0 %v442
        %v925 = vpop.f32.mrb[0].mxu0
        %v926 = vadd.f32 0.0, %v925
        %v927 = vpop.f32.mrb[0].mxu0
        %v928 = vpop.f32.mrb[0].mxu0
        %v929 = vpop.f32.mrb[0].mxu0
        %930 = vdwg.mxu0
        %v931 = vadd.f32 %v784, %v926
        %v933 = vunpack.c.l.b16 %v678
        %v934 = vpack.c.b16 %v933, %v933
        %v936 = vshrl.u32 %v934, 16
        %v938 = vshll.u32 %v934, 16
        %v940 = vrot.slane %v938, 1
        %v941 = vor.u32 %v936, %v940
        %943 = vmatprep.subr.bf16.mxu0 0
        %944 = vmatpush1.bf16.msra.mxu0 %v875
        %945 = vmatprep.subr.bf16.mxu0 0
        %946 = vmatpush1.bf16.msra.mxu0 %v876
        %947 = vmatprep.subr.bf16.mxu0 0
        %948 = vmatpush1.bf16.msra.mxu0 %v877
        %949 = vmatprep.subr.bf16.mxu0 0
        %950 = vmatpush1.bf16.msra.mxu0 %v878
        %951 = vmatprep.subr.bf16.mxu0 0
        %952 = vmatpush1.bf16.msra.mxu0 %v879
        %953 = vmatprep.subr.bf16.mxu0 0
        %954 = vmatpush1.bf16.msra.mxu0 %v880
        %955 = vmatprep.subr.bf16.mxu0 0
        %956 = vmatpush1.bf16.msra.mxu0 %v881
        %957 = vmatprep.subr.bf16.mxu0 0
        %958 = vmatpush1.bf16.msra.mxu0 %v882
        %959 = vmatprep.subr.bf16.mxu0 0
        %960 = vmatpush1.bf16.msra.mxu0 0
        %961 = vmatprep.subr.bf16.mxu0 0
        %962 = vmatpush1.bf16.msra.mxu0 0
        %963 = vmatprep.subr.bf16.mxu0 0
        %964 = vmatpush1.bf16.msra.mxu0 0
        %965 = vmatprep.subr.bf16.mxu0 0
        %966 = vmatpush1.bf16.msra.mxu0 0
        %967 = vmatprep.subr.bf16.mxu0 0
        %968 = vmatpush1.bf16.msra.mxu0 0
        %969 = vmatprep.subr.bf16.mxu0 0
        %970 = vmatpush1.bf16.msra.mxu0 0
        %971 = vmatprep.subr.bf16.mxu0 0
        %972 = vmatpush1.bf16.msra.mxu0 0
        %973 = vmatprep.subr.bf16.mxu0 0
        %974 = vmatpush1.bf16.msra.mxu0 0
        %975 = vmatprep.mubr.bf16.mxu0 0
        %976 = vmatmul.mubr.bf16.gmra.mrb[0].mxu0 %v941
        %v977 = vpop.f32.mrb[0].mxu0
        %v978 = vadd.f32 0.0, %v977
        %v979 = vpop.f32.mrb[0].mxu0
        %v980 = vpop.f32.mrb[0].mxu0
        %v981 = vpop.f32.mrb[0].mxu0
        %982 = vdwg.mxu0
        %v983 = vadd.f32 %v825, %v978
        %s984 = scalar_lea.vmem %s1, 320
        %v985 = vld [vmem:[%s984] sm:$0xf]
        %v986 = vld [vmem:[%s984 + $0x4] sm:$0xf]
        %v987 = vld [vmem:[%s984 + $0x8] sm:$0xf]
        %v988 = vld [vmem:[%s984 + $0xc] sm:$0xf]
        %v989 = vld [vmem:[%s984 + $0x10] sm:$0xf]
        %v990 = vld [vmem:[%s984 + $0x14] sm:$0xf]
        %v991 = vld [vmem:[%s984 + $0x18] sm:$0xf]
        %v992 = vld [vmem:[%s984 + $0x1c] sm:$0xf]
        %v993 = vld [vmem:[%s984 + $0x20] sm:$0xf]
        %v994 = vld [vmem:[%s984 + $0x24] sm:$0xf]
        %v995 = vld [vmem:[%s984 + $0x28] sm:$0xf]
        %v996 = vld [vmem:[%s984 + $0x2c] sm:$0xf]
        %v997 = vld [vmem:[%s984 + $0x30] sm:$0xf]
        %v998 = vld [vmem:[%s984 + $0x34] sm:$0xf]
        %v999 = vld [vmem:[%s984 + $0x38] sm:$0xf]
        %v1000 = vld [vmem:[%s984 + $0x3c] sm:$0xf]
        %v1017 = vunpack.c.l.b16 %v985
        %v1018 = vunpack.c.l.b16 %v986
        %v1019 = vunpack.c.l.b16 %v987
        %v1020 = vunpack.c.l.b16 %v988
        %v1021 = vunpack.c.l.b16 %v989
        %v1022 = vunpack.c.l.b16 %v990
        %v1023 = vunpack.c.l.b16 %v991
        %v1024 = vunpack.c.l.b16 %v992
        %v1025 = vunpack.c.l.b16 %v993
        %v1026 = vunpack.c.l.b16 %v994
        %v1027 = vunpack.c.l.b16 %v995
        %v1028 = vunpack.c.l.b16 %v996
        %v1029 = vunpack.c.l.b16 %v997
        %v1030 = vunpack.c.l.b16 %v998
        %v1031 = vunpack.c.l.b16 %v999
        %v1032 = vunpack.c.l.b16 %v1000
        %v1033 = vpack.c.b16 %v1018, %v1017
        %v1034 = vpack.c.b16 %v1020, %v1019
        %v1035 = vpack.c.b16 %v1022, %v1021
        %v1036 = vpack.c.b16 %v1024, %v1023
        %v1037 = vpack.c.b16 %v1026, %v1025
        %v1038 = vpack.c.b16 %v1028, %v1027
        %v1039 = vpack.c.b16 %v1030, %v1029
        %v1040 = vpack.c.b16 %v1032, %v1031
        %1049 = vmatprep.subr.bf16.mxu0 0
        %1050 = vmatpush1.bf16.msra.mxu0 %v1033
        %1051 = vmatprep.subr.bf16.mxu0 0
        %1052 = vmatpush1.bf16.msra.mxu0 %v1034
        %1053 = vmatprep.subr.bf16.mxu0 0
        %1054 = vmatpush1.bf16.msra.mxu0 %v1035
        %1055 = vmatprep.subr.bf16.mxu0 0
        %1056 = vmatpush1.bf16.msra.mxu0 %v1036
        %1057 = vmatprep.subr.bf16.mxu0 0
        %1058 = vmatpush1.bf16.msra.mxu0 %v1037
        %1059 = vmatprep.subr.bf16.mxu0 0
        %1060 = vmatpush1.bf16.msra.mxu0 %v1038
        %1061 = vmatprep.subr.bf16.mxu0 0
        %1062 = vmatpush1.bf16.msra.mxu0 %v1039
        %1063 = vmatprep.subr.bf16.mxu0 0
        %1064 = vmatpush1.bf16.msra.mxu0 %v1040
        %1065 = vmatprep.subr.bf16.mxu0 0
        %1066 = vmatpush1.bf16.msra.mxu0 0
        %1067 = vmatprep.subr.bf16.mxu0 0
        %1068 = vmatpush1.bf16.msra.mxu0 0
        %1069 = vmatprep.subr.bf16.mxu0 0
        %1070 = vmatpush1.bf16.msra.mxu0 0
        %1071 = vmatprep.subr.bf16.mxu0 0
        %1072 = vmatpush1.bf16.msra.mxu0 0
        %1073 = vmatprep.subr.bf16.mxu0 0
        %1074 = vmatpush1.bf16.msra.mxu0 0
        %1075 = vmatprep.subr.bf16.mxu0 0
        %1076 = vmatpush1.bf16.msra.mxu0 0
        %1077 = vmatprep.subr.bf16.mxu0 0
        %1078 = vmatpush1.bf16.msra.mxu0 0
        %1079 = vmatprep.subr.bf16.mxu0 0
        %1080 = vmatpush1.bf16.msra.mxu0 0
        %1081 = vmatprep.mubr.bf16.mxu0 0
        %1082 = vmatmul.mubr.bf16.gmra.mrb[0].mxu0 %v632
        %v1083 = vpop.f32.mrb[0].mxu0
        %v1084 = vadd.f32 0.0, %v1083
        %v1085 = vpop.f32.mrb[0].mxu0
        %v1086 = vpop.f32.mrb[0].mxu0
        %v1087 = vpop.f32.mrb[0].mxu0
        %1088 = vdwg.mxu0
        %v1089 = vadd.f32 %v931, %v1084
        %v1090 = vrot.slane %v934, 1
        %1092 = vmatprep.subr.bf16.mxu0 0
        %1093 = vmatpush1.bf16.msra.mxu0 %v1033
        %1094 = vmatprep.subr.bf16.mxu0 0
        %1095 = vmatpush1.bf16.msra.mxu0 %v1034
        %1096 = vmatprep.subr.bf16.mxu0 0
        %1097 = vmatpush1.bf16.msra.mxu0 %v1035
        %1098 = vmatprep.subr.bf16.mxu0 0
        %1099 = vmatpush1.bf16.msra.mxu0 %v1036
        %1100 = vmatprep.subr.bf16.mxu0 0
        %1101 = vmatpush1.bf16.msra.mxu0 %v1037
        %1102 = vmatprep.subr.bf16.mxu0 0
        %1103 = vmatpush1.bf16.msra.mxu0 %v1038
        %1104 = vmatprep.subr.bf16.mxu0 0
        %1105 = vmatpush1.bf16.msra.mxu0 %v1039
        %1106 = vmatprep.subr.bf16.mxu0 0
        %1107 = vmatpush1.bf16.msra.mxu0 %v1040
        %1108 = vmatprep.subr.bf16.mxu0 0
        %1109 = vmatpush1.bf16.msra.mxu0 0
        %1110 = vmatprep.subr.bf16.mxu0 0
        %1111 = vmatpush1.bf16.msra.mxu0 0
        %1112 = vmatprep.subr.bf16.mxu0 0
        %1113 = vmatpush1.bf16.msra.mxu0 0
        %1114 = vmatprep.subr.bf16.mxu0 0
        %1115 = vmatpush1.bf16.msra.mxu0 0
        %1116 = vmatprep.subr.bf16.mxu0 0
        %1117 = vmatpush1.bf16.msra.mxu0 0
        %1118 = vmatprep.subr.bf16.mxu0 0
        %1119 = vmatpush1.bf16.msra.mxu0 0
        %1120 = vmatprep.subr.bf16.mxu0 0
        %1121 = vmatpush1.bf16.msra.mxu0 0
        %1122 = vmatprep.subr.bf16.mxu0 0
        %1123 = vmatpush1.bf16.msra.mxu0 0
        %1124 = vmatprep.mubr.bf16.mxu0 0
        %1125 = vmatmul.mubr.bf16.gmra.mrb[0].mxu0 %v1090
        %v1126 = vpop.f32.mrb[0].mxu0
        %v1127 = vadd.f32 0.0, %v1126
        %v1128 = vpop.f32.mrb[0].mxu0
        %v1129 = vpop.f32.mrb[0].mxu0
        %v1130 = vpop.f32.mrb[0].mxu0
        %1131 = vdwg.mxu0
        %v1132 = vadd.f32 %v983, %v1127
        %s1133 = sadd.s32 %s205, 3
        %s1134 = smul.addr %s1133, 4
        %s1135 = scalar_lea.vmem %s191, %s1134
        %v1136 = vld [vmem:[%s1135] sm:$0x7]
        %s1137 = scalar_lea.vmem %s1, 384
        %v1138 = vld [vmem:[%s1137] sm:$0xf]
        %v1139 = vld [vmem:[%s1137 + $0x4] sm:$0xf]
        %v1140 = vld [vmem:[%s1137 + $0x8] sm:$0xf]
        %v1141 = vld [vmem:[%s1137 + $0xc] sm:$0xf]
        %v1142 = vld [vmem:[%s1137 + $0x10] sm:$0xf]
        %v1143 = vld [vmem:[%s1137 + $0x14] sm:$0xf]
        %v1144 = vld [vmem:[%s1137 + $0x18] sm:$0xf]
        %v1145 = vld [vmem:[%s1137 + $0x1c] sm:$0xf]
        %v1146 = vld [vmem:[%s1137 + $0x20] sm:$0xf]
        %v1147 = vld [vmem:[%s1137 + $0x24] sm:$0xf]
        %v1148 = vld [vmem:[%s1137 + $0x28] sm:$0xf]
        %v1149 = vld [vmem:[%s1137 + $0x2c] sm:$0xf]
        %v1150 = vld [vmem:[%s1137 + $0x30] sm:$0xf]
        %v1151 = vld [vmem:[%s1137 + $0x34] sm:$0xf]
        %v1152 = vld [vmem:[%s1137 + $0x38] sm:$0xf]
        %v1153 = vld [vmem:[%s1137 + $0x3c] sm:$0xf]
        %v1170 = vunpack.c.l.b16 %v1138
        %v1171 = vunpack.c.l.b16 %v1139
        %v1172 = vunpack.c.l.b16 %v1140
        %v1173 = vunpack.c.l.b16 %v1141
        %v1174 = vunpack.c.l.b16 %v1142
        %v1175 = vunpack.c.l.b16 %v1143
        %v1176 = vunpack.c.l.b16 %v1144
        %v1177 = vunpack.c.l.b16 %v1145
        %v1178 = vunpack.c.l.b16 %v1146
        %v1179 = vunpack.c.l.b16 %v1147
        %v1180 = vunpack.c.l.b16 %v1148
        %v1181 = vunpack.c.l.b16 %v1149
        %v1182 = vunpack.c.l.b16 %v1150
        %v1183 = vunpack.c.l.b16 %v1151
        %v1184 = vunpack.c.l.b16 %v1152
        %v1185 = vunpack.c.l.b16 %v1153
        %v1186 = vpack.c.b16 %v1171, %v1170
        %v1187 = vpack.c.b16 %v1173, %v1172
        %v1188 = vpack.c.b16 %v1175, %v1174
        %v1189 = vpack.c.b16 %v1177, %v1176
        %v1190 = vpack.c.b16 %v1179, %v1178
        %v1191 = vpack.c.b16 %v1181, %v1180
        %v1192 = vpack.c.b16 %v1183, %v1182
        %v1193 = vpack.c.b16 %v1185, %v1184
        %1202 = vmatprep.subr.bf16.mxu0 0
        %1203 = vmatpush1.bf16.msra.mxu0 %v1186
        %1204 = vmatprep.subr.bf16.mxu0 0
        %1205 = vmatpush1.bf16.msra.mxu0 %v1187
        %1206 = vmatprep.subr.bf16.mxu0 0
        %1207 = vmatpush1.bf16.msra.mxu0 %v1188
        %1208 = vmatprep.subr.bf16.mxu0 0
        %1209 = vmatpush1.bf16.msra.mxu0 %v1189
        %1210 = vmatprep.subr.bf16.mxu0 0
        %1211 = vmatpush1.bf16.msra.mxu0 %v1190
        %1212 = vmatprep.subr.bf16.mxu0 0
        %1213 = vmatpush1.bf16.msra.mxu0 %v1191
        %1214 = vmatprep.subr.bf16.mxu0 0
        %1215 = vmatpush1.bf16.msra.mxu0 %v1192
        %1216 = vmatprep.subr.bf16.mxu0 0
        %1217 = vmatpush1.bf16.msra.mxu0 %v1193
        %1218 = vmatprep.subr.bf16.mxu0 0
        %1219 = vmatpush1.bf16.msra.mxu0 0
        %1220 = vmatprep.subr.bf16.mxu0 0
        %1221 = vmatpush1.bf16.msra.mxu0 0
        %1222 = vmatprep.subr.bf16.mxu0 0
        %1223 = vmatpush1.bf16.msra.mxu0 0
        %1224 = vmatprep.subr.bf16.mxu0 0
        %1225 = vmatpush1.bf16.msra.mxu0 0
        %1226 = vmatprep.subr.bf16.mxu0 0
        %1227 = vmatpush1.bf16.msra.mxu0 0
        %1228 = vmatprep.subr.bf16.mxu0 0
        %1229 = vmatpush1.bf16.msra.mxu0 0
        %1230 = vmatprep.subr.bf16.mxu0 0
        %1231 = vmatpush1.bf16.msra.mxu0 0
        %1232 = vmatprep.subr.bf16.mxu0 0
        %1233 = vmatpush1.bf16.msra.mxu0 0
        %1234 = vmatprep.mubr.bf16.mxu0 0
        %1235 = vmatmul.mubr.bf16.gmra.mrb[0].mxu0 %v678
        %v1236 = vpop.f32.mrb[0].mxu0
        %v1237 = vadd.f32 0.0, %v1236
        %v1238 = vpop.f32.mrb[0].mxu0
        %v1239 = vpop.f32.mrb[0].mxu0
        %v1240 = vpop.f32.mrb[0].mxu0
        %1241 = vdwg.mxu0
        %v1242 = vadd.f32 %v1089, %v1237
        %1243 = vmatprep.subr.bf16.mxu0 0
        %1244 = vmatpush1.bf16.msra.mxu0 %v1186
        %1245 = vmatprep.subr.bf16.mxu0 0
        %1246 = vmatpush1.bf16.msra.mxu0 %v1187
        %1247 = vmatprep.subr.bf16.mxu0 0
        %1248 = vmatpush1.bf16.msra.mxu0 %v1188
        %1249 = vmatprep.subr.bf16.mxu0 0
        %1250 = vmatpush1.bf16.msra.mxu0 %v1189
        %1251 = vmatprep.subr.bf16.mxu0 0
        %1252 = vmatpush1.bf16.msra.mxu0 %v1190
        %1253 = vmatprep.subr.bf16.mxu0 0
        %1254 = vmatpush1.bf16.msra.mxu0 %v1191
        %1255 = vmatprep.subr.bf16.mxu0 0
        %1256 = vmatpush1.bf16.msra.mxu0 %v1192
        %1257 = vmatprep.subr.bf16.mxu0 0
        %1258 = vmatpush1.bf16.msra.mxu0 %v1193
        %1259 = vmatprep.subr.bf16.mxu0 0
        %1260 = vmatpush1.bf16.msra.mxu0 0
        %1261 = vmatprep.subr.bf16.mxu0 0
        %1262 = vmatpush1.bf16.msra.mxu0 0
        %1263 = vmatprep.subr.bf16.mxu0 0
        %1264 = vmatpush1.bf16.msra.mxu0 0
        %1265 = vmatprep.subr.bf16.mxu0 0
        %1266 = vmatpush1.bf16.msra.mxu0 0
        %1267 = vmatprep.subr.bf16.mxu0 0
        %1268 = vmatpush1.bf16.msra.mxu0 0
        %1269 = vmatprep.subr.bf16.mxu0 0
        %1270 = vmatpush1.bf16.msra.mxu0 0
        %1271 = vmatprep.subr.bf16.mxu0 0
        %1272 = vmatpush1.bf16.msra.mxu0 0
        %1273 = vmatprep.subr.bf16.mxu0 0
        %1274 = vmatpush1.bf16.msra.mxu0 0
        %1275 = vmatprep.mubr.bf16.mxu0 0
        %1276 = vmatmul.mubr.bf16.gmra.mrb[0].mxu0 %v1136
        %v1277 = vpop.f32.mrb[0].mxu0
        %v1278 = vadd.f32 0.0, %v1277
        %v1279 = vpop.f32.mrb[0].mxu0
        %v1280 = vpop.f32.mrb[0].mxu0
        %v1281 = vpop.f32.mrb[0].mxu0
        %1282 = vdwg.mxu0
        %v1283 = vadd.f32 %v1132, %v1278
        %s1284 = scalar_lea.vmem %s1, 448
        %v1285 = vld [vmem:[%s1284] sm:$0xf]
        %v1286 = vld [vmem:[%s1284 + $0x4] sm:$0xf]
        %v1287 = vld [vmem:[%s1284 + $0x8] sm:$0xf]
        %v1288 = vld [vmem:[%s1284 + $0xc] sm:$0xf]
        %v1289 = vld [vmem:[%s1284 + $0x10] sm:$0xf]
        %v1290 = vld [vmem:[%s1284 + $0x14] sm:$0xf]
        %v1291 = vld [vmem:[%s1284 + $0x18] sm:$0xf]
        %v1292 = vld [vmem:[%s1284 + $0x1c] sm:$0xf]
        %v1293 = vld [vmem:[%s1284 + $0x20] sm:$0xf]
        %v1294 = vld [vmem:[%s1284 + $0x24] sm:$0xf]
        %v1295 = vld [vmem:[%s1284 + $0x28] sm:$0xf]
        %v1296 = vld [vmem:[%s1284 + $0x2c] sm:$0xf]
        %v1297 = vld [vmem:[%s1284 + $0x30] sm:$0xf]
        %v1298 = vld [vmem:[%s1284 + $0x34] sm:$0xf]
        %v1299 = vld [vmem:[%s1284 + $0x38] sm:$0xf]
        %v1300 = vld [vmem:[%s1284 + $0x3c] sm:$0xf]
        %v1317 = vunpack.c.l.b16 %v1285
        %v1318 = vunpack.c.l.b16 %v1286
        %v1319 = vunpack.c.l.b16 %v1287
        %v1320 = vunpack.c.l.b16 %v1288
        %v1321 = vunpack.c.l.b16 %v1289
        %v1322 = vunpack.c.l.b16 %v1290
        %v1323 = vunpack.c.l.b16 %v1291
        %v1324 = vunpack.c.l.b16 %v1292
        %v1325 = vunpack.c.l.b16 %v1293
        %v1326 = vunpack.c.l.b16 %v1294
        %v1327 = vunpack.c.l.b16 %v1295
        %v1328 = vunpack.c.l.b16 %v1296
        %v1329 = vunpack.c.l.b16 %v1297
        %v1330 = vunpack.c.l.b16 %v1298
        %v1331 = vunpack.c.l.b16 %v1299
        %v1332 = vunpack.c.l.b16 %v1300
        %v1333 = vpack.c.b16 %v1318, %v1317
        %v1334 = vpack.c.b16 %v1320, %v1319
        %v1335 = vpack.c.b16 %v1322, %v1321
        %v1336 = vpack.c.b16 %v1324, %v1323
        %v1337 = vpack.c.b16 %v1326, %v1325
        %v1338 = vpack.c.b16 %v1328, %v1327
        %v1339 = vpack.c.b16 %v1330, %v1329
        %v1340 = vpack.c.b16 %v1332, %v1331
        %1349 = vmatprep.subr.bf16.mxu0 0
        %1350 = vmatpush1.bf16.msra.mxu0 %v1333
        %1351 = vmatprep.subr.bf16.mxu0 0
        %1352 = vmatpush1.bf16.msra.mxu0 %v1334
        %1353 = vmatprep.subr.bf16.mxu0 0
        %1354 = vmatpush1.bf16.msra.mxu0 %v1335
        %1355 = vmatprep.subr.bf16.mxu0 0
        %1356 = vmatpush1.bf16.msra.mxu0 %v1336
        %1357 = vmatprep.subr.bf16.mxu0 0
        %1358 = vmatpush1.bf16.msra.mxu0 %v1337
        %1359 = vmatprep.subr.bf16.mxu0 0
        %1360 = vmatpush1.bf16.msra.mxu0 %v1338
        %1361 = vmatprep.subr.bf16.mxu0 0
        %1362 = vmatpush1.bf16.msra.mxu0 %v1339
        %1363 = vmatprep.subr.bf16.mxu0 0
        %1364 = vmatpush1.bf16.msra.mxu0 %v1340
        %1365 = vmatprep.subr.bf16.mxu0 0
        %1366 = vmatpush1.bf16.msra.mxu0 0
        %1367 = vmatprep.subr.bf16.mxu0 0
        %1368 = vmatpush1.bf16.msra.mxu0 0
        %1369 = vmatprep.subr.bf16.mxu0 0
        %1370 = vmatpush1.bf16.msra.mxu0 0
        %1371 = vmatprep.subr.bf16.mxu0 0
        %1372 = vmatpush1.bf16.msra.mxu0 0
        %1373 = vmatprep.subr.bf16.mxu0 0
        %1374 = vmatpush1.bf16.msra.mxu0 0
        %1375 = vmatprep.subr.bf16.mxu0 0
        %1376 = vmatpush1.bf16.msra.mxu0 0
        %1377 = vmatprep.subr.bf16.mxu0 0
        %1378 = vmatpush1.bf16.msra.mxu0 0
        %1379 = vmatprep.subr.bf16.mxu0 0
        %1380 = vmatpush1.bf16.msra.mxu0 0
        %1381 = vmatprep.mubr.bf16.mxu0 0
        %1382 = vmatmul.mubr.bf16.gmra.mrb[0].mxu0 %v941
        %v1383 = vpop.f32.mrb[0].mxu0
        %v1384 = vadd.f32 0.0, %v1383
        %v1385 = vpop.f32.mrb[0].mxu0
        %v1386 = vpop.f32.mrb[0].mxu0
        %v1387 = vpop.f32.mrb[0].mxu0
        %1388 = vdwg.mxu0
        %v1389 = vadd.f32 %v1242, %v1384
        %v1391 = vunpack.c.l.b16 %v1136
        %v1392 = vpack.c.b16 %v1391, %v1391
        %v1394 = vshrl.u32 %v1392, 16
        %v1396 = vshll.u32 %v1392, 16
        %v1398 = vrot.slane %v1396, 1
        %v1399 = vor.u32 %v1394, %v1398
        %1401 = vmatprep.subr.bf16.mxu0 0
        %1402 = vmatpush1.bf16.msra.mxu0 %v1333
        %1403 = vmatprep.subr.bf16.mxu0 0
        %1404 = vmatpush1.bf16.msra.mxu0 %v1334
        %1405 = vmatprep.subr.bf16.mxu0 0
        %1406 = vmatpush1.bf16.msra.mxu0 %v1335
        %1407 = vmatprep.subr.bf16.mxu0 0
        %1408 = vmatpush1.bf16.msra.mxu0 %v1336
        %1409 = vmatprep.subr.bf16.mxu0 0
        %1410 = vmatpush1.bf16.msra.mxu0 %v1337
        %1411 = vmatprep.subr.bf16.mxu0 0
        %1412 = vmatpush1.bf16.msra.mxu0 %v1338
        %1413 = vmatprep.subr.bf16.mxu0 0
        %1414 = vmatpush1.bf16.msra.mxu0 %v1339
        %1415 = vmatprep.subr.bf16.mxu0 0
        %1416 = vmatpush1.bf16.msra.mxu0 %v1340
        %1417 = vmatprep.subr.bf16.mxu0 0
        %1418 = vmatpush1.bf16.msra.mxu0 0
        %1419 = vmatprep.subr.bf16.mxu0 0
        %1420 = vmatpush1.bf16.msra.mxu0 0
        %1421 = vmatprep.subr.bf16.mxu0 0
        %1422 = vmatpush1.bf16.msra.mxu0 0
        %1423 = vmatprep.subr.bf16.mxu0 0
        %1424 = vmatpush1.bf16.msra.mxu0 0
        %1425 = vmatprep.subr.bf16.mxu0 0
        %1426 = vmatpush1.bf16.msra.mxu0 0
        %1427 = vmatprep.subr.bf16.mxu0 0
        %1428 = vmatpush1.bf16.msra.mxu0 0
        %1429 = vmatprep.subr.bf16.mxu0 0
        %1430 = vmatpush1.bf16.msra.mxu0 0
        %1431 = vmatprep.subr.bf16.mxu0 0
        %1432 = vmatpush1.bf16.msra.mxu0 0
        %1433 = vmatprep.mubr.bf16.mxu0 0
        %1434 = vmatmul.mubr.bf16.gmra.mrb[0].mxu0 %v1399
        %v1435 = vpop.f32.mrb[0].mxu0
        %v1436 = vadd.f32 0.0, %v1435
        %v1437 = vpop.f32.mrb[0].mxu0
        %v1438 = vpop.f32.mrb[0].mxu0
        %v1439 = vpop.f32.mrb[0].mxu0
        %1440 = vdwg.mxu0
        %v1441 = vadd.f32 %v1283, %v1436
        %s1442 = scalar_lea.vmem %s1, 512
        %v1443 = vld [vmem:[%s1442] sm:$0xf]
        %v1444 = vld [vmem:[%s1442 + $0x4] sm:$0xf]
        %v1445 = vld [vmem:[%s1442 + $0x8] sm:$0xf]
        %v1446 = vld [vmem:[%s1442 + $0xc] sm:$0xf]
        %v1447 = vld [vmem:[%s1442 + $0x10] sm:$0xf]
        %v1448 = vld [vmem:[%s1442 + $0x14] sm:$0xf]
        %v1449 = vld [vmem:[%s1442 + $0x18] sm:$0xf]
        %v1450 = vld [vmem:[%s1442 + $0x1c] sm:$0xf]
        %v1451 = vld [vmem:[%s1442 + $0x20] sm:$0xf]
        %v1452 = vld [vmem:[%s1442 + $0x24] sm:$0xf]
        %v1453 = vld [vmem:[%s1442 + $0x28] sm:$0xf]
        %v1454 = vld [vmem:[%s1442 + $0x2c] sm:$0xf]
        %v1455 = vld [vmem:[%s1442 + $0x30] sm:$0xf]
        %v1456 = vld [vmem:[%s1442 + $0x34] sm:$0xf]
        %v1457 = vld [vmem:[%s1442 + $0x38] sm:$0xf]
        %v1458 = vld [vmem:[%s1442 + $0x3c] sm:$0xf]
        %v1475 = vunpack.c.l.b16 %v1443
        %v1476 = vunpack.c.l.b16 %v1444
        %v1477 = vunpack.c.l.b16 %v1445
        %v1478 = vunpack.c.l.b16 %v1446
        %v1479 = vunpack.c.l.b16 %v1447
        %v1480 = vunpack.c.l.b16 %v1448
        %v1481 = vunpack.c.l.b16 %v1449
        %v1482 = vunpack.c.l.b16 %v1450
        %v1483 = vunpack.c.l.b16 %v1451
        %v1484 = vunpack.c.l.b16 %v1452
        %v1485 = vunpack.c.l.b16 %v1453
        %v1486 = vunpack.c.l.b16 %v1454
        %v1487 = vunpack.c.l.b16 %v1455
        %v1488 = vunpack.c.l.b16 %v1456
        %v1489 = vunpack.c.l.b16 %v1457
        %v1490 = vunpack.c.l.b16 %v1458
        %v1491 = vpack.c.b16 %v1476, %v1475
        %v1492 = vpack.c.b16 %v1478, %v1477
        %v1493 = vpack.c.b16 %v1480, %v1479
        %v1494 = vpack.c.b16 %v1482, %v1481
        %v1495 = vpack.c.b16 %v1484, %v1483
        %v1496 = vpack.c.b16 %v1486, %v1485
        %v1497 = vpack.c.b16 %v1488, %v1487
        %v1498 = vpack.c.b16 %v1490, %v1489
        %1507 = vmatprep.subr.bf16.mxu0 0
        %1508 = vmatpush1.bf16.msra.mxu0 %v1491
        %1509 = vmatprep.subr.bf16.mxu0 0
        %1510 = vmatpush1.bf16.msra.mxu0 %v1492
        %1511 = vmatprep.subr.bf16.mxu0 0
        %1512 = vmatpush1.bf16.msra.mxu0 %v1493
        %1513 = vmatprep.subr.bf16.mxu0 0
        %1514 = vmatpush1.bf16.msra.mxu0 %v1494
        %1515 = vmatprep.subr.bf16.mxu0 0
        %1516 = vmatpush1.bf16.msra.mxu0 %v1495
        %1517 = vmatprep.subr.bf16.mxu0 0
        %1518 = vmatpush1.bf16.msra.mxu0 %v1496
        %1519 = vmatprep.subr.bf16.mxu0 0
        %1520 = vmatpush1.bf16.msra.mxu0 %v1497
        %1521 = vmatprep.subr.bf16.mxu0 0
        %1522 = vmatpush1.bf16.msra.mxu0 %v1498
        %1523 = vmatprep.subr.bf16.mxu0 0
        %1524 = vmatpush1.bf16.msra.mxu0 0
        %1525 = vmatprep.subr.bf16.mxu0 0
        %1526 = vmatpush1.bf16.msra.mxu0 0
        %1527 = vmatprep.subr.bf16.mxu0 0
        %1528 = vmatpush1.bf16.msra.mxu0 0
        %1529 = vmatprep.subr.bf16.mxu0 0
        %1530 = vmatpush1.bf16.msra.mxu0 0
        %1531 = vmatprep.subr.bf16.mxu0 0
        %1532 = vmatpush1.bf16.msra.mxu0 0
        %1533 = vmatprep.subr.bf16.mxu0 0
        %1534 = vmatpush1.bf16.msra.mxu0 0
        %1535 = vmatprep.subr.bf16.mxu0 0
        %1536 = vmatpush1.bf16.msra.mxu0 0
        %1537 = vmatprep.subr.bf16.mxu0 0
        %1538 = vmatpush1.bf16.msra.mxu0 0
        %1539 = vmatprep.mubr.bf16.mxu0 0
        %1540 = vmatmul.mubr.bf16.gmra.mrb[0].mxu0 %v1090
        %v1541 = vpop.f32.mrb[0].mxu0
        %v1542 = vadd.f32 0.0, %v1541
        %v1543 = vpop.f32.mrb[0].mxu0
        %v1544 = vpop.f32.mrb[0].mxu0
        %v1545 = vpop.f32.mrb[0].mxu0
        %1546 = vdwg.mxu0
        %v1547 = vadd.f32 %v1389, %v1542
        %v1548 = vrot.slane %v1392, 1
        %1550 = vmatprep.subr.bf16.mxu0 0
        %1551 = vmatpush1.bf16.msra.mxu0 %v1491
        %1552 = vmatprep.subr.bf16.mxu0 0
        %1553 = vmatpush1.bf16.msra.mxu0 %v1492
        %1554 = vmatprep.subr.bf16.mxu0 0
        %1555 = vmatpush1.bf16.msra.mxu0 %v1493
        %1556 = vmatprep.subr.bf16.mxu0 0
        %1557 = vmatpush1.bf16.msra.mxu0 %v1494
        %1558 = vmatprep.subr.bf16.mxu0 0
        %1559 = vmatpush1.bf16.msra.mxu0 %v1495
        %1560 = vmatprep.subr.bf16.mxu0 0
        %1561 = vmatpush1.bf16.msra.mxu0 %v1496
        %1562 = vmatprep.subr.bf16.mxu0 0
        %1563 = vmatpush1.bf16.msra.mxu0 %v1497
        %1564 = vmatprep.subr.bf16.mxu0 0
        %1565 = vmatpush1.bf16.msra.mxu0 %v1498
        %1566 = vmatprep.subr.bf16.mxu0 0
        %1567 = vmatpush1.bf16.msra.mxu0 0
        %1568 = vmatprep.subr.bf16.mxu0 0
        %1569 = vmatpush1.bf16.msra.mxu0 0
        %1570 = vmatprep.subr.bf16.mxu0 0
        %1571 = vmatpush1.bf16.msra.mxu0 0
        %1572 = vmatprep.subr.bf16.mxu0 0
        %1573 = vmatpush1.bf16.msra.mxu0 0
        %1574 = vmatprep.subr.bf16.mxu0 0
        %1575 = vmatpush1.bf16.msra.mxu0 0
        %1576 = vmatprep.subr.bf16.mxu0 0
        %1577 = vmatpush1.bf16.msra.mxu0 0
        %1578 = vmatprep.subr.bf16.mxu0 0
        %1579 = vmatpush1.bf16.msra.mxu0 0
        %1580 = vmatprep.subr.bf16.mxu0 0
        %1581 = vmatpush1.bf16.msra.mxu0 0
        %1582 = vmatprep.mubr.bf16.mxu0 0
        %1583 = vmatmul.mubr.bf16.gmra.mrb[0].mxu0 %v1548
        %v1584 = vpop.f32.mrb[0].mxu0
        %v1585 = vadd.f32 0.0, %v1584
        %v1586 = vpop.f32.mrb[0].mxu0
        %v1587 = vpop.f32.mrb[0].mxu0
        %v1588 = vpop.f32.mrb[0].mxu0
        %1589 = vdwg.mxu0
        %v1590 = vadd.f32 %v1441, %v1585
        %v1591 = vmax.f32 %v1547, %v1590
        %1592 = vst [vmem:[#allocation2] sm:$0xf] %v1591
        %v1593 = vld [vmem:[#allocation2] ss:$2 sm:$0x3]
        %s1594 = scalar_lea.vmem [#allocation2], 1
        %v1595 = vld [vmem:[%s1594] ss:$2 sm:$0x3]
        %v1596 = vmax.f32 %v1593, %v1595
        %v1598 = vlaneseq
        %v1599 = vshrl.u32 %v1598, 7
        %v1600 = vsub.s32 0, %v1599
        %v1601 = vrot.slane %v197, %v1600
        %v1603 = vmul.f32 %v1596, %v1601
        %v1605 = vlaneseq
        %v1606 = vshrl.u32 %v1605, 7
        %v1607 = vsub.s32 0, %v1606
        %v1608 = vrot.slane %v198, %v1607
        %v1610 = vadd.f32 %v1603, %v1608
        %vm1611 = vcmp.ge.f32.partialorder %v1610, 0.0
        %v1612 = vmul.f32 %v1610, 0.01
        %v1613 = vsel %vm1611, %v1610, %v1612
        %v1614 = vpack.c.bf16 %v1613, %v1613
        %s1615 = scalar_lea.vmem %s195, %s200
        %1616 = vst [vmem:[%s1615] sm:$0x1] %v1614
      $region41: #{forward.6} parent=35 // loop_footer
        %s204 = sadd.s32 1, %s200
      $region42: #{forward.6} parent=35 // loop_footer_branch
        %199 = sbr.rel target = $region38
      $region43: #{forward.6} parent=35 // loop_exit
        _
      %p1617 = scmp.lt.s32.totalorder %s15, 1
      %s1618 = scalar_select %p1617, %s15, 1
      %s1619 = smul.addr %s1618, 2
      %s1620 = scalar_lea.vmem %s4, %s1619
      // Predicated region
      $region44: #{forward.6} parent=35 // pred_check
        %p1621 = pneg %p122
      $region45: #{forward.6} parent=35 // pred_check_branch
        %1623 = sbr.rel (%p1621) target = $region47
      $region46: #{forward.6} parent=35 // pred_region
        _
      $region47: #{forward.6} parent=35 // pred_fallthru
        _
    $region36: #{forward.6} parent=5 // pred_fallthru
      _
    %p1624 = scmp.le.s32.totalorder 2, %s10
    // Predicated region
    $region48: #{forward.6} parent=5 // pred_check
      %p1625 = pneg %p1624
    $region49: #{forward.6} parent=5 // pred_check_branch
      %1627 = sbr.rel (%p1625) target = $region51
    $region50: #{forward.6} parent=5 // pred_region
      %s1628 = ssub.s32 %s10, 2
      // Predicated region
      $region52: #{forward.6} parent=50 // pred_check
        %p1629 = pneg %p128
      $region53: #{forward.6} parent=50 // pred_check_branch
        %1631 = sbr.rel (%p1629) target = $region55
      $region54: #{forward.6} parent=50 // pred_region
        %p1632 = scmp.lt.s32.totalorder %s16, 1
        %s1633 = scalar_select %p1632, %s16, 1
        %s1634 = smul.addr %s1633, 2
        %s1635 = scalar_lea.vmem %s4, %s1634
      $region55: #{forward.6} parent=50 // pred_fallthru
        _
    $region51: #{forward.6} parent=5 // pred_fallthru
      _
  $region6: #{forward.6} parent=0 // loop_footer
    %s14 = sadd.s32 1, %s10
  $region7: #{forward.6} parent=0 // loop_footer_branch
    %9 = sbr.rel target = $region3
  $region8: #{forward.6} parent=0 // loop_exit
    _

// kernel: forward.4
$region0: #{forward.4}
  #allocation0 [shape = 'u32[]', space=smem, size = 0x4, offset = 0x4, fixed_abs, tag = 'smem constant byte address 0x4 - core index']
  #allocation1 [shape = 'u32[144,128]{1,0:T(1,128)}', space=vmem, size = 0x12000, scoped, tag = 'internal scratch']
  #allocation2 [shape = 'f32[28,128]{1,0:T(8,128)}', space=vmem, size = 0x4000, scoped, tag = 'scratch operand']
  %s0 = inlined_call_operand.vmem [shape: bf16[2,32,32,128], index: 0, kind: input, shape index: {}]
  %s1 = inlined_call_operand.vmem [shape: bf16[25,128,128], index: 1, kind: input, shape index: {}]
  %s2 = inlined_call_operand.vmem [shape: f32[1,128], index: 2, kind: input, shape index: {}]
  %s3 = inlined_call_operand.vmem [shape: f32[1,128], index: 3, kind: input, shape index: {}]
  %s4 = inlined_call_operand.vmem [shape: bf16[2,14,14,128], index: 4, kind: output, shape index: {}]
  %s5 = sld [smem:[#allocation0]]
  $region56: #{forward.4} parent=0
    _
  %s7 = ssub.s32 1, %s5
  %s8 = scalar_select 0, %s7, %s5
  loop: start=0, step=1, limit=4
  $region2: #{forward.4} parent=0 // loop_pre_header
    _
  $region3: #{forward.4} parent=0 // loop_header
    %s10 = sphi 0, %s14
    %p11 = scmp.ge.s32.totalorder %s10, 4
    %s20 = sphi 0, %s22
    %s23 = sphi 0, %s20
    %s24 = sphi 0, %s23
    %s40 = sphi 0, %s24
    %s44 = sphi 0, %s44
    %s46 = sphi 0, %s44
    %s47 = sphi 0, %s46
    %s61 = sphi 0, %s47
    %s65 = sphi 0, %s65
    %s67 = sphi 0, %s65
    %s68 = sphi 0, %s67
    %s82 = sphi 0, %s68
    %s86 = sphi 0, %s86
    %s88 = sphi 0, %s86
    %s89 = sphi 0, %s88
    %s103 = sphi 0, %s89
    %s109 = sphi 0, %s111
    %s112 = sphi 0, %s109
    %s113 = sphi 0, %s112
    %s129 = sphi 0, %s113
  $region4: #{forward.4} parent=0 // loop_header_branch
    %13 = sbr.rel (%p11) target = $region8
  $region5: #{forward.4} parent=0 // loop_body
    %s15 = ssub.s32 %s10, 1
    %s16 = ssub.s32 %s10, 2
    %s17 = sadd.s32 %s10, 1
    %s18 = ssub.s32 %s10, %s17
    %p19 = scmp.eq.s32.totalorder %s18, 0
    %s21 = sadd.s32 %s20, 1
    %s22 = scalar_select %p19, %s20, %s21
    %p25 = pneg %p19
    %p26 = scmp.eq.s32.totalorder %s10, 1
    %p27 = por %p25, %p26
    %p28 = scmp.ne.s32.totalorder %s20, %s23
    %p29 = scmp.eq.s32.totalorder %s10, 0
    %p30 = por %p28, %p29
    %p31 = scmp.ne.s32.totalorder %s20, %s23
    %p32 = scmp.eq.s32.totalorder %s15, 1
    %p33 = por %p31, %p32
    %p34 = scmp.ne.s32.totalorder %s23, %s24
    %p35 = scmp.eq.s32.totalorder %s15, 0
    %p36 = por %p34, %p35
    %p37 = scmp.ne.s32.totalorder %s23, %s24
    %p38 = scmp.eq.s32.totalorder %s16, 1
    %p39 = por %p37, %p38
    %p41 = scmp.ne.s32.totalorder %s24, %s40
    %p42 = scmp.eq.s32.totalorder %s16, 0
    %p43 = por %p41, %p42
    %s45 = sadd.s32 %s44, 1
    %p48 = scmp.eq.s32.totalorder %s10, 1
    %p49 = scmp.ne.s32.totalorder %s44, %s46
    %p50 = scmp.eq.s32.totalorder %s10, 0
    %p51 = por %p49, %p50
    %p52 = scmp.ne.s32.totalorder %s44, %s46
    %p53 = scmp.eq.s32.totalorder %s15, 1
    %p54 = por %p52, %p53
    %p55 = scmp.ne.s32.totalorder %s46, %s47
    %p56 = scmp.eq.s32.totalorder %s15, 0
    %p57 = por %p55, %p56
    %p58 = scmp.ne.s32.totalorder %s46, %s47
    %p59 = scmp.eq.s32.totalorder %s16, 1
    %p60 = por %p58, %p59
    %p62 = scmp.ne.s32.totalorder %s47, %s61
    %p63 = scmp.eq.s32.totalorder %s16, 0
    %p64 = por %p62, %p63
    %s66 = sadd.s32 %s65, 1
    %p69 = scmp.eq.s32.totalorder %s10, 1
    %p70 = scmp.ne.s32.totalorder %s65, %s67
    %p71 = scmp.eq.s32.totalorder %s10, 0
    %p72 = por %p70, %p71
    %p73 = scmp.ne.s32.totalorder %s65, %s67
    %p74 = scmp.eq.s32.totalorder %s15, 1
    %p75 = por %p73, %p74
    %p76 = scmp.ne.s32.totalorder %s67, %s68
    %p77 = scmp.eq.s32.totalorder %s15, 0
    %p78 = por %p76, %p77
    %p79 = scmp.ne.s32.totalorder %s67, %s68
    %p80 = scmp.eq.s32.totalorder %s16, 1
    %p81 = por %p79, %p80
    %p83 = scmp.ne.s32.totalorder %s68, %s82
    %p84 = scmp.eq.s32.totalorder %s16, 0
    %p85 = por %p83, %p84
    %s87 = sadd.s32 %s86, 1
    %p90 = scmp.eq.s32.totalorder %s10, 1
    %p91 = scmp.ne.s32.totalorder %s86, %s88
    %p92 = scmp.eq.s32.totalorder %s10, 0
    %p93 = por %p91, %p92
    %p94 = scmp.ne.s32.totalorder %s86, %s88
    %p95 = scmp.eq.s32.totalorder %s15, 1
    %p96 = por %p94, %p95
    %p97 = scmp.ne.s32.totalorder %s88, %s89
    %p98 = scmp.eq.s32.totalorder %s15, 0
    %p99 = por %p97, %p98
    %p100 = scmp.ne.s32.totalorder %s88, %s89
    %p101 = scmp.eq.s32.totalorder %s16, 1
    %p102 = por %p100, %p101
    %p104 = scmp.ne.s32.totalorder %s89, %s103
    %p105 = scmp.eq.s32.totalorder %s16, 0
    %p106 = por %p104, %p105
    %s107 = ssub.s32 %s10, %s17
    %p108 = scmp.eq.s32.totalorder %s107, 0
    %s110 = sadd.s32 %s109, 1
    %s111 = scalar_select %p108, %s109, %s110
    %p114 = pneg %p108
    %p115 = scmp.eq.s32.totalorder %s10, 1
    %p116 = por %p114, %p115
    %p117 = scmp.ne.s32.totalorder %s109, %s112
    %p118 = scmp.eq.s32.totalorder %s10, 0
    %p119 = por %p117, %p118
    %p120 = scmp.ne.s32.totalorder %s109, %s112
    %p121 = scmp.eq.s32.totalorder %s15, 1
    %p122 = por %p120, %p121
    %p123 = scmp.ne.s32.totalorder %s112, %s113
    %p124 = scmp.eq.s32.totalorder %s15, 0
    %p125 = por %p123, %p124
    %p126 = scmp.ne.s32.totalorder %s112, %s113
    %p127 = scmp.eq.s32.totalorder %s16, 1
    %p128 = por %p126, %p127
    %p130 = scmp.ne.s32.totalorder %s113, %s129
    %p131 = scmp.eq.s32.totalorder %s16, 0
    %p132 = por %p130, %p131
    %p133 = scmp.le.s32.totalorder 1, %s10
    %p134 = scmp.lt.s32.totalorder %s10, 3
    %p135 = pnand %p133, %p134
    %p136 = pneg %p135
    // Predicated region
    $region9: #{forward.4} parent=5 // pred_check
      _
    $region10: #{forward.4} parent=5 // pred_check_branch
      %138 = sbr.rel (%p135) target = $region12
    $region11: #{forward.4} parent=5 // pred_region
      %s139 = ssub.s32 %s10, 1
      // Predicated region
      $region13: #{forward.4} parent=11 // pred_check
        %p140 = pneg %p57
      $region14: #{forward.4} parent=11 // pred_check_branch
        %142 = sbr.rel (%p140) target = $region16
      $region15: #{forward.4} parent=11 // pred_region
        _
      $region16: #{forward.4} parent=11 // pred_fallthru
        _
      // Predicated region
      $region17: #{forward.4} parent=11 // pred_check
        %p143 = pneg %p78
      $region18: #{forward.4} parent=11 // pred_check_branch
        %145 = sbr.rel (%p143) target = $region20
      $region19: #{forward.4} parent=11 // pred_region
        _
      $region20: #{forward.4} parent=11 // pred_fallthru
        _
      // Predicated region
      $region21: #{forward.4} parent=11 // pred_check
        %p146 = pneg %p99
      $region22: #{forward.4} parent=11 // pred_check_branch
        %148 = sbr.rel (%p146) target = $region24
      $region23: #{forward.4} parent=11 // pred_region
        _
      $region24: #{forward.4} parent=11 // pred_fallthru
        _
    $region12: #{forward.4} parent=5 // pred_fallthru
      _
    %p149 = scmp.lt.s32.totalorder %s10, 2
    // Predicated region
    $region25: #{forward.4} parent=5 // pred_check
      %p150 = pneg %p149
    $region26: #{forward.4} parent=5 // pred_check_branch
      %152 = sbr.rel (%p150) target = $region28
    $region27: #{forward.4} parent=5 // pred_region
      // Predicated region
      $region29: #{forward.4} parent=27 // pred_check
        %p153 = pneg %p30
      $region30: #{forward.4} parent=27 // pred_check_branch
        %155 = sbr.rel (%p153) target = $region32
      $region31: #{forward.4} parent=27 // pred_region
        %p156 = scmp.lt.s32.totalorder %s10, 1
        %s157 = scalar_select %p156, %s10, 1
        %s158 = smul.addr %s157, 128
        %s159 = smul.addr %s158, 4
        %s160 = scalar_lea.vmem %s0, %s159
      $region32: #{forward.4} parent=27 // pred_fallthru
        _
    $region28: #{forward.4} parent=5 // pred_fallthru
      _
    %p161 = scmp.le.s32.totalorder 1, %s10
    %p162 = scmp.lt.s32.totalorder %s10, 3
    %p163 = pnand %p161, %p162
    %p164 = pneg %p163
    // Predicated region
    $region33: #{forward.4} parent=5 // pred_check
      _
    $region34: #{forward.4} parent=5 // pred_check_branch
      %166 = sbr.rel (%p163) target = $region36
    $region35: #{forward.4} parent=5 // pred_region
      %s167 = ssub.s32 %s10, 1
      %p168 = scmp.lt.s32.totalorder %s15, 1
      %s169 = scalar_select %p168, %s15, 1
      %s170 = smul.addr %s169, 128
      %s171 = smul.addr %s170, 4
      %s172 = scalar_lea.vmem %s0, %s171
      %p173 = pneg %p36
      %p174 = pneg %p33
      %p175 = pneg %p57
      %p176 = pneg %p54
      %p177 = pneg %p78
      %p178 = pneg %p75
      %p179 = pneg %p99
      %p180 = pneg %p96
      %p181 = pneg %p125
      %p182 = pneg %p122
      %p183 = scmp.lt.s32.totalorder %s15, 1
      %s184 = scalar_select %p183, %s15, 1
      %s185 = smul.addr %s184, 28
      %s186 = smul.addr %s185, 4
      %s187 = scalar_lea.vmem %s4, %s186
      %p188 = scmp.lt.s32.totalorder %s15, 1
      %s189 = scalar_select %p188, %s15, 1
      %s190 = smul.addr %s189, 128
      %s191 = smul.addr %s190, 4
      %s192 = scalar_lea.vmem %s0, %s191
      %p193 = scmp.lt.s32.totalorder %s15, 1
      %s194 = scalar_select %p193, %s15, 1
      %s195 = smul.addr %s194, 28
      %s196 = smul.addr %s195, 4
      %s197 = scalar_lea.vmem %s4, %s196
      %v199 = vld [vmem:[%s2] sm:$0x1]
      %v200 = vld [vmem:[%s3] sm:$0x1]
      loop: start=0, step=1, limit=14
      $region37: #{forward.4} parent=35 // loop_pre_header
        _
      $region38: #{forward.4} parent=35 // loop_header
        %s202 = sphi 0, %s206
        %p203 = scmp.ge.s32.totalorder %s202, 14
      $region39: #{forward.4} parent=35 // loop_header_branch
        %205 = sbr.rel (%p203) target = $region43
      $region40: #{forward.4} parent=35 // loop_body
        %s207 = smul.u32 %s202, 2
        %s208 = smul.u32 %s207, 4
        %s209 = smul.addr %s208, 4
        %s210 = scalar_lea.vmem %s192, %s209
        %v211 = vld [vmem:[%s210] sm:$0xf]
        %v212 = vld [vmem:[%s210 + $0x4] sm:$0xf]
        %v213 = vld [vmem:[%s210 + $0x8] sm:$0xf]
        %v214 = vld [vmem:[%s210 + $0xc] sm:$0xf]
        %s215 = sadd.s32 %s207, 1
        %s216 = smul.u32 %s215, 4
        %s217 = smul.addr %s216, 4
        %s218 = scalar_lea.vmem %s192, %s217
        %v219 = vld [vmem:[%s218] sm:$0xf]
        %v220 = vld [vmem:[%s218 + $0x4] sm:$0xf]
        %v221 = vld [vmem:[%s218 + $0x8] sm:$0xf]
        %v222 = vld [vmem:[%s218 + $0xc] sm:$0xf]
        %v223 = vld [vmem:[%s1] sm:$0xf]
        %v224 = vld [vmem:[%s1 + $0x4] sm:$0xf]
        %v225 = vld [vmem:[%s1 + $0x8] sm:$0xf]
        %v226 = vld [vmem:[%s1 + $0xc] sm:$0xf]
        %v227 = vld [vmem:[%s1 + $0x10] sm:$0xf]
        %v228 = vld [vmem:[%s1 + $0x14] sm:$0xf]
        %v229 = vld [vmem:[%s1 + $0x18] sm:$0xf]
        %v230 = vld [vmem:[%s1 + $0x1c] sm:$0xf]
        %v231 = vld [vmem:[%s1 + $0x20] sm:$0xf]
        %v232 = vld [vmem:[%s1 + $0x24] sm:$0xf]
        %v233 = vld [vmem:[%s1 + $0x28] sm:$0xf]
        %v234 = vld [vmem:[%s1 + $0x2c] sm:$0xf]
        %v235 = vld [vmem:[%s1 + $0x30] sm:$0xf]
        %v236 = vld [vmem:[%s1 + $0x34] sm:$0xf]
        %v237 = vld [vmem:[%s1 + $0x38] sm:$0xf]
        %v238 = vld [vmem:[%s1 + $0x3c] sm:$0xf]
        %s239 = scalar_lea.vmem %s1, 64
        %v240 = vld [vmem:[%s239] sm:$0xf]
        %v241 = vld [vmem:[%s239 + $0x4] sm:$0xf]
        %v242 = vld [vmem:[%s239 + $0x8] sm:$0xf]
        %v243 = vld [vmem:[%s239 + $0xc] sm:$0xf]
        %v244 = vld [vmem:[%s239 + $0x10] sm:$0xf]
        %v245 = vld [vmem:[%s239 + $0x14] sm:$0xf]
        %v246 = vld [vmem:[%s239 + $0x18] sm:$0xf]
        %v247 = vld [vmem:[%s239 + $0x1c] sm:$0xf]
        %v248 = vld [vmem:[%s239 + $0x20] sm:$0xf]
        %v249 = vld [vmem:[%s239 + $0x24] sm:$0xf]
        %v250 = vld [vmem:[%s239 + $0x28] sm:$0xf]
        %v251 = vld [vmem:[%s239 + $0x2c] sm:$0xf]
        %v252 = vld [vmem:[%s239 + $0x30] sm:$0xf]
        %v253 = vld [vmem:[%s239 + $0x34] sm:$0xf]
        %v254 = vld [vmem:[%s239 + $0x38] sm:$0xf]
        %v255 = vld [vmem:[%s239 + $0x3c] sm:$0xf]
        %v260 = vunpack.c.l.b16 %v211
        %v261 = vunpack.c.l.b16 %v212
        %v262 = vunpack.c.l.b16 %v213
        %v263 = vunpack.c.l.b16 %v214
        %v264 = vpack.c.b16 %v261, %v260
        %v265 = vpack.c.b16 %v263, %v262
        %vm266 = vsmask.f32 7424
        %v268 = vshrl.u32 %v264, 16
        %v270 = vshll.u32 %v264, 16
        %v272 = vrot.slane %v270, 1
        %v273 = vor.u32 %v268, %v272
        %v275 = vshll.u32 %v265, 16
        %v277 = vrot.slane %v275, 1
        %v278 = vsel %vm266, %v273, %v277
        %v279 = vshrl.u32 %v265, 16
        %v281 = vor.u32 %v279, %v277
        %v300 = vunpack.c.l.b16 %v240
        %v301 = vunpack.c.l.b16 %v241
        %v302 = vunpack.c.l.b16 %v242
        %v303 = vunpack.c.l.b16 %v243
        %v304 = vunpack.c.l.b16 %v244
        %v305 = vunpack.c.l.b16 %v245
        %v306 = vunpack.c.l.b16 %v246
        %v307 = vunpack.c.l.b16 %v247
        %v308 = vunpack.c.l.b16 %v248
        %v309 = vunpack.c.l.b16 %v249
        %v310 = vunpack.c.l.b16 %v250
        %v311 = vunpack.c.l.b16 %v251
        %v312 = vunpack.c.l.b16 %v252
        %v313 = vunpack.c.l.b16 %v253
        %v314 = vunpack.c.l.b16 %v254
        %v315 = vunpack.c.l.b16 %v255
        %v316 = vpack.c.b16 %v301, %v300
        %v317 = vpack.c.b16 %v303, %v302
        %v318 = vpack.c.b16 %v305, %v304
        %v319 = vpack.c.b16 %v307, %v306
        %v320 = vpack.c.b16 %v309, %v308
        %v321 = vpack.c.b16 %v311, %v310
        %v322 = vpack.c.b16 %v313, %v312
        %v323 = vpack.c.b16 %v315, %v314
        %332 = vmatprep.subr.bf16.mxu0 0
        %333 = vmatpush1.bf16.msra.mxu0 %v316
        %334 = vmatprep.subr.bf16.mxu0 0
        %335 = vmatpush1.bf16.msra.mxu0 %v317
        %336 = vmatprep.subr.bf16.mxu0 0
        %337 = vmatpush1.bf16.msra.mxu0 %v318
        %338 = vmatprep.subr.bf16.mxu0 0
        %339 = vmatpush1.bf16.msra.mxu0 %v319
        %340 = vmatprep.subr.bf16.mxu0 0
        %341 = vmatpush1.bf16.msra.mxu0 %v320
        %342 = vmatprep.subr.bf16.mxu0 0
        %343 = vmatpush1.bf16.msra.mxu0 %v321
        %344 = vmatprep.subr.bf16.mxu0 0
        %345 = vmatpush1.bf16.msra.mxu0 %v322
        %346 = vmatprep.subr.bf16.mxu0 0
        %347 = vmatpush1.bf16.msra.mxu0 %v323
        %348 = vmatprep.subr.bf16.mxu0 0
        %349 = vmatpush1.bf16.msra.mxu0 0
        %350 = vmatprep.subr.bf16.mxu0 0
        %351 = vmatpush1.bf16.msra.mxu0 0
        %352 = vmatprep.subr.bf16.mxu0 0
        %353 = vmatpush1.bf16.msra.mxu0 0
        %354 = vmatprep.subr.bf16.mxu0 0
        %355 = vmatpush1.bf16.msra.mxu0 0
        %356 = vmatprep.subr.bf16.mxu0 0
        %357 = vmatpush1.bf16.msra.mxu0 0
        %358 = vmatprep.subr.bf16.mxu0 0
        %359 = vmatpush1.bf16.msra.mxu0 0
        %360 = vmatprep.subr.bf16.mxu0 0
        %361 = vmatpush1.bf16.msra.mxu0 0
        %362 = vmatprep.subr.bf16.mxu0 0
        %363 = vmatpush1.bf16.msra.mxu0 0
        %364 = vmatprep.mubr.bf16.mxu0 0
        %365 = vmatmul.mubr.bf16.gmra.mrb[0].mxu0 %v278
        %v366 = vpop.f32.mrb[0].mxu0
        %v367 = vadd.f32 0.0, %v366
        %v368 = vpop.f32.mrb[0].mxu0
        %v369 = vpop.f32.mrb[0].mxu0
        %v370 = vadd.f32 0.0, %v369
        %v371 = vpop.f32.mrb[0].mxu0
        %372 = vmatprep.mubr.bf16.mxu0 0
        %373 = vmatmul.mubr.bf16.gmra.mrb[0].mxu0 %v281
        %v374 = vpop.f32.mrb[0].mxu0
        %v375 = vadd.f32 0.0, %v374
        %v376 = vpop.f32.mrb[0].mxu0
        %v377 = vpop.f32.mrb[0].mxu0
        %v378 = vadd.f32 0.0, %v377
        %v379 = vpop.f32.mrb[0].mxu0
        %380 = vdwg.mxu0
        %v399 = vunpack.c.l.b16 %v223
        %v400 = vunpack.c.l.b16 %v224
        %v401 = vunpack.c.l.b16 %v225
        %v402 = vunpack.c.l.b16 %v226
        %v403 = vunpack.c.l.b16 %v227
        %v404 = vunpack.c.l.b16 %v228
        %v405 = vunpack.c.l.b16 %v229
        %v406 = vunpack.c.l.b16 %v230
        %v407 = vunpack.c.l.b16 %v231
        %v408 = vunpack.c.l.b16 %v232
        %v409 = vunpack.c.l.b16 %v233
        %v410 = vunpack.c.l.b16 %v234
        %v411 = vunpack.c.l.b16 %v235
        %v412 = vunpack.c.l.b16 %v236
        %v413 = vunpack.c.l.b16 %v237
        %v414 = vunpack.c.l.b16 %v238
        %v415 = vpack.c.b16 %v400, %v399
        %v416 = vpack.c.b16 %v402, %v401
        %v417 = vpack.c.b16 %v404, %v403
        %v418 = vpack.c.b16 %v406, %v405
        %v419 = vpack.c.b16 %v408, %v407
        %v420 = vpack.c.b16 %v410, %v409
        %v421 = vpack.c.b16 %v412, %v411
        %v422 = vpack.c.b16 %v414, %v413
        %431 = vmatprep.subr.bf16.mxu0 0
        %432 = vmatpush1.bf16.msra.mxu0 %v415
        %433 = vmatprep.subr.bf16.mxu0 0
        %434 = vmatpush1.bf16.msra.mxu0 %v416
        %435 = vmatprep.subr.bf16.mxu0 0
        %436 = vmatpush1.bf16.msra.mxu0 %v417
        %437 = vmatprep.subr.bf16.mxu0 0
        %438 = vmatpush1.bf16.msra.mxu0 %v418
        %439 = vmatprep.subr.bf16.mxu0 0
        %440 = vmatpush1.bf16.msra.mxu0 %v419
        %441 = vmatprep.subr.bf16.mxu0 0
        %442 = vmatpush1.bf16.msra.mxu0 %v420
        %443 = vmatprep.subr.bf16.mxu0 0
        %444 = vmatpush1.bf16.msra.mxu0 %v421
        %445 = vmatprep.subr.bf16.mxu0 0
        %446 = vmatpush1.bf16.msra.mxu0 %v422
        %447 = vmatprep.subr.bf16.mxu0 0
        %448 = vmatpush1.bf16.msra.mxu0 0
        %449 = vmatprep.subr.bf16.mxu0 0
        %450 = vmatpush1.bf16.msra.mxu0 0
        %451 = vmatprep.subr.bf16.mxu0 0
        %452 = vmatpush1.bf16.msra.mxu0 0
        %453 = vmatprep.subr.bf16.mxu0 0
        %454 = vmatpush1.bf16.msra.mxu0 0
        %455 = vmatprep.subr.bf16.mxu0 0
        %456 = vmatpush1.bf16.msra.mxu0 0
        %457 = vmatprep.subr.bf16.mxu0 0
        %458 = vmatpush1.bf16.msra.mxu0 0
        %459 = vmatprep.subr.bf16.mxu0 0
        %460 = vmatpush1.bf16.msra.mxu0 0
        %461 = vmatprep.subr.bf16.mxu0 0
        %462 = vmatpush1.bf16.msra.mxu0 0
        %463 = vmatprep.mubr.bf16.mxu0 0
        %464 = vmatmul.mubr.bf16.gmra.mrb[0].mxu0 %v264
        %v465 = vpop.f32.mrb[0].mxu0
        %v466 = vadd.f32 %v367, %v465
        %v467 = vpop.f32.mrb[0].mxu0
        %v468 = vpop.f32.mrb[0].mxu0
        %v469 = vadd.f32 %v370, %v468
        %v470 = vpop.f32.mrb[0].mxu0
        %471 = vmatprep.mubr.bf16.mxu0 0
        %472 = vmatmul.mubr.bf16.gmra.mrb[0].mxu0 %v265
        %v473 = vpop.f32.mrb[0].mxu0
        %v474 = vadd.f32 %v375, %v473
        %v475 = vpop.f32.mrb[0].mxu0
        %v476 = vpop.f32.mrb[0].mxu0
        %v477 = vadd.f32 %v378, %v476
        %v478 = vpop.f32.mrb[0].mxu0
        %479 = vdwg.mxu0
        %v484 = vunpack.c.l.b16 %v219
        %v485 = vunpack.c.l.b16 %v220
        %v486 = vunpack.c.l.b16 %v221
        %v487 = vunpack.c.l.b16 %v222
        %v488 = vpack.c.b16 %v485, %v484
        %v489 = vpack.c.b16 %v487, %v486
        %v491 = vshrl.u32 %v488, 16
        %v493 = vshll.u32 %v488, 16
        %v495 = vrot.slane %v493, 1
        %v496 = vor.u32 %v491, %v495
        %v498 = vshll.u32 %v489, 16
        %v500 = vrot.slane %v498, 1
        %v501 = vsel %vm266, %v496, %v500
        %v502 = vshrl.u32 %v489, 16
        %v504 = vor.u32 %v502, %v500
        %507 = vmatprep.subr.bf16.mxu0 0
        %508 = vmatpush1.bf16.msra.mxu0 %v316
        %509 = vmatprep.subr.bf16.mxu0 0
        %510 = vmatpush1.bf16.msra.mxu0 %v317
        %511 = vmatprep.subr.bf16.mxu0 0
        %512 = vmatpush1.bf16.msra.mxu0 %v318
        %513 = vmatprep.subr.bf16.mxu0 0
        %514 = vmatpush1.bf16.msra.mxu0 %v319
        %515 = vmatprep.subr.bf16.mxu0 0
        %516 = vmatpush1.bf16.msra.mxu0 %v320
        %517 = vmatprep.subr.bf16.mxu0 0
        %518 = vmatpush1.bf16.msra.mxu0 %v321
        %519 = vmatprep.subr.bf16.mxu0 0
        %520 = vmatpush1.bf16.msra.mxu0 %v322
        %521 = vmatprep.subr.bf16.mxu0 0
        %522 = vmatpush1.bf16.msra.mxu0 %v323
        %523 = vmatprep.subr.bf16.mxu0 0
        %524 = vmatpush1.bf16.msra.mxu0 0
        %525 = vmatprep.subr.bf16.mxu0 0
        %526 = vmatpush1.bf16.msra.mxu0 0
        %527 = vmatprep.subr.bf16.mxu0 0
        %528 = vmatpush1.bf16.msra.mxu0 0
        %529 = vmatprep.subr.bf16.mxu0 0
        %530 = vmatpush1.bf16.msra.mxu0 0
        %531 = vmatprep.subr.bf16.mxu0 0
        %532 = vmatpush1.bf16.msra.mxu0 0
        %533 = vmatprep.subr.bf16.mxu0 0
        %534 = vmatpush1.bf16.msra.mxu0 0
        %535 = vmatprep.subr.bf16.mxu0 0
        %536 = vmatpush1.bf16.msra.mxu0 0
        %537 = vmatprep.subr.bf16.mxu0 0
        %538 = vmatpush1.bf16.msra.mxu0 0
        %539 = vmatprep.mubr.bf16.mxu0 0
        %540 = vmatmul.mubr.bf16.gmra.mrb[0].mxu0 %v501
        %v541 = vpop.f32.mrb[0].mxu0
        %v542 = vadd.f32 0.0, %v541
        %v543 = vpop.f32.mrb[0].mxu0
        %v544 = vpop.f32.mrb[0].mxu0
        %v545 = vadd.f32 0.0, %v544
        %v546 = vpop.f32.mrb[0].mxu0
        %547 = vmatprep.mubr.bf16.mxu0 0
        %548 = vmatmul.mubr.bf16.gmra.mrb[0].mxu0 %v504
        %v549 = vpop.f32.mrb[0].mxu0
        %v550 = vadd.f32 0.0, %v549
        %v551 = vpop.f32.mrb[0].mxu0
        %v552 = vpop.f32.mrb[0].mxu0
        %v553 = vadd.f32 0.0, %v552
        %v554 = vpop.f32.mrb[0].mxu0
        %555 = vdwg.mxu0
        %558 = vmatprep.subr.bf16.mxu0 0
        %559 = vmatpush1.bf16.msra.mxu0 %v415
        %560 = vmatprep.subr.bf16.mxu0 0
        %561 = vmatpush1.bf16.msra.mxu0 %v416
        %562 = vmatprep.subr.bf16.mxu0 0
        %563 = vmatpush1.bf16.msra.mxu0 %v417
        %564 = vmatprep.subr.bf16.mxu0 0
        %565 = vmatpush1.bf16.msra.mxu0 %v418
        %566 = vmatprep.subr.bf16.mxu0 0
        %567 = vmatpush1.bf16.msra.mxu0 %v419
        %568 = vmatprep.subr.bf16.mxu0 0
        %569 = vmatpush1.bf16.msra.mxu0 %v420
        %570 = vmatprep.subr.bf16.mxu0 0
        %571 = vmatpush1.bf16.msra.mxu0 %v421
        %572 = vmatprep.subr.bf16.mxu0 0
        %573 = vmatpush1.bf16.msra.mxu0 %v422
        %574 = vmatprep.subr.bf16.mxu0 0
        %575 = vmatpush1.bf16.msra.mxu0 0
        %576 = vmatprep.subr.bf16.mxu0 0
        %577 = vmatpush1.bf16.msra.mxu0 0
        %578 = vmatprep.subr.bf16.mxu0 0
        %579 = vmatpush1.bf16.msra.mxu0 0
        %580 = vmatprep.subr.bf16.mxu0 0
        %581 = vmatpush1.bf16.msra.mxu0 0
        %582 = vmatprep.subr.bf16.mxu0 0
        %583 = vmatpush1.bf16.msra.mxu0 0
        %584 = vmatprep.subr.bf16.mxu0 0
        %585 = vmatpush1.bf16.msra.mxu0 0
        %586 = vmatprep.subr.bf16.mxu0 0
        %587 = vmatpush1.bf16.msra.mxu0 0
        %588 = vmatprep.subr.bf16.mxu0 0
        %589 = vmatpush1.bf16.msra.mxu0 0
        %590 = vmatprep.mubr.bf16.mxu0 0
        %591 = vmatmul.mubr.bf16.gmra.mrb[0].mxu0 %v488
        %v592 = vpop.f32.mrb[0].mxu0
        %v593 = vadd.f32 %v542, %v592
        %v594 = vpop.f32.mrb[0].mxu0
        %v595 = vpop.f32.mrb[0].mxu0
        %v596 = vadd.f32 %v545, %v595
        %v597 = vpop.f32.mrb[0].mxu0
        %598 = vmatprep.mubr.bf16.mxu0 0
        %599 = vmatmul.mubr.bf16.gmra.mrb[0].mxu0 %v489
        %v600 = vpop.f32.mrb[0].mxu0
        %v601 = vadd.f32 %v550, %v600
        %v602 = vpop.f32.mrb[0].mxu0
        %v603 = vpop.f32.mrb[0].mxu0
        %v604 = vadd.f32 %v553, %v603
        %v605 = vpop.f32.mrb[0].mxu0
        %606 = vdwg.mxu0
        %s607 = scalar_lea.vmem %s1, 128
        %v608 = vld [vmem:[%s607] sm:$0xf]
        %v609 = vld [vmem:[%s607 + $0x4] sm:$0xf]
        %v610 = vld [vmem:[%s607 + $0x8] sm:$0xf]
        %v611 = vld [vmem:[%s607 + $0xc] sm:$0xf]
        %v612 = vld [vmem:[%s607 + $0x10] sm:$0xf]
        %v613 = vld [vmem:[%s607 + $0x14] sm:$0xf]
        %v614 = vld [vmem:[%s607 + $0x18] sm:$0xf]
        %v615 = vld [vmem:[%s607 + $0x1c] sm:$0xf]
        %v616 = vld [vmem:[%s607 + $0x20] sm:$0xf]
        %v617 = vld [vmem:[%s607 + $0x24] sm:$0xf]
        %v618 = vld [vmem:[%s607 + $0x28] sm:$0xf]
        %v619 = vld [vmem:[%s607 + $0x2c] sm:$0xf]
        %v620 = vld [vmem:[%s607 + $0x30] sm:$0xf]
        %v621 = vld [vmem:[%s607 + $0x34] sm:$0xf]
        %v622 = vld [vmem:[%s607 + $0x38] sm:$0xf]
        %v623 = vld [vmem:[%s607 + $0x3c] sm:$0xf]
        %vm624 = vcmask 1046528
        %v625 = vrot.slane %v264, 1
        %v626 = vrot.slane %v265, 1
        %v627 = vsel %vm624, %v625, %v626
        %v646 = vunpack.c.l.b16 %v608
        %v647 = vunpack.c.l.b16 %v609
        %v648 = vunpack.c.l.b16 %v610
        %v649 = vunpack.c.l.b16 %v611
        %v650 = vunpack.c.l.b16 %v612
        %v651 = vunpack.c.l.b16 %v613
        %v652 = vunpack.c.l.b16 %v614
        %v653 = vunpack.c.l.b16 %v615
        %v654 = vunpack.c.l.b16 %v616
        %v655 = vunpack.c.l.b16 %v617
        %v656 = vunpack.c.l.b16 %v618
        %v657 = vunpack.c.l.b16 %v619
        %v658 = vunpack.c.l.b16 %v620
        %v659 = vunpack.c.l.b16 %v621
        %v660 = vunpack.c.l.b16 %v622
        %v661 = vunpack.c.l.b16 %v623
        %v662 = vpack.c.b16 %v647, %v646
        %v663 = vpack.c.b16 %v649, %v648
        %v664 = vpack.c.b16 %v651, %v650
        %v665 = vpack.c.b16 %v653, %v652
        %v666 = vpack.c.b16 %v655, %v654
        %v667 = vpack.c.b16 %v657, %v656
        %v668 = vpack.c.b16 %v659, %v658
        %v669 = vpack.c.b16 %v661, %v660
        %678 = vmatprep.subr.bf16.mxu0 0
        %679 = vmatpush1.bf16.msra.mxu0 %v662
        %680 = vmatprep.subr.bf16.mxu0 0
        %681 = vmatpush1.bf16.msra.mxu0 %v663
        %682 = vmatprep.subr.bf16.mxu0 0
        %683 = vmatpush1.bf16.msra.mxu0 %v664
        %684 = vmatprep.subr.bf16.mxu0 0
        %685 = vmatpush1.bf16.msra.mxu0 %v665
        %686 = vmatprep.subr.bf16.mxu0 0
        %687 = vmatpush1.bf16.msra.mxu0 %v666
        %688 = vmatprep.subr.bf16.mxu0 0
        %689 = vmatpush1.bf16.msra.mxu0 %v667
        %690 = vmatprep.subr.bf16.mxu0 0
        %691 = vmatpush1.bf16.msra.mxu0 %v668
        %692 = vmatprep.subr.bf16.mxu0 0
        %693 = vmatpush1.bf16.msra.mxu0 %v669
        %694 = vmatprep.subr.bf16.mxu0 0
        %695 = vmatpush1.bf16.msra.mxu0 0
        %696 = vmatprep.subr.bf16.mxu0 0
        %697 = vmatpush1.bf16.msra.mxu0 0
        %698 = vmatprep.subr.bf16.mxu0 0
        %699 = vmatpush1.bf16.msra.mxu0 0
        %700 = vmatprep.subr.bf16.mxu0 0
        %701 = vmatpush1.bf16.msra.mxu0 0
        %702 = vmatprep.subr.bf16.mxu0 0
        %703 = vmatpush1.bf16.msra.mxu0 0
        %704 = vmatprep.subr.bf16.mxu0 0
        %705 = vmatpush1.bf16.msra.mxu0 0
        %706 = vmatprep.subr.bf16.mxu0 0
        %707 = vmatpush1.bf16.msra.mxu0 0
        %708 = vmatprep.subr.bf16.mxu0 0
        %709 = vmatpush1.bf16.msra.mxu0 0
        %710 = vmatprep.mubr.bf16.mxu0 0
        %711 = vmatmul.mubr.bf16.gmra.mrb[0].mxu0 %v627
        %v712 = vpop.f32.mrb[0].mxu0
        %v713 = vadd.f32 0.0, %v712
        %v714 = vpop.f32.mrb[0].mxu0
        %v715 = vpop.f32.mrb[0].mxu0
        %v716 = vadd.f32 0.0, %v715
        %v717 = vpop.f32.mrb[0].mxu0
        %718 = vmatprep.mubr.bf16.mxu0 0
        %719 = vmatmul.mubr.bf16.gmra.mrb[0].mxu0 %v626
        %v720 = vpop.f32.mrb[0].mxu0
        %v721 = vadd.f32 0.0, %v720
        %v722 = vpop.f32.mrb[0].mxu0
        %v723 = vpop.f32.mrb[0].mxu0
        %v724 = vadd.f32 0.0, %v723
        %v725 = vpop.f32.mrb[0].mxu0
        %726 = vdwg.mxu0
        %v727 = vadd.f32 %v466, %v713
        %v728 = vadd.f32 %v469, %v716
        %v729 = vadd.f32 %v474, %v721
        %v730 = vadd.f32 %v477, %v724
        %v731 = vrot.slane %v488, 1
        %v732 = vrot.slane %v489, 1
        %v733 = vsel %vm624, %v731, %v732
        %736 = vmatprep.subr.bf16.mxu0 0
        %737 = vmatpush1.bf16.msra.mxu0 %v662
        %738 = vmatprep.subr.bf16.mxu0 0
        %739 = vmatpush1.bf16.msra.mxu0 %v663
        %740 = vmatprep.subr.bf16.mxu0 0
        %741 = vmatpush1.bf16.msra.mxu0 %v664
        %742 = vmatprep.subr.bf16.mxu0 0
        %743 = vmatpush1.bf16.msra.mxu0 %v665
        %744 = vmatprep.subr.bf16.mxu0 0
        %745 = vmatpush1.bf16.msra.mxu0 %v666
        %746 = vmatprep.subr.bf16.mxu0 0
        %747 = vmatpush1.bf16.msra.mxu0 %v667
        %748 = vmatprep.subr.bf16.mxu0 0
        %749 = vmatpush1.bf16.msra.mxu0 %v668
        %750 = vmatprep.subr.bf16.mxu0 0
        %751 = vmatpush1.bf16.msra.mxu0 %v669
        %752 = vmatprep.subr.bf16.mxu0 0
        %753 = vmatpush1.bf16.msra.mxu0 0
        %754 = vmatprep.subr.bf16.mxu0 0
        %755 = vmatpush1.bf16.msra.mxu0 0
        %756 = vmatprep.subr.bf16.mxu0 0
        %757 = vmatpush1.bf16.msra.mxu0 0
        %758 = vmatprep.subr.bf16.mxu0 0
        %759 = vmatpush1.bf16.msra.mxu0 0
        %760 = vmatprep.subr.bf16.mxu0 0
        %761 = vmatpush1.bf16.msra.mxu0 0
        %762 = vmatprep.subr.bf16.mxu0 0
        %763 = vmatpush1.bf16.msra.mxu0 0
        %764 = vmatprep.subr.bf16.mxu0 0
        %765 = vmatpush1.bf16.msra.mxu0 0
        %766 = vmatprep.subr.bf16.mxu0 0
        %767 = vmatpush1.bf16.msra.mxu0 0
        %768 = vmatprep.mubr.bf16.mxu0 0
        %769 = vmatmul.mubr.bf16.gmra.mrb[0].mxu0 %v733
        %v770 = vpop.f32.mrb[0].mxu0
        %v771 = vadd.f32 0.0, %v770
        %v772 = vpop.f32.mrb[0].mxu0
        %v773 = vpop.f32.mrb[0].mxu0
        %v774 = vadd.f32 0.0, %v773
        %v775 = vpop.f32.mrb[0].mxu0
        %776 = vmatprep.mubr.bf16.mxu0 0
        %777 = vmatmul.mubr.bf16.gmra.mrb[0].mxu0 %v732
        %v778 = vpop.f32.mrb[0].mxu0
        %v779 = vadd.f32 0.0, %v778
        %v780 = vpop.f32.mrb[0].mxu0
        %v781 = vpop.f32.mrb[0].mxu0
        %v782 = vadd.f32 0.0, %v781
        %v783 = vpop.f32.mrb[0].mxu0
        %784 = vdwg.mxu0
        %v785 = vadd.f32 %v593, %v771
        %v786 = vadd.f32 %v596, %v774
        %v787 = vadd.f32 %v601, %v779
        %v788 = vadd.f32 %v604, %v782
        %s789 = scalar_lea.vmem %s1, 192
        %v790 = vld [vmem:[%s789] sm:$0xf]
        %v791 = vld [vmem:[%s789 + $0x4] sm:$0xf]
        %v792 = vld [vmem:[%s789 + $0x8] sm:$0xf]
        %v793 = vld [vmem:[%s789 + $0xc] sm:$0xf]
        %v794 = vld [vmem:[%s789 + $0x10] sm:$0xf]
        %v795 = vld [vmem:[%s789 + $0x14] sm:$0xf]
        %v796 = vld [vmem:[%s789 + $0x18] sm:$0xf]
        %v797 = vld [vmem:[%s789 + $0x1c] sm:$0xf]
        %v798 = vld [vmem:[%s789 + $0x20] sm:$0xf]
        %v799 = vld [vmem:[%s789 + $0x24] sm:$0xf]
        %v800 = vld [vmem:[%s789 + $0x28] sm:$0xf]
        %v801 = vld [vmem:[%s789 + $0x2c] sm:$0xf]
        %v802 = vld [vmem:[%s789 + $0x30] sm:$0xf]
        %v803 = vld [vmem:[%s789 + $0x34] sm:$0xf]
        %v804 = vld [vmem:[%s789 + $0x38] sm:$0xf]
        %v805 = vld [vmem:[%s789 + $0x3c] sm:$0xf]
        %vm806 = vsmask.f32 6400
        %v807 = vrot.slane %v268, 1
        %v808 = vrot.slane %v270, 2
        %v809 = vor.u32 %v807, %v808
        %v810 = vrot.slane %v279, 1
        %v811 = vrot.slane %v275, 2
        %v812 = vor.u32 %v810, %v811
        %v813 = vsel %vm806, %v809, %v812
        %v832 = vunpack.c.l.b16 %v790
        %v833 = vunpack.c.l.b16 %v791
        %v834 = vunpack.c.l.b16 %v792
        %v835 = vunpack.c.l.b16 %v793
        %v836 = vunpack.c.l.b16 %v794
        %v837 = vunpack.c.l.b16 %v795
        %v838 = vunpack.c.l.b16 %v796
        %v839 = vunpack.c.l.b16 %v797
        %v840 = vunpack.c.l.b16 %v798
        %v841 = vunpack.c.l.b16 %v799
        %v842 = vunpack.c.l.b16 %v800
        %v843 = vunpack.c.l.b16 %v801
        %v844 = vunpack.c.l.b16 %v802
        %v845 = vunpack.c.l.b16 %v803
        %v846 = vunpack.c.l.b16 %v804
        %v847 = vunpack.c.l.b16 %v805
        %v848 = vpack.c.b16 %v833, %v832
        %v849 = vpack.c.b16 %v835, %v834
        %v850 = vpack.c.b16 %v837, %v836
        %v851 = vpack.c.b16 %v839, %v838
        %v852 = vpack.c.b16 %v841, %v840
        %v853 = vpack.c.b16 %v843, %v842
        %v854 = vpack.c.b16 %v845, %v844
        %v855 = vpack.c.b16 %v847, %v846
        %864 = vmatprep.subr.bf16.mxu0 0
        %865 = vmatpush1.bf16.msra.mxu0 %v848
        %866 = vmatprep.subr.bf16.mxu0 0
        %867 = vmatpush1.bf16.msra.mxu0 %v849
        %868 = vmatprep.subr.bf16.mxu0 0
        %869 = vmatpush1.bf16.msra.mxu0 %v850
        %870 = vmatprep.subr.bf16.mxu0 0
        %871 = vmatpush1.bf16.msra.mxu0 %v851
        %872 = vmatprep.subr.bf16.mxu0 0
        %873 = vmatpush1.bf16.msra.mxu0 %v852
        %874 = vmatprep.subr.bf16.mxu0 0
        %875 = vmatpush1.bf16.msra.mxu0 %v853
        %876 = vmatprep.subr.bf16.mxu0 0
        %877 = vmatpush1.bf16.msra.mxu0 %v854
        %878 = vmatprep.subr.bf16.mxu0 0
        %879 = vmatpush1.bf16.msra.mxu0 %v855
        %880 = vmatprep.subr.bf16.mxu0 0
        %881 = vmatpush1.bf16.msra.mxu0 0
        %882 = vmatprep.subr.bf16.mxu0 0
        %883 = vmatpush1.bf16.msra.mxu0 0
        %884 = vmatprep.subr.bf16.mxu0 0
        %885 = vmatpush1.bf16.msra.mxu0 0
        %886 = vmatprep.subr.bf16.mxu0 0
        %887 = vmatpush1.bf16.msra.mxu0 0
        %888 = vmatprep.subr.bf16.mxu0 0
        %889 = vmatpush1.bf16.msra.mxu0 0
        %890 = vmatprep.subr.bf16.mxu0 0
        %891 = vmatpush1.bf16.msra.mxu0 0
        %892 = vmatprep.subr.bf16.mxu0 0
        %893 = vmatpush1.bf16.msra.mxu0 0
        %894 = vmatprep.subr.bf16.mxu0 0
        %895 = vmatpush1.bf16.msra.mxu0 0
        %896 = vmatprep.mubr.bf16.mxu0 0
        %897 = vmatmul.mubr.bf16.gmra.mrb[0].mxu0 %v813
        %v898 = vpop.f32.mrb[0].mxu0
        %v899 = vadd.f32 0.0, %v898
        %v900 = vpop.f32.mrb[0].mxu0
        %v901 = vpop.f32.mrb[0].mxu0
        %v902 = vadd.f32 0.0, %v901
        %v903 = vpop.f32.mrb[0].mxu0
        %904 = vmatprep.mubr.bf16.mxu0 0
        %905 = vmatmul.mubr.bf16.gmra.mrb[0].mxu0 %v812
        %v906 = vpop.f32.mrb[0].mxu0
        %v907 = vadd.f32 0.0, %v906
        %v908 = vpop.f32.mrb[0].mxu0
        %v909 = vpop.f32.mrb[0].mxu0
        %v910 = vadd.f32 0.0, %v909
        %v911 = vpop.f32.mrb[0].mxu0
        %912 = vdwg.mxu0
        %v913 = vadd.f32 %v727, %v899
        %v914 = vadd.f32 %v728, %v902
        %v915 = vadd.f32 %v729, %v907
        %v916 = vadd.f32 %v730, %v910
        %v917 = vrot.slane %v491, 1
        %v918 = vrot.slane %v493, 2
        %v919 = vor.u32 %v917, %v918
        %v920 = vrot.slane %v502, 1
        %v921 = vrot.slane %v498, 2
        %v922 = vor.u32 %v920, %v921
        %v923 = vsel %vm806, %v919, %v922
        %926 = vmatprep.subr.bf16.mxu0 0
        %927 = vmatpush1.bf16.msra.mxu0 %v848
        %928 = vmatprep.subr.bf16.mxu0 0
        %929 = vmatpush1.bf16.msra.mxu0 %v849
        %930 = vmatprep.subr.bf16.mxu0 0
        %931 = vmatpush1.bf16.msra.mxu0 %v850
        %932 = vmatprep.subr.bf16.mxu0 0
        %933 = vmatpush1.bf16.msra.mxu0 %v851
        %934 = vmatprep.subr.bf16.mxu0 0
        %935 = vmatpush1.bf16.msra.mxu0 %v852
        %936 = vmatprep.subr.bf16.mxu0 0
        %937 = vmatpush1.bf16.msra.mxu0 %v853
        %938 = vmatprep.subr.bf16.mxu0 0
        %939 = vmatpush1.bf16.msra.mxu0 %v854
        %940 = vmatprep.subr.bf16.mxu0 0
        %941 = vmatpush1.bf16.msra.mxu0 %v855
        %942 = vmatprep.subr.bf16.mxu0 0
        %943 = vmatpush1.bf16.msra.mxu0 0
        %944 = vmatprep.subr.bf16.mxu0 0
        %945 = vmatpush1.bf16.msra.mxu0 0
        %946 = vmatprep.subr.bf16.mxu0 0
        %947 = vmatpush1.bf16.msra.mxu0 0
        %948 = vmatprep.subr.bf16.mxu0 0
        %949 = vmatpush1.bf16.msra.mxu0 0
        %950 = vmatprep.subr.bf16.mxu0 0
        %951 = vmatpush1.bf16.msra.mxu0 0
        %952 = vmatprep.subr.bf16.mxu0 0
        %953 = vmatpush1.bf16.msra.mxu0 0
        %954 = vmatprep.subr.bf16.mxu0 0
        %955 = vmatpush1.bf16.msra.mxu0 0
        %956 = vmatprep.subr.bf16.mxu0 0
        %957 = vmatpush1.bf16.msra.mxu0 0
        %958 = vmatprep.mubr.bf16.mxu0 0
        %959 = vmatmul.mubr.bf16.gmra.mrb[0].mxu0 %v923
        %v960 = vpop.f32.mrb[0].mxu0
        %v961 = vadd.f32 0.0, %v960
        %v962 = vpop.f32.mrb[0].mxu0
        %v963 = vpop.f32.mrb[0].mxu0
        %v964 = vadd.f32 0.0, %v963
        %v965 = vpop.f32.mrb[0].mxu0
        %966 = vmatprep.mubr.bf16.mxu0 0
        %967 = vmatmul.mubr.bf16.gmra.mrb[0].mxu0 %v922
        %v968 = vpop.f32.mrb[0].mxu0
        %v969 = vadd.f32 0.0, %v968
        %v970 = vpop.f32.mrb[0].mxu0
        %v971 = vpop.f32.mrb[0].mxu0
        %v972 = vadd.f32 0.0, %v971
        %v973 = vpop.f32.mrb[0].mxu0
        %974 = vdwg.mxu0
        %v975 = vadd.f32 %v785, %v961
        %v976 = vadd.f32 %v786, %v964
        %v977 = vadd.f32 %v787, %v969
        %v978 = vadd.f32 %v788, %v972
        %s979 = scalar_lea.vmem %s1, 256
        %v980 = vld [vmem:[%s979] sm:$0xf]
        %v981 = vld [vmem:[%s979 + $0x4] sm:$0xf]
        %v982 = vld [vmem:[%s979 + $0x8] sm:$0xf]
        %v983 = vld [vmem:[%s979 + $0xc] sm:$0xf]
        %v984 = vld [vmem:[%s979 + $0x10] sm:$0xf]
        %v985 = vld [vmem:[%s979 + $0x14] sm:$0xf]
        %v986 = vld [vmem:[%s979 + $0x18] sm:$0xf]
        %v987 = vld [vmem:[%s979 + $0x1c] sm:$0xf]
        %v988 = vld [vmem:[%s979 + $0x20] sm:$0xf]
        %v989 = vld [vmem:[%s979 + $0x24] sm:$0xf]
        %v990 = vld [vmem:[%s979 + $0x28] sm:$0xf]
        %v991 = vld [vmem:[%s979 + $0x2c] sm:$0xf]
        %v992 = vld [vmem:[%s979 + $0x30] sm:$0xf]
        %v993 = vld [vmem:[%s979 + $0x34] sm:$0xf]
        %v994 = vld [vmem:[%s979 + $0x38] sm:$0xf]
        %v995 = vld [vmem:[%s979 + $0x3c] sm:$0xf]
        %vm996 = vcmask 1045504
        %v997 = vrot.slane %v264, 2
        %v998 = vrot.slane %v265, 2
        %v999 = vsel %vm996, %v997, %v998
        %v1018 = vunpack.c.l.b16 %v980
        %v1019 = vunpack.c.l.b16 %v981
        %v1020 = vunpack.c.l.b16 %v982
        %v1021 = vunpack.c.l.b16 %v983
        %v1022 = vunpack.c.l.b16 %v984
        %v1023 = vunpack.c.l.b16 %v985
        %v1024 = vunpack.c.l.b16 %v986
        %v1025 = vunpack.c.l.b16 %v987
        %v1026 = vunpack.c.l.b16 %v988
        %v1027 = vunpack.c.l.b16 %v989
        %v1028 = vunpack.c.l.b16 %v990
        %v1029 = vunpack.c.l.b16 %v991
        %v1030 = vunpack.c.l.b16 %v992
        %v1031 = vunpack.c.l.b16 %v993
        %v1032 = vunpack.c.l.b16 %v994
        %v1033 = vunpack.c.l.b16 %v995
        %v1034 = vpack.c.b16 %v1019, %v1018
        %v1035 = vpack.c.b16 %v1021, %v1020
        %v1036 = vpack.c.b16 %v1023, %v1022
        %v1037 = vpack.c.b16 %v1025, %v1024
        %v1038 = vpack.c.b16 %v1027, %v1026
        %v1039 = vpack.c.b16 %v1029, %v1028
        %v1040 = vpack.c.b16 %v1031, %v1030
        %v1041 = vpack.c.b16 %v1033, %v1032
        %1050 = vmatprep.subr.bf16.mxu0 0
        %1051 = vmatpush1.bf16.msra.mxu0 %v1034
        %1052 = vmatprep.subr.bf16.mxu0 0
        %1053 = vmatpush1.bf16.msra.mxu0 %v1035
        %1054 = vmatprep.subr.bf16.mxu0 0
        %1055 = vmatpush1.bf16.msra.mxu0 %v1036
        %1056 = vmatprep.subr.bf16.mxu0 0
        %1057 = vmatpush1.bf16.msra.mxu0 %v1037
        %1058 = vmatprep.subr.bf16.mxu0 0
        %1059 = vmatpush1.bf16.msra.mxu0 %v1038
        %1060 = vmatprep.subr.bf16.mxu0 0
        %1061 = vmatpush1.bf16.msra.mxu0 %v1039
        %1062 = vmatprep.subr.bf16.mxu0 0
        %1063 = vmatpush1.bf16.msra.mxu0 %v1040
        %1064 = vmatprep.subr.bf16.mxu0 0
        %1065 = vmatpush1.bf16.msra.mxu0 %v1041
        %1066 = vmatprep.subr.bf16.mxu0 0
        %1067 = vmatpush1.bf16.msra.mxu0 0
        %1068 = vmatprep.subr.bf16.mxu0 0
        %1069 = vmatpush1.bf16.msra.mxu0 0
        %1070 = vmatprep.subr.bf16.mxu0 0
        %1071 = vmatpush1.bf16.msra.mxu0 0
        %1072 = vmatprep.subr.bf16.mxu0 0
        %1073 = vmatpush1.bf16.msra.mxu0 0
        %1074 = vmatprep.subr.bf16.mxu0 0
        %1075 = vmatpush1.bf16.msra.mxu0 0
        %1076 = vmatprep.subr.bf16.mxu0 0
        %1077 = vmatpush1.bf16.msra.mxu0 0
        %1078 = vmatprep.subr.bf16.mxu0 0
        %1079 = vmatpush1.bf16.msra.mxu0 0
        %1080 = vmatprep.subr.bf16.mxu0 0
        %1081 = vmatpush1.bf16.msra.mxu0 0
        %1082 = vmatprep.mubr.bf16.mxu0 0
        %1083 = vmatmul.mubr.bf16.gmra.mrb[0].mxu0 %v999
        %v1084 = vpop.f32.mrb[0].mxu0
        %v1085 = vadd.f32 0.0, %v1084
        %v1086 = vpop.f32.mrb[0].mxu0
        %v1087 = vpop.f32.mrb[0].mxu0
        %v1088 = vadd.f32 0.0, %v1087
        %v1089 = vpop.f32.mrb[0].mxu0
        %1090 = vmatprep.mubr.bf16.mxu0 0
        %1091 = vmatmul.mubr.bf16.gmra.mrb[0].mxu0 %v998
        %v1092 = vpop.f32.mrb[0].mxu0
        %v1093 = vadd.f32 0.0, %v1092
        %v1094 = vpop.f32.mrb[0].mxu0
        %v1095 = vpop.f32.mrb[0].mxu0
        %v1096 = vadd.f32 0.0, %v1095
        %v1097 = vpop.f32.mrb[0].mxu0
        %1098 = vdwg.mxu0
        %v1099 = vadd.f32 %v913, %v1085
        %v1100 = vadd.f32 %v914, %v1088
        %v1101 = vadd.f32 %v915, %v1093
        %v1102 = vadd.f32 %v916, %v1096
        %v1103 = vrot.slane %v488, 2
        %v1104 = vrot.slane %v489, 2
        %v1105 = vsel %vm996, %v1103, %v1104
        %1108 = vmatprep.subr.bf16.mxu0 0
        %1109 = vmatpush1.bf16.msra.mxu0 %v1034
        %1110 = vmatprep.subr.bf16.mxu0 0
        %1111 = vmatpush1.bf16.msra.mxu0 %v1035
        %1112 = vmatprep.subr.bf16.mxu0 0
        %1113 = vmatpush1.bf16.msra.mxu0 %v1036
        %1114 = vmatprep.subr.bf16.mxu0 0
        %1115 = vmatpush1.bf16.msra.mxu0 %v1037
        %1116 = vmatprep.subr.bf16.mxu0 0
        %1117 = vmatpush1.bf16.msra.mxu0 %v1038
        %1118 = vmatprep.subr.bf16.mxu0 0
        %1119 = vmatpush1.bf16.msra.mxu0 %v1039
        %1120 = vmatprep.subr.bf16.mxu0 0
        %1121 = vmatpush1.bf16.msra.mxu0 %v1040
        %1122 = vmatprep.subr.bf16.mxu0 0
        %1123 = vmatpush1.bf16.msra.mxu0 %v1041
        %1124 = vmatprep.subr.bf16.mxu0 0
        %1125 = vmatpush1.bf16.msra.mxu0 0
        %1126 = vmatprep.subr.bf16.mxu0 0
        %1127 = vmatpush1.bf16.msra.mxu0 0
        %1128 = vmatprep.subr.bf16.mxu0 0
        %1129 = vmatpush1.bf16.msra.mxu0 0
        %1130 = vmatprep.subr.bf16.mxu0 0
        %1131 = vmatpush1.bf16.msra.mxu0 0
        %1132 = vmatprep.subr.bf16.mxu0 0
        %1133 = vmatpush1.bf16.msra.mxu0 0
        %1134 = vmatprep.subr.bf16.mxu0 0
        %1135 = vmatpush1.bf16.msra.mxu0 0
        %1136 = vmatprep.subr.bf16.mxu0 0
        %1137 = vmatpush1.bf16.msra.mxu0 0
        %1138 = vmatprep.subr.bf16.mxu0 0
        %1139 = vmatpush1.bf16.msra.mxu0 0
        %1140 = vmatprep.mubr.bf16.mxu0 0
        %1141 = vmatmul.mubr.bf16.gmra.mrb[0].mxu0 %v1105
        %v1142 = vpop.f32.mrb[0].mxu0
        %v1143 = vadd.f32 0.0, %v1142
        %v1144 = vpop.f32.mrb[0].mxu0
        %v1145 = vpop.f32.mrb[0].mxu0
        %v1146 = vadd.f32 0.0, %v1145
        %v1147 = vpop.f32.mrb[0].mxu0
        %1148 = vmatprep.mubr.bf16.mxu0 0
        %1149 = vmatmul.mubr.bf16.gmra.mrb[0].mxu0 %v1104
        %v1150 = vpop.f32.mrb[0].mxu0
        %v1151 = vadd.f32 0.0, %v1150
        %v1152 = vpop.f32.mrb[0].mxu0
        %v1153 = vpop.f32.mrb[0].mxu0
        %v1154 = vadd.f32 0.0, %v1153
        %v1155 = vpop.f32.mrb[0].mxu0
        %1156 = vdwg.mxu0
        %v1157 = vadd.f32 %v975, %v1143
        %v1158 = vadd.f32 %v976, %v1146
        %v1159 = vadd.f32 %v977, %v1151
        %v1160 = vadd.f32 %v978, %v1154
        %s1161 = sadd.s32 %s207, 2
        %s1162 = smul.u32 %s1161, 4
        %s1163 = smul.addr %s1162, 4
        %s1164 = scalar_lea.vmem %s192, %s1163
        %v1165 = vld [vmem:[%s1164] sm:$0xf]
        %v1166 = vld [vmem:[%s1164 + $0x4] sm:$0xf]
        %v1167 = vld [vmem:[%s1164 + $0x8] sm:$0xf]
        %v1168 = vld [vmem:[%s1164 + $0xc] sm:$0xf]
        %s1169 = scalar_lea.vmem %s1, 320
        %v1170 = vld [vmem:[%s1169] sm:$0xf]
        %v1171 = vld [vmem:[%s1169 + $0x4] sm:$0xf]
        %v1172 = vld [vmem:[%s1169 + $0x8] sm:$0xf]
        %v1173 = vld [vmem:[%s1169 + $0xc] sm:$0xf]
        %v1174 = vld [vmem:[%s1169 + $0x10] sm:$0xf]
        %v1175 = vld [vmem:[%s1169 + $0x14] sm:$0xf]
        %v1176 = vld [vmem:[%s1169 + $0x18] sm:$0xf]
        %v1177 = vld [vmem:[%s1169 + $0x1c] sm:$0xf]
        %v1178 = vld [vmem:[%s1169 + $0x20] sm:$0xf]
        %v1179 = vld [vmem:[%s1169 + $0x24] sm:$0xf]
        %v1180 = vld [vmem:[%s1169 + $0x28] sm:$0xf]
        %v1181 = vld [vmem:[%s1169 + $0x2c] sm:$0xf]
        %v1182 = vld [vmem:[%s1169 + $0x30] sm:$0xf]
        %v1183 = vld [vmem:[%s1169 + $0x34] sm:$0xf]
        %v1184 = vld [vmem:[%s1169 + $0x38] sm:$0xf]
        %v1185 = vld [vmem:[%s1169 + $0x3c] sm:$0xf]
        %v1202 = vunpack.c.l.b16 %v1170
        %v1203 = vunpack.c.l.b16 %v1171
        %v1204 = vunpack.c.l.b16 %v1172
        %v1205 = vunpack.c.l.b16 %v1173
        %v1206 = vunpack.c.l.b16 %v1174
        %v1207 = vunpack.c.l.b16 %v1175
        %v1208 = vunpack.c.l.b16 %v1176
        %v1209 = vunpack.c.l.b16 %v1177
        %v1210 = vunpack.c.l.b16 %v1178
        %v1211 = vunpack.c.l.b16 %v1179
        %v1212 = vunpack.c.l.b16 %v1180
        %v1213 = vunpack.c.l.b16 %v1181
        %v1214 = vunpack.c.l.b16 %v1182
        %v1215 = vunpack.c.l.b16 %v1183
        %v1216 = vunpack.c.l.b16 %v1184
        %v1217 = vunpack.c.l.b16 %v1185
        %v1218 = vpack.c.b16 %v1203, %v1202
        %v1219 = vpack.c.b16 %v1205, %v1204
        %v1220 = vpack.c.b16 %v1207, %v1206
        %v1221 = vpack.c.b16 %v1209, %v1208
        %v1222 = vpack.c.b16 %v1211, %v1210
        %v1223 = vpack.c.b16 %v1213, %v1212
        %v1224 = vpack.c.b16 %v1215, %v1214
        %v1225 = vpack.c.b16 %v1217, %v1216
        %1234 = vmatprep.subr.bf16.mxu0 0
        %1235 = vmatpush1.bf16.msra.mxu0 %v1218
        %1236 = vmatprep.subr.bf16.mxu0 0
        %1237 = vmatpush1.bf16.msra.mxu0 %v1219
        %1238 = vmatprep.subr.bf16.mxu0 0
        %1239 = vmatpush1.bf16.msra.mxu0 %v1220
        %1240 = vmatprep.subr.bf16.mxu0 0
        %1241 = vmatpush1.bf16.msra.mxu0 %v1221
        %1242 = vmatprep.subr.bf16.mxu0 0
        %1243 = vmatpush1.bf16.msra.mxu0 %v1222
        %1244 = vmatprep.subr.bf16.mxu0 0
        %1245 = vmatpush1.bf16.msra.mxu0 %v1223
        %1246 = vmatprep.subr.bf16.mxu0 0
        %1247 = vmatpush1.bf16.msra.mxu0 %v1224
        %1248 = vmatprep.subr.bf16.mxu0 0
        %1249 = vmatpush1.bf16.msra.mxu0 %v1225
        %1250 = vmatprep.subr.bf16.mxu0 0
        %1251 = vmatpush1.bf16.msra.mxu0 0
        %1252 = vmatprep.subr.bf16.mxu0 0
        %1253 = vmatpush1.bf16.msra.mxu0 0
        %1254 = vmatprep.subr.bf16.mxu0 0
        %1255 = vmatpush1.bf16.msra.mxu0 0
        %1256 = vmatprep.subr.bf16.mxu0 0
        %1257 = vmatpush1.bf16.msra.mxu0 0
        %1258 = vmatprep.subr.bf16.mxu0 0
        %1259 = vmatpush1.bf16.msra.mxu0 0
        %1260 = vmatprep.subr.bf16.mxu0 0
        %1261 = vmatpush1.bf16.msra.mxu0 0
        %1262 = vmatprep.subr.bf16.mxu0 0
        %1263 = vmatpush1.bf16.msra.mxu0 0
        %1264 = vmatprep.subr.bf16.mxu0 0
        %1265 = vmatpush1.bf16.msra.mxu0 0
        %1266 = vmatprep.mubr.bf16.mxu0 0
        %1267 = vmatmul.mubr.bf16.gmra.mrb[0].mxu0 %v488
        %v1268 = vpop.f32.mrb[0].mxu0
        %v1269 = vadd.f32 0.0, %v1268
        %v1270 = vpop.f32.mrb[0].mxu0
        %v1271 = vpop.f32.mrb[0].mxu0
        %v1272 = vadd.f32 0.0, %v1271
        %v1273 = vpop.f32.mrb[0].mxu0
        %1274 = vmatprep.mubr.bf16.mxu0 0
        %1275 = vmatmul.mubr.bf16.gmra.mrb[0].mxu0 %v489
        %v1276 = vpop.f32.mrb[0].mxu0
        %v1277 = vadd.f32 0.0, %v1276
        %v1278 = vpop.f32.mrb[0].mxu0
        %v1279 = vpop.f32.mrb[0].mxu0
        %v1280 = vadd.f32 0.0, %v1279
        %v1281 = vpop.f32.mrb[0].mxu0
        %1282 = vdwg.mxu0
        %v1283 = vadd.f32 %v1099, %v1269
        %v1284 = vadd.f32 %v1100, %v1272
        %v1285 = vadd.f32 %v1101, %v1277
        %v1286 = vadd.f32 %v1102, %v1280
        %v1291 = vunpack.c.l.b16 %v1165
        %v1292 = vunpack.c.l.b16 %v1166
        %v1293 = vunpack.c.l.b16 %v1167
        %v1294 = vunpack.c.l.b16 %v1168
        %v1295 = vpack.c.b16 %v1292, %v1291
        %v1296 = vpack.c.b16 %v1294, %v1293
        %1299 = vmatprep.subr.bf16.mxu0 0
        %1300 = vmatpush1.bf16.msra.mxu0 %v1218
        %1301 = vmatprep.subr.bf16.mxu0 0
        %1302 = vmatpush1.bf16.msra.mxu0 %v1219
        %1303 = vmatprep.subr.bf16.mxu0 0
        %1304 = vmatpush1.bf16.msra.mxu0 %v1220
        %1305 = vmatprep.subr.bf16.mxu0 0
        %1306 = vmatpush1.bf16.msra.mxu0 %v1221
        %1307 = vmatprep.subr.bf16.mxu0 0
        %1308 = vmatpush1.bf16.msra.mxu0 %v1222
        %1309 = vmatprep.subr.bf16.mxu0 0
        %1310 = vmatpush1.bf16.msra.mxu0 %v1223
        %1311 = vmatprep.subr.bf16.mxu0 0
        %1312 = vmatpush1.bf16.msra.mxu0 %v1224
        %1313 = vmatprep.subr.bf16.mxu0 0
        %1314 = vmatpush1.bf16.msra.mxu0 %v1225
        %1315 = vmatprep.subr.bf16.mxu0 0
        %1316 = vmatpush1.bf16.msra.mxu0 0
        %1317 = vmatprep.subr.bf16.mxu0 0
        %1318 = vmatpush1.bf16.msra.mxu0 0
        %1319 = vmatprep.subr.bf16.mxu0 0
        %1320 = vmatpush1.bf16.msra.mxu0 0
        %1321 = vmatprep.subr.bf16.mxu0 0
        %1322 = vmatpush1.bf16.msra.mxu0 0
        %1323 = vmatprep.subr.bf16.mxu0 0
        %1324 = vmatpush1.bf16.msra.mxu0 0
        %1325 = vmatprep.subr.bf16.mxu0 0
        %1326 = vmatpush1.bf16.msra.mxu0 0
        %1327 = vmatprep.subr.bf16.mxu0 0
        %1328 = vmatpush1.bf16.msra.mxu0 0
        %1329 = vmatprep.subr.bf16.mxu0 0
        %1330 = vmatpush1.bf16.msra.mxu0 0
        %1331 = vmatprep.mubr.bf16.mxu0 0
        %1332 = vmatmul.mubr.bf16.gmra.mrb[0].mxu0 %v1295
        %v1333 = vpop.f32.mrb[0].mxu0
        %v1334 = vadd.f32 0.0, %v1333
        %v1335 = vpop.f32.mrb[0].mxu0
        %v1336 = vpop.f32.mrb[0].mxu0
        %v1337 = vadd.f32 0.0, %v1336
        %v1338 = vpop.f32.mrb[0].mxu0
        %1339 = vmatprep.mubr.bf16.mxu0 0
        %1340 = vmatmul.mubr.bf16.gmra.mrb[0].mxu0 %v1296
        %v1341 = vpop.f32.mrb[0].mxu0
        %v1342 = vadd.f32 0.0, %v1341
        %v1343 = vpop.f32.mrb[0].mxu0
        %v1344 = vpop.f32.mrb[0].mxu0
        %v1345 = vadd.f32 0.0, %v1344
        %v1346 = vpop.f32.mrb[0].mxu0
        %1347 = vdwg.mxu0
        %v1348 = vadd.f32 %v1157, %v1334
        %v1349 = vadd.f32 %v1158, %v1337
        %v1350 = vadd.f32 %v1159, %v1342
        %v1351 = vadd.f32 %v1160, %v1345
        %s1352 = scalar_lea.vmem %s1, 384
        %v1353 = vld [vmem:[%s1352] sm:$0xf]
        %v1354 = vld [vmem:[%s1352 + $0x4] sm:$0xf]
        %v1355 = vld [vmem:[%s1352 + $0x8] sm:$0xf]
        %v1356 = vld [vmem:[%s1352 + $0xc] sm:$0xf]
        %v1357 = vld [vmem:[%s1352 + $0x10] sm:$0xf]
        %v1358 = vld [vmem:[%s1352 + $0x14] sm:$0xf]
        %v1359 = vld [vmem:[%s1352 + $0x18] sm:$0xf]
        %v1360 = vld [vmem:[%s1352 + $0x1c] sm:$0xf]
        %v1361 = vld [vmem:[%s1352 + $0x20] sm:$0xf]
        %v1362 = vld [vmem:[%s1352 + $0x24] sm:$0xf]
        %v1363 = vld [vmem:[%s1352 + $0x28] sm:$0xf]
        %v1364 = vld [vmem:[%s1352 + $0x2c] sm:$0xf]
        %v1365 = vld [vmem:[%s1352 + $0x30] sm:$0xf]
        %v1366 = vld [vmem:[%s1352 + $0x34] sm:$0xf]
        %v1367 = vld [vmem:[%s1352 + $0x38] sm:$0xf]
        %v1368 = vld [vmem:[%s1352 + $0x3c] sm:$0xf]
        %v1385 = vunpack.c.l.b16 %v1353
        %v1386 = vunpack.c.l.b16 %v1354
        %v1387 = vunpack.c.l.b16 %v1355
        %v1388 = vunpack.c.l.b16 %v1356
        %v1389 = vunpack.c.l.b16 %v1357
        %v1390 = vunpack.c.l.b16 %v1358
        %v1391 = vunpack.c.l.b16 %v1359
        %v1392 = vunpack.c.l.b16 %v1360
        %v1393 = vunpack.c.l.b16 %v1361
        %v1394 = vunpack.c.l.b16 %v1362
        %v1395 = vunpack.c.l.b16 %v1363
        %v1396 = vunpack.c.l.b16 %v1364
        %v1397 = vunpack.c.l.b16 %v1365
        %v1398 = vunpack.c.l.b16 %v1366
        %v1399 = vunpack.c.l.b16 %v1367
        %v1400 = vunpack.c.l.b16 %v1368
        %v1401 = vpack.c.b16 %v1386, %v1385
        %v1402 = vpack.c.b16 %v1388, %v1387
        %v1403 = vpack.c.b16 %v1390, %v1389
        %v1404 = vpack.c.b16 %v1392, %v1391
        %v1405 = vpack.c.b16 %v1394, %v1393
        %v1406 = vpack.c.b16 %v1396, %v1395
        %v1407 = vpack.c.b16 %v1398, %v1397
        %v1408 = vpack.c.b16 %v1400, %v1399
        %1417 = vmatprep.subr.bf16.mxu0 0
        %1418 = vmatpush1.bf16.msra.mxu0 %v1401
        %1419 = vmatprep.subr.bf16.mxu0 0
        %1420 = vmatpush1.bf16.msra.mxu0 %v1402
        %1421 = vmatprep.subr.bf16.mxu0 0
        %1422 = vmatpush1.bf16.msra.mxu0 %v1403
        %1423 = vmatprep.subr.bf16.mxu0 0
        %1424 = vmatpush1.bf16.msra.mxu0 %v1404
        %1425 = vmatprep.subr.bf16.mxu0 0
        %1426 = vmatpush1.bf16.msra.mxu0 %v1405
        %1427 = vmatprep.subr.bf16.mxu0 0
        %1428 = vmatpush1.bf16.msra.mxu0 %v1406
        %1429 = vmatprep.subr.bf16.mxu0 0
        %1430 = vmatpush1.bf16.msra.mxu0 %v1407
        %1431 = vmatprep.subr.bf16.mxu0 0
        %1432 = vmatpush1.bf16.msra.mxu0 %v1408
        %1433 = vmatprep.subr.bf16.mxu0 0
        %1434 = vmatpush1.bf16.msra.mxu0 0
        %1435 = vmatprep.subr.bf16.mxu0 0
        %1436 = vmatpush1.bf16.msra.mxu0 0
        %1437 = vmatprep.subr.bf16.mxu0 0
        %1438 = vmatpush1.bf16.msra.mxu0 0
        %1439 = vmatprep.subr.bf16.mxu0 0
        %1440 = vmatpush1.bf16.msra.mxu0 0
        %1441 = vmatprep.subr.bf16.mxu0 0
        %1442 = vmatpush1.bf16.msra.mxu0 0
        %1443 = vmatprep.subr.bf16.mxu0 0
        %1444 = vmatpush1.bf16.msra.mxu0 0
        %1445 = vmatprep.subr.bf16.mxu0 0
        %1446 = vmatpush1.bf16.msra.mxu0 0
        %1447 = vmatprep.subr.bf16.mxu0 0
        %1448 = vmatpush1.bf16.msra.mxu0 0
        %1449 = vmatprep.mubr.bf16.mxu0 0
        %1450 = vmatmul.mubr.bf16.gmra.mrb[0].mxu0 %v501
        %v1451 = vpop.f32.mrb[0].mxu0
        %v1452 = vadd.f32 0.0, %v1451
        %v1453 = vpop.f32.mrb[0].mxu0
        %v1454 = vpop.f32.mrb[0].mxu0
        %v1455 = vadd.f32 0.0, %v1454
        %v1456 = vpop.f32.mrb[0].mxu0
        %1457 = vmatprep.mubr.bf16.mxu0 0
        %1458 = vmatmul.mubr.bf16.gmra.mrb[0].mxu0 %v504
        %v1459 = vpop.f32.mrb[0].mxu0
        %v1460 = vadd.f32 0.0, %v1459
        %v1461 = vpop.f32.mrb[0].mxu0
        %v1462 = vpop.f32.mrb[0].mxu0
        %v1463 = vadd.f32 0.0, %v1462
        %v1464 = vpop.f32.mrb[0].mxu0
        %1465 = vdwg.mxu0
        %v1466 = vadd.f32 %v1283, %v1452
        %v1467 = vadd.f32 %v1284, %v1455
        %v1468 = vadd.f32 %v1285, %v1460
        %v1469 = vadd.f32 %v1286, %v1463
        %v1471 = vshrl.u32 %v1295, 16
        %v1473 = vshll.u32 %v1295, 16
        %v1475 = vrot.slane %v1473, 1
        %v1476 = vor.u32 %v1471, %v1475
        %v1478 = vshll.u32 %v1296, 16
        %v1480 = vrot.slane %v1478, 1
        %v1481 = vsel %vm266, %v1476, %v1480
        %v1482 = vshrl.u32 %v1296, 16
        %v1484 = vor.u32 %v1482, %v1480
        %1487 = vmatprep.subr.bf16.mxu0 0
        %1488 = vmatpush1.bf16.msra.mxu0 %v1401
        %1489 = vmatprep.subr.bf16.mxu0 0
        %1490 = vmatpush1.bf16.msra.mxu0 %v1402
        %1491 = vmatprep.subr.bf16.mxu0 0
        %1492 = vmatpush1.bf16.msra.mxu0 %v1403
        %1493 = vmatprep.subr.bf16.mxu0 0
        %1494 = vmatpush1.bf16.msra.mxu0 %v1404
        %1495 = vmatprep.subr.bf16.mxu0 0
        %1496 = vmatpush1.bf16.msra.mxu0 %v1405
        %1497 = vmatprep.subr.bf16.mxu0 0
        %1498 = vmatpush1.bf16.msra.mxu0 %v1406
        %1499 = vmatprep.subr.bf16.mxu0 0
        %1500 = vmatpush1.bf16.msra.mxu0 %v1407
        %1501 = vmatprep.subr.bf16.mxu0 0
        %1502 = vmatpush1.bf16.msra.mxu0 %v1408
        %1503 = vmatprep.subr.bf16.mxu0 0
        %1504 = vmatpush1.bf16.msra.mxu0 0
        %1505 = vmatprep.subr.bf16.mxu0 0
        %1506 = vmatpush1.bf16.msra.mxu0 0
        %1507 = vmatprep.subr.bf16.mxu0 0
        %1508 = vmatpush1.bf16.msra.mxu0 0
        %1509 = vmatprep.subr.bf16.mxu0 0
        %1510 = vmatpush1.bf16.msra.mxu0 0
        %1511 = vmatprep.subr.bf16.mxu0 0
        %1512 = vmatpush1.bf16.msra.mxu0 0
        %1513 = vmatprep.subr.bf16.mxu0 0
        %1514 = vmatpush1.bf16.msra.mxu0 0
        %1515 = vmatprep.subr.bf16.mxu0 0
        %1516 = vmatpush1.bf16.msra.mxu0 0
        %1517 = vmatprep.subr.bf16.mxu0 0
        %1518 = vmatpush1.bf16.msra.mxu0 0
        %1519 = vmatprep.mubr.bf16.mxu0 0
        %1520 = vmatmul.mubr.bf16.gmra.mrb[0].mxu0 %v1481
        %v1521 = vpop.f32.mrb[0].mxu0
        %v1522 = vadd.f32 0.0, %v1521
        %v1523 = vpop.f32.mrb[0].mxu0
        %v1524 = vpop.f32.mrb[0].mxu0
        %v1525 = vadd.f32 0.0, %v1524
        %v1526 = vpop.f32.mrb[0].mxu0
        %1527 = vmatprep.mubr.bf16.mxu0 0
        %1528 = vmatmul.mubr.bf16.gmra.mrb[0].mxu0 %v1484
        %v1529 = vpop.f32.mrb[0].mxu0
        %v1530 = vadd.f32 0.0, %v1529
        %v1531 = vpop.f32.mrb[0].mxu0
        %v1532 = vpop.f32.mrb[0].mxu0
        %v1533 = vadd.f32 0.0, %v1532
        %v1534 = vpop.f32.mrb[0].mxu0
        %1535 = vdwg.mxu0
        %v1536 = vadd.f32 %v1348, %v1522
        %v1537 = vadd.f32 %v1349, %v1525
        %v1538 = vadd.f32 %v1350, %v1530
        %v1539 = vadd.f32 %v1351, %v1533
        %s1540 = scalar_lea.vmem %s1, 448
        %v1541 = vld [vmem:[%s1540] sm:$0xf]
        %v1542 = vld [vmem:[%s1540 + $0x4] sm:$0xf]
        %v1543 = vld [vmem:[%s1540 + $0x8] sm:$0xf]
        %v1544 = vld [vmem:[%s1540 + $0xc] sm:$0xf]
        %v1545 = vld [vmem:[%s1540 + $0x10] sm:$0xf]
        %v1546 = vld [vmem:[%s1540 + $0x14] sm:$0xf]
        %v1547 = vld [vmem:[%s1540 + $0x18] sm:$0xf]
        %v1548 = vld [vmem:[%s1540 + $0x1c] sm:$0xf]
        %v1549 = vld [vmem:[%s1540 + $0x20] sm:$0xf]
        %v1550 = vld [vmem:[%s1540 + $0x24] sm:$0xf]
        %v1551 = vld [vmem:[%s1540 + $0x28] sm:$0xf]
        %v1552 = vld [vmem:[%s1540 + $0x2c] sm:$0xf]
        %v1553 = vld [vmem:[%s1540 + $0x30] sm:$0xf]
        %v1554 = vld [vmem:[%s1540 + $0x34] sm:$0xf]
        %v1555 = vld [vmem:[%s1540 + $0x38] sm:$0xf]
        %v1556 = vld [vmem:[%s1540 + $0x3c] sm:$0xf]
        %v1573 = vunpack.c.l.b16 %v1541
        %v1574 = vunpack.c.l.b16 %v1542
        %v1575 = vunpack.c.l.b16 %v1543
        %v1576 = vunpack.c.l.b16 %v1544
        %v1577 = vunpack.c.l.b16 %v1545
        %v1578 = vunpack.c.l.b16 %v1546
        %v1579 = vunpack.c.l.b16 %v1547
        %v1580 = vunpack.c.l.b16 %v1548
        %v1581 = vunpack.c.l.b16 %v1549
        %v1582 = vunpack.c.l.b16 %v1550
        %v1583 = vunpack.c.l.b16 %v1551
        %v1584 = vunpack.c.l.b16 %v1552
        %v1585 = vunpack.c.l.b16 %v1553
        %v1586 = vunpack.c.l.b16 %v1554
        %v1587 = vunpack.c.l.b16 %v1555
        %v1588 = vunpack.c.l.b16 %v1556
        %v1589 = vpack.c.b16 %v1574, %v1573
        %v1590 = vpack.c.b16 %v1576, %v1575
        %v1591 = vpack.c.b16 %v1578, %v1577
        %v1592 = vpack.c.b16 %v1580, %v1579
        %v1593 = vpack.c.b16 %v1582, %v1581
        %v1594 = vpack.c.b16 %v1584, %v1583
        %v1595 = vpack.c.b16 %v1586, %v1585
        %v1596 = vpack.c.b16 %v1588, %v1587
        %1605 = vmatprep.subr.bf16.mxu0 0
        %1606 = vmatpush1.bf16.msra.mxu0 %v1589
        %1607 = vmatprep.subr.bf16.mxu0 0
        %1608 = vmatpush1.bf16.msra.mxu0 %v1590
        %1609 = vmatprep.subr.bf16.mxu0 0
        %1610 = vmatpush1.bf16.msra.mxu0 %v1591
        %1611 = vmatprep.subr.bf16.mxu0 0
        %1612 = vmatpush1.bf16.msra.mxu0 %v1592
        %1613 = vmatprep.subr.bf16.mxu0 0
        %1614 = vmatpush1.bf16.msra.mxu0 %v1593
        %1615 = vmatprep.subr.bf16.mxu0 0
        %1616 = vmatpush1.bf16.msra.mxu0 %v1594
        %1617 = vmatprep.subr.bf16.mxu0 0
        %1618 = vmatpush1.bf16.msra.mxu0 %v1595
        %1619 = vmatprep.subr.bf16.mxu0 0
        %1620 = vmatpush1.bf16.msra.mxu0 %v1596
        %1621 = vmatprep.subr.bf16.mxu0 0
        %1622 = vmatpush1.bf16.msra.mxu0 0
        %1623 = vmatprep.subr.bf16.mxu0 0
        %1624 = vmatpush1.bf16.msra.mxu0 0
        %1625 = vmatprep.subr.bf16.mxu0 0
        %1626 = vmatpush1.bf16.msra.mxu0 0
        %1627 = vmatprep.subr.bf16.mxu0 0
        %1628 = vmatpush1.bf16.msra.mxu0 0
        %1629 = vmatprep.subr.bf16.mxu0 0
        %1630 = vmatpush1.bf16.msra.mxu0 0
        %1631 = vmatprep.subr.bf16.mxu0 0
        %1632 = vmatpush1.bf16.msra.mxu0 0
        %1633 = vmatprep.subr.bf16.mxu0 0
        %1634 = vmatpush1.bf16.msra.mxu0 0
        %1635 = vmatprep.subr.bf16.mxu0 0
        %1636 = vmatpush1.bf16.msra.mxu0 0
        %1637 = vmatprep.mubr.bf16.mxu0 0
        %1638 = vmatmul.mubr.bf16.gmra.mrb[0].mxu0 %v733
        %v1639 = vpop.f32.mrb[0].mxu0
        %v1640 = vadd.f32 0.0, %v1639
        %v1641 = vpop.f32.mrb[0].mxu0
        %v1642 = vpop.f32.mrb[0].mxu0
        %v1643 = vadd.f32 0.0, %v1642
        %v1644 = vpop.f32.mrb[0].mxu0
        %1645 = vmatprep.mubr.bf16.mxu0 0
        %1646 = vmatmul.mubr.bf16.gmra.mrb[0].mxu0 %v732
        %v1647 = vpop.f32.mrb[0].mxu0
        %v1648 = vadd.f32 0.0, %v1647
        %v1649 = vpop.f32.mrb[0].mxu0
        %v1650 = vpop.f32.mrb[0].mxu0
        %v1651 = vadd.f32 0.0, %v1650
        %v1652 = vpop.f32.mrb[0].mxu0
        %1653 = vdwg.mxu0
        %v1654 = vadd.f32 %v1466, %v1640
        %v1655 = vadd.f32 %v1467, %v1643
        %v1656 = vadd.f32 %v1468, %v1648
        %v1657 = vadd.f32 %v1469, %v1651
        %v1658 = vrot.slane %v1295, 1
        %v1659 = vrot.slane %v1296, 1
        %v1660 = vsel %vm624, %v1658, %v1659
        %1663 = vmatprep.subr.bf16.mxu0 0
        %1664 = vmatpush1.bf16.msra.mxu0 %v1589
        %1665 = vmatprep.subr.bf16.mxu0 0
        %1666 = vmatpush1.bf16.msra.mxu0 %v1590
        %1667 = vmatprep.subr.bf16.mxu0 0
        %1668 = vmatpush1.bf16.msra.mxu0 %v1591
        %1669 = vmatprep.subr.bf16.mxu0 0
        %1670 = vmatpush1.bf16.msra.mxu0 %v1592
        %1671 = vmatprep.subr.bf16.mxu0 0
        %1672 = vmatpush1.bf16.msra.mxu0 %v1593
        %1673 = vmatprep.subr.bf16.mxu0 0
        %1674 = vmatpush1.bf16.msra.mxu0 %v1594
        %1675 = vmatprep.subr.bf16.mxu0 0
        %1676 = vmatpush1.bf16.msra.mxu0 %v1595
        %1677 = vmatprep.subr.bf16.mxu0 0
        %1678 = vmatpush1.bf16.msra.mxu0 %v1596
        %1679 = vmatprep.subr.bf16.mxu0 0
        %1680 = vmatpush1.bf16.msra.mxu0 0
        %1681 = vmatprep.subr.bf16.mxu0 0
        %1682 = vmatpush1.bf16.msra.mxu0 0
        %1683 = vmatprep.subr.bf16.mxu0 0
        %1684 = vmatpush1.bf16.msra.mxu0 0
        %1685 = vmatprep.subr.bf16.mxu0 0
        %1686 = vmatpush1.bf16.msra.mxu0 0
        %1687 = vmatprep.subr.bf16.mxu0 0
        %1688 = vmatpush1.bf16.msra.mxu0 0
        %1689 = vmatprep.subr.bf16.mxu0 0
        %1690 = vmatpush1.bf16.msra.mxu0 0
        %1691 = vmatprep.subr.bf16.mxu0 0
        %1692 = vmatpush1.bf16.msra.mxu0 0
        %1693 = vmatprep.subr.bf16.mxu0 0
        %1694 = vmatpush1.bf16.msra.mxu0 0
        %1695 = vmatprep.mubr.bf16.mxu0 0
        %1696 = vmatmul.mubr.bf16.gmra.mrb[0].mxu0 %v1660
        %v1697 = vpop.f32.mrb[0].mxu0
        %v1698 = vadd.f32 0.0, %v1697
        %v1699 = vpop.f32.mrb[0].mxu0
        %v1700 = vpop.f32.mrb[0].mxu0
        %v1701 = vadd.f32 0.0, %v1700
        %v1702 = vpop.f32.mrb[0].mxu0
        %1703 = vmatprep.mubr.bf16.mxu0 0
        %1704 = vmatmul.mubr.bf16.gmra.mrb[0].mxu0 %v1659
        %v1705 = vpop.f32.mrb[0].mxu0
        %v1706 = vadd.f32 0.0, %v1705
        %v1707 = vpop.f32.mrb[0].mxu0
        %v1708 = vpop.f32.mrb[0].mxu0
        %v1709 = vadd.f32 0.0, %v1708
        %v1710 = vpop.f32.mrb[0].mxu0
        %1711 = vdwg.mxu0
        %v1712 = vadd.f32 %v1536, %v1698
        %v1713 = vadd.f32 %v1537, %v1701
        %v1714 = vadd.f32 %v1538, %v1706
        %v1715 = vadd.f32 %v1539, %v1709
        %s1716 = scalar_lea.vmem %s1, 512
        %v1717 = vld [vmem:[%s1716] sm:$0xf]
        %v1718 = vld [vmem:[%s1716 + $0x4] sm:$0xf]
        %v1719 = vld [vmem:[%s1716 + $0x8] sm:$0xf]
        %v1720 = vld [vmem:[%s1716 + $0xc] sm:$0xf]
        %v1721 = vld [vmem:[%s1716 + $0x10] sm:$0xf]
        %v1722 = vld [vmem:[%s1716 + $0x14] sm:$0xf]
        %v1723 = vld [vmem:[%s1716 + $0x18] sm:$0xf]
        %v1724 = vld [vmem:[%s1716 + $0x1c] sm:$0xf]
        %v1725 = vld [vmem:[%s1716 + $0x20] sm:$0xf]
        %v1726 = vld [vmem:[%s1716 + $0x24] sm:$0xf]
        %v1727 = vld [vmem:[%s1716 + $0x28] sm:$0xf]
        %v1728 = vld [vmem:[%s1716 + $0x2c] sm:$0xf]
        %v1729 = vld [vmem:[%s1716 + $0x30] sm:$0xf]
        %v1730 = vld [vmem:[%s1716 + $0x34] sm:$0xf]
        %v1731 = vld [vmem:[%s1716 + $0x38] sm:$0xf]
        %v1732 = vld [vmem:[%s1716 + $0x3c] sm:$0xf]
        %v1749 = vunpack.c.l.b16 %v1717
        %v1750 = vunpack.c.l.b16 %v1718
        %v1751 = vunpack.c.l.b16 %v1719
        %v1752 = vunpack.c.l.b16 %v1720
        %v1753 = vunpack.c.l.b16 %v1721
        %v1754 = vunpack.c.l.b16 %v1722
        %v1755 = vunpack.c.l.b16 %v1723
        %v1756 = vunpack.c.l.b16 %v1724
        %v1757 = vunpack.c.l.b16 %v1725
        %v1758 = vunpack.c.l.b16 %v1726
        %v1759 = vunpack.c.l.b16 %v1727
        %v1760 = vunpack.c.l.b16 %v1728
        %v1761 = vunpack.c.l.b16 %v1729
        %v1762 = vunpack.c.l.b16 %v1730
        %v1763 = vunpack.c.l.b16 %v1731
        %v1764 = vunpack.c.l.b16 %v1732
        %v1765 = vpack.c.b16 %v1750, %v1749
        %v1766 = vpack.c.b16 %v1752, %v1751
        %v1767 = vpack.c.b16 %v1754, %v1753
        %v1768 = vpack.c.b16 %v1756, %v1755
        %v1769 = vpack.c.b16 %v1758, %v1757
        %v1770 = vpack.c.b16 %v1760, %v1759
        %v1771 = vpack.c.b16 %v1762, %v1761
        %v1772 = vpack.c.b16 %v1764, %v1763
        %1781 = vmatprep.subr.bf16.mxu0 0
        %1782 = vmatpush1.bf16.msra.mxu0 %v1765
        %1783 = vmatprep.subr.bf16.mxu0 0
        %1784 = vmatpush1.bf16.msra.mxu0 %v1766
        %1785 = vmatprep.subr.bf16.mxu0 0
        %1786 = vmatpush1.bf16.msra.mxu0 %v1767
        %1787 = vmatprep.subr.bf16.mxu0 0
        %1788 = vmatpush1.bf16.msra.mxu0 %v1768
        %1789 = vmatprep.subr.bf16.mxu0 0
        %1790 = vmatpush1.bf16.msra.mxu0 %v1769
        %1791 = vmatprep.subr.bf16.mxu0 0
        %1792 = vmatpush1.bf16.msra.mxu0 %v1770
        %1793 = vmatprep.subr.bf16.mxu0 0
        %1794 = vmatpush1.bf16.msra.mxu0 %v1771
        %1795 = vmatprep.subr.bf16.mxu0 0
        %1796 = vmatpush1.bf16.msra.mxu0 %v1772
        %1797 = vmatprep.subr.bf16.mxu0 0
        %1798 = vmatpush1.bf16.msra.mxu0 0
        %1799 = vmatprep.subr.bf16.mxu0 0
        %1800 = vmatpush1.bf16.msra.mxu0 0
        %1801 = vmatprep.subr.bf16.mxu0 0
        %1802 = vmatpush1.bf16.msra.mxu0 0
        %1803 = vmatprep.subr.bf16.mxu0 0
        %1804 = vmatpush1.bf16.msra.mxu0 0
        %1805 = vmatprep.subr.bf16.mxu0 0
        %1806 = vmatpush1.bf16.msra.mxu0 0
        %1807 = vmatprep.subr.bf16.mxu0 0
        %1808 = vmatpush1.bf16.msra.mxu0 0
        %1809 = vmatprep.subr.bf16.mxu0 0
        %1810 = vmatpush1.bf16.msra.mxu0 0
        %1811 = vmatprep.subr.bf16.mxu0 0
        %1812 = vmatpush1.bf16.msra.mxu0 0
        %1813 = vmatprep.mubr.bf16.mxu0 0
        %1814 = vmatmul.mubr.bf16.gmra.mrb[0].mxu0 %v923
        %v1815 = vpop.f32.mrb[0].mxu0
        %v1816 = vadd.f32 0.0, %v1815
        %v1817 = vpop.f32.mrb[0].mxu0
        %v1818 = vpop.f32.mrb[0].mxu0
        %v1819 = vadd.f32 0.0, %v1818
        %v1820 = vpop.f32.mrb[0].mxu0
        %1821 = vmatprep.mubr.bf16.mxu0 0
        %1822 = vmatmul.mubr.bf16.gmra.mrb[0].mxu0 %v922
        %v1823 = vpop.f32.mrb[0].mxu0
        %v1824 = vadd.f32 0.0, %v1823
        %v1825 = vpop.f32.mrb[0].mxu0
        %v1826 = vpop.f32.mrb[0].mxu0
        %v1827 = vadd.f32 0.0, %v1826
        %v1828 = vpop.f32.mrb[0].mxu0
        %1829 = vdwg.mxu0
        %v1830 = vadd.f32 %v1654, %v1816
        %v1831 = vadd.f32 %v1655, %v1819
        %v1832 = vadd.f32 %v1656, %v1824
        %v1833 = vadd.f32 %v1657, %v1827
        %v1834 = vrot.slane %v1471, 1
        %v1835 = vrot.slane %v1473, 2
        %v1836 = vor.u32 %v1834, %v1835
        %v1837 = vrot.slane %v1482, 1
        %v1838 = vrot.slane %v1478, 2
        %v1839 = vor.u32 %v1837, %v1838
        %v1840 = vsel %vm806, %v1836, %v1839
        %1843 = vmatprep.subr.bf16.mxu0 0
        %1844 = vmatpush1.bf16.msra.mxu0 %v1765
        %1845 = vmatprep.subr.bf16.mxu0 0
        %1846 = vmatpush1.bf16.msra.mxu0 %v1766
        %1847 = vmatprep.subr.bf16.mxu0 0
        %1848 = vmatpush1.bf16.msra.mxu0 %v1767
        %1849 = vmatprep.subr.bf16.mxu0 0
        %1850 = vmatpush1.bf16.msra.mxu0 %v1768
        %1851 = vmatprep.subr.bf16.mxu0 0
        %1852 = vmatpush1.bf16.msra.mxu0 %v1769
        %1853 = vmatprep.subr.bf16.mxu0 0
        %1854 = vmatpush1.bf16.msra.mxu0 %v1770
        %1855 = vmatprep.subr.bf16.mxu0 0
        %1856 = vmatpush1.bf16.msra.mxu0 %v1771
        %1857 = vmatprep.subr.bf16.mxu0 0
        %1858 = vmatpush1.bf16.msra.mxu0 %v1772
        %1859 = vmatprep.subr.bf16.mxu0 0
        %1860 = vmatpush1.bf16.msra.mxu0 0
        %1861 = vmatprep.subr.bf16.mxu0 0
        %1862 = vmatpush1.bf16.msra.mxu0 0
        %1863 = vmatprep.subr.bf16.mxu0 0
        %1864 = vmatpush1.bf16.msra.mxu0 0
        %1865 = vmatprep.subr.bf16.mxu0 0
        %1866 = vmatpush1.bf16.msra.mxu0 0
        %1867 = vmatprep.subr.bf16.mxu0 0
        %1868 = vmatpush1.bf16.msra.mxu0 0
        %1869 = vmatprep.subr.bf16.mxu0 0
        %1870 = vmatpush1.bf16.msra.mxu0 0
        %1871 = vmatprep.subr.bf16.mxu0 0
        %1872 = vmatpush1.bf16.msra.mxu0 0
        %1873 = vmatprep.subr.bf16.mxu0 0
        %1874 = vmatpush1.bf16.msra.mxu0 0
        %1875 = vmatprep.mubr.bf16.mxu0 0
        %1876 = vmatmul.mubr.bf16.gmra.mrb[0].mxu0 %v1840
        %v1877 = vpop.f32.mrb[0].mxu0
        %v1878 = vadd.f32 0.0, %v1877
        %v1879 = vpop.f32.mrb[0].mxu0
        %v1880 = vpop.f32.mrb[0].mxu0
        %v1881 = vadd.f32 0.0, %v1880
        %v1882 = vpop.f32.mrb[0].mxu0
        %1883 = vmatprep.mubr.bf16.mxu0 0
        %1884 = vmatmul.mubr.bf16.gmra.mrb[0].mxu0 %v1839
        %v1885 = vpop.f32.mrb[0].mxu0
        %v1886 = vadd.f32 0.0, %v1885
        %v1887 = vpop.f32.mrb[0].mxu0
        %v1888 = vpop.f32.mrb[0].mxu0
        %v1889 = vadd.f32 0.0, %v1888
        %v1890 = vpop.f32.mrb[0].mxu0
        %1891 = vdwg.mxu0
        %v1892 = vadd.f32 %v1712, %v1878
        %v1893 = vadd.f32 %v1713, %v1881
        %v1894 = vadd.f32 %v1714, %v1886
        %v1895 = vadd.f32 %v1715, %v1889
        %s1896 = scalar_lea.vmem %s1, 576
        %v1897 = vld [vmem:[%s1896] sm:$0xf]
        %v1898 = vld [vmem:[%s1896 + $0x4] sm:$0xf]
        %v1899 = vld [vmem:[%s1896 + $0x8] sm:$0xf]
        %v1900 = vld [vmem:[%s1896 + $0xc] sm:$0xf]
        %v1901 = vld [vmem:[%s1896 + $0x10] sm:$0xf]
        %v1902 = vld [vmem:[%s1896 + $0x14] sm:$0xf]
        %v1903 = vld [vmem:[%s1896 + $0x18] sm:$0xf]
        %v1904 = vld [vmem:[%s1896 + $0x1c] sm:$0xf]
        %v1905 = vld [vmem:[%s1896 + $0x20] sm:$0xf]
        %v1906 = vld [vmem:[%s1896 + $0x24] sm:$0xf]
        %v1907 = vld [vmem:[%s1896 + $0x28] sm:$0xf]
        %v1908 = vld [vmem:[%s1896 + $0x2c] sm:$0xf]
        %v1909 = vld [vmem:[%s1896 + $0x30] sm:$0xf]
        %v1910 = vld [vmem:[%s1896 + $0x34] sm:$0xf]
        %v1911 = vld [vmem:[%s1896 + $0x38] sm:$0xf]
        %v1912 = vld [vmem:[%s1896 + $0x3c] sm:$0xf]
        %v1929 = vunpack.c.l.b16 %v1897
        %v1930 = vunpack.c.l.b16 %v1898
        %v1931 = vunpack.c.l.b16 %v1899
        %v1932 = vunpack.c.l.b16 %v1900
        %v1933 = vunpack.c.l.b16 %v1901
        %v1934 = vunpack.c.l.b16 %v1902
        %v1935 = vunpack.c.l.b16 %v1903
        %v1936 = vunpack.c.l.b16 %v1904
        %v1937 = vunpack.c.l.b16 %v1905
        %v1938 = vunpack.c.l.b16 %v1906
        %v1939 = vunpack.c.l.b16 %v1907
        %v1940 = vunpack.c.l.b16 %v1908
        %v1941 = vunpack.c.l.b16 %v1909
        %v1942 = vunpack.c.l.b16 %v1910
        %v1943 = vunpack.c.l.b16 %v1911
        %v1944 = vunpack.c.l.b16 %v1912
        %v1945 = vpack.c.b16 %v1930, %v1929
        %v1946 = vpack.c.b16 %v1932, %v1931
        %v1947 = vpack.c.b16 %v1934, %v1933
        %v1948 = vpack.c.b16 %v1936, %v1935
        %v1949 = vpack.c.b16 %v1938, %v1937
        %v1950 = vpack.c.b16 %v1940, %v1939
        %v1951 = vpack.c.b16 %v1942, %v1941
        %v1952 = vpack.c.b16 %v1944, %v1943
        %1961 = vmatprep.subr.bf16.mxu0 0
        %1962 = vmatpush1.bf16.msra.mxu0 %v1945
        %1963 = vmatprep.subr.bf16.mxu0 0
        %1964 = vmatpush1.bf16.msra.mxu0 %v1946
        %1965 = vmatprep.subr.bf16.mxu0 0
        %1966 = vmatpush1.bf16.msra.mxu0 %v1947
        %1967 = vmatprep.subr.bf16.mxu0 0
        %1968 = vmatpush1.bf16.msra.mxu0 %v1948
        %1969 = vmatprep.subr.bf16.mxu0 0
        %1970 = vmatpush1.bf16.msra.mxu0 %v1949
        %1971 = vmatprep.subr.bf16.mxu0 0
        %1972 = vmatpush1.bf16.msra.mxu0 %v1950
        %1973 = vmatprep.subr.bf16.mxu0 0
        %1974 = vmatpush1.bf16.msra.mxu0 %v1951
        %1975 = vmatprep.subr.bf16.mxu0 0
        %1976 = vmatpush1.bf16.msra.mxu0 %v1952
        %1977 = vmatprep.subr.bf16.mxu0 0
        %1978 = vmatpush1.bf16.msra.mxu0 0
        %1979 = vmatprep.subr.bf16.mxu0 0
        %1980 = vmatpush1.bf16.msra.mxu0 0
        %1981 = vmatprep.subr.bf16.mxu0 0
        %1982 = vmatpush1.bf16.msra.mxu0 0
        %1983 = vmatprep.subr.bf16.mxu0 0
        %1984 = vmatpush1.bf16.msra.mxu0 0
        %1985 = vmatprep.subr.bf16.mxu0 0
        %1986 = vmatpush1.bf16.msra.mxu0 0
        %1987 = vmatprep.subr.bf16.mxu0 0
        %1988 = vmatpush1.bf16.msra.mxu0 0
        %1989 = vmatprep.subr.bf16.mxu0 0
        %1990 = vmatpush1.bf16.msra.mxu0 0
        %1991 = vmatprep.subr.bf16.mxu0 0
        %1992 = vmatpush1.bf16.msra.mxu0 0
        %1993 = vmatprep.mubr.bf16.mxu0 0
        %1994 = vmatmul.mubr.bf16.gmra.mrb[0].mxu0 %v1105
        %v1995 = vpop.f32.mrb[0].mxu0
        %v1996 = vadd.f32 0.0, %v1995
        %v1997 = vpop.f32.mrb[0].mxu0
        %v1998 = vpop.f32.mrb[0].mxu0
        %v1999 = vadd.f32 0.0, %v1998
        %v2000 = vpop.f32.mrb[0].mxu0
        %2001 = vmatprep.mubr.bf16.mxu0 0
        %2002 = vmatmul.mubr.bf16.gmra.mrb[0].mxu0 %v1104
        %v2003 = vpop.f32.mrb[0].mxu0
        %v2004 = vadd.f32 0.0, %v2003
        %v2005 = vpop.f32.mrb[0].mxu0
        %v2006 = vpop.f32.mrb[0].mxu0
        %v2007 = vadd.f32 0.0, %v2006
        %v2008 = vpop.f32.mrb[0].mxu0
        %2009 = vdwg.mxu0
        %v2010 = vadd.f32 %v1830, %v1996
        %v2011 = vadd.f32 %v1831, %v1999
        %v2012 = vadd.f32 %v1832, %v2004
        %v2013 = vadd.f32 %v1833, %v2007
        %v2014 = vrot.slane %v1295, 2
        %v2015 = vrot.slane %v1296, 2
        %v2016 = vsel %vm996, %v2014, %v2015
        %2019 = vmatprep.subr.bf16.mxu0 0
        %2020 = vmatpush1.bf16.msra.mxu0 %v1945
        %2021 = vmatprep.subr.bf16.mxu0 0
        %2022 = vmatpush1.bf16.msra.mxu0 %v1946
        %2023 = vmatprep.subr.bf16.mxu0 0
        %2024 = vmatpush1.bf16.msra.mxu0 %v1947
        %2025 = vmatprep.subr.bf16.mxu0 0
        %2026 = vmatpush1.bf16.msra.mxu0 %v1948
        %2027 = vmatprep.subr.bf16.mxu0 0
        %2028 = vmatpush1.bf16.msra.mxu0 %v1949
        %2029 = vmatprep.subr.bf16.mxu0 0
        %2030 = vmatpush1.bf16.msra.mxu0 %v1950
        %2031 = vmatprep.subr.bf16.mxu0 0
        %2032 = vmatpush1.bf16.msra.mxu0 %v1951
        %2033 = vmatprep.subr.bf16.mxu0 0
        %2034 = vmatpush1.bf16.msra.mxu0 %v1952
        %2035 = vmatprep.subr.bf16.mxu0 0
        %2036 = vmatpush1.bf16.msra.mxu0 0
        %2037 = vmatprep.subr.bf16.mxu0 0
        %2038 = vmatpush1.bf16.msra.mxu0 0
        %2039 = vmatprep.subr.bf16.mxu0 0
        %2040 = vmatpush1.bf16.msra.mxu0 0
        %2041 = vmatprep.subr.bf16.mxu0 0
        %2042 = vmatpush1.bf16.msra.mxu0 0
        %2043 = vmatprep.subr.bf16.mxu0 0
        %2044 = vmatpush1.bf16.msra.mxu0 0
        %2045 = vmatprep.subr.bf16.mxu0 0
        %2046 = vmatpush1.bf16.msra.mxu0 0
        %2047 = vmatprep.subr.bf16.mxu0 0
        %2048 = vmatpush1.bf16.msra.mxu0 0
        %2049 = vmatprep.subr.bf16.mxu0 0
        %2050 = vmatpush1.bf16.msra.mxu0 0
        %2051 = vmatprep.mubr.bf16.mxu0 0
        %2052 = vmatmul.mubr.bf16.gmra.mrb[0].mxu0 %v2016
        %v2053 = vpop.f32.mrb[0].mxu0
        %v2054 = vadd.f32 0.0, %v2053
        %v2055 = vpop.f32.mrb[0].mxu0
        %v2056 = vpop.f32.mrb[0].mxu0
        %v2057 = vadd.f32 0.0, %v2056
        %v2058 = vpop.f32.mrb[0].mxu0
        %2059 = vmatprep.mubr.bf16.mxu0 0
        %2060 = vmatmul.mubr.bf16.gmra.mrb[0].mxu0 %v2015
        %v2061 = vpop.f32.mrb[0].mxu0
        %v2062 = vadd.f32 0.0, %v2061
        %v2063 = vpop.f32.mrb[0].mxu0
        %v2064 = vpop.f32.mrb[0].mxu0
        %v2065 = vadd.f32 0.0, %v2064
        %v2066 = vpop.f32.mrb[0].mxu0
        %2067 = vdwg.mxu0
        %v2068 = vadd.f32 %v1892, %v2054
        %v2069 = vadd.f32 %v1893, %v2057
        %v2070 = vadd.f32 %v1894, %v2062
        %v2071 = vadd.f32 %v1895, %v2065
        %s2072 = sadd.s32 %s207, 3
        %s2073 = smul.u32 %s2072, 4
        %s2074 = smul.addr %s2073, 4
        %s2075 = scalar_lea.vmem %s192, %s2074
        %v2076 = vld [vmem:[%s2075] sm:$0xf]
        %v2077 = vld [vmem:[%s2075 + $0x4] sm:$0xf]
        %v2078 = vld [vmem:[%s2075 + $0x8] sm:$0xf]
        %v2079 = vld [vmem:[%s2075 + $0xc] sm:$0xf]
        %s2080 = scalar_lea.vmem %s1, 640
        %v2081 = vld [vmem:[%s2080] sm:$0xf]
        %v2082 = vld [vmem:[%s2080 + $0x4] sm:$0xf]
        %v2083 = vld [vmem:[%s2080 + $0x8] sm:$0xf]
        %v2084 = vld [vmem:[%s2080 + $0xc] sm:$0xf]
        %v2085 = vld [vmem:[%s2080 + $0x10] sm:$0xf]
        %v2086 = vld [vmem:[%s2080 + $0x14] sm:$0xf]
        %v2087 = vld [vmem:[%s2080 + $0x18] sm:$0xf]
        %v2088 = vld [vmem:[%s2080 + $0x1c] sm:$0xf]
        %v2089 = vld [vmem:[%s2080 + $0x20] sm:$0xf]
        %v2090 = vld [vmem:[%s2080 + $0x24] sm:$0xf]
        %v2091 = vld [vmem:[%s2080 + $0x28] sm:$0xf]
        %v2092 = vld [vmem:[%s2080 + $0x2c] sm:$0xf]
        %v2093 = vld [vmem:[%s2080 + $0x30] sm:$0xf]
        %v2094 = vld [vmem:[%s2080 + $0x34] sm:$0xf]
        %v2095 = vld [vmem:[%s2080 + $0x38] sm:$0xf]
        %v2096 = vld [vmem:[%s2080 + $0x3c] sm:$0xf]
        %v2113 = vunpack.c.l.b16 %v2081
        %v2114 = vunpack.c.l.b16 %v2082
        %v2115 = vunpack.c.l.b16 %v2083
        %v2116 = vunpack.c.l.b16 %v2084
        %v2117 = vunpack.c.l.b16 %v2085
        %v2118 = vunpack.c.l.b16 %v2086
        %v2119 = vunpack.c.l.b16 %v2087
        %v2120 = vunpack.c.l.b16 %v2088
        %v2121 = vunpack.c.l.b16 %v2089
        %v2122 = vunpack.c.l.b16 %v2090
        %v2123 = vunpack.c.l.b16 %v2091
        %v2124 = vunpack.c.l.b16 %v2092
        %v2125 = vunpack.c.l.b16 %v2093
        %v2126 = vunpack.c.l.b16 %v2094
        %v2127 = vunpack.c.l.b16 %v2095
        %v2128 = vunpack.c.l.b16 %v2096
        %v2129 = vpack.c.b16 %v2114, %v2113
        %v2130 = vpack.c.b16 %v2116, %v2115
        %v2131 = vpack.c.b16 %v2118, %v2117
        %v2132 = vpack.c.b16 %v2120, %v2119
        %v2133 = vpack.c.b16 %v2122, %v2121
        %v2134 = vpack.c.b16 %v2124, %v2123
        %v2135 = vpack.c.b16 %v2126, %v2125
        %v2136 = vpack.c.b16 %v2128, %v2127
        %2145 = vmatprep.subr.bf16.mxu0 0
        %2146 = vmatpush1.bf16.msra.mxu0 %v2129
        %2147 = vmatprep.subr.bf16.mxu0 0
        %2148 = vmatpush1.bf16.msra.mxu0 %v2130
        %2149 = vmatprep.subr.bf16.mxu0 0
        %2150 = vmatpush1.bf16.msra.mxu0 %v2131
        %2151 = vmatprep.subr.bf16.mxu0 0
        %2152 = vmatpush1.bf16.msra.mxu0 %v2132
        %2153 = vmatprep.subr.bf16.mxu0 0
        %2154 = vmatpush1.bf16.msra.mxu0 %v2133
        %2155 = vmatprep.subr.bf16.mxu0 0
        %2156 = vmatpush1.bf16.msra.mxu0 %v2134
        %2157 = vmatprep.subr.bf16.mxu0 0
        %2158 = vmatpush1.bf16.msra.mxu0 %v2135
        %2159 = vmatprep.subr.bf16.mxu0 0
        %2160 = vmatpush1.bf16.msra.mxu0 %v2136
        %2161 = vmatprep.subr.bf16.mxu0 0
        %2162 = vmatpush1.bf16.msra.mxu0 0
        %2163 = vmatprep.subr.bf16.mxu0 0
        %2164 = vmatpush1.bf16.msra.mxu0 0
        %2165 = vmatprep.subr.bf16.mxu0 0
        %2166 = vmatpush1.bf16.msra.mxu0 0
        %2167 = vmatprep.subr.bf16.mxu0 0
        %2168 = vmatpush1.bf16.msra.mxu0 0
        %2169 = vmatprep.subr.bf16.mxu0 0
        %2170 = vmatpush1.bf16.msra.mxu0 0
        %2171 = vmatprep.subr.bf16.mxu0 0
        %2172 = vmatpush1.bf16.msra.mxu0 0
        %2173 = vmatprep.subr.bf16.mxu0 0
        %2174 = vmatpush1.bf16.msra.mxu0 0
        %2175 = vmatprep.subr.bf16.mxu0 0
        %2176 = vmatpush1.bf16.msra.mxu0 0
        %2177 = vmatprep.mubr.bf16.mxu0 0
        %2178 = vmatmul.mubr.bf16.gmra.mrb[0].mxu0 %v1295
        %v2179 = vpop.f32.mrb[0].mxu0
        %v2180 = vadd.f32 0.0, %v2179
        %v2181 = vpop.f32.mrb[0].mxu0
        %v2182 = vpop.f32.mrb[0].mxu0
        %v2183 = vadd.f32 0.0, %v2182
        %v2184 = vpop.f32.mrb[0].mxu0
        %2185 = vmatprep.mubr.bf16.mxu0 0
        %2186 = vmatmul.mubr.bf16.gmra.mrb[0].mxu0 %v1296
        %v2187 = vpop.f32.mrb[0].mxu0
        %v2188 = vadd.f32 0.0, %v2187
        %v2189 = vpop.f32.mrb[0].mxu0
        %v2190 = vpop.f32.mrb[0].mxu0
        %v2191 = vadd.f32 0.0, %v2190
        %v2192 = vpop.f32.mrb[0].mxu0
        %2193 = vdwg.mxu0
        %v2194 = vadd.f32 %v2010, %v2180
        %v2195 = vadd.f32 %v2011, %v2183
        %v2196 = vadd.f32 %v2012, %v2188
        %v2197 = vadd.f32 %v2013, %v2191
        %v2202 = vunpack.c.l.b16 %v2076
        %v2203 = vunpack.c.l.b16 %v2077
        %v2204 = vunpack.c.l.b16 %v2078
        %v2205 = vunpack.c.l.b16 %v2079
        %v2206 = vpack.c.b16 %v2203, %v2202
        %v2207 = vpack.c.b16 %v2205, %v2204
        %2210 = vmatprep.subr.bf16.mxu0 0
        %2211 = vmatpush1.bf16.msra.mxu0 %v2129
        %2212 = vmatprep.subr.bf16.mxu0 0
        %2213 = vmatpush1.bf16.msra.mxu0 %v2130
        %2214 = vmatprep.subr.bf16.mxu0 0
        %2215 = vmatpush1.bf16.msra.mxu0 %v2131
        %2216 = vmatprep.subr.bf16.mxu0 0
        %2217 = vmatpush1.bf16.msra.mxu0 %v2132
        %2218 = vmatprep.subr.bf16.mxu0 0
        %2219 = vmatpush1.bf16.msra.mxu0 %v2133
        %2220 = vmatprep.subr.bf16.mxu0 0
        %2221 = vmatpush1.bf16.msra.mxu0 %v2134
        %2222 = vmatprep.subr.bf16.mxu0 0
        %2223 = vmatpush1.bf16.msra.mxu0 %v2135
        %2224 = vmatprep.subr.bf16.mxu0 0
        %2225 = vmatpush1.bf16.msra.mxu0 %v2136
        %2226 = vmatprep.subr.bf16.mxu0 0
        %2227 = vmatpush1.bf16.msra.mxu0 0
        %2228 = vmatprep.subr.bf16.mxu0 0
        %2229 = vmatpush1.bf16.msra.mxu0 0
        %2230 = vmatprep.subr.bf16.mxu0 0
        %2231 = vmatpush1.bf16.msra.mxu0 0
        %2232 = vmatprep.subr.bf16.mxu0 0
        %2233 = vmatpush1.bf16.msra.mxu0 0
        %2234 = vmatprep.subr.bf16.mxu0 0
        %2235 = vmatpush1.bf16.msra.mxu0 0
        %2236 = vmatprep.subr.bf16.mxu0 0
        %2237 = vmatpush1.bf16.msra.mxu0 0
        %2238 = vmatprep.subr.bf16.mxu0 0
        %2239 = vmatpush1.bf16.msra.mxu0 0
        %2240 = vmatprep.subr.bf16.mxu0 0
        %2241 = vmatpush1.bf16.msra.mxu0 0
        %2242 = vmatprep.mubr.bf16.mxu0 0
        %2243 = vmatmul.mubr.bf16.gmra.mrb[0].mxu0 %v2206
        %v2244 = vpop.f32.mrb[0].mxu0
        %v2245 = vadd.f32 0.0, %v2244
        %v2246 = vpop.f32.mrb[0].mxu0
        %v2247 = vpop.f32.mrb[0].mxu0
        %v2248 = vadd.f32 0.0, %v2247
        %v2249 = vpop.f32.mrb[0].mxu0
        %2250 = vmatprep.mubr.bf16.mxu0 0
        %2251 = vmatmul.mubr.bf16.gmra.mrb[0].mxu0 %v2207
        %v2252 = vpop.f32.mrb[0].mxu0
        %v2253 = vadd.f32 0.0, %v2252
        %v2254 = vpop.f32.mrb[0].mxu0
        %v2255 = vpop.f32.mrb[0].mxu0
        %v2256 = vadd.f32 0.0, %v2255
        %v2257 = vpop.f32.mrb[0].mxu0
        %2258 = vdwg.mxu0
        %v2259 = vadd.f32 %v2068, %v2245
        %v2260 = vadd.f32 %v2069, %v2248
        %v2261 = vadd.f32 %v2070, %v2253
        %v2262 = vadd.f32 %v2071, %v2256
        %s2263 = scalar_lea.vmem %s1, 704
        %v2264 = vld [vmem:[%s2263] sm:$0xf]
        %v2265 = vld [vmem:[%s2263 + $0x4] sm:$0xf]
        %v2266 = vld [vmem:[%s2263 + $0x8] sm:$0xf]
        %v2267 = vld [vmem:[%s2263 + $0xc] sm:$0xf]
        %v2268 = vld [vmem:[%s2263 + $0x10] sm:$0xf]
        %v2269 = vld [vmem:[%s2263 + $0x14] sm:$0xf]
        %v2270 = vld [vmem:[%s2263 + $0x18] sm:$0xf]
        %v2271 = vld [vmem:[%s2263 + $0x1c] sm:$0xf]
        %v2272 = vld [vmem:[%s2263 + $0x20] sm:$0xf]
        %v2273 = vld [vmem:[%s2263 + $0x24] sm:$0xf]
        %v2274 = vld [vmem:[%s2263 + $0x28] sm:$0xf]
        %v2275 = vld [vmem:[%s2263 + $0x2c] sm:$0xf]
        %v2276 = vld [vmem:[%s2263 + $0x30] sm:$0xf]
        %v2277 = vld [vmem:[%s2263 + $0x34] sm:$0xf]
        %v2278 = vld [vmem:[%s2263 + $0x38] sm:$0xf]
        %v2279 = vld [vmem:[%s2263 + $0x3c] sm:$0xf]
        %v2296 = vunpack.c.l.b16 %v2264
        %v2297 = vunpack.c.l.b16 %v2265
        %v2298 = vunpack.c.l.b16 %v2266
        %v2299 = vunpack.c.l.b16 %v2267
        %v2300 = vunpack.c.l.b16 %v2268
        %v2301 = vunpack.c.l.b16 %v2269
        %v2302 = vunpack.c.l.b16 %v2270
        %v2303 = vunpack.c.l.b16 %v2271
        %v2304 = vunpack.c.l.b16 %v2272
        %v2305 = vunpack.c.l.b16 %v2273
        %v2306 = vunpack.c.l.b16 %v2274
        %v2307 = vunpack.c.l.b16 %v2275
        %v2308 = vunpack.c.l.b16 %v2276
        %v2309 = vunpack.c.l.b16 %v2277
        %v2310 = vunpack.c.l.b16 %v2278
        %v2311 = vunpack.c.l.b16 %v2279
        %v2312 = vpack.c.b16 %v2297, %v2296
        %v2313 = vpack.c.b16 %v2299, %v2298
        %v2314 = vpack.c.b16 %v2301, %v2300
        %v2315 = vpack.c.b16 %v2303, %v2302
        %v2316 = vpack.c.b16 %v2305, %v2304
        %v2317 = vpack.c.b16 %v2307, %v2306
        %v2318 = vpack.c.b16 %v2309, %v2308
        %v2319 = vpack.c.b16 %v2311, %v2310
        %2328 = vmatprep.subr.bf16.mxu0 0
        %2329 = vmatpush1.bf16.msra.mxu0 %v2312
        %2330 = vmatprep.subr.bf16.mxu0 0
        %2331 = vmatpush1.bf16.msra.mxu0 %v2313
        %2332 = vmatprep.subr.bf16.mxu0 0
        %2333 = vmatpush1.bf16.msra.mxu0 %v2314
        %2334 = vmatprep.subr.bf16.mxu0 0
        %2335 = vmatpush1.bf16.msra.mxu0 %v2315
        %2336 = vmatprep.subr.bf16.mxu0 0
        %2337 = vmatpush1.bf16.msra.mxu0 %v2316
        %2338 = vmatprep.subr.bf16.mxu0 0
        %2339 = vmatpush1.bf16.msra.mxu0 %v2317
        %2340 = vmatprep.subr.bf16.mxu0 0
        %2341 = vmatpush1.bf16.msra.mxu0 %v2318
        %2342 = vmatprep.subr.bf16.mxu0 0
        %2343 = vmatpush1.bf16.msra.mxu0 %v2319
        %2344 = vmatprep.subr.bf16.mxu0 0
        %2345 = vmatpush1.bf16.msra.mxu0 0
        %2346 = vmatprep.subr.bf16.mxu0 0
        %2347 = vmatpush1.bf16.msra.mxu0 0
        %2348 = vmatprep.subr.bf16.mxu0 0
        %2349 = vmatpush1.bf16.msra.mxu0 0
        %2350 = vmatprep.subr.bf16.mxu0 0
        %2351 = vmatpush1.bf16.msra.mxu0 0
        %2352 = vmatprep.subr.bf16.mxu0 0
        %2353 = vmatpush1.bf16.msra.mxu0 0
        %2354 = vmatprep.subr.bf16.mxu0 0
        %2355 = vmatpush1.bf16.msra.mxu0 0
        %2356 = vmatprep.subr.bf16.mxu0 0
        %2357 = vmatpush1.bf16.msra.mxu0 0
        %2358 = vmatprep.subr.bf16.mxu0 0
        %2359 = vmatpush1.bf16.msra.mxu0 0
        %2360 = vmatprep.mubr.bf16.mxu0 0
        %2361 = vmatmul.mubr.bf16.gmra.mrb[0].mxu0 %v1481
        %v2362 = vpop.f32.mrb[0].mxu0
        %v2363 = vadd.f32 0.0, %v2362
        %v2364 = vpop.f32.mrb[0].mxu0
        %v2365 = vpop.f32.mrb[0].mxu0
        %v2366 = vadd.f32 0.0, %v2365
        %v2367 = vpop.f32.mrb[0].mxu0
        %2368 = vmatprep.mubr.bf16.mxu0 0
        %2369 = vmatmul.mubr.bf16.gmra.mrb[0].mxu0 %v1484
        %v2370 = vpop.f32.mrb[0].mxu0
        %v2371 = vadd.f32 0.0, %v2370
        %v2372 = vpop.f32.mrb[0].mxu0
        %v2373 = vpop.f32.mrb[0].mxu0
        %v2374 = vadd.f32 0.0, %v2373
        %v2375 = vpop.f32.mrb[0].mxu0
        %2376 = vdwg.mxu0
        %v2377 = vadd.f32 %v2194, %v2363
        %v2378 = vadd.f32 %v2195, %v2366
        %v2379 = vadd.f32 %v2196, %v2371
        %v2380 = vadd.f32 %v2197, %v2374
        %v2382 = vshrl.u32 %v2206, 16
        %v2384 = vshll.u32 %v2206, 16
        %v2386 = vrot.slane %v2384, 1
        %v2387 = vor.u32 %v2382, %v2386
        %v2389 = vshll.u32 %v2207, 16
        %v2391 = vrot.slane %v2389, 1
        %v2392 = vsel %vm266, %v2387, %v2391
        %v2393 = vshrl.u32 %v2207, 16
        %v2395 = vor.u32 %v2393, %v2391
        %2398 = vmatprep.subr.bf16.mxu0 0
        %2399 = vmatpush1.bf16.msra.mxu0 %v2312
        %2400 = vmatprep.subr.bf16.mxu0 0
        %2401 = vmatpush1.bf16.msra.mxu0 %v2313
        %2402 = vmatprep.subr.bf16.mxu0 0
        %2403 = vmatpush1.bf16.msra.mxu0 %v2314
        %2404 = vmatprep.subr.bf16.mxu0 0
        %2405 = vmatpush1.bf16.msra.mxu0 %v2315
        %2406 = vmatprep.subr.bf16.mxu0 0
        %2407 = vmatpush1.bf16.msra.mxu0 %v2316
        %2408 = vmatprep.subr.bf16.mxu0 0
        %2409 = vmatpush1.bf16.msra.mxu0 %v2317
        %2410 = vmatprep.subr.bf16.mxu0 0
        %2411 = vmatpush1.bf16.msra.mxu0 %v2318
        %2412 = vmatprep.subr.bf16.mxu0 0
        %2413 = vmatpush1.bf16.msra.mxu0 %v2319
        %2414 = vmatprep.subr.bf16.mxu0 0
        %2415 = vmatpush1.bf16.msra.mxu0 0
        %2416 = vmatprep.subr.bf16.mxu0 0
        %2417 = vmatpush1.bf16.msra.mxu0 0
        %2418 = vmatprep.subr.bf16.mxu0 0
        %2419 = vmatpush1.bf16.msra.mxu0 0
        %2420 = vmatprep.subr.bf16.mxu0 0
        %2421 = vmatpush1.bf16.msra.mxu0 0
        %2422 = vmatprep.subr.bf16.mxu0 0
        %2423 = vmatpush1.bf16.msra.mxu0 0
        %2424 = vmatprep.subr.bf16.mxu0 0
        %2425 = vmatpush1.bf16.msra.mxu0 0
        %2426 = vmatprep.subr.bf16.mxu0 0
        %2427 = vmatpush1.bf16.msra.mxu0 0
        %2428 = vmatprep.subr.bf16.mxu0 0
        %2429 = vmatpush1.bf16.msra.mxu0 0
        %2430 = vmatprep.mubr.bf16.mxu0 0
        %2431 = vmatmul.mubr.bf16.gmra.mrb[0].mxu0 %v2392
        %v2432 = vpop.f32.mrb[0].mxu0
        %v2433 = vadd.f32 0.0, %v2432
        %v2434 = vpop.f32.mrb[0].mxu0
        %v2435 = vpop.f32.mrb[0].mxu0
        %v2436 = vadd.f32 0.0, %v2435
        %v2437 = vpop.f32.mrb[0].mxu0
        %2438 = vmatprep.mubr.bf16.mxu0 0
        %2439 = vmatmul.mubr.bf16.gmra.mrb[0].mxu0 %v2395
        %v2440 = vpop.f32.mrb[0].mxu0
        %v2441 = vadd.f32 0.0, %v2440
        %v2442 = vpop.f32.mrb[0].mxu0
        %v2443 = vpop.f32.mrb[0].mxu0
        %v2444 = vadd.f32 0.0, %v2443
        %v2445 = vpop.f32.mrb[0].mxu0
        %2446 = vdwg.mxu0
        %v2447 = vadd.f32 %v2259, %v2433
        %v2448 = vadd.f32 %v2260, %v2436
        %v2449 = vadd.f32 %v2261, %v2441
        %v2450 = vadd.f32 %v2262, %v2444
        %s2451 = scalar_lea.vmem %s1, 768
        %v2452 = vld [vmem:[%s2451] sm:$0xf]
        %v2453 = vld [vmem:[%s2451 + $0x4] sm:$0xf]
        %v2454 = vld [vmem:[%s2451 + $0x8] sm:$0xf]
        %v2455 = vld [vmem:[%s2451 + $0xc] sm:$0xf]
        %v2456 = vld [vmem:[%s2451 + $0x10] sm:$0xf]
        %v2457 = vld [vmem:[%s2451 + $0x14] sm:$0xf]
        %v2458 = vld [vmem:[%s2451 + $0x18] sm:$0xf]
        %v2459 = vld [vmem:[%s2451 + $0x1c] sm:$0xf]
        %v2460 = vld [vmem:[%s2451 + $0x20] sm:$0xf]
        %v2461 = vld [vmem:[%s2451 + $0x24] sm:$0xf]
        %v2462 = vld [vmem:[%s2451 + $0x28] sm:$0xf]
        %v2463 = vld [vmem:[%s2451 + $0x2c] sm:$0xf]
        %v2464 = vld [vmem:[%s2451 + $0x30] sm:$0xf]
        %v2465 = vld [vmem:[%s2451 + $0x34] sm:$0xf]
        %v2466 = vld [vmem:[%s2451 + $0x38] sm:$0xf]
        %v2467 = vld [vmem:[%s2451 + $0x3c] sm:$0xf]
        %v2484 = vunpack.c.l.b16 %v2452
        %v2485 = vunpack.c.l.b16 %v2453
        %v2486 = vunpack.c.l.b16 %v2454
        %v2487 = vunpack.c.l.b16 %v2455
        %v2488 = vunpack.c.l.b16 %v2456
        %v2489 = vunpack.c.l.b16 %v2457
        %v2490 = vunpack.c.l.b16 %v2458
        %v2491 = vunpack.c.l.b16 %v2459
        %v2492 = vunpack.c.l.b16 %v2460
        %v2493 = vunpack.c.l.b16 %v2461
        %v2494 = vunpack.c.l.b16 %v2462
        %v2495 = vunpack.c.l.b16 %v2463
        %v2496 = vunpack.c.l.b16 %v2464
        %v2497 = vunpack.c.l.b16 %v2465
        %v2498 = vunpack.c.l.b16 %v2466
        %v2499 = vunpack.c.l.b16 %v2467
        %v2500 = vpack.c.b16 %v2485, %v2484
        %v2501 = vpack.c.b16 %v2487, %v2486
        %v2502 = vpack.c.b16 %v2489, %v2488
        %v2503 = vpack.c.b16 %v2491, %v2490
        %v2504 = vpack.c.b16 %v2493, %v2492
        %v2505 = vpack.c.b16 %v2495, %v2494
        %v2506 = vpack.c.b16 %v2497, %v2496
        %v2507 = vpack.c.b16 %v2499, %v2498
        %2516 = vmatprep.subr.bf16.mxu0 0
        %2517 = vmatpush1.bf16.msra.mxu0 %v2500
        %2518 = vmatprep.subr.bf16.mxu0 0
        %2519 = vmatpush1.bf16.msra.mxu0 %v2501
        %2520 = vmatprep.subr.bf16.mxu0 0
        %2521 = vmatpush1.bf16.msra.mxu0 %v2502
        %2522 = vmatprep.subr.bf16.mxu0 0
        %2523 = vmatpush1.bf16.msra.mxu0 %v2503
        %2524 = vmatprep.subr.bf16.mxu0 0
        %2525 = vmatpush1.bf16.msra.mxu0 %v2504
        %2526 = vmatprep.subr.bf16.mxu0 0
        %2527 = vmatpush1.bf16.msra.mxu0 %v2505
        %2528 = vmatprep.subr.bf16.mxu0 0
        %2529 = vmatpush1.bf16.msra.mxu0 %v2506
        %2530 = vmatprep.subr.bf16.mxu0 0
        %2531 = vmatpush1.bf16.msra.mxu0 %v2507
        %2532 = vmatprep.subr.bf16.mxu0 0
        %2533 = vmatpush1.bf16.msra.mxu0 0
        %2534 = vmatprep.subr.bf16.mxu0 0
        %2535 = vmatpush1.bf16.msra.mxu0 0
        %2536 = vmatprep.subr.bf16.mxu0 0
        %2537 = vmatpush1.bf16.msra.mxu0 0
        %2538 = vmatprep.subr.bf16.mxu0 0
        %2539 = vmatpush1.bf16.msra.mxu0 0
        %2540 = vmatprep.subr.bf16.mxu0 0
        %2541 = vmatpush1.bf16.msra.mxu0 0
        %2542 = vmatprep.subr.bf16.mxu0 0
        %2543 = vmatpush1.bf16.msra.mxu0 0
        %2544 = vmatprep.subr.bf16.mxu0 0
        %2545 = vmatpush1.bf16.msra.mxu0 0
        %2546 = vmatprep.subr.bf16.mxu0 0
        %2547 = vmatpush1.bf16.msra.mxu0 0
        %2548 = vmatprep.mubr.bf16.mxu0 0
        %2549 = vmatmul.mubr.bf16.gmra.mrb[0].mxu0 %v1660
        %v2550 = vpop.f32.mrb[0].mxu0
        %v2551 = vadd.f32 0.0, %v2550
        %v2552 = vpop.f32.mrb[0].mxu0
        %v2553 = vpop.f32.mrb[0].mxu0
        %v2554 = vadd.f32 0.0, %v2553
        %v2555 = vpop.f32.mrb[0].mxu0
        %2556 = vmatprep.mubr.bf16.mxu0 0
        %2557 = vmatmul.mubr.bf16.gmra.mrb[0].mxu0 %v1659
        %v2558 = vpop.f32.mrb[0].mxu0
        %v2559 = vadd.f32 0.0, %v2558
        %v2560 = vpop.f32.mrb[0].mxu0
        %v2561 = vpop.f32.mrb[0].mxu0
        %v2562 = vadd.f32 0.0, %v2561
        %v2563 = vpop.f32.mrb[0].mxu0
        %2564 = vdwg.mxu0
        %v2565 = vadd.f32 %v2377, %v2551
        %v2566 = vadd.f32 %v2378, %v2554
        %v2567 = vadd.f32 %v2379, %v2559
        %v2568 = vadd.f32 %v2380, %v2562
        %v2569 = vrot.slane %v2206, 1
        %v2570 = vrot.slane %v2207, 1
        %v2571 = vsel %vm624, %v2569, %v2570
        %2574 = vmatprep.subr.bf16.mxu0 0
        %2575 = vmatpush1.bf16.msra.mxu0 %v2500
        %2576 = vmatprep.subr.bf16.mxu0 0
        %2577 = vmatpush1.bf16.msra.mxu0 %v2501
        %2578 = vmatprep.subr.bf16.mxu0 0
        %2579 = vmatpush1.bf16.msra.mxu0 %v2502
        %2580 = vmatprep.subr.bf16.mxu0 0
        %2581 = vmatpush1.bf16.msra.mxu0 %v2503
        %2582 = vmatprep.subr.bf16.mxu0 0
        %2583 = vmatpush1.bf16.msra.mxu0 %v2504
        %2584 = vmatprep.subr.bf16.mxu0 0
        %2585 = vmatpush1.bf16.msra.mxu0 %v2505
        %2586 = vmatprep.subr.bf16.mxu0 0
        %2587 = vmatpush1.bf16.msra.mxu0 %v2506
        %2588 = vmatprep.subr.bf16.mxu0 0
        %2589 = vmatpush1.bf16.msra.mxu0 %v2507
        %2590 = vmatprep.subr.bf16.mxu0 0
        %2591 = vmatpush1.bf16.msra.mxu0 0
        %2592 = vmatprep.subr.bf16.mxu0 0
        %2593 = vmatpush1.bf16.msra.mxu0 0
        %2594 = vmatprep.subr.bf16.mxu0 0
        %2595 = vmatpush1.bf16.msra.mxu0 0
        %2596 = vmatprep.subr.bf16.mxu0 0
        %2597 = vmatpush1.bf16.msra.mxu0 0
        %2598 = vmatprep.subr.bf16.mxu0 0
        %2599 = vmatpush1.bf16.msra.mxu0 0
        %2600 = vmatprep.subr.bf16.mxu0 0
        %2601 = vmatpush1.bf16.msra.mxu0 0
        %2602 = vmatprep.subr.bf16.mxu0 0
        %2603 = vmatpush1.bf16.msra.mxu0 0
        %2604 = vmatprep.subr.bf16.mxu0 0
        %2605 = vmatpush1.bf16.msra.mxu0 0
        %2606 = vmatprep.mubr.bf16.mxu0 0
        %2607 = vmatmul.mubr.bf16.gmra.mrb[0].mxu0 %v2571
        %v2608 = vpop.f32.mrb[0].mxu0
        %v2609 = vadd.f32 0.0, %v2608
        %v2610 = vpop.f32.mrb[0].mxu0
        %v2611 = vpop.f32.mrb[0].mxu0
        %v2612 = vadd.f32 0.0, %v2611
        %v2613 = vpop.f32.mrb[0].mxu0
        %2614 = vmatprep.mubr.bf16.mxu0 0
        %2615 = vmatmul.mubr.bf16.gmra.mrb[0].mxu0 %v2570
        %v2616 = vpop.f32.mrb[0].mxu0
        %v2617 = vadd.f32 0.0, %v2616
        %v2618 = vpop.f32.mrb[0].mxu0
        %v2619 = vpop.f32.mrb[0].mxu0
        %v2620 = vadd.f32 0.0, %v2619
        %v2621 = vpop.f32.mrb[0].mxu0
        %2622 = vdwg.mxu0
        %v2623 = vadd.f32 %v2447, %v2609
        %v2624 = vadd.f32 %v2448, %v2612
        %v2625 = vadd.f32 %v2449, %v2617
        %v2626 = vadd.f32 %v2450, %v2620
        %s2627 = scalar_lea.vmem %s1, 832
        %v2628 = vld [vmem:[%s2627] sm:$0xf]
        %v2629 = vld [vmem:[%s2627 + $0x4] sm:$0xf]
        %v2630 = vld [vmem:[%s2627 + $0x8] sm:$0xf]
        %v2631 = vld [vmem:[%s2627 + $0xc] sm:$0xf]
        %v2632 = vld [vmem:[%s2627 + $0x10] sm:$0xf]
        %v2633 = vld [vmem:[%s2627 + $0x14] sm:$0xf]
        %v2634 = vld [vmem:[%s2627 + $0x18] sm:$0xf]
        %v2635 = vld [vmem:[%s2627 + $0x1c] sm:$0xf]
        %v2636 = vld [vmem:[%s2627 + $0x20] sm:$0xf]
        %v2637 = vld [vmem:[%s2627 + $0x24] sm:$0xf]
        %v2638 = vld [vmem:[%s2627 + $0x28] sm:$0xf]
        %v2639 = vld [vmem:[%s2627 + $0x2c] sm:$0xf]
        %v2640 = vld [vmem:[%s2627 + $0x30] sm:$0xf]
        %v2641 = vld [vmem:[%s2627 + $0x34] sm:$0xf]
        %v2642 = vld [vmem:[%s2627 + $0x38] sm:$0xf]
        %v2643 = vld [vmem:[%s2627 + $0x3c] sm:$0xf]
        %v2660 = vunpack.c.l.b16 %v2628
        %v2661 = vunpack.c.l.b16 %v2629
        %v2662 = vunpack.c.l.b16 %v2630
        %v2663 = vunpack.c.l.b16 %v2631
        %v2664 = vunpack.c.l.b16 %v2632
        %v2665 = vunpack.c.l.b16 %v2633
        %v2666 = vunpack.c.l.b16 %v2634
        %v2667 = vunpack.c.l.b16 %v2635
        %v2668 = vunpack.c.l.b16 %v2636
        %v2669 = vunpack.c.l.b16 %v2637
        %v2670 = vunpack.c.l.b16 %v2638
        %v2671 = vunpack.c.l.b16 %v2639
        %v2672 = vunpack.c.l.b16 %v2640
        %v2673 = vunpack.c.l.b16 %v2641
        %v2674 = vunpack.c.l.b16 %v2642
        %v2675 = vunpack.c.l.b16 %v2643
        %v2676 = vpack.c.b16 %v2661, %v2660
        %v2677 = vpack.c.b16 %v2663, %v2662
        %v2678 = vpack.c.b16 %v2665, %v2664
        %v2679 = vpack.c.b16 %v2667, %v2666
        %v2680 = vpack.c.b16 %v2669, %v2668
        %v2681 = vpack.c.b16 %v2671, %v2670
        %v2682 = vpack.c.b16 %v2673, %v2672
        %v2683 = vpack.c.b16 %v2675, %v2674
        %2692 = vmatprep.subr.bf16.mxu0 0
        %2693 = vmatpush1.bf16.msra.mxu0 %v2676
        %2694 = vmatprep.subr.bf16.mxu0 0
        %2695 = vmatpush1.bf16.msra.mxu0 %v2677
        %2696 = vmatprep.subr.bf16.mxu0 0
        %2697 = vmatpush1.bf16.msra.mxu0 %v2678
        %2698 = vmatprep.subr.bf16.mxu0 0
        %2699 = vmatpush1.bf16.msra.mxu0 %v2679
        %2700 = vmatprep.subr.bf16.mxu0 0
        %2701 = vmatpush1.bf16.msra.mxu0 %v2680
        %2702 = vmatprep.subr.bf16.mxu0 0
        %2703 = vmatpush1.bf16.msra.mxu0 %v2681
        %2704 = vmatprep.subr.bf16.mxu0 0
        %2705 = vmatpush1.bf16.msra.mxu0 %v2682
        %2706 = vmatprep.subr.bf16.mxu0 0
        %2707 = vmatpush1.bf16.msra.mxu0 %v2683
        %2708 = vmatprep.subr.bf16.mxu0 0
        %2709 = vmatpush1.bf16.msra.mxu0 0
        %2710 = vmatprep.subr.bf16.mxu0 0
        %2711 = vmatpush1.bf16.msra.mxu0 0
        %2712 = vmatprep.subr.bf16.mxu0 0
        %2713 = vmatpush1.bf16.msra.mxu0 0
        %2714 = vmatprep.subr.bf16.mxu0 0
        %2715 = vmatpush1.bf16.msra.mxu0 0
        %2716 = vmatprep.subr.bf16.mxu0 0
        %2717 = vmatpush1.bf16.msra.mxu0 0
        %2718 = vmatprep.subr.bf16.mxu0 0
        %2719 = vmatpush1.bf16.msra.mxu0 0
        %2720 = vmatprep.subr.bf16.mxu0 0
        %2721 = vmatpush1.bf16.msra.mxu0 0
        %2722 = vmatprep.subr.bf16.mxu0 0
        %2723 = vmatpush1.bf16.msra.mxu0 0
        %2724 = vmatprep.mubr.bf16.mxu0 0
        %2725 = vmatmul.mubr.bf16.gmra.mrb[0].mxu0 %v1840
        %v2726 = vpop.f32.mrb[0].mxu0
        %v2727 = vadd.f32 0.0, %v2726
        %v2728 = vpop.f32.mrb[0].mxu0
        %v2729 = vpop.f32.mrb[0].mxu0
        %v2730 = vadd.f32 0.0, %v2729
        %v2731 = vpop.f32.mrb[0].mxu0
        %2732 = vmatprep.mubr.bf16.mxu0 0
        %2733 = vmatmul.mubr.bf16.gmra.mrb[0].mxu0 %v1839
        %v2734 = vpop.f32.mrb[0].mxu0
        %v2735 = vadd.f32 0.0, %v2734
        %v2736 = vpop.f32.mrb[0].mxu0
        %v2737 = vpop.f32.mrb[0].mxu0
        %v2738 = vadd.f32 0.0, %v2737
        %v2739 = vpop.f32.mrb[0].mxu0
        %2740 = vdwg.mxu0
        %v2741 = vadd.f32 %v2565, %v2727
        %v2742 = vadd.f32 %v2566, %v2730
        %v2743 = vadd.f32 %v2567, %v2735
        %v2744 = vadd.f32 %v2568, %v2738
        %v2745 = vrot.slane %v2382, 1
        %v2746 = vrot.slane %v2384, 2
        %v2747 = vor.u32 %v2745, %v2746
        %v2748 = vrot.slane %v2393, 1
        %v2749 = vrot.slane %v2389, 2
        %v2750 = vor.u32 %v2748, %v2749
        %v2751 = vsel %vm806, %v2747, %v2750
        %2754 = vmatprep.subr.bf16.mxu0 0
        %2755 = vmatpush1.bf16.msra.mxu0 %v2676
        %2756 = vmatprep.subr.bf16.mxu0 0
        %2757 = vmatpush1.bf16.msra.mxu0 %v2677
        %2758 = vmatprep.subr.bf16.mxu0 0
        %2759 = vmatpush1.bf16.msra.mxu0 %v2678
        %2760 = vmatprep.subr.bf16.mxu0 0
        %2761 = vmatpush1.bf16.msra.mxu0 %v2679
        %2762 = vmatprep.subr.bf16.mxu0 0
        %2763 = vmatpush1.bf16.msra.mxu0 %v2680
        %2764 = vmatprep.subr.bf16.mxu0 0
        %2765 = vmatpush1.bf16.msra.mxu0 %v2681
        %2766 = vmatprep.subr.bf16.mxu0 0
        %2767 = vmatpush1.bf16.msra.mxu0 %v2682
        %2768 = vmatprep.subr.bf16.mxu0 0
        %2769 = vmatpush1.bf16.msra.mxu0 %v2683
        %2770 = vmatprep.subr.bf16.mxu0 0
        %2771 = vmatpush1.bf16.msra.mxu0 0
        %2772 = vmatprep.subr.bf16.mxu0 0
        %2773 = vmatpush1.bf16.msra.mxu0 0
        %2774 = vmatprep.subr.bf16.mxu0 0
        %2775 = vmatpush1.bf16.msra.mxu0 0
        %2776 = vmatprep.subr.bf16.mxu0 0
        %2777 = vmatpush1.bf16.msra.mxu0 0
        %2778 = vmatprep.subr.bf16.mxu0 0
        %2779 = vmatpush1.bf16.msra.mxu0 0
        %2780 = vmatprep.subr.bf16.mxu0 0
        %2781 = vmatpush1.bf16.msra.mxu0 0
        %2782 = vmatprep.subr.bf16.mxu0 0
        %2783 = vmatpush1.bf16.msra.mxu0 0
        %2784 = vmatprep.subr.bf16.mxu0 0
        %2785 = vmatpush1.bf16.msra.mxu0 0
        %2786 = vmatprep.mubr.bf16.mxu0 0
        %2787 = vmatmul.mubr.bf16.gmra.mrb[0].mxu0 %v2751
        %v2788 = vpop.f32.mrb[0].mxu0
        %v2789 = vadd.f32 0.0, %v2788
        %v2790 = vpop.f32.mrb[0].mxu0
        %v2791 = vpop.f32.mrb[0].mxu0
        %v2792 = vadd.f32 0.0, %v2791
        %v2793 = vpop.f32.mrb[0].mxu0
        %2794 = vmatprep.mubr.bf16.mxu0 0
        %2795 = vmatmul.mubr.bf16.gmra.mrb[0].mxu0 %v2750
        %v2796 = vpop.f32.mrb[0].mxu0
        %v2797 = vadd.f32 0.0, %v2796
        %v2798 = vpop.f32.mrb[0].mxu0
        %v2799 = vpop.f32.mrb[0].mxu0
        %v2800 = vadd.f32 0.0, %v2799
        %v2801 = vpop.f32.mrb[0].mxu0
        %2802 = vdwg.mxu0
        %v2803 = vadd.f32 %v2623, %v2789
        %v2804 = vadd.f32 %v2624, %v2792
        %v2805 = vadd.f32 %v2625, %v2797
        %v2806 = vadd.f32 %v2626, %v2800
        %s2807 = scalar_lea.vmem %s1, 896
        %v2808 = vld [vmem:[%s2807] sm:$0xf]
        %v2809 = vld [vmem:[%s2807 + $0x4] sm:$0xf]
        %v2810 = vld [vmem:[%s2807 + $0x8] sm:$0xf]
        %v2811 = vld [vmem:[%s2807 + $0xc] sm:$0xf]
        %v2812 = vld [vmem:[%s2807 + $0x10] sm:$0xf]
        %v2813 = vld [vmem:[%s2807 + $0x14] sm:$0xf]
        %v2814 = vld [vmem:[%s2807 + $0x18] sm:$0xf]
        %v2815 = vld [vmem:[%s2807 + $0x1c] sm:$0xf]
        %v2816 = vld [vmem:[%s2807 + $0x20] sm:$0xf]
        %v2817 = vld [vmem:[%s2807 + $0x24] sm:$0xf]
        %v2818 = vld [vmem:[%s2807 + $0x28] sm:$0xf]
        %v2819 = vld [vmem:[%s2807 + $0x2c] sm:$0xf]
        %v2820 = vld [vmem:[%s2807 + $0x30] sm:$0xf]
        %v2821 = vld [vmem:[%s2807 + $0x34] sm:$0xf]
        %v2822 = vld [vmem:[%s2807 + $0x38] sm:$0xf]
        %v2823 = vld [vmem:[%s2807 + $0x3c] sm:$0xf]
        %v2840 = vunpack.c.l.b16 %v2808
        %v2841 = vunpack.c.l.b16 %v2809
        %v2842 = vunpack.c.l.b16 %v2810
        %v2843 = vunpack.c.l.b16 %v2811
        %v2844 = vunpack.c.l.b16 %v2812
        %v2845 = vunpack.c.l.b16 %v2813
        %v2846 = vunpack.c.l.b16 %v2814
        %v2847 = vunpack.c.l.b16 %v2815
        %v2848 = vunpack.c.l.b16 %v2816
        %v2849 = vunpack.c.l.b16 %v2817
        %v2850 = vunpack.c.l.b16 %v2818
        %v2851 = vunpack.c.l.b16 %v2819
        %v2852 = vunpack.c.l.b16 %v2820
        %v2853 = vunpack.c.l.b16 %v2821
        %v2854 = vunpack.c.l.b16 %v2822
        %v2855 = vunpack.c.l.b16 %v2823
        %v2856 = vpack.c.b16 %v2841, %v2840
        %v2857 = vpack.c.b16 %v2843, %v2842
        %v2858 = vpack.c.b16 %v2845, %v2844
        %v2859 = vpack.c.b16 %v2847, %v2846
        %v2860 = vpack.c.b16 %v2849, %v2848
        %v2861 = vpack.c.b16 %v2851, %v2850
        %v2862 = vpack.c.b16 %v2853, %v2852
        %v2863 = vpack.c.b16 %v2855, %v2854
        %2872 = vmatprep.subr.bf16.mxu0 0
        %2873 = vmatpush1.bf16.msra.mxu0 %v2856
        %2874 = vmatprep.subr.bf16.mxu0 0
        %2875 = vmatpush1.bf16.msra.mxu0 %v2857
        %2876 = vmatprep.subr.bf16.mxu0 0
        %2877 = vmatpush1.bf16.msra.mxu0 %v2858
        %2878 = vmatprep.subr.bf16.mxu0 0
        %2879 = vmatpush1.bf16.msra.mxu0 %v2859
        %2880 = vmatprep.subr.bf16.mxu0 0
        %2881 = vmatpush1.bf16.msra.mxu0 %v2860
        %2882 = vmatprep.subr.bf16.mxu0 0
        %2883 = vmatpush1.bf16.msra.mxu0 %v2861
        %2884 = vmatprep.subr.bf16.mxu0 0
        %2885 = vmatpush1.bf16.msra.mxu0 %v2862
        %2886 = vmatprep.subr.bf16.mxu0 0
        %2887 = vmatpush1.bf16.msra.mxu0 %v2863
        %2888 = vmatprep.subr.bf16.mxu0 0
        %2889 = vmatpush1.bf16.msra.mxu0 0
        %2890 = vmatprep.subr.bf16.mxu0 0
        %2891 = vmatpush1.bf16.msra.mxu0 0
        %2892 = vmatprep.subr.bf16.mxu0 0
        %2893 = vmatpush1.bf16.msra.mxu0 0
        %2894 = vmatprep.subr.bf16.mxu0 0
        %2895 = vmatpush1.bf16.msra.mxu0 0
        %2896 = vmatprep.subr.bf16.mxu0 0
        %2897 = vmatpush1.bf16.msra.mxu0 0
        %2898 = vmatprep.subr.bf16.mxu0 0
        %2899 = vmatpush1.bf16.msra.mxu0 0
        %2900 = vmatprep.subr.bf16.mxu0 0
        %2901 = vmatpush1.bf16.msra.mxu0 0
        %2902 = vmatprep.subr.bf16.mxu0 0
        %2903 = vmatpush1.bf16.msra.mxu0 0
        %2904 = vmatprep.mubr.bf16.mxu0 0
        %2905 = vmatmul.mubr.bf16.gmra.mrb[0].mxu0 %v2016
        %v2906 = vpop.f32.mrb[0].mxu0
        %v2907 = vadd.f32 0.0, %v2906
        %v2908 = vpop.f32.mrb[0].mxu0
        %v2909 = vpop.f32.mrb[0].mxu0
        %v2910 = vadd.f32 0.0, %v2909
        %v2911 = vpop.f32.mrb[0].mxu0
        %2912 = vmatprep.mubr.bf16.mxu0 0
        %2913 = vmatmul.mubr.bf16.gmra.mrb[0].mxu0 %v2015
        %v2914 = vpop.f32.mrb[0].mxu0
        %v2915 = vadd.f32 0.0, %v2914
        %v2916 = vpop.f32.mrb[0].mxu0
        %v2917 = vpop.f32.mrb[0].mxu0
        %v2918 = vadd.f32 0.0, %v2917
        %v2919 = vpop.f32.mrb[0].mxu0
        %2920 = vdwg.mxu0
        %v2921 = vadd.f32 %v2741, %v2907
        %v2922 = vadd.f32 %v2742, %v2910
        %v2923 = vadd.f32 %v2743, %v2915
        %v2924 = vadd.f32 %v2744, %v2918
        %v2925 = vrot.slane %v2206, 2
        %v2926 = vrot.slane %v2207, 2
        %v2927 = vsel %vm996, %v2925, %v2926
        %2930 = vmatprep.subr.bf16.mxu0 0
        %2931 = vmatpush1.bf16.msra.mxu0 %v2856
        %2932 = vmatprep.subr.bf16.mxu0 0
        %2933 = vmatpush1.bf16.msra.mxu0 %v2857
        %2934 = vmatprep.subr.bf16.mxu0 0
        %2935 = vmatpush1.bf16.msra.mxu0 %v2858
        %2936 = vmatprep.subr.bf16.mxu0 0
        %2937 = vmatpush1.bf16.msra.mxu0 %v2859
        %2938 = vmatprep.subr.bf16.mxu0 0
        %2939 = vmatpush1.bf16.msra.mxu0 %v2860
        %2940 = vmatprep.subr.bf16.mxu0 0
        %2941 = vmatpush1.bf16.msra.mxu0 %v2861
        %2942 = vmatprep.subr.bf16.mxu0 0
        %2943 = vmatpush1.bf16.msra.mxu0 %v2862
        %2944 = vmatprep.subr.bf16.mxu0 0
        %2945 = vmatpush1.bf16.msra.mxu0 %v2863
        %2946 = vmatprep.subr.bf16.mxu0 0
        %2947 = vmatpush1.bf16.msra.mxu0 0
        %2948 = vmatprep.subr.bf16.mxu0 0
        %2949 = vmatpush1.bf16.msra.mxu0 0
        %2950 = vmatprep.subr.bf16.mxu0 0
        %2951 = vmatpush1.bf16.msra.mxu0 0
        %2952 = vmatprep.subr.bf16.mxu0 0
        %2953 = vmatpush1.bf16.msra.mxu0 0
        %2954 = vmatprep.subr.bf16.mxu0 0
        %2955 = vmatpush1.bf16.msra.mxu0 0
        %2956 = vmatprep.subr.bf16.mxu0 0
        %2957 = vmatpush1.bf16.msra.mxu0 0
        %2958 = vmatprep.subr.bf16.mxu0 0
        %2959 = vmatpush1.bf16.msra.mxu0 0
        %2960 = vmatprep.subr.bf16.mxu0 0
        %2961 = vmatpush1.bf16.msra.mxu0 0
        %2962 = vmatprep.mubr.bf16.mxu0 0
        %2963 = vmatmul.mubr.bf16.gmra.mrb[0].mxu0 %v2927
        %v2964 = vpop.f32.mrb[0].mxu0
        %v2965 = vadd.f32 0.0, %v2964
        %v2966 = vpop.f32.mrb[0].mxu0
        %v2967 = vpop.f32.mrb[0].mxu0
        %v2968 = vadd.f32 0.0, %v2967
        %v2969 = vpop.f32.mrb[0].mxu0
        %2970 = vmatprep.mubr.bf16.mxu0 0
        %2971 = vmatmul.mubr.bf16.gmra.mrb[0].mxu0 %v2926
        %v2972 = vpop.f32.mrb[0].mxu0
        %v2973 = vadd.f32 0.0, %v2972
        %v2974 = vpop.f32.mrb[0].mxu0
        %v2975 = vpop.f32.mrb[0].mxu0
        %v2976 = vadd.f32 0.0, %v2975
        %v2977 = vpop.f32.mrb[0].mxu0
        %2978 = vdwg.mxu0
        %v2979 = vadd.f32 %v2803, %v2965
        %v2980 = vadd.f32 %v2804, %v2968
        %v2981 = vadd.f32 %v2805, %v2973
        %v2982 = vadd.f32 %v2806, %v2976
        %s2983 = sadd.s32 %s207, 4
        %s2984 = smul.u32 %s2983, 4
        %s2985 = smul.addr %s2984, 4
        %s2986 = scalar_lea.vmem %s192, %s2985
        %v2987 = vld [vmem:[%s2986] sm:$0xf]
        %v2988 = vld [vmem:[%s2986 + $0x4] sm:$0xf]
        %v2989 = vld [vmem:[%s2986 + $0x8] sm:$0xf]
        %v2990 = vld [vmem:[%s2986 + $0xc] sm:$0xf]
        %s2991 = scalar_lea.vmem %s1, 960
        %v2992 = vld [vmem:[%s2991] sm:$0xf]
        %v2993 = vld [vmem:[%s2991 + $0x4] sm:$0xf]
        %v2994 = vld [vmem:[%s2991 + $0x8] sm:$0xf]
        %v2995 = vld [vmem:[%s2991 + $0xc] sm:$0xf]
        %v2996 = vld [vmem:[%s2991 + $0x10] sm:$0xf]
        %v2997 = vld [vmem:[%s2991 + $0x14] sm:$0xf]
        %v2998 = vld [vmem:[%s2991 + $0x18] sm:$0xf]
        %v2999 = vld [vmem:[%s2991 + $0x1c] sm:$0xf]
        %v3000 = vld [vmem:[%s2991 + $0x20] sm:$0xf]
        %v3001 = vld [vmem:[%s2991 + $0x24] sm:$0xf]
        %v3002 = vld [vmem:[%s2991 + $0x28] sm:$0xf]
        %v3003 = vld [vmem:[%s2991 + $0x2c] sm:$0xf]
        %v3004 = vld [vmem:[%s2991 + $0x30] sm:$0xf]
        %v3005 = vld [vmem:[%s2991 + $0x34] sm:$0xf]
        %v3006 = vld [vmem:[%s2991 + $0x38] sm:$0xf]
        %v3007 = vld [vmem:[%s2991 + $0x3c] sm:$0xf]
        %v3024 = vunpack.c.l.b16 %v2992
        %v3025 = vunpack.c.l.b16 %v2993
        %v3026 = vunpack.c.l.b16 %v2994
        %v3027 = vunpack.c.l.b16 %v2995
        %v3028 = vunpack.c.l.b16 %v2996
        %v3029 = vunpack.c.l.b16 %v2997
        %v3030 = vunpack.c.l.b16 %v2998
        %v3031 = vunpack.c.l.b16 %v2999
        %v3032 = vunpack.c.l.b16 %v3000
        %v3033 = vunpack.c.l.b16 %v3001
        %v3034 = vunpack.c.l.b16 %v3002
        %v3035 = vunpack.c.l.b16 %v3003
        %v3036 = vunpack.c.l.b16 %v3004
        %v3037 = vunpack.c.l.b16 %v3005
        %v3038 = vunpack.c.l.b16 %v3006
        %v3039 = vunpack.c.l.b16 %v3007
        %v3040 = vpack.c.b16 %v3025, %v3024
        %v3041 = vpack.c.b16 %v3027, %v3026
        %v3042 = vpack.c.b16 %v3029, %v3028
        %v3043 = vpack.c.b16 %v3031, %v3030
        %v3044 = vpack.c.b16 %v3033, %v3032
        %v3045 = vpack.c.b16 %v3035, %v3034
        %v3046 = vpack.c.b16 %v3037, %v3036
        %v3047 = vpack.c.b16 %v3039, %v3038
        %3056 = vmatprep.subr.bf16.mxu0 0
        %3057 = vmatpush1.bf16.msra.mxu0 %v3040
        %3058 = vmatprep.subr.bf16.mxu0 0
        %3059 = vmatpush1.bf16.msra.mxu0 %v3041
        %3060 = vmatprep.subr.bf16.mxu0 0
        %3061 = vmatpush1.bf16.msra.mxu0 %v3042
        %3062 = vmatprep.subr.bf16.mxu0 0
        %3063 = vmatpush1.bf16.msra.mxu0 %v3043
        %3064 = vmatprep.subr.bf16.mxu0 0
        %3065 = vmatpush1.bf16.msra.mxu0 %v3044
        %3066 = vmatprep.subr.bf16.mxu0 0
        %3067 = vmatpush1.bf16.msra.mxu0 %v3045
        %3068 = vmatprep.subr.bf16.mxu0 0
        %3069 = vmatpush1.bf16.msra.mxu0 %v3046
        %3070 = vmatprep.subr.bf16.mxu0 0
        %3071 = vmatpush1.bf16.msra.mxu0 %v3047
        %3072 = vmatprep.subr.bf16.mxu0 0
        %3073 = vmatpush1.bf16.msra.mxu0 0
        %3074 = vmatprep.subr.bf16.mxu0 0
        %3075 = vmatpush1.bf16.msra.mxu0 0
        %3076 = vmatprep.subr.bf16.mxu0 0
        %3077 = vmatpush1.bf16.msra.mxu0 0
        %3078 = vmatprep.subr.bf16.mxu0 0
        %3079 = vmatpush1.bf16.msra.mxu0 0
        %3080 = vmatprep.subr.bf16.mxu0 0
        %3081 = vmatpush1.bf16.msra.mxu0 0
        %3082 = vmatprep.subr.bf16.mxu0 0
        %3083 = vmatpush1.bf16.msra.mxu0 0
        %3084 = vmatprep.subr.bf16.mxu0 0
        %3085 = vmatpush1.bf16.msra.mxu0 0
        %3086 = vmatprep.subr.bf16.mxu0 0
        %3087 = vmatpush1.bf16.msra.mxu0 0
        %3088 = vmatprep.mubr.bf16.mxu0 0
        %3089 = vmatmul.mubr.bf16.gmra.mrb[0].mxu0 %v2206
        %v3090 = vpop.f32.mrb[0].mxu0
        %v3091 = vadd.f32 0.0, %v3090
        %v3092 = vpop.f32.mrb[0].mxu0
        %v3093 = vpop.f32.mrb[0].mxu0
        %v3094 = vadd.f32 0.0, %v3093
        %v3095 = vpop.f32.mrb[0].mxu0
        %3096 = vmatprep.mubr.bf16.mxu0 0
        %3097 = vmatmul.mubr.bf16.gmra.mrb[0].mxu0 %v2207
        %v3098 = vpop.f32.mrb[0].mxu0
        %v3099 = vadd.f32 0.0, %v3098
        %v3100 = vpop.f32.mrb[0].mxu0
        %v3101 = vpop.f32.mrb[0].mxu0
        %v3102 = vadd.f32 0.0, %v3101
        %v3103 = vpop.f32.mrb[0].mxu0
        %3104 = vdwg.mxu0
        %v3105 = vadd.f32 %v2921, %v3091
        %v3106 = vadd.f32 %v2922, %v3094
        %v3107 = vadd.f32 %v2923, %v3099
        %v3108 = vadd.f32 %v2924, %v3102
        %v3113 = vunpack.c.l.b16 %v2987
        %v3114 = vunpack.c.l.b16 %v2988
        %v3115 = vunpack.c.l.b16 %v2989
        %v3116 = vunpack.c.l.b16 %v2990
        %v3117 = vpack.c.b16 %v3114, %v3113
        %v3118 = vpack.c.b16 %v3116, %v3115
        %3121 = vmatprep.subr.bf16.mxu0 0
        %3122 = vmatpush1.bf16.msra.mxu0 %v3040
        %3123 = vmatprep.subr.bf16.mxu0 0
        %3124 = vmatpush1.bf16.msra.mxu0 %v3041
        %3125 = vmatprep.subr.bf16.mxu0 0
        %3126 = vmatpush1.bf16.msra.mxu0 %v3042
        %3127 = vmatprep.subr.bf16.mxu0 0
        %3128 = vmatpush1.bf16.msra.mxu0 %v3043
        %3129 = vmatprep.subr.bf16.mxu0 0
        %3130 = vmatpush1.bf16.msra.mxu0 %v3044
        %3131 = vmatprep.subr.bf16.mxu0 0
        %3132 = vmatpush1.bf16.msra.mxu0 %v3045
        %3133 = vmatprep.subr.bf16.mxu0 0
        %3134 = vmatpush1.bf16.msra.mxu0 %v3046
        %3135 = vmatprep.subr.bf16.mxu0 0
        %3136 = vmatpush1.bf16.msra.mxu0 %v3047
        %3137 = vmatprep.subr.bf16.mxu0 0
        %3138 = vmatpush1.bf16.msra.mxu0 0
        %3139 = vmatprep.subr.bf16.mxu0 0
        %3140 = vmatpush1.bf16.msra.mxu0 0
        %3141 = vmatprep.subr.bf16.mxu0 0
        %3142 = vmatpush1.bf16.msra.mxu0 0
        %3143 = vmatprep.subr.bf16.mxu0 0
        %3144 = vmatpush1.bf16.msra.mxu0 0
        %3145 = vmatprep.subr.bf16.mxu0 0
        %3146 = vmatpush1.bf16.msra.mxu0 0
        %3147 = vmatprep.subr.bf16.mxu0 0
        %3148 = vmatpush1.bf16.msra.mxu0 0
        %3149 = vmatprep.subr.bf16.mxu0 0
        %3150 = vmatpush1.bf16.msra.mxu0 0
        %3151 = vmatprep.subr.bf16.mxu0 0
        %3152 = vmatpush1.bf16.msra.mxu0 0
        %3153 = vmatprep.mubr.bf16.mxu0 0
        %3154 = vmatmul.mubr.bf16.gmra.mrb[0].mxu0 %v3117
        %v3155 = vpop.f32.mrb[0].mxu0
        %v3156 = vadd.f32 0.0, %v3155
        %v3157 = vpop.f32.mrb[0].mxu0
        %v3158 = vpop.f32.mrb[0].mxu0
        %v3159 = vadd.f32 0.0, %v3158
        %v3160 = vpop.f32.mrb[0].mxu0
        %3161 = vmatprep.mubr.bf16.mxu0 0
        %3162 = vmatmul.mubr.bf16.gmra.mrb[0].mxu0 %v3118
        %v3163 = vpop.f32.mrb[0].mxu0
        %v3164 = vadd.f32 0.0, %v3163
        %v3165 = vpop.f32.mrb[0].mxu0
        %v3166 = vpop.f32.mrb[0].mxu0
        %v3167 = vadd.f32 0.0, %v3166
        %v3168 = vpop.f32.mrb[0].mxu0
        %3169 = vdwg.mxu0
        %v3170 = vadd.f32 %v2979, %v3156
        %v3171 = vadd.f32 %v2980, %v3159
        %v3172 = vadd.f32 %v2981, %v3164
        %v3173 = vadd.f32 %v2982, %v3167
        %s3174 = scalar_lea.vmem %s1, 1024
        %v3175 = vld [vmem:[%s3174] sm:$0xf]
        %v3176 = vld [vmem:[%s3174 + $0x4] sm:$0xf]
        %v3177 = vld [vmem:[%s3174 + $0x8] sm:$0xf]
        %v3178 = vld [vmem:[%s3174 + $0xc] sm:$0xf]
        %v3179 = vld [vmem:[%s3174 + $0x10] sm:$0xf]
        %v3180 = vld [vmem:[%s3174 + $0x14] sm:$0xf]
        %v3181 = vld [vmem:[%s3174 + $0x18] sm:$0xf]
        %v3182 = vld [vmem:[%s3174 + $0x1c] sm:$0xf]
        %v3183 = vld [vmem:[%s3174 + $0x20] sm:$0xf]
        %v3184 = vld [vmem:[%s3174 + $0x24] sm:$0xf]
        %v3185 = vld [vmem:[%s3174 + $0x28] sm:$0xf]
        %v3186 = vld [vmem:[%s3174 + $0x2c] sm:$0xf]
        %v3187 = vld [vmem:[%s3174 + $0x30] sm:$0xf]
        %v3188 = vld [vmem:[%s3174 + $0x34] sm:$0xf]
        %v3189 = vld [vmem:[%s3174 + $0x38] sm:$0xf]
        %v3190 = vld [vmem:[%s3174 + $0x3c] sm:$0xf]
        %v3207 = vunpack.c.l.b16 %v3175
        %v3208 = vunpack.c.l.b16 %v3176
        %v3209 = vunpack.c.l.b16 %v3177
        %v3210 = vunpack.c.l.b16 %v3178
        %v3211 = vunpack.c.l.b16 %v3179
        %v3212 = vunpack.c.l.b16 %v3180
        %v3213 = vunpack.c.l.b16 %v3181
        %v3214 = vunpack.c.l.b16 %v3182
        %v3215 = vunpack.c.l.b16 %v3183
        %v3216 = vunpack.c.l.b16 %v3184
        %v3217 = vunpack.c.l.b16 %v3185
        %v3218 = vunpack.c.l.b16 %v3186
        %v3219 = vunpack.c.l.b16 %v3187
        %v3220 = vunpack.c.l.b16 %v3188
        %v3221 = vunpack.c.l.b16 %v3189
        %v3222 = vunpack.c.l.b16 %v3190
        %v3223 = vpack.c.b16 %v3208, %v3207
        %v3224 = vpack.c.b16 %v3210, %v3209
        %v3225 = vpack.c.b16 %v3212, %v3211
        %v3226 = vpack.c.b16 %v3214, %v3213
        %v3227 = vpack.c.b16 %v3216, %v3215
        %v3228 = vpack.c.b16 %v3218, %v3217
        %v3229 = vpack.c.b16 %v3220, %v3219
        %v3230 = vpack.c.b16 %v3222, %v3221
        %3239 = vmatprep.subr.bf16.mxu0 0
        %3240 = vmatpush1.bf16.msra.mxu0 %v3223
        %3241 = vmatprep.subr.bf16.mxu0 0
        %3242 = vmatpush1.bf16.msra.mxu0 %v3224
        %3243 = vmatprep.subr.bf16.mxu0 0
        %3244 = vmatpush1.bf16.msra.mxu0 %v3225
        %3245 = vmatprep.subr.bf16.mxu0 0
        %3246 = vmatpush1.bf16.msra.mxu0 %v3226
        %3247 = vmatprep.subr.bf16.mxu0 0
        %3248 = vmatpush1.bf16.msra.mxu0 %v3227
        %3249 = vmatprep.subr.bf16.mxu0 0
        %3250 = vmatpush1.bf16.msra.mxu0 %v3228
        %3251 = vmatprep.subr.bf16.mxu0 0
        %3252 = vmatpush1.bf16.msra.mxu0 %v3229
        %3253 = vmatprep.subr.bf16.mxu0 0
        %3254 = vmatpush1.bf16.msra.mxu0 %v3230
        %3255 = vmatprep.subr.bf16.mxu0 0
        %3256 = vmatpush1.bf16.msra.mxu0 0
        %3257 = vmatprep.subr.bf16.mxu0 0
        %3258 = vmatpush1.bf16.msra.mxu0 0
        %3259 = vmatprep.subr.bf16.mxu0 0
        %3260 = vmatpush1.bf16.msra.mxu0 0
        %3261 = vmatprep.subr.bf16.mxu0 0
        %3262 = vmatpush1.bf16.msra.mxu0 0
        %3263 = vmatprep.subr.bf16.mxu0 0
        %3264 = vmatpush1.bf16.msra.mxu0 0
        %3265 = vmatprep.subr.bf16.mxu0 0
        %3266 = vmatpush1.bf16.msra.mxu0 0
        %3267 = vmatprep.subr.bf16.mxu0 0
        %3268 = vmatpush1.bf16.msra.mxu0 0
        %3269 = vmatprep.subr.bf16.mxu0 0
        %3270 = vmatpush1.bf16.msra.mxu0 0
        %3271 = vmatprep.mubr.bf16.mxu0 0
        %3272 = vmatmul.mubr.bf16.gmra.mrb[0].mxu0 %v2392
        %v3273 = vpop.f32.mrb[0].mxu0
        %v3274 = vadd.f32 0.0, %v3273
        %v3275 = vpop.f32.mrb[0].mxu0
        %v3276 = vpop.f32.mrb[0].mxu0
        %v3277 = vadd.f32 0.0, %v3276
        %v3278 = vpop.f32.mrb[0].mxu0
        %3279 = vmatprep.mubr.bf16.mxu0 0
        %3280 = vmatmul.mubr.bf16.gmra.mrb[0].mxu0 %v2395
        %v3281 = vpop.f32.mrb[0].mxu0
        %v3282 = vadd.f32 0.0, %v3281
        %v3283 = vpop.f32.mrb[0].mxu0
        %v3284 = vpop.f32.mrb[0].mxu0
        %v3285 = vadd.f32 0.0, %v3284
        %v3286 = vpop.f32.mrb[0].mxu0
        %3287 = vdwg.mxu0
        %v3288 = vadd.f32 %v3105, %v3274
        %v3289 = vadd.f32 %v3106, %v3277
        %v3290 = vadd.f32 %v3107, %v3282
        %v3291 = vadd.f32 %v3108, %v3285
        %v3293 = vshrl.u32 %v3117, 16
        %v3295 = vshll.u32 %v3117, 16
        %v3297 = vrot.slane %v3295, 1
        %v3298 = vor.u32 %v3293, %v3297
        %v3300 = vshll.u32 %v3118, 16
        %v3302 = vrot.slane %v3300, 1
        %v3303 = vsel %vm266, %v3298, %v3302
        %v3304 = vshrl.u32 %v3118, 16
        %v3306 = vor.u32 %v3304, %v3302
        %3309 = vmatprep.subr.bf16.mxu0 0
        %3310 = vmatpush1.bf16.msra.mxu0 %v3223
        %3311 = vmatprep.subr.bf16.mxu0 0
        %3312 = vmatpush1.bf16.msra.mxu0 %v3224
        %3313 = vmatprep.subr.bf16.mxu0 0
        %3314 = vmatpush1.bf16.msra.mxu0 %v3225
        %3315 = vmatprep.subr.bf16.mxu0 0
        %3316 = vmatpush1.bf16.msra.mxu0 %v3226
        %3317 = vmatprep.subr.bf16.mxu0 0
        %3318 = vmatpush1.bf16.msra.mxu0 %v3227
        %3319 = vmatprep.subr.bf16.mxu0 0
        %3320 = vmatpush1.bf16.msra.mxu0 %v3228
        %3321 = vmatprep.subr.bf16.mxu0 0
        %3322 = vmatpush1.bf16.msra.mxu0 %v3229
        %3323 = vmatprep.subr.bf16.mxu0 0
        %3324 = vmatpush1.bf16.msra.mxu0 %v3230
        %3325 = vmatprep.subr.bf16.mxu0 0
        %3326 = vmatpush1.bf16.msra.mxu0 0
        %3327 = vmatprep.subr.bf16.mxu0 0
        %3328 = vmatpush1.bf16.msra.mxu0 0
        %3329 = vmatprep.subr.bf16.mxu0 0
        %3330 = vmatpush1.bf16.msra.mxu0 0
        %3331 = vmatprep.subr.bf16.mxu0 0
        %3332 = vmatpush1.bf16.msra.mxu0 0
        %3333 = vmatprep.subr.bf16.mxu0 0
        %3334 = vmatpush1.bf16.msra.mxu0 0
        %3335 = vmatprep.subr.bf16.mxu0 0
        %3336 = vmatpush1.bf16.msra.mxu0 0
        %3337 = vmatprep.subr.bf16.mxu0 0
        %3338 = vmatpush1.bf16.msra.mxu0 0
        %3339 = vmatprep.subr.bf16.mxu0 0
        %3340 = vmatpush1.bf16.msra.mxu0 0
        %3341 = vmatprep.mubr.bf16.mxu0 0
        %3342 = vmatmul.mubr.bf16.gmra.mrb[0].mxu0 %v3303
        %v3343 = vpop.f32.mrb[0].mxu0
        %v3344 = vadd.f32 0.0, %v3343
        %v3345 = vpop.f32.mrb[0].mxu0
        %v3346 = vpop.f32.mrb[0].mxu0
        %v3347 = vadd.f32 0.0, %v3346
        %v3348 = vpop.f32.mrb[0].mxu0
        %3349 = vmatprep.mubr.bf16.mxu0 0
        %3350 = vmatmul.mubr.bf16.gmra.mrb[0].mxu0 %v3306
        %v3351 = vpop.f32.mrb[0].mxu0
        %v3352 = vadd.f32 0.0, %v3351
        %v3353 = vpop.f32.mrb[0].mxu0
        %v3354 = vpop.f32.mrb[0].mxu0
        %v3355 = vadd.f32 0.0, %v3354
        %v3356 = vpop.f32.mrb[0].mxu0
        %3357 = vdwg.mxu0
        %v3358 = vadd.f32 %v3170, %v3344
        %v3359 = vadd.f32 %v3171, %v3347
        %v3360 = vadd.f32 %v3172, %v3352
        %v3361 = vadd.f32 %v3173, %v3355
        %s3362 = scalar_lea.vmem %s1, 1088
        %v3363 = vld [vmem:[%s3362] sm:$0xf]
        %v3364 = vld [vmem:[%s3362 + $0x4] sm:$0xf]
        %v3365 = vld [vmem:[%s3362 + $0x8] sm:$0xf]
        %v3366 = vld [vmem:[%s3362 + $0xc] sm:$0xf]
        %v3367 = vld [vmem:[%s3362 + $0x10] sm:$0xf]
        %v3368 = vld [vmem:[%s3362 + $0x14] sm:$0xf]
        %v3369 = vld [vmem:[%s3362 + $0x18] sm:$0xf]
        %v3370 = vld [vmem:[%s3362 + $0x1c] sm:$0xf]
        %v3371 = vld [vmem:[%s3362 + $0x20] sm:$0xf]
        %v3372 = vld [vmem:[%s3362 + $0x24] sm:$0xf]
        %v3373 = vld [vmem:[%s3362 + $0x28] sm:$0xf]
        %v3374 = vld [vmem:[%s3362 + $0x2c] sm:$0xf]
        %v3375 = vld [vmem:[%s3362 + $0x30] sm:$0xf]
        %v3376 = vld [vmem:[%s3362 + $0x34] sm:$0xf]
        %v3377 = vld [vmem:[%s3362 + $0x38] sm:$0xf]
        %v3378 = vld [vmem:[%s3362 + $0x3c] sm:$0xf]
        %v3395 = vunpack.c.l.b16 %v3363
        %v3396 = vunpack.c.l.b16 %v3364
        %v3397 = vunpack.c.l.b16 %v3365
        %v3398 = vunpack.c.l.b16 %v3366
        %v3399 = vunpack.c.l.b16 %v3367
        %v3400 = vunpack.c.l.b16 %v3368
        %v3401 = vunpack.c.l.b16 %v3369
        %v3402 = vunpack.c.l.b16 %v3370
        %v3403 = vunpack.c.l.b16 %v3371
        %v3404 = vunpack.c.l.b16 %v3372
        %v3405 = vunpack.c.l.b16 %v3373
        %v3406 = vunpack.c.l.b16 %v3374
        %v3407 = vunpack.c.l.b16 %v3375
        %v3408 = vunpack.c.l.b16 %v3376
        %v3409 = vunpack.c.l.b16 %v3377
        %v3410 = vunpack.c.l.b16 %v3378
        %v3411 = vpack.c.b16 %v3396, %v3395
        %v3412 = vpack.c.b16 %v3398, %v3397
        %v3413 = vpack.c.b16 %v3400, %v3399
        %v3414 = vpack.c.b16 %v3402, %v3401
        %v3415 = vpack.c.b16 %v3404, %v3403
        %v3416 = vpack.c.b16 %v3406, %v3405
        %v3417 = vpack.c.b16 %v3408, %v3407
        %v3418 = vpack.c.b16 %v3410, %v3409
        %3427 = vmatprep.subr.bf16.mxu0 0
        %3428 = vmatpush1.bf16.msra.mxu0 %v3411
        %3429 = vmatprep.subr.bf16.mxu0 0
        %3430 = vmatpush1.bf16.msra.mxu0 %v3412
        %3431 = vmatprep.subr.bf16.mxu0 0
        %3432 = vmatpush1.bf16.msra.mxu0 %v3413
        %3433 = vmatprep.subr.bf16.mxu0 0
        %3434 = vmatpush1.bf16.msra.mxu0 %v3414
        %3435 = vmatprep.subr.bf16.mxu0 0
        %3436 = vmatpush1.bf16.msra.mxu0 %v3415
        %3437 = vmatprep.subr.bf16.mxu0 0
        %3438 = vmatpush1.bf16.msra.mxu0 %v3416
        %3439 = vmatprep.subr.bf16.mxu0 0
        %3440 = vmatpush1.bf16.msra.mxu0 %v3417
        %3441 = vmatprep.subr.bf16.mxu0 0
        %3442 = vmatpush1.bf16.msra.mxu0 %v3418
        %3443 = vmatprep.subr.bf16.mxu0 0
        %3444 = vmatpush1.bf16.msra.mxu0 0
        %3445 = vmatprep.subr.bf16.mxu0 0
        %3446 = vmatpush1.bf16.msra.mxu0 0
        %3447 = vmatprep.subr.bf16.mxu0 0
        %3448 = vmatpush1.bf16.msra.mxu0 0
        %3449 = vmatprep.subr.bf16.mxu0 0
        %3450 = vmatpush1.bf16.msra.mxu0 0
        %3451 = vmatprep.subr.bf16.mxu0 0
        %3452 = vmatpush1.bf16.msra.mxu0 0
        %3453 = vmatprep.subr.bf16.mxu0 0
        %3454 = vmatpush1.bf16.msra.mxu0 0
        %3455 = vmatprep.subr.bf16.mxu0 0
        %3456 = vmatpush1.bf16.msra.mxu0 0
        %3457 = vmatprep.subr.bf16.mxu0 0
        %3458 = vmatpush1.bf16.msra.mxu0 0
        %3459 = vmatprep.mubr.bf16.mxu0 0
        %3460 = vmatmul.mubr.bf16.gmra.mrb[0].mxu0 %v2571
        %v3461 = vpop.f32.mrb[0].mxu0
        %v3462 = vadd.f32 0.0, %v3461
        %v3463 = vpop.f32.mrb[0].mxu0
        %v3464 = vpop.f32.mrb[0].mxu0
        %v3465 = vadd.f32 0.0, %v3464
        %v3466 = vpop.f32.mrb[0].mxu0
        %3467 = vmatprep.mubr.bf16.mxu0 0
        %3468 = vmatmul.mubr.bf16.gmra.mrb[0].mxu0 %v2570
        %v3469 = vpop.f32.mrb[0].mxu0
        %v3470 = vadd.f32 0.0, %v3469
        %v3471 = vpop.f32.mrb[0].mxu0
        %v3472 = vpop.f32.mrb[0].mxu0
        %v3473 = vadd.f32 0.0, %v3472
        %v3474 = vpop.f32.mrb[0].mxu0
        %3475 = vdwg.mxu0
        %v3476 = vadd.f32 %v3288, %v3462
        %v3477 = vadd.f32 %v3289, %v3465
        %v3478 = vadd.f32 %v3290, %v3470
        %v3479 = vadd.f32 %v3291, %v3473
        %v3480 = vrot.slane %v3117, 1
        %v3481 = vrot.slane %v3118, 1
        %v3482 = vsel %vm624, %v3480, %v3481
        %3485 = vmatprep.subr.bf16.mxu0 0
        %3486 = vmatpush1.bf16.msra.mxu0 %v3411
        %3487 = vmatprep.subr.bf16.mxu0 0
        %3488 = vmatpush1.bf16.msra.mxu0 %v3412
        %3489 = vmatprep.subr.bf16.mxu0 0
        %3490 = vmatpush1.bf16.msra.mxu0 %v3413
        %3491 = vmatprep.subr.bf16.mxu0 0
        %3492 = vmatpush1.bf16.msra.mxu0 %v3414
        %3493 = vmatprep.subr.bf16.mxu0 0
        %3494 = vmatpush1.bf16.msra.mxu0 %v3415
        %3495 = vmatprep.subr.bf16.mxu0 0
        %3496 = vmatpush1.bf16.msra.mxu0 %v3416
        %3497 = vmatprep.subr.bf16.mxu0 0
        %3498 = vmatpush1.bf16.msra.mxu0 %v3417
        %3499 = vmatprep.subr.bf16.mxu0 0
        %3500 = vmatpush1.bf16.msra.mxu0 %v3418
        %3501 = vmatprep.subr.bf16.mxu0 0
        %3502 = vmatpush1.bf16.msra.mxu0 0
        %3503 = vmatprep.subr.bf16.mxu0 0
        %3504 = vmatpush1.bf16.msra.mxu0 0
        %3505 = vmatprep.subr.bf16.mxu0 0
        %3506 = vmatpush1.bf16.msra.mxu0 0
        %3507 = vmatprep.subr.bf16.mxu0 0
        %3508 = vmatpush1.bf16.msra.mxu0 0
        %3509 = vmatprep.subr.bf16.mxu0 0
        %3510 = vmatpush1.bf16.msra.mxu0 0
        %3511 = vmatprep.subr.bf16.mxu0 0
        %3512 = vmatpush1.bf16.msra.mxu0 0
        %3513 = vmatprep.subr.bf16.mxu0 0
        %3514 = vmatpush1.bf16.msra.mxu0 0
        %3515 = vmatprep.subr.bf16.mxu0 0
        %3516 = vmatpush1.bf16.msra.mxu0 0
        %3517 = vmatprep.mubr.bf16.mxu0 0
        %3518 = vmatmul.mubr.bf16.gmra.mrb[0].mxu0 %v3482
        %v3519 = vpop.f32.mrb[0].mxu0
        %v3520 = vadd.f32 0.0, %v3519
        %v3521 = vpop.f32.mrb[0].mxu0
        %v3522 = vpop.f32.mrb[0].mxu0
        %v3523 = vadd.f32 0.0, %v3522
        %v3524 = vpop.f32.mrb[0].mxu0
        %3525 = vmatprep.mubr.bf16.mxu0 0
        %3526 = vmatmul.mubr.bf16.gmra.mrb[0].mxu0 %v3481
        %v3527 = vpop.f32.mrb[0].mxu0
        %v3528 = vadd.f32 0.0, %v3527
        %v3529 = vpop.f32.mrb[0].mxu0
        %v3530 = vpop.f32.mrb[0].mxu0
        %v3531 = vadd.f32 0.0, %v3530
        %v3532 = vpop.f32.mrb[0].mxu0
        %3533 = vdwg.mxu0
        %v3534 = vadd.f32 %v3358, %v3520
        %v3535 = vadd.f32 %v3359, %v3523
        %v3536 = vadd.f32 %v3360, %v3528
        %v3537 = vadd.f32 %v3361, %v3531
        %s3538 = scalar_lea.vmem %s1, 1152
        %v3539 = vld [vmem:[%s3538] sm:$0xf]
        %v3540 = vld [vmem:[%s3538 + $0x4] sm:$0xf]
        %v3541 = vld [vmem:[%s3538 + $0x8] sm:$0xf]
        %v3542 = vld [vmem:[%s3538 + $0xc] sm:$0xf]
        %v3543 = vld [vmem:[%s3538 + $0x10] sm:$0xf]
        %v3544 = vld [vmem:[%s3538 + $0x14] sm:$0xf]
        %v3545 = vld [vmem:[%s3538 + $0x18] sm:$0xf]
        %v3546 = vld [vmem:[%s3538 + $0x1c] sm:$0xf]
        %v3547 = vld [vmem:[%s3538 + $0x20] sm:$0xf]
        %v3548 = vld [vmem:[%s3538 + $0x24] sm:$0xf]
        %v3549 = vld [vmem:[%s3538 + $0x28] sm:$0xf]
        %v3550 = vld [vmem:[%s3538 + $0x2c] sm:$0xf]
        %v3551 = vld [vmem:[%s3538 + $0x30] sm:$0xf]
        %v3552 = vld [vmem:[%s3538 + $0x34] sm:$0xf]
        %v3553 = vld [vmem:[%s3538 + $0x38] sm:$0xf]
        %v3554 = vld [vmem:[%s3538 + $0x3c] sm:$0xf]
        %v3571 = vunpack.c.l.b16 %v3539
        %v3572 = vunpack.c.l.b16 %v3540
        %v3573 = vunpack.c.l.b16 %v3541
        %v3574 = vunpack.c.l.b16 %v3542
        %v3575 = vunpack.c.l.b16 %v3543
        %v3576 = vunpack.c.l.b16 %v3544
        %v3577 = vunpack.c.l.b16 %v3545
        %v3578 = vunpack.c.l.b16 %v3546
        %v3579 = vunpack.c.l.b16 %v3547
        %v3580 = vunpack.c.l.b16 %v3548
        %v3581 = vunpack.c.l.b16 %v3549
        %v3582 = vunpack.c.l.b16 %v3550
        %v3583 = vunpack.c.l.b16 %v3551
        %v3584 = vunpack.c.l.b16 %v3552
        %v3585 = vunpack.c.l.b16 %v3553
        %v3586 = vunpack.c.l.b16 %v3554
        %v3587 = vpack.c.b16 %v3572, %v3571
        %v3588 = vpack.c.b16 %v3574, %v3573
        %v3589 = vpack.c.b16 %v3576, %v3575
        %v3590 = vpack.c.b16 %v3578, %v3577
        %v3591 = vpack.c.b16 %v3580, %v3579
        %v3592 = vpack.c.b16 %v3582, %v3581
        %v3593 = vpack.c.b16 %v3584, %v3583
        %v3594 = vpack.c.b16 %v3586, %v3585
        %3603 = vmatprep.subr.bf16.mxu0 0
        %3604 = vmatpush1.bf16.msra.mxu0 %v3587
        %3605 = vmatprep.subr.bf16.mxu0 0
        %3606 = vmatpush1.bf16.msra.mxu0 %v3588
        %3607 = vmatprep.subr.bf16.mxu0 0
        %3608 = vmatpush1.bf16.msra.mxu0 %v3589
        %3609 = vmatprep.subr.bf16.mxu0 0
        %3610 = vmatpush1.bf16.msra.mxu0 %v3590
        %3611 = vmatprep.subr.bf16.mxu0 0
        %3612 = vmatpush1.bf16.msra.mxu0 %v3591
        %3613 = vmatprep.subr.bf16.mxu0 0
        %3614 = vmatpush1.bf16.msra.mxu0 %v3592
        %3615 = vmatprep.subr.bf16.mxu0 0
        %3616 = vmatpush1.bf16.msra.mxu0 %v3593
        %3617 = vmatprep.subr.bf16.mxu0 0
        %3618 = vmatpush1.bf16.msra.mxu0 %v3594
        %3619 = vmatprep.subr.bf16.mxu0 0
        %3620 = vmatpush1.bf16.msra.mxu0 0
        %3621 = vmatprep.subr.bf16.mxu0 0
        %3622 = vmatpush1.bf16.msra.mxu0 0
        %3623 = vmatprep.subr.bf16.mxu0 0
        %3624 = vmatpush1.bf16.msra.mxu0 0
        %3625 = vmatprep.subr.bf16.mxu0 0
        %3626 = vmatpush1.bf16.msra.mxu0 0
        %3627 = vmatprep.subr.bf16.mxu0 0
        %3628 = vmatpush1.bf16.msra.mxu0 0
        %3629 = vmatprep.subr.bf16.mxu0 0
        %3630 = vmatpush1.bf16.msra.mxu0 0
        %3631 = vmatprep.subr.bf16.mxu0 0
        %3632 = vmatpush1.bf16.msra.mxu0 0
        %3633 = vmatprep.subr.bf16.mxu0 0
        %3634 = vmatpush1.bf16.msra.mxu0 0
        %3635 = vmatprep.mubr.bf16.mxu0 0
        %3636 = vmatmul.mubr.bf16.gmra.mrb[0].mxu0 %v2751
        %v3637 = vpop.f32.mrb[0].mxu0
        %v3638 = vadd.f32 0.0, %v3637
        %v3639 = vpop.f32.mrb[0].mxu0
        %v3640 = vpop.f32.mrb[0].mxu0
        %v3641 = vadd.f32 0.0, %v3640
        %v3642 = vpop.f32.mrb[0].mxu0
        %3643 = vmatprep.mubr.bf16.mxu0 0
        %3644 = vmatmul.mubr.bf16.gmra.mrb[0].mxu0 %v2750
        %v3645 = vpop.f32.mrb[0].mxu0
        %v3646 = vadd.f32 0.0, %v3645
        %v3647 = vpop.f32.mrb[0].mxu0
        %v3648 = vpop.f32.mrb[0].mxu0
        %v3649 = vadd.f32 0.0, %v3648
        %v3650 = vpop.f32.mrb[0].mxu0
        %3651 = vdwg.mxu0
        %v3652 = vadd.f32 %v3476, %v3638
        %v3653 = vadd.f32 %v3477, %v3641
        %v3654 = vadd.f32 %v3478, %v3646
        %v3655 = vadd.f32 %v3479, %v3649
        %v3656 = vrot.slane %v3293, 1
        %v3657 = vrot.slane %v3295, 2
        %v3658 = vor.u32 %v3656, %v3657
        %v3659 = vrot.slane %v3304, 1
        %v3660 = vrot.slane %v3300, 2
        %v3661 = vor.u32 %v3659, %v3660
        %v3662 = vsel %vm806, %v3658, %v3661
        %3665 = vmatprep.subr.bf16.mxu0 0
        %3666 = vmatpush1.bf16.msra.mxu0 %v3587
        %3667 = vmatprep.subr.bf16.mxu0 0
        %3668 = vmatpush1.bf16.msra.mxu0 %v3588
        %3669 = vmatprep.subr.bf16.mxu0 0
        %3670 = vmatpush1.bf16.msra.mxu0 %v3589
        %3671 = vmatprep.subr.bf16.mxu0 0
        %3672 = vmatpush1.bf16.msra.mxu0 %v3590
        %3673 = vmatprep.subr.bf16.mxu0 0
        %3674 = vmatpush1.bf16.msra.mxu0 %v3591
        %3675 = vmatprep.subr.bf16.mxu0 0
        %3676 = vmatpush1.bf16.msra.mxu0 %v3592
        %3677 = vmatprep.subr.bf16.mxu0 0
        %3678 = vmatpush1.bf16.msra.mxu0 %v3593
        %3679 = vmatprep.subr.bf16.mxu0 0
        %3680 = vmatpush1.bf16.msra.mxu0 %v3594
        %3681 = vmatprep.subr.bf16.mxu0 0
        %3682 = vmatpush1.bf16.msra.mxu0 0
        %3683 = vmatprep.subr.bf16.mxu0 0
        %3684 = vmatpush1.bf16.msra.mxu0 0
        %3685 = vmatprep.subr.bf16.mxu0 0
        %3686 = vmatpush1.bf16.msra.mxu0 0
        %3687 = vmatprep.subr.bf16.mxu0 0
        %3688 = vmatpush1.bf16.msra.mxu0 0
        %3689 = vmatprep.subr.bf16.mxu0 0
        %3690 = vmatpush1.bf16.msra.mxu0 0
        %3691 = vmatprep.subr.bf16.mxu0 0
        %3692 = vmatpush1.bf16.msra.mxu0 0
        %3693 = vmatprep.subr.bf16.mxu0 0
        %3694 = vmatpush1.bf16.msra.mxu0 0
        %3695 = vmatprep.subr.bf16.mxu0 0
        %3696 = vmatpush1.bf16.msra.mxu0 0
        %3697 = vmatprep.mubr.bf16.mxu0 0
        %3698 = vmatmul.mubr.bf16.gmra.mrb[0].mxu0 %v3662
        %v3699 = vpop.f32.mrb[0].mxu0
        %v3700 = vadd.f32 0.0, %v3699
        %v3701 = vpop.f32.mrb[0].mxu0
        %v3702 = vpop.f32.mrb[0].mxu0
        %v3703 = vadd.f32 0.0, %v3702
        %v3704 = vpop.f32.mrb[0].mxu0
        %3705 = vmatprep.mubr.bf16.mxu0 0
        %3706 = vmatmul.mubr.bf16.gmra.mrb[0].mxu0 %v3661
        %v3707 = vpop.f32.mrb[0].mxu0
        %v3708 = vadd.f32 0.0, %v3707
        %v3709 = vpop.f32.mrb[0].mxu0
        %v3710 = vpop.f32.mrb[0].mxu0
        %v3711 = vadd.f32 0.0, %v3710
        %v3712 = vpop.f32.mrb[0].mxu0
        %3713 = vdwg.mxu0
        %v3714 = vadd.f32 %v3534, %v3700
        %v3715 = vadd.f32 %v3535, %v3703
        %v3716 = vadd.f32 %v3536, %v3708
        %v3717 = vadd.f32 %v3537, %v3711
        %s3718 = scalar_lea.vmem %s1, 1216
        %v3719 = vld [vmem:[%s3718] sm:$0xf]
        %v3720 = vld [vmem:[%s3718 + $0x4] sm:$0xf]
        %v3721 = vld [vmem:[%s3718 + $0x8] sm:$0xf]
        %v3722 = vld [vmem:[%s3718 + $0xc] sm:$0xf]
        %v3723 = vld [vmem:[%s3718 + $0x10] sm:$0xf]
        %v3724 = vld [vmem:[%s3718 + $0x14] sm:$0xf]
        %v3725 = vld [vmem:[%s3718 + $0x18] sm:$0xf]
        %v3726 = vld [vmem:[%s3718 + $0x1c] sm:$0xf]
        %v3727 = vld [vmem:[%s3718 + $0x20] sm:$0xf]
        %v3728 = vld [vmem:[%s3718 + $0x24] sm:$0xf]
        %v3729 = vld [vmem:[%s3718 + $0x28] sm:$0xf]
        %v3730 = vld [vmem:[%s3718 + $0x2c] sm:$0xf]
        %v3731 = vld [vmem:[%s3718 + $0x30] sm:$0xf]
        %v3732 = vld [vmem:[%s3718 + $0x34] sm:$0xf]
        %v3733 = vld [vmem:[%s3718 + $0x38] sm:$0xf]
        %v3734 = vld [vmem:[%s3718 + $0x3c] sm:$0xf]
        %v3751 = vunpack.c.l.b16 %v3719
        %v3752 = vunpack.c.l.b16 %v3720
        %v3753 = vunpack.c.l.b16 %v3721
        %v3754 = vunpack.c.l.b16 %v3722
        %v3755 = vunpack.c.l.b16 %v3723
        %v3756 = vunpack.c.l.b16 %v3724
        %v3757 = vunpack.c.l.b16 %v3725
        %v3758 = vunpack.c.l.b16 %v3726
        %v3759 = vunpack.c.l.b16 %v3727
        %v3760 = vunpack.c.l.b16 %v3728
        %v3761 = vunpack.c.l.b16 %v3729
        %v3762 = vunpack.c.l.b16 %v3730
        %v3763 = vunpack.c.l.b16 %v3731
        %v3764 = vunpack.c.l.b16 %v3732
        %v3765 = vunpack.c.l.b16 %v3733
        %v3766 = vunpack.c.l.b16 %v3734
        %v3767 = vpack.c.b16 %v3752, %v3751
        %v3768 = vpack.c.b16 %v3754, %v3753
        %v3769 = vpack.c.b16 %v3756, %v3755
        %v3770 = vpack.c.b16 %v3758, %v3757
        %v3771 = vpack.c.b16 %v3760, %v3759
        %v3772 = vpack.c.b16 %v3762, %v3761
        %v3773 = vpack.c.b16 %v3764, %v3763
        %v3774 = vpack.c.b16 %v3766, %v3765
        %3783 = vmatprep.subr.bf16.mxu0 0
        %3784 = vmatpush1.bf16.msra.mxu0 %v3767
        %3785 = vmatprep.subr.bf16.mxu0 0
        %3786 = vmatpush1.bf16.msra.mxu0 %v3768
        %3787 = vmatprep.subr.bf16.mxu0 0
        %3788 = vmatpush1.bf16.msra.mxu0 %v3769
        %3789 = vmatprep.subr.bf16.mxu0 0
        %3790 = vmatpush1.bf16.msra.mxu0 %v3770
        %3791 = vmatprep.subr.bf16.mxu0 0
        %3792 = vmatpush1.bf16.msra.mxu0 %v3771
        %3793 = vmatprep.subr.bf16.mxu0 0
        %3794 = vmatpush1.bf16.msra.mxu0 %v3772
        %3795 = vmatprep.subr.bf16.mxu0 0
        %3796 = vmatpush1.bf16.msra.mxu0 %v3773
        %3797 = vmatprep.subr.bf16.mxu0 0
        %3798 = vmatpush1.bf16.msra.mxu0 %v3774
        %3799 = vmatprep.subr.bf16.mxu0 0
        %3800 = vmatpush1.bf16.msra.mxu0 0
        %3801 = vmatprep.subr.bf16.mxu0 0
        %3802 = vmatpush1.bf16.msra.mxu0 0
        %3803 = vmatprep.subr.bf16.mxu0 0
        %3804 = vmatpush1.bf16.msra.mxu0 0
        %3805 = vmatprep.subr.bf16.mxu0 0
        %3806 = vmatpush1.bf16.msra.mxu0 0
        %3807 = vmatprep.subr.bf16.mxu0 0
        %3808 = vmatpush1.bf16.msra.mxu0 0
        %3809 = vmatprep.subr.bf16.mxu0 0
        %3810 = vmatpush1.bf16.msra.mxu0 0
        %3811 = vmatprep.subr.bf16.mxu0 0
        %3812 = vmatpush1.bf16.msra.mxu0 0
        %3813 = vmatprep.subr.bf16.mxu0 0
        %3814 = vmatpush1.bf16.msra.mxu0 0
        %3815 = vmatprep.mubr.bf16.mxu0 0
        %3816 = vmatmul.mubr.bf16.gmra.mrb[0].mxu0 %v2927
        %v3817 = vpop.f32.mrb[0].mxu0
        %v3818 = vadd.f32 0.0, %v3817
        %v3819 = vpop.f32.mrb[0].mxu0
        %v3820 = vpop.f32.mrb[0].mxu0
        %v3821 = vadd.f32 0.0, %v3820
        %v3822 = vpop.f32.mrb[0].mxu0
        %3823 = vmatprep.mubr.bf16.mxu0 0
        %3824 = vmatmul.mubr.bf16.gmra.mrb[0].mxu0 %v2926
        %v3825 = vpop.f32.mrb[0].mxu0
        %v3826 = vadd.f32 0.0, %v3825
        %v3827 = vpop.f32.mrb[0].mxu0
        %v3828 = vpop.f32.mrb[0].mxu0
        %v3829 = vadd.f32 0.0, %v3828
        %v3830 = vpop.f32.mrb[0].mxu0
        %3831 = vdwg.mxu0
        %v3832 = vadd.f32 %v3652, %v3818
        %v3833 = vadd.f32 %v3653, %v3821
        %v3834 = vadd.f32 %v3654, %v3826
        %v3835 = vadd.f32 %v3655, %v3829
        %v3836 = vrot.slane %v3117, 2
        %v3837 = vrot.slane %v3118, 2
        %v3838 = vsel %vm996, %v3836, %v3837
        %3841 = vmatprep.subr.bf16.mxu0 0
        %3842 = vmatpush1.bf16.msra.mxu0 %v3767
        %3843 = vmatprep.subr.bf16.mxu0 0
        %3844 = vmatpush1.bf16.msra.mxu0 %v3768
        %3845 = vmatprep.subr.bf16.mxu0 0
        %3846 = vmatpush1.bf16.msra.mxu0 %v3769
        %3847 = vmatprep.subr.bf16.mxu0 0
        %3848 = vmatpush1.bf16.msra.mxu0 %v3770
        %3849 = vmatprep.subr.bf16.mxu0 0
        %3850 = vmatpush1.bf16.msra.mxu0 %v3771
        %3851 = vmatprep.subr.bf16.mxu0 0
        %3852 = vmatpush1.bf16.msra.mxu0 %v3772
        %3853 = vmatprep.subr.bf16.mxu0 0
        %3854 = vmatpush1.bf16.msra.mxu0 %v3773
        %3855 = vmatprep.subr.bf16.mxu0 0
        %3856 = vmatpush1.bf16.msra.mxu0 %v3774
        %3857 = vmatprep.subr.bf16.mxu0 0
        %3858 = vmatpush1.bf16.msra.mxu0 0
        %3859 = vmatprep.subr.bf16.mxu0 0
        %3860 = vmatpush1.bf16.msra.mxu0 0
        %3861 = vmatprep.subr.bf16.mxu0 0
        %3862 = vmatpush1.bf16.msra.mxu0 0
        %3863 = vmatprep.subr.bf16.mxu0 0
        %3864 = vmatpush1.bf16.msra.mxu0 0
        %3865 = vmatprep.subr.bf16.mxu0 0
        %3866 = vmatpush1.bf16.msra.mxu0 0
        %3867 = vmatprep.subr.bf16.mxu0 0
        %3868 = vmatpush1.bf16.msra.mxu0 0
        %3869 = vmatprep.subr.bf16.mxu0 0
        %3870 = vmatpush1.bf16.msra.mxu0 0
        %3871 = vmatprep.subr.bf16.mxu0 0
        %3872 = vmatpush1.bf16.msra.mxu0 0
        %3873 = vmatprep.mubr.bf16.mxu0 0
        %3874 = vmatmul.mubr.bf16.gmra.mrb[0].mxu0 %v3838
        %v3875 = vpop.f32.mrb[0].mxu0
        %v3876 = vadd.f32 0.0, %v3875
        %v3877 = vpop.f32.mrb[0].mxu0
        %v3878 = vpop.f32.mrb[0].mxu0
        %v3879 = vadd.f32 0.0, %v3878
        %v3880 = vpop.f32.mrb[0].mxu0
        %3881 = vmatprep.mubr.bf16.mxu0 0
        %3882 = vmatmul.mubr.bf16.gmra.mrb[0].mxu0 %v3837
        %v3883 = vpop.f32.mrb[0].mxu0
        %v3884 = vadd.f32 0.0, %v3883
        %v3885 = vpop.f32.mrb[0].mxu0
        %v3886 = vpop.f32.mrb[0].mxu0
        %v3887 = vadd.f32 0.0, %v3886
        %v3888 = vpop.f32.mrb[0].mxu0
        %3889 = vdwg.mxu0
        %v3890 = vadd.f32 %v3714, %v3876
        %v3891 = vadd.f32 %v3715, %v3879
        %v3892 = vadd.f32 %v3716, %v3884
        %v3893 = vadd.f32 %v3717, %v3887
        %s3894 = sadd.s32 %s207, 5
        %s3895 = smul.u32 %s3894, 4
        %s3896 = smul.addr %s3895, 4
        %s3897 = scalar_lea.vmem %s192, %s3896
        %v3898 = vld [vmem:[%s3897] sm:$0xf]
        %v3899 = vld [vmem:[%s3897 + $0x4] sm:$0xf]
        %v3900 = vld [vmem:[%s3897 + $0x8] sm:$0xf]
        %v3901 = vld [vmem:[%s3897 + $0xc] sm:$0xf]
        %s3902 = scalar_lea.vmem %s1, 1280
        %v3903 = vld [vmem:[%s3902] sm:$0xf]
        %v3904 = vld [vmem:[%s3902 + $0x4] sm:$0xf]
        %v3905 = vld [vmem:[%s3902 + $0x8] sm:$0xf]
        %v3906 = vld [vmem:[%s3902 + $0xc] sm:$0xf]
        %v3907 = vld [vmem:[%s3902 + $0x10] sm:$0xf]
        %v3908 = vld [vmem:[%s3902 + $0x14] sm:$0xf]
        %v3909 = vld [vmem:[%s3902 + $0x18] sm:$0xf]
        %v3910 = vld [vmem:[%s3902 + $0x1c] sm:$0xf]
        %v3911 = vld [vmem:[%s3902 + $0x20] sm:$0xf]
        %v3912 = vld [vmem:[%s3902 + $0x24] sm:$0xf]
        %v3913 = vld [vmem:[%s3902 + $0x28] sm:$0xf]
        %v3914 = vld [vmem:[%s3902 + $0x2c] sm:$0xf]
        %v3915 = vld [vmem:[%s3902 + $0x30] sm:$0xf]
        %v3916 = vld [vmem:[%s3902 + $0x34] sm:$0xf]
        %v3917 = vld [vmem:[%s3902 + $0x38] sm:$0xf]
        %v3918 = vld [vmem:[%s3902 + $0x3c] sm:$0xf]
        %v3935 = vunpack.c.l.b16 %v3903
        %v3936 = vunpack.c.l.b16 %v3904
        %v3937 = vunpack.c.l.b16 %v3905
        %v3938 = vunpack.c.l.b16 %v3906
        %v3939 = vunpack.c.l.b16 %v3907
        %v3940 = vunpack.c.l.b16 %v3908
        %v3941 = vunpack.c.l.b16 %v3909
        %v3942 = vunpack.c.l.b16 %v3910
        %v3943 = vunpack.c.l.b16 %v3911
        %v3944 = vunpack.c.l.b16 %v3912
        %v3945 = vunpack.c.l.b16 %v3913
        %v3946 = vunpack.c.l.b16 %v3914
        %v3947 = vunpack.c.l.b16 %v3915
        %v3948 = vunpack.c.l.b16 %v3916
        %v3949 = vunpack.c.l.b16 %v3917
        %v3950 = vunpack.c.l.b16 %v3918
        %v3951 = vpack.c.b16 %v3936, %v3935
        %v3952 = vpack.c.b16 %v3938, %v3937
        %v3953 = vpack.c.b16 %v3940, %v3939
        %v3954 = vpack.c.b16 %v3942, %v3941
        %v3955 = vpack.c.b16 %v3944, %v3943
        %v3956 = vpack.c.b16 %v3946, %v3945
        %v3957 = vpack.c.b16 %v3948, %v3947
        %v3958 = vpack.c.b16 %v3950, %v3949
        %3967 = vmatprep.subr.bf16.mxu0 0
        %3968 = vmatpush1.bf16.msra.mxu0 %v3951
        %3969 = vmatprep.subr.bf16.mxu0 0
        %3970 = vmatpush1.bf16.msra.mxu0 %v3952
        %3971 = vmatprep.subr.bf16.mxu0 0
        %3972 = vmatpush1.bf16.msra.mxu0 %v3953
        %3973 = vmatprep.subr.bf16.mxu0 0
        %3974 = vmatpush1.bf16.msra.mxu0 %v3954
        %3975 = vmatprep.subr.bf16.mxu0 0
        %3976 = vmatpush1.bf16.msra.mxu0 %v3955
        %3977 = vmatprep.subr.bf16.mxu0 0
        %3978 = vmatpush1.bf16.msra.mxu0 %v3956
        %3979 = vmatprep.subr.bf16.mxu0 0
        %3980 = vmatpush1.bf16.msra.mxu0 %v3957
        %3981 = vmatprep.subr.bf16.mxu0 0
        %3982 = vmatpush1.bf16.msra.mxu0 %v3958
        %3983 = vmatprep.subr.bf16.mxu0 0
        %3984 = vmatpush1.bf16.msra.mxu0 0
        %3985 = vmatprep.subr.bf16.mxu0 0
        %3986 = vmatpush1.bf16.msra.mxu0 0
        %3987 = vmatprep.subr.bf16.mxu0 0
        %3988 = vmatpush1.bf16.msra.mxu0 0
        %3989 = vmatprep.subr.bf16.mxu0 0
        %3990 = vmatpush1.bf16.msra.mxu0 0
        %3991 = vmatprep.subr.bf16.mxu0 0
        %3992 = vmatpush1.bf16.msra.mxu0 0
        %3993 = vmatprep.subr.bf16.mxu0 0
        %3994 = vmatpush1.bf16.msra.mxu0 0
        %3995 = vmatprep.subr.bf16.mxu0 0
        %3996 = vmatpush1.bf16.msra.mxu0 0
        %3997 = vmatprep.subr.bf16.mxu0 0
        %3998 = vmatpush1.bf16.msra.mxu0 0
        %3999 = vmatprep.mubr.bf16.mxu0 0
        %4000 = vmatmul.mubr.bf16.gmra.mrb[0].mxu0 %v3117
        %v4001 = vpop.f32.mrb[0].mxu0
        %v4002 = vadd.f32 0.0, %v4001
        %v4003 = vpop.f32.mrb[0].mxu0
        %v4004 = vpop.f32.mrb[0].mxu0
        %v4005 = vadd.f32 0.0, %v4004
        %v4006 = vpop.f32.mrb[0].mxu0
        %4007 = vmatprep.mubr.bf16.mxu0 0
        %4008 = vmatmul.mubr.bf16.gmra.mrb[0].mxu0 %v3118
        %v4009 = vpop.f32.mrb[0].mxu0
        %v4010 = vadd.f32 0.0, %v4009
        %v4011 = vpop.f32.mrb[0].mxu0
        %v4012 = vpop.f32.mrb[0].mxu0
        %v4013 = vadd.f32 0.0, %v4012
        %v4014 = vpop.f32.mrb[0].mxu0
        %4015 = vdwg.mxu0
        %v4016 = vadd.f32 %v3832, %v4002
        %v4017 = vadd.f32 %v3833, %v4005
        %v4018 = vadd.f32 %v3834, %v4010
        %v4019 = vadd.f32 %v3835, %v4013
        %v4024 = vunpack.c.l.b16 %v3898
        %v4025 = vunpack.c.l.b16 %v3899
        %v4026 = vunpack.c.l.b16 %v3900
        %v4027 = vunpack.c.l.b16 %v3901
        %v4028 = vpack.c.b16 %v4025, %v4024
        %v4029 = vpack.c.b16 %v4027, %v4026
        %4032 = vmatprep.subr.bf16.mxu0 0
        %4033 = vmatpush1.bf16.msra.mxu0 %v3951
        %4034 = vmatprep.subr.bf16.mxu0 0
        %4035 = vmatpush1.bf16.msra.mxu0 %v3952
        %4036 = vmatprep.subr.bf16.mxu0 0
        %4037 = vmatpush1.bf16.msra.mxu0 %v3953
        %4038 = vmatprep.subr.bf16.mxu0 0
        %4039 = vmatpush1.bf16.msra.mxu0 %v3954
        %4040 = vmatprep.subr.bf16.mxu0 0
        %4041 = vmatpush1.bf16.msra.mxu0 %v3955
        %4042 = vmatprep.subr.bf16.mxu0 0
        %4043 = vmatpush1.bf16.msra.mxu0 %v3956
        %4044 = vmatprep.subr.bf16.mxu0 0
        %4045 = vmatpush1.bf16.msra.mxu0 %v3957
        %4046 = vmatprep.subr.bf16.mxu0 0
        %4047 = vmatpush1.bf16.msra.mxu0 %v3958
        %4048 = vmatprep.subr.bf16.mxu0 0
        %4049 = vmatpush1.bf16.msra.mxu0 0
        %4050 = vmatprep.subr.bf16.mxu0 0
        %4051 = vmatpush1.bf16.msra.mxu0 0
        %4052 = vmatprep.subr.bf16.mxu0 0
        %4053 = vmatpush1.bf16.msra.mxu0 0
        %4054 = vmatprep.subr.bf16.mxu0 0
        %4055 = vmatpush1.bf16.msra.mxu0 0
        %4056 = vmatprep.subr.bf16.mxu0 0
        %4057 = vmatpush1.bf16.msra.mxu0 0
        %4058 = vmatprep.subr.bf16.mxu0 0
        %4059 = vmatpush1.bf16.msra.mxu0 0
        %4060 = vmatprep.subr.bf16.mxu0 0
        %4061 = vmatpush1.bf16.msra.mxu0 0
        %4062 = vmatprep.subr.bf16.mxu0 0
        %4063 = vmatpush1.bf16.msra.mxu0 0
        %4064 = vmatprep.mubr.bf16.mxu0 0
        %4065 = vmatmul.mubr.bf16.gmra.mrb[0].mxu0 %v4028
        %v4066 = vpop.f32.mrb[0].mxu0
        %v4067 = vadd.f32 0.0, %v4066
        %v4068 = vpop.f32.mrb[0].mxu0
        %v4069 = vpop.f32.mrb[0].mxu0
        %v4070 = vadd.f32 0.0, %v4069
        %v4071 = vpop.f32.mrb[0].mxu0
        %4072 = vmatprep.mubr.bf16.mxu0 0
        %4073 = vmatmul.mubr.bf16.gmra.mrb[0].mxu0 %v4029
        %v4074 = vpop.f32.mrb[0].mxu0
        %v4075 = vadd.f32 0.0, %v4074
        %v4076 = vpop.f32.mrb[0].mxu0
        %v4077 = vpop.f32.mrb[0].mxu0
        %v4078 = vadd.f32 0.0, %v4077
        %v4079 = vpop.f32.mrb[0].mxu0
        %4080 = vdwg.mxu0
        %v4081 = vadd.f32 %v3890, %v4067
        %v4082 = vadd.f32 %v3891, %v4070
        %v4083 = vadd.f32 %v3892, %v4075
        %v4084 = vadd.f32 %v3893, %v4078
        %s4085 = scalar_lea.vmem %s1, 1344
        %v4086 = vld [vmem:[%s4085] sm:$0xf]
        %v4087 = vld [vmem:[%s4085 + $0x4] sm:$0xf]
        %v4088 = vld [vmem:[%s4085 + $0x8] sm:$0xf]
        %v4089 = vld [vmem:[%s4085 + $0xc] sm:$0xf]
        %v4090 = vld [vmem:[%s4085 + $0x10] sm:$0xf]
        %v4091 = vld [vmem:[%s4085 + $0x14] sm:$0xf]
        %v4092 = vld [vmem:[%s4085 + $0x18] sm:$0xf]
        %v4093 = vld [vmem:[%s4085 + $0x1c] sm:$0xf]
        %v4094 = vld [vmem:[%s4085 + $0x20] sm:$0xf]
        %v4095 = vld [vmem:[%s4085 + $0x24] sm:$0xf]
        %v4096 = vld [vmem:[%s4085 + $0x28] sm:$0xf]
        %v4097 = vld [vmem:[%s4085 + $0x2c] sm:$0xf]
        %v4098 = vld [vmem:[%s4085 + $0x30] sm:$0xf]
        %v4099 = vld [vmem:[%s4085 + $0x34] sm:$0xf]
        %v4100 = vld [vmem:[%s4085 + $0x38] sm:$0xf]
        %v4101 = vld [vmem:[%s4085 + $0x3c] sm:$0xf]
        %v4118 = vunpack.c.l.b16 %v4086
        %v4119 = vunpack.c.l.b16 %v4087
        %v4120 = vunpack.c.l.b16 %v4088
        %v4121 = vunpack.c.l.b16 %v4089
        %v4122 = vunpack.c.l.b16 %v4090
        %v4123 = vunpack.c.l.b16 %v4091
        %v4124 = vunpack.c.l.b16 %v4092
        %v4125 = vunpack.c.l.b16 %v4093
        %v4126 = vunpack.c.l.b16 %v4094
        %v4127 = vunpack.c.l.b16 %v4095
        %v4128 = vunpack.c.l.b16 %v4096
        %v4129 = vunpack.c.l.b16 %v4097
        %v4130 = vunpack.c.l.b16 %v4098
        %v4131 = vunpack.c.l.b16 %v4099
        %v4132 = vunpack.c.l.b16 %v4100
        %v4133 = vunpack.c.l.b16 %v4101
        %v4134 = vpack.c.b16 %v4119, %v4118
        %v4135 = vpack.c.b16 %v4121, %v4120
        %v4136 = vpack.c.b16 %v4123, %v4122
        %v4137 = vpack.c.b16 %v4125, %v4124
        %v4138 = vpack.c.b16 %v4127, %v4126
        %v4139 = vpack.c.b16 %v4129, %v4128
        %v4140 = vpack.c.b16 %v4131, %v4130
        %v4141 = vpack.c.b16 %v4133, %v4132
        %4150 = vmatprep.subr.bf16.mxu0 0
        %4151 = vmatpush1.bf16.msra.mxu0 %v4134
        %4152 = vmatprep.subr.bf16.mxu0 0
        %4153 = vmatpush1.bf16.msra.mxu0 %v4135
        %4154 = vmatprep.subr.bf16.mxu0 0
        %4155 = vmatpush1.bf16.msra.mxu0 %v4136
        %4156 = vmatprep.subr.bf16.mxu0 0
        %4157 = vmatpush1.bf16.msra.mxu0 %v4137
        %4158 = vmatprep.subr.bf16.mxu0 0
        %4159 = vmatpush1.bf16.msra.mxu0 %v4138
        %4160 = vmatprep.subr.bf16.mxu0 0
        %4161 = vmatpush1.bf16.msra.mxu0 %v4139
        %4162 = vmatprep.subr.bf16.mxu0 0
        %4163 = vmatpush1.bf16.msra.mxu0 %v4140
        %4164 = vmatprep.subr.bf16.mxu0 0
        %4165 = vmatpush1.bf16.msra.mxu0 %v4141
        %4166 = vmatprep.subr.bf16.mxu0 0
        %4167 = vmatpush1.bf16.msra.mxu0 0
        %4168 = vmatprep.subr.bf16.mxu0 0
        %4169 = vmatpush1.bf16.msra.mxu0 0
        %4170 = vmatprep.subr.bf16.mxu0 0
        %4171 = vmatpush1.bf16.msra.mxu0 0
        %4172 = vmatprep.subr.bf16.mxu0 0
        %4173 = vmatpush1.bf16.msra.mxu0 0
        %4174 = vmatprep.subr.bf16.mxu0 0
        %4175 = vmatpush1.bf16.msra.mxu0 0
        %4176 = vmatprep.subr.bf16.mxu0 0
        %4177 = vmatpush1.bf16.msra.mxu0 0
        %4178 = vmatprep.subr.bf16.mxu0 0
        %4179 = vmatpush1.bf16.msra.mxu0 0
        %4180 = vmatprep.subr.bf16.mxu0 0
        %4181 = vmatpush1.bf16.msra.mxu0 0
        %4182 = vmatprep.mubr.bf16.mxu0 0
        %4183 = vmatmul.mubr.bf16.gmra.mrb[0].mxu0 %v3303
        %v4184 = vpop.f32.mrb[0].mxu0
        %v4185 = vadd.f32 0.0, %v4184
        %v4186 = vpop.f32.mrb[0].mxu0
        %v4187 = vpop.f32.mrb[0].mxu0
        %v4188 = vadd.f32 0.0, %v4187
        %v4189 = vpop.f32.mrb[0].mxu0
        %4190 = vmatprep.mubr.bf16.mxu0 0
        %4191 = vmatmul.mubr.bf16.gmra.mrb[0].mxu0 %v3306
        %v4192 = vpop.f32.mrb[0].mxu0
        %v4193 = vadd.f32 0.0, %v4192
        %v4194 = vpop.f32.mrb[0].mxu0
        %v4195 = vpop.f32.mrb[0].mxu0
        %v4196 = vadd.f32 0.0, %v4195
        %v4197 = vpop.f32.mrb[0].mxu0
        %4198 = vdwg.mxu0
        %v4199 = vadd.f32 %v4016, %v4185
        %v4200 = vadd.f32 %v4017, %v4188
        %v4201 = vadd.f32 %v4018, %v4193
        %v4202 = vadd.f32 %v4019, %v4196
        %v4204 = vshrl.u32 %v4028, 16
        %v4206 = vshll.u32 %v4028, 16
        %v4208 = vrot.slane %v4206, 1
        %v4209 = vor.u32 %v4204, %v4208
        %v4211 = vshll.u32 %v4029, 16
        %v4213 = vrot.slane %v4211, 1
        %v4214 = vsel %vm266, %v4209, %v4213
        %v4215 = vshrl.u32 %v4029, 16
        %v4217 = vor.u32 %v4215, %v4213
        %4220 = vmatprep.subr.bf16.mxu0 0
        %4221 = vmatpush1.bf16.msra.mxu0 %v4134
        %4222 = vmatprep.subr.bf16.mxu0 0
        %4223 = vmatpush1.bf16.msra.mxu0 %v4135
        %4224 = vmatprep.subr.bf16.mxu0 0
        %4225 = vmatpush1.bf16.msra.mxu0 %v4136
        %4226 = vmatprep.subr.bf16.mxu0 0
        %4227 = vmatpush1.bf16.msra.mxu0 %v4137
        %4228 = vmatprep.subr.bf16.mxu0 0
        %4229 = vmatpush1.bf16.msra.mxu0 %v4138
        %4230 = vmatprep.subr.bf16.mxu0 0
        %4231 = vmatpush1.bf16.msra.mxu0 %v4139
        %4232 = vmatprep.subr.bf16.mxu0 0
        %4233 = vmatpush1.bf16.msra.mxu0 %v4140
        %4234 = vmatprep.subr.bf16.mxu0 0
        %4235 = vmatpush1.bf16.msra.mxu0 %v4141
        %4236 = vmatprep.subr.bf16.mxu0 0
        %4237 = vmatpush1.bf16.msra.mxu0 0
        %4238 = vmatprep.subr.bf16.mxu0 0
        %4239 = vmatpush1.bf16.msra.mxu0 0
        %4240 = vmatprep.subr.bf16.mxu0 0
        %4241 = vmatpush1.bf16.msra.mxu0 0
        %4242 = vmatprep.subr.bf16.mxu0 0
        %4243 = vmatpush1.bf16.msra.mxu0 0
        %4244 = vmatprep.subr.bf16.mxu0 0
        %4245 = vmatpush1.bf16.msra.mxu0 0
        %4246 = vmatprep.subr.bf16.mxu0 0
        %4247 = vmatpush1.bf16.msra.mxu0 0
        %4248 = vmatprep.subr.bf16.mxu0 0
        %4249 = vmatpush1.bf16.msra.mxu0 0
        %4250 = vmatprep.subr.bf16.mxu0 0
        %4251 = vmatpush1.bf16.msra.mxu0 0
        %4252 = vmatprep.mubr.bf16.mxu0 0
        %4253 = vmatmul.mubr.bf16.gmra.mrb[0].mxu0 %v4214
        %v4254 = vpop.f32.mrb[0].mxu0
        %v4255 = vadd.f32 0.0, %v4254
        %v4256 = vpop.f32.mrb[0].mxu0
        %v4257 = vpop.f32.mrb[0].mxu0
        %v4258 = vadd.f32 0.0, %v4257
        %v4259 = vpop.f32.mrb[0].mxu0
        %4260 = vmatprep.mubr.bf16.mxu0 0
        %4261 = vmatmul.mubr.bf16.gmra.mrb[0].mxu0 %v4217
        %v4262 = vpop.f32.mrb[0].mxu0
        %v4263 = vadd.f32 0.0, %v4262
        %v4264 = vpop.f32.mrb[0].mxu0
        %v4265 = vpop.f32.mrb[0].mxu0
        %v4266 = vadd.f32 0.0, %v4265
        %v4267 = vpop.f32.mrb[0].mxu0
        %4268 = vdwg.mxu0
        %v4269 = vadd.f32 %v4081, %v4255
        %v4270 = vadd.f32 %v4082, %v4258
        %v4271 = vadd.f32 %v4083, %v4263
        %v4272 = vadd.f32 %v4084, %v4266
        %s4273 = scalar_lea.vmem %s1, 1408
        %v4274 = vld [vmem:[%s4273] sm:$0xf]
        %v4275 = vld [vmem:[%s4273 + $0x4] sm:$0xf]
        %v4276 = vld [vmem:[%s4273 + $0x8] sm:$0xf]
        %v4277 = vld [vmem:[%s4273 + $0xc] sm:$0xf]
        %v4278 = vld [vmem:[%s4273 + $0x10] sm:$0xf]
        %v4279 = vld [vmem:[%s4273 + $0x14] sm:$0xf]
        %v4280 = vld [vmem:[%s4273 + $0x18] sm:$0xf]
        %v4281 = vld [vmem:[%s4273 + $0x1c] sm:$0xf]
        %v4282 = vld [vmem:[%s4273 + $0x20] sm:$0xf]
        %v4283 = vld [vmem:[%s4273 + $0x24] sm:$0xf]
        %v4284 = vld [vmem:[%s4273 + $0x28] sm:$0xf]
        %v4285 = vld [vmem:[%s4273 + $0x2c] sm:$0xf]
        %v4286 = vld [vmem:[%s4273 + $0x30] sm:$0xf]
        %v4287 = vld [vmem:[%s4273 + $0x34] sm:$0xf]
        %v4288 = vld [vmem:[%s4273 + $0x38] sm:$0xf]
        %v4289 = vld [vmem:[%s4273 + $0x3c] sm:$0xf]
        %v4306 = vunpack.c.l.b16 %v4274
        %v4307 = vunpack.c.l.b16 %v4275
        %v4308 = vunpack.c.l.b16 %v4276
        %v4309 = vunpack.c.l.b16 %v4277
        %v4310 = vunpack.c.l.b16 %v4278
        %v4311 = vunpack.c.l.b16 %v4279
        %v4312 = vunpack.c.l.b16 %v4280
        %v4313 = vunpack.c.l.b16 %v4281
        %v4314 = vunpack.c.l.b16 %v4282
        %v4315 = vunpack.c.l.b16 %v4283
        %v4316 = vunpack.c.l.b16 %v4284
        %v4317 = vunpack.c.l.b16 %v4285
        %v4318 = vunpack.c.l.b16 %v4286
        %v4319 = vunpack.c.l.b16 %v4287
        %v4320 = vunpack.c.l.b16 %v4288
        %v4321 = vunpack.c.l.b16 %v4289
        %v4322 = vpack.c.b16 %v4307, %v4306
        %v4323 = vpack.c.b16 %v4309, %v4308
        %v4324 = vpack.c.b16 %v4311, %v4310
        %v4325 = vpack.c.b16 %v4313, %v4312
        %v4326 = vpack.c.b16 %v4315, %v4314
        %v4327 = vpack.c.b16 %v4317, %v4316
        %v4328 = vpack.c.b16 %v4319, %v4318
        %v4329 = vpack.c.b16 %v4321, %v4320
        %4338 = vmatprep.subr.bf16.mxu0 0
        %4339 = vmatpush1.bf16.msra.mxu0 %v4322
        %4340 = vmatprep.subr.bf16.mxu0 0
        %4341 = vmatpush1.bf16.msra.mxu0 %v4323
        %4342 = vmatprep.subr.bf16.mxu0 0
        %4343 = vmatpush1.bf16.msra.mxu0 %v4324
        %4344 = vmatprep.subr.bf16.mxu0 0
        %4345 = vmatpush1.bf16.msra.mxu0 %v4325
        %4346 = vmatprep.subr.bf16.mxu0 0
        %4347 = vmatpush1.bf16.msra.mxu0 %v4326
        %4348 = vmatprep.subr.bf16.mxu0 0
        %4349 = vmatpush1.bf16.msra.mxu0 %v4327
        %4350 = vmatprep.subr.bf16.mxu0 0
        %4351 = vmatpush1.bf16.msra.mxu0 %v4328
        %4352 = vmatprep.subr.bf16.mxu0 0
        %4353 = vmatpush1.bf16.msra.mxu0 %v4329
        %4354 = vmatprep.subr.bf16.mxu0 0
        %4355 = vmatpush1.bf16.msra.mxu0 0
        %4356 = vmatprep.subr.bf16.mxu0 0
        %4357 = vmatpush1.bf16.msra.mxu0 0
        %4358 = vmatprep.subr.bf16.mxu0 0
        %4359 = vmatpush1.bf16.msra.mxu0 0
        %4360 = vmatprep.subr.bf16.mxu0 0
        %4361 = vmatpush1.bf16.msra.mxu0 0
        %4362 = vmatprep.subr.bf16.mxu0 0
        %4363 = vmatpush1.bf16.msra.mxu0 0
        %4364 = vmatprep.subr.bf16.mxu0 0
        %4365 = vmatpush1.bf16.msra.mxu0 0
        %4366 = vmatprep.subr.bf16.mxu0 0
        %4367 = vmatpush1.bf16.msra.mxu0 0
        %4368 = vmatprep.subr.bf16.mxu0 0
        %4369 = vmatpush1.bf16.msra.mxu0 0
        %4370 = vmatprep.mubr.bf16.mxu0 0
        %4371 = vmatmul.mubr.bf16.gmra.mrb[0].mxu0 %v3482
        %v4372 = vpop.f32.mrb[0].mxu0
        %v4373 = vadd.f32 0.0, %v4372
        %v4374 = vpop.f32.mrb[0].mxu0
        %v4375 = vpop.f32.mrb[0].mxu0
        %v4376 = vadd.f32 0.0, %v4375
        %v4377 = vpop.f32.mrb[0].mxu0
        %4378 = vmatprep.mubr.bf16.mxu0 0
        %4379 = vmatmul.mubr.bf16.gmra.mrb[0].mxu0 %v3481
        %v4380 = vpop.f32.mrb[0].mxu0
        %v4381 = vadd.f32 0.0, %v4380
        %v4382 = vpop.f32.mrb[0].mxu0
        %v4383 = vpop.f32.mrb[0].mxu0
        %v4384 = vadd.f32 0.0, %v4383
        %v4385 = vpop.f32.mrb[0].mxu0
        %4386 = vdwg.mxu0
        %v4387 = vadd.f32 %v4199, %v4373
        %v4388 = vadd.f32 %v4200, %v4376
        %v4389 = vadd.f32 %v4201, %v4381
        %v4390 = vadd.f32 %v4202, %v4384
        %v4391 = vrot.slane %v4028, 1
        %v4392 = vrot.slane %v4029, 1
        %v4393 = vsel %vm624, %v4391, %v4392
        %4396 = vmatprep.subr.bf16.mxu0 0
        %4397 = vmatpush1.bf16.msra.mxu0 %v4322
        %4398 = vmatprep.subr.bf16.mxu0 0
        %4399 = vmatpush1.bf16.msra.mxu0 %v4323
        %4400 = vmatprep.subr.bf16.mxu0 0
        %4401 = vmatpush1.bf16.msra.mxu0 %v4324
        %4402 = vmatprep.subr.bf16.mxu0 0
        %4403 = vmatpush1.bf16.msra.mxu0 %v4325
        %4404 = vmatprep.subr.bf16.mxu0 0
        %4405 = vmatpush1.bf16.msra.mxu0 %v4326
        %4406 = vmatprep.subr.bf16.mxu0 0
        %4407 = vmatpush1.bf16.msra.mxu0 %v4327
        %4408 = vmatprep.subr.bf16.mxu0 0
        %4409 = vmatpush1.bf16.msra.mxu0 %v4328
        %4410 = vmatprep.subr.bf16.mxu0 0
        %4411 = vmatpush1.bf16.msra.mxu0 %v4329
        %4412 = vmatprep.subr.bf16.mxu0 0
        %4413 = vmatpush1.bf16.msra.mxu0 0
        %4414 = vmatprep.subr.bf16.mxu0 0
        %4415 = vmatpush1.bf16.msra.mxu0 0
        %4416 = vmatprep.subr.bf16.mxu0 0
        %4417 = vmatpush1.bf16.msra.mxu0 0
        %4418 = vmatprep.subr.bf16.mxu0 0
        %4419 = vmatpush1.bf16.msra.mxu0 0
        %4420 = vmatprep.subr.bf16.mxu0 0
        %4421 = vmatpush1.bf16.msra.mxu0 0
        %4422 = vmatprep.subr.bf16.mxu0 0
        %4423 = vmatpush1.bf16.msra.mxu0 0
        %4424 = vmatprep.subr.bf16.mxu0 0
        %4425 = vmatpush1.bf16.msra.mxu0 0
        %4426 = vmatprep.subr.bf16.mxu0 0
        %4427 = vmatpush1.bf16.msra.mxu0 0
        %4428 = vmatprep.mubr.bf16.mxu0 0
        %4429 = vmatmul.mubr.bf16.gmra.mrb[0].mxu0 %v4393
        %v4430 = vpop.f32.mrb[0].mxu0
        %v4431 = vadd.f32 0.0, %v4430
        %v4432 = vpop.f32.mrb[0].mxu0
        %v4433 = vpop.f32.mrb[0].mxu0
        %v4434 = vadd.f32 0.0, %v4433
        %v4435 = vpop.f32.mrb[0].mxu0
        %4436 = vmatprep.mubr.bf16.mxu0 0
        %4437 = vmatmul.mubr.bf16.gmra.mrb[0].mxu0 %v4392
        %v4438 = vpop.f32.mrb[0].mxu0
        %v4439 = vadd.f32 0.0, %v4438
        %v4440 = vpop.f32.mrb[0].mxu0
        %v4441 = vpop.f32.mrb[0].mxu0
        %v4442 = vadd.f32 0.0, %v4441
        %v4443 = vpop.f32.mrb[0].mxu0
        %4444 = vdwg.mxu0
        %v4445 = vadd.f32 %v4269, %v4431
        %v4446 = vadd.f32 %v4270, %v4434
        %v4447 = vadd.f32 %v4271, %v4439
        %v4448 = vadd.f32 %v4272, %v4442
        %s4449 = scalar_lea.vmem %s1, 1472
        %v4450 = vld [vmem:[%s4449] sm:$0xf]
        %v4451 = vld [vmem:[%s4449 + $0x4] sm:$0xf]
        %v4452 = vld [vmem:[%s4449 + $0x8] sm:$0xf]
        %v4453 = vld [vmem:[%s4449 + $0xc] sm:$0xf]
        %v4454 = vld [vmem:[%s4449 + $0x10] sm:$0xf]
        %v4455 = vld [vmem:[%s4449 + $0x14] sm:$0xf]
        %v4456 = vld [vmem:[%s4449 + $0x18] sm:$0xf]
        %v4457 = vld [vmem:[%s4449 + $0x1c] sm:$0xf]
        %v4458 = vld [vmem:[%s4449 + $0x20] sm:$0xf]
        %v4459 = vld [vmem:[%s4449 + $0x24] sm:$0xf]
        %v4460 = vld [vmem:[%s4449 + $0x28] sm:$0xf]
        %v4461 = vld [vmem:[%s4449 + $0x2c] sm:$0xf]
        %v4462 = vld [vmem:[%s4449 + $0x30] sm:$0xf]
        %v4463 = vld [vmem:[%s4449 + $0x34] sm:$0xf]
        %v4464 = vld [vmem:[%s4449 + $0x38] sm:$0xf]
        %v4465 = vld [vmem:[%s4449 + $0x3c] sm:$0xf]
        %v4482 = vunpack.c.l.b16 %v4450
        %v4483 = vunpack.c.l.b16 %v4451
        %v4484 = vunpack.c.l.b16 %v4452
        %v4485 = vunpack.c.l.b16 %v4453
        %v4486 = vunpack.c.l.b16 %v4454
        %v4487 = vunpack.c.l.b16 %v4455
        %v4488 = vunpack.c.l.b16 %v4456
        %v4489 = vunpack.c.l.b16 %v4457
        %v4490 = vunpack.c.l.b16 %v4458
        %v4491 = vunpack.c.l.b16 %v4459
        %v4492 = vunpack.c.l.b16 %v4460
        %v4493 = vunpack.c.l.b16 %v4461
        %v4494 = vunpack.c.l.b16 %v4462
        %v4495 = vunpack.c.l.b16 %v4463
        %v4496 = vunpack.c.l.b16 %v4464
        %v4497 = vunpack.c.l.b16 %v4465
        %v4498 = vpack.c.b16 %v4483, %v4482
        %v4499 = vpack.c.b16 %v4485, %v4484
        %v4500 = vpack.c.b16 %v4487, %v4486
        %v4501 = vpack.c.b16 %v4489, %v4488
        %v4502 = vpack.c.b16 %v4491, %v4490
        %v4503 = vpack.c.b16 %v4493, %v4492
        %v4504 = vpack.c.b16 %v4495, %v4494
        %v4505 = vpack.c.b16 %v4497, %v4496
        %4514 = vmatprep.subr.bf16.mxu0 0
        %4515 = vmatpush1.bf16.msra.mxu0 %v4498
        %4516 = vmatprep.subr.bf16.mxu0 0
        %4517 = vmatpush1.bf16.msra.mxu0 %v4499
        %4518 = vmatprep.subr.bf16.mxu0 0
        %4519 = vmatpush1.bf16.msra.mxu0 %v4500
        %4520 = vmatprep.subr.bf16.mxu0 0
        %4521 = vmatpush1.bf16.msra.mxu0 %v4501
        %4522 = vmatprep.subr.bf16.mxu0 0
        %4523 = vmatpush1.bf16.msra.mxu0 %v4502
        %4524 = vmatprep.subr.bf16.mxu0 0
        %4525 = vmatpush1.bf16.msra.mxu0 %v4503
        %4526 = vmatprep.subr.bf16.mxu0 0
        %4527 = vmatpush1.bf16.msra.mxu0 %v4504
        %4528 = vmatprep.subr.bf16.mxu0 0
        %4529 = vmatpush1.bf16.msra.mxu0 %v4505
        %4530 = vmatprep.subr.bf16.mxu0 0
        %4531 = vmatpush1.bf16.msra.mxu0 0
        %4532 = vmatprep.subr.bf16.mxu0 0
        %4533 = vmatpush1.bf16.msra.mxu0 0
        %4534 = vmatprep.subr.bf16.mxu0 0
        %4535 = vmatpush1.bf16.msra.mxu0 0
        %4536 = vmatprep.subr.bf16.mxu0 0
        %4537 = vmatpush1.bf16.msra.mxu0 0
        %4538 = vmatprep.subr.bf16.mxu0 0
        %4539 = vmatpush1.bf16.msra.mxu0 0
        %4540 = vmatprep.subr.bf16.mxu0 0
        %4541 = vmatpush1.bf16.msra.mxu0 0
        %4542 = vmatprep.subr.bf16.mxu0 0
        %4543 = vmatpush1.bf16.msra.mxu0 0
        %4544 = vmatprep.subr.bf16.mxu0 0
        %4545 = vmatpush1.bf16.msra.mxu0 0
        %4546 = vmatprep.mubr.bf16.mxu0 0
        %4547 = vmatmul.mubr.bf16.gmra.mrb[0].mxu0 %v3662
        %v4548 = vpop.f32.mrb[0].mxu0
        %v4549 = vadd.f32 0.0, %v4548
        %v4550 = vpop.f32.mrb[0].mxu0
        %v4551 = vpop.f32.mrb[0].mxu0
        %v4552 = vadd.f32 0.0, %v4551
        %v4553 = vpop.f32.mrb[0].mxu0
        %4554 = vmatprep.mubr.bf16.mxu0 0
        %4555 = vmatmul.mubr.bf16.gmra.mrb[0].mxu0 %v3661
        %v4556 = vpop.f32.mrb[0].mxu0
        %v4557 = vadd.f32 0.0, %v4556
        %v4558 = vpop.f32.mrb[0].mxu0
        %v4559 = vpop.f32.mrb[0].mxu0
        %v4560 = vadd.f32 0.0, %v4559
        %v4561 = vpop.f32.mrb[0].mxu0
        %4562 = vdwg.mxu0
        %v4563 = vadd.f32 %v4387, %v4549
        %v4564 = vadd.f32 %v4388, %v4552
        %v4565 = vadd.f32 %v4389, %v4557
        %v4566 = vadd.f32 %v4390, %v4560
        %v4567 = vrot.slane %v4204, 1
        %v4568 = vrot.slane %v4206, 2
        %v4569 = vor.u32 %v4567, %v4568
        %v4570 = vrot.slane %v4215, 1
        %v4571 = vrot.slane %v4211, 2
        %v4572 = vor.u32 %v4570, %v4571
        %v4573 = vsel %vm806, %v4569, %v4572
        %4576 = vmatprep.subr.bf16.mxu0 0
        %4577 = vmatpush1.bf16.msra.mxu0 %v4498
        %4578 = vmatprep.subr.bf16.mxu0 0
        %4579 = vmatpush1.bf16.msra.mxu0 %v4499
        %4580 = vmatprep.subr.bf16.mxu0 0
        %4581 = vmatpush1.bf16.msra.mxu0 %v4500
        %4582 = vmatprep.subr.bf16.mxu0 0
        %4583 = vmatpush1.bf16.msra.mxu0 %v4501
        %4584 = vmatprep.subr.bf16.mxu0 0
        %4585 = vmatpush1.bf16.msra.mxu0 %v4502
        %4586 = vmatprep.subr.bf16.mxu0 0
        %4587 = vmatpush1.bf16.msra.mxu0 %v4503
        %4588 = vmatprep.subr.bf16.mxu0 0
        %4589 = vmatpush1.bf16.msra.mxu0 %v4504
        %4590 = vmatprep.subr.bf16.mxu0 0
        %4591 = vmatpush1.bf16.msra.mxu0 %v4505
        %4592 = vmatprep.subr.bf16.mxu0 0
        %4593 = vmatpush1.bf16.msra.mxu0 0
        %4594 = vmatprep.subr.bf16.mxu0 0
        %4595 = vmatpush1.bf16.msra.mxu0 0
        %4596 = vmatprep.subr.bf16.mxu0 0
        %4597 = vmatpush1.bf16.msra.mxu0 0
        %4598 = vmatprep.subr.bf16.mxu0 0
        %4599 = vmatpush1.bf16.msra.mxu0 0
        %4600 = vmatprep.subr.bf16.mxu0 0
        %4601 = vmatpush1.bf16.msra.mxu0 0
        %4602 = vmatprep.subr.bf16.mxu0 0
        %4603 = vmatpush1.bf16.msra.mxu0 0
        %4604 = vmatprep.subr.bf16.mxu0 0
        %4605 = vmatpush1.bf16.msra.mxu0 0
        %4606 = vmatprep.subr.bf16.mxu0 0
        %4607 = vmatpush1.bf16.msra.mxu0 0
        %4608 = vmatprep.mubr.bf16.mxu0 0
        %4609 = vmatmul.mubr.bf16.gmra.mrb[0].mxu0 %v4573
        %v4610 = vpop.f32.mrb[0].mxu0
        %v4611 = vadd.f32 0.0, %v4610
        %v4612 = vpop.f32.mrb[0].mxu0
        %v4613 = vpop.f32.mrb[0].mxu0
        %v4614 = vadd.f32 0.0, %v4613
        %v4615 = vpop.f32.mrb[0].mxu0
        %4616 = vmatprep.mubr.bf16.mxu0 0
        %4617 = vmatmul.mubr.bf16.gmra.mrb[0].mxu0 %v4572
        %v4618 = vpop.f32.mrb[0].mxu0
        %v4619 = vadd.f32 0.0, %v4618
        %v4620 = vpop.f32.mrb[0].mxu0
        %v4621 = vpop.f32.mrb[0].mxu0
        %v4622 = vadd.f32 0.0, %v4621
        %v4623 = vpop.f32.mrb[0].mxu0
        %4624 = vdwg.mxu0
        %v4625 = vadd.f32 %v4445, %v4611
        %v4626 = vadd.f32 %v4446, %v4614
        %v4627 = vadd.f32 %v4447, %v4619
        %v4628 = vadd.f32 %v4448, %v4622
        %s4629 = scalar_lea.vmem %s1, 1536
        %v4630 = vld [vmem:[%s4629] sm:$0xf]
        %v4631 = vld [vmem:[%s4629 + $0x4] sm:$0xf]
        %v4632 = vld [vmem:[%s4629 + $0x8] sm:$0xf]
        %v4633 = vld [vmem:[%s4629 + $0xc] sm:$0xf]
        %v4634 = vld [vmem:[%s4629 + $0x10] sm:$0xf]
        %v4635 = vld [vmem:[%s4629 + $0x14] sm:$0xf]
        %v4636 = vld [vmem:[%s4629 + $0x18] sm:$0xf]
        %v4637 = vld [vmem:[%s4629 + $0x1c] sm:$0xf]
        %v4638 = vld [vmem:[%s4629 + $0x20] sm:$0xf]
        %v4639 = vld [vmem:[%s4629 + $0x24] sm:$0xf]
        %v4640 = vld [vmem:[%s4629 + $0x28] sm:$0xf]
        %v4641 = vld [vmem:[%s4629 + $0x2c] sm:$0xf]
        %v4642 = vld [vmem:[%s4629 + $0x30] sm:$0xf]
        %v4643 = vld [vmem:[%s4629 + $0x34] sm:$0xf]
        %v4644 = vld [vmem:[%s4629 + $0x38] sm:$0xf]
        %v4645 = vld [vmem:[%s4629 + $0x3c] sm:$0xf]
        %v4662 = vunpack.c.l.b16 %v4630
        %v4663 = vunpack.c.l.b16 %v4631
        %v4664 = vunpack.c.l.b16 %v4632
        %v4665 = vunpack.c.l.b16 %v4633
        %v4666 = vunpack.c.l.b16 %v4634
        %v4667 = vunpack.c.l.b16 %v4635
        %v4668 = vunpack.c.l.b16 %v4636
        %v4669 = vunpack.c.l.b16 %v4637
        %v4670 = vunpack.c.l.b16 %v4638
        %v4671 = vunpack.c.l.b16 %v4639
        %v4672 = vunpack.c.l.b16 %v4640
        %v4673 = vunpack.c.l.b16 %v4641
        %v4674 = vunpack.c.l.b16 %v4642
        %v4675 = vunpack.c.l.b16 %v4643
        %v4676 = vunpack.c.l.b16 %v4644
        %v4677 = vunpack.c.l.b16 %v4645
        %v4678 = vpack.c.b16 %v4663, %v4662
        %v4679 = vpack.c.b16 %v4665, %v4664
        %v4680 = vpack.c.b16 %v4667, %v4666
        %v4681 = vpack.c.b16 %v4669, %v4668
        %v4682 = vpack.c.b16 %v4671, %v4670
        %v4683 = vpack.c.b16 %v4673, %v4672
        %v4684 = vpack.c.b16 %v4675, %v4674
        %v4685 = vpack.c.b16 %v4677, %v4676
        %4694 = vmatprep.subr.bf16.mxu0 0
        %4695 = vmatpush1.bf16.msra.mxu0 %v4678
        %4696 = vmatprep.subr.bf16.mxu0 0
        %4697 = vmatpush1.bf16.msra.mxu0 %v4679
        %4698 = vmatprep.subr.bf16.mxu0 0
        %4699 = vmatpush1.bf16.msra.mxu0 %v4680
        %4700 = vmatprep.subr.bf16.mxu0 0
        %4701 = vmatpush1.bf16.msra.mxu0 %v4681
        %4702 = vmatprep.subr.bf16.mxu0 0
        %4703 = vmatpush1.bf16.msra.mxu0 %v4682
        %4704 = vmatprep.subr.bf16.mxu0 0
        %4705 = vmatpush1.bf16.msra.mxu0 %v4683
        %4706 = vmatprep.subr.bf16.mxu0 0
        %4707 = vmatpush1.bf16.msra.mxu0 %v4684
        %4708 = vmatprep.subr.bf16.mxu0 0
        %4709 = vmatpush1.bf16.msra.mxu0 %v4685
        %4710 = vmatprep.subr.bf16.mxu0 0
        %4711 = vmatpush1.bf16.msra.mxu0 0
        %4712 = vmatprep.subr.bf16.mxu0 0
        %4713 = vmatpush1.bf16.msra.mxu0 0
        %4714 = vmatprep.subr.bf16.mxu0 0
        %4715 = vmatpush1.bf16.msra.mxu0 0
        %4716 = vmatprep.subr.bf16.mxu0 0
        %4717 = vmatpush1.bf16.msra.mxu0 0
        %4718 = vmatprep.subr.bf16.mxu0 0
        %4719 = vmatpush1.bf16.msra.mxu0 0
        %4720 = vmatprep.subr.bf16.mxu0 0
        %4721 = vmatpush1.bf16.msra.mxu0 0
        %4722 = vmatprep.subr.bf16.mxu0 0
        %4723 = vmatpush1.bf16.msra.mxu0 0
        %4724 = vmatprep.subr.bf16.mxu0 0
        %4725 = vmatpush1.bf16.msra.mxu0 0
        %4726 = vmatprep.mubr.bf16.mxu0 0
        %4727 = vmatmul.mubr.bf16.gmra.mrb[0].mxu0 %v3838
        %v4728 = vpop.f32.mrb[0].mxu0
        %v4729 = vadd.f32 0.0, %v4728
        %v4730 = vpop.f32.mrb[0].mxu0
        %v4731 = vpop.f32.mrb[0].mxu0
        %v4732 = vadd.f32 0.0, %v4731
        %v4733 = vpop.f32.mrb[0].mxu0
        %4734 = vmatprep.mubr.bf16.mxu0 0
        %4735 = vmatmul.mubr.bf16.gmra.mrb[0].mxu0 %v3837
        %v4736 = vpop.f32.mrb[0].mxu0
        %v4737 = vadd.f32 0.0, %v4736
        %v4738 = vpop.f32.mrb[0].mxu0
        %v4739 = vpop.f32.mrb[0].mxu0
        %v4740 = vadd.f32 0.0, %v4739
        %v4741 = vpop.f32.mrb[0].mxu0
        %4742 = vdwg.mxu0
        %v4743 = vadd.f32 %v4563, %v4729
        %v4744 = vadd.f32 %v4564, %v4732
        %v4745 = vadd.f32 %v4565, %v4737
        %v4746 = vadd.f32 %v4566, %v4740
        %v4747 = vrot.slane %v4028, 2
        %v4748 = vrot.slane %v4029, 2
        %v4749 = vsel %vm996, %v4747, %v4748
        %4752 = vmatprep.subr.bf16.mxu0 0
        %4753 = vmatpush1.bf16.msra.mxu0 %v4678
        %4754 = vmatprep.subr.bf16.mxu0 0
        %4755 = vmatpush1.bf16.msra.mxu0 %v4679
        %4756 = vmatprep.subr.bf16.mxu0 0
        %4757 = vmatpush1.bf16.msra.mxu0 %v4680
        %4758 = vmatprep.subr.bf16.mxu0 0
        %4759 = vmatpush1.bf16.msra.mxu0 %v4681
        %4760 = vmatprep.subr.bf16.mxu0 0
        %4761 = vmatpush1.bf16.msra.mxu0 %v4682
        %4762 = vmatprep.subr.bf16.mxu0 0
        %4763 = vmatpush1.bf16.msra.mxu0 %v4683
        %4764 = vmatprep.subr.bf16.mxu0 0
        %4765 = vmatpush1.bf16.msra.mxu0 %v4684
        %4766 = vmatprep.subr.bf16.mxu0 0
        %4767 = vmatpush1.bf16.msra.mxu0 %v4685
        %4768 = vmatprep.subr.bf16.mxu0 0
        %4769 = vmatpush1.bf16.msra.mxu0 0
        %4770 = vmatprep.subr.bf16.mxu0 0
        %4771 = vmatpush1.bf16.msra.mxu0 0
        %4772 = vmatprep.subr.bf16.mxu0 0
        %4773 = vmatpush1.bf16.msra.mxu0 0
        %4774 = vmatprep.subr.bf16.mxu0 0
        %4775 = vmatpush1.bf16.msra.mxu0 0
        %4776 = vmatprep.subr.bf16.mxu0 0
        %4777 = vmatpush1.bf16.msra.mxu0 0
        %4778 = vmatprep.subr.bf16.mxu0 0
        %4779 = vmatpush1.bf16.msra.mxu0 0
        %4780 = vmatprep.subr.bf16.mxu0 0
        %4781 = vmatpush1.bf16.msra.mxu0 0
        %4782 = vmatprep.subr.bf16.mxu0 0
        %4783 = vmatpush1.bf16.msra.mxu0 0
        %4784 = vmatprep.mubr.bf16.mxu0 0
        %4785 = vmatmul.mubr.bf16.gmra.mrb[0].mxu0 %v4749
        %v4786 = vpop.f32.mrb[0].mxu0
        %v4787 = vadd.f32 0.0, %v4786
        %v4788 = vpop.f32.mrb[0].mxu0
        %v4789 = vpop.f32.mrb[0].mxu0
        %v4790 = vadd.f32 0.0, %v4789
        %v4791 = vpop.f32.mrb[0].mxu0
        %4792 = vmatprep.mubr.bf16.mxu0 0
        %4793 = vmatmul.mubr.bf16.gmra.mrb[0].mxu0 %v4748
        %v4794 = vpop.f32.mrb[0].mxu0
        %v4795 = vadd.f32 0.0, %v4794
        %v4796 = vpop.f32.mrb[0].mxu0
        %v4797 = vpop.f32.mrb[0].mxu0
        %v4798 = vadd.f32 0.0, %v4797
        %v4799 = vpop.f32.mrb[0].mxu0
        %4800 = vdwg.mxu0
        %v4801 = vadd.f32 %v4625, %v4787
        %v4802 = vadd.f32 %v4626, %v4790
        %v4803 = vadd.f32 %v4627, %v4795
        %v4804 = vadd.f32 %v4628, %v4798
        %v4805 = vmax.f32 %v4743, %v4801
        %v4806 = vmax.f32 %v4744, %v4802
        %v4807 = vmax.f32 %v4745, %v4803
        %v4808 = vmax.f32 %v4746, %v4804
        %4809 = vst [vmem:[#allocation2] sm:$0xff] %v4805
        %4810 = vst [vmem:[#allocation2 + $0x8] sm:$0xff] %v4806
        %4811 = vst [vmem:[#allocation2 + $0x10] sm:$0xff] %v4807
        %4812 = vst [vmem:[#allocation2 + $0x18] sm:$0xf] %v4808
        %v4813 = vld [vmem:[#allocation2] ss:$2 sm:$0xff]
        %s4814 = scalar_lea.vmem [#allocation2], 16
        %v4815 = vld [vmem:[%s4814] ss:$2 sm:$0x3f]
        %s4816 = scalar_lea.vmem [#allocation2], 1
        %v4817 = vld [vmem:[%s4816] ss:$2 sm:$0xff]
        %s4818 = scalar_lea.vmem [#allocation2], 17
        %v4819 = vld [vmem:[%s4818] ss:$2 sm:$0x3f]
        %v4820 = vmax.f32 %v4813, %v4817
        %v4821 = vmax.f32 %v4815, %v4819
        %v4823 = vlaneseq
        %v4824 = vshrl.u32 %v4823, 7
        %v4825 = vsub.s32 0, %v4824
        %v4826 = vrot.slane %v199, %v4825
        %v4828 = vmul.f32 %v4820, %v4826
        %v4829 = vmul.f32 %v4821, %v4826
        %v4831 = vlaneseq
        %v4832 = vshrl.u32 %v4831, 7
        %v4833 = vsub.s32 0, %v4832
        %v4834 = vrot.slane %v200, %v4833
        %v4836 = vadd.f32 %v4828, %v4834
        %v4837 = vadd.f32 %v4829, %v4834
        %vm4838 = vcmp.ge.f32.partialorder %v4836, 0.0
        %vm4839 = vcmp.ge.f32.partialorder %v4837, 0.0
        %v4840 = vmul.f32 %v4836, 0.01
        %v4841 = vmul.f32 %v4837, 0.01
        %v4842 = vsel %vm4838, %v4836, %v4840
        %v4843 = vsel %vm4839, %v4837, %v4841
        %v4844 = vpack.c.bf16 %v4843, %v4842
        %v4846 = vunpack.c.l.b16 %v4844
        %v4847 = vunpack.c.h.b16 %v4844
        %v4848 = vpack.c.b16 %v4846, %v4846
        %v4849 = vpack.c.b16 %v4847, %v4847
        %s4852 = smul.addr %s207, 4
        %s4853 = scalar_lea.vmem %s197, %s4852
        %4854 = vst [vmem:[%s4853] sm:$0xf] %v4848
        %4855 = vst [vmem:[%s4853 + $0x4] sm:$0x7] %v4849
      $region41: #{forward.4} parent=35 // loop_footer
        %s206 = sadd.s32 1, %s202
      $region42: #{forward.4} parent=35 // loop_footer_branch
        %201 = sbr.rel target = $region38
      $region43: #{forward.4} parent=35 // loop_exit
        _
      %p4856 = scmp.lt.s32.totalorder %s15, 1
      %s4857 = scalar_select %p4856, %s15, 1
      %s4858 = smul.addr %s4857, 28
      %s4859 = smul.addr %s4858, 4
      %s4860 = scalar_lea.vmem %s4, %s4859
      // Predicated region
      $region44: #{forward.4} parent=35 // pred_check
        %p4861 = pneg %p122
      $region45: #{forward.4} parent=35 // pred_check_branch
        %4863 = sbr.rel (%p4861) target = $region47
      $region46: #{forward.4} parent=35 // pred_region
        _
      $region47: #{forward.4} parent=35 // pred_fallthru
        _
    $region36: #{forward.4} parent=5 // pred_fallthru
      _
    %p4864 = scmp.le.s32.totalorder 2, %s10
    // Predicated region
    $region48: #{forward.4} parent=5 // pred_check
      %p4865 = pneg %p4864
    $region49: #{forward.4} parent=5 // pred_check_branch
      %4867 = sbr.rel (%p4865) target = $region51
    $region50: #{forward.4} parent=5 // pred_region
      %s4868 = ssub.s32 %s10, 2
      // Predicated region
      $region52: #{forward.4} parent=50 // pred_check
        %p4869 = pneg %p128
      $region53: #{forward.4} parent=50 // pred_check_branch
        %4871 = sbr.rel (%p4869) target = $region55
      $region54: #{forward.4} parent=50 // pred_region
        %p4872 = scmp.lt.s32.totalorder %s16, 1
        %s4873 = scalar_select %p4872, %s16, 1
        %s4874 = smul.addr %s4873, 28
        %s4875 = smul.addr %s4874, 4
        %s4876 = scalar_lea.vmem %s4, %s4875
      $region55: #{forward.4} parent=50 // pred_fallthru
        _
    $region51: #{forward.4} parent=5 // pred_fallthru
      _
  $region6: #{forward.4} parent=0 // loop_footer
    %s14 = sadd.s32 1, %s10
  $region7: #{forward.4} parent=0 // loop_footer_branch
    %9 = sbr.rel target = $region3
  $region8: #{forward.4} parent=0 // loop_exit
    _

</llo_original>
